<compile_context>
chip_gen: v7x
topology: tpu7x:2x2x1
jax: 0.10.0
libtpu: 0.0.40
codegen_flags: <defaults>
</compile_context>

<pallas_src>
import numpy as np

import jax
import jax.numpy as jnp
from jax.experimental import pallas as pl
from jax.experimental.pallas import tpu as pltpu

# ----------------------------- configuration -------------------------------
B = 2                       # batch_size (module default is 2)
IMG_C = 3
IMG_H = IMG_W = 128         # config['input_resolution'] = (128, 128)
PATCH = 8                   # VAE downsamples by 8
LAT_H, LAT_W = IMG_H // PATCH, IMG_W // PATCH          # latent spatial 16x16
OUT_H, OUT_W = IMG_H // 8, IMG_W // 8                  # output_resolution
LAT_C = 4                   # unet.in_channels
HID = 64                    # toy-UNet hidden width (2*HID == 128 lanes)
ROWS = B * LAT_H * LAT_W    # 512 flattened latent pixels
TILE_ROWS = 256             # row tile -> grid of 2 (shards across v7x TCs)
PATCH_DIM = IMG_C * PATCH * PATCH   # 192

NUM_TIMESTEPS = 3
SCHED_TIMESTEPS = (601, 301, 1)     # config['scheduler_timesteps']
SAVE_TIMESTEP = (0, 1, 2)           # config['save_timestep']
VAE_SCALE = 0.18215

# ---------------- DDIM (eta=0) coefficients as compile-time floats ----------
_betas = np.linspace(0.00085 ** 0.5, 0.012 ** 0.5, 1000, dtype=np.float64) ** 2
_acp = np.cumprod(1.0 - _betas)
DDIM_CX, DDIM_CEPS = [], []
for _i, _t in enumerate(SCHED_TIMESTEPS):
    _a_t = _acp[_t]
    _a_prev = _acp[SCHED_TIMESTEPS[_i + 1]] if _i + 1 < NUM_TIMESTEPS else 1.0
    DDIM_CX.append(float(np.sqrt(_a_prev) / np.sqrt(_a_t)))
    DDIM_CEPS.append(float(np.sqrt(1.0 - _a_prev)
                           - np.sqrt(_a_prev) * np.sqrt(1.0 - _a_t) / np.sqrt(_a_t)))

# --------------------- packed parameter slab row layout ---------------------
# Everything row-stacked at 8-row-aligned offsets, lanes start at 0.
VAE_W_ROW = 0                                  # (PATCH_DIM, 2*LAT_C)
VAE_B_ROW = 192                                # (1, 2*LAT_C)
W1_ROW = 200                                   # (LAT_C, HID)
W2_ROW = 208                                   # (HID, HID)
W3T_ROW = 272                                  # NUM_T x (HID, LAT_C), c_eps folded
B1T_ROW = W3T_ROW + NUM_TIMESTEPS * HID        # (NUM_T, HID)  = 464
B2T_ROW = B1T_ROW + 8                          # (NUM_T, HID)  = 472
B3T_ROW = B2T_ROW + 8                          # (NUM_T, LAT_C), c_eps folded = 480
PARAM_ROWS = B3T_ROW + 8                       # 488 (multiple of 8)


# ---------------------- fused VAE + diffusion kernel ------------------------
def fused_diffusion_kernel(w_ref, patches_ref, noise_ref, feats_ref, xout_ref):
    # ---- weights: static views of the packed slab (loaded once per tile) ----
    vae_w = w_ref[VAE_W_ROW:VAE_W_ROW + PATCH_DIM, :2 * LAT_C].astype(jnp.bfloat16)
    vae_b = w_ref[VAE_B_ROW:VAE_B_ROW + 1, :2 * LAT_C]
    w1 = w_ref[W1_ROW:W1_ROW + LAT_C, :HID]
    w2 = w_ref[W2_ROW:W2_ROW + HID, :HID]

    # ---- VAE encode: bf16 patch-conv matmul (f32 acc) + sample + scale ------
    h = jnp.dot(patches_ref[...], vae_w,
                preferred_element_type=jnp.float32) + vae_b
    mean = h[:, :LAT_C]
    logvar = jnp.clip(h[:, LAT_C:], -30.0, 20.0)
    std = jnp.exp(0.5 * logvar)                          # EUP
    x = (mean + std * noise_ref[...]) * VAE_SCALE        # latent, stays in vregs

    # ---- NUM_TIMESTEPS fused UNet eps-pred + DDIM updates (static unroll) ---
    for i in range(NUM_TIMESTEPS):
        b1 = w_ref[B1T_ROW + i:B1T_ROW + i + 1, :HID]    # bias + timestep emb
        b2 = w_ref[B2T_ROW + i:B2T_ROW + i + 1, :HID]
        w3 = w_ref[W3T_ROW + i * HID:W3T_ROW + (i + 1) * HID, :LAT_C]  # c_eps*w3
        b3 = w_ref[B3T_ROW + i:B3T_ROW + i + 1, :LAT_C]                # c_eps*b3

        # "resnet block" 1
        h1 = jnp.dot(x, w1, preferred_element_type=jnp.float32) + b1
        h1 = h1 * jax.nn.sigmoid(h1)
        # "resnet block" 2
        h2 = jnp.dot(h1, w2, preferred_element_type=jnp.float32) + b2
        h2 = h2 * jax.nn.sigmoid(h2)
        # epsilon head, already scaled by the DDIM c_eps for this step
        eps_scaled = jnp.dot(h2, w3, preferred_element_type=jnp.float32) + b3

        # resnet-hook features: h1|h2 fills exactly 128 lanes -> one unmasked
        # full-width store per save_timestep (bf16 writeback)
        feats_ref[i] = jnp.concatenate([h1, h2], axis=-1).astype(feats_ref.dtype)

        # DDIM (eta = 0): x_{t-1} = c_x * x + c_eps * eps  (c_x is an immediate)
        x = DDIM_CX[i] * x + eps_scaled

    xout_ref[...] = x


def fused_forward(packed_params, patches, noise):
    n_tiles = ROWS // TILE_ROWS
    return pl.pallas_call(
        fused_diffusion_kernel,
        out_shape=(
            jax.ShapeDtypeStruct((NUM_TIMESTEPS, ROWS, 2 * HID), jnp.bfloat16),
            jax.ShapeDtypeStruct((ROWS, LAT_C), jnp.float32),
        ),
        grid=(n_tiles,),
        in_specs=[
            pl.BlockSpec((PARAM_ROWS, 128), lambda i: (0, 0)),        # param slab
            pl.BlockSpec((TILE_ROWS, PATCH_DIM), lambda i: (i, 0)),   # patches bf16
            pl.BlockSpec((TILE_ROWS, LAT_C), lambda i: (i, 0)),       # vae noise
        ],
        out_specs=(
            pl.BlockSpec((NUM_TIMESTEPS, TILE_ROWS, 2 * HID), lambda i: (0, i, 0)),
            pl.BlockSpec((TILE_ROWS, LAT_C), lambda i: (i, 0)),
        ),
        compiler_params=pltpu.CompilerParams(
            dimension_semantics=("parallel",)),
    )(packed_params, patches, noise)


# ------------------------------ glue (plain JAX) ----------------------------
def timestep_embedding(t):
    half = HID // 2
    freqs = np.exp(-np.log(10000.0) * np.arange(half, dtype=np.float64) / half)
    args = float(t) * freqs
    return np.concatenate([np.sin(args), np.cos(args)]).astype(np.float32)


def make_params(key):
    ks = jax.random.split(key, 12)
    n = lambda k, s, scale=0.05: (scale * jax.random.normal(k, s)).astype(jnp.float32)
    return {
        "vae_w": n(ks[0], (PATCH_DIM, 2 * LAT_C)),
        "vae_b": n(ks[1], (1, 2 * LAT_C)),
        "w1": n(ks[2], (LAT_C, HID)),
        "b1": n(ks[3], (1, HID)),
        "w2": n(ks[4], (HID, HID)),
        "b2": n(ks[5], (1, HID)),
        "w3": n(ks[6], (HID, LAT_C)),
        "b3": n(ks[7], (1, LAT_C)),
        "wt1": n(ks[8], (HID, HID)),
        "bt1": n(ks[9], (HID,)),
        "wt2": n(ks[10], (HID, HID)),
        "bt2": n(ks[11], (HID,)),
    }


def pack_params(params):
    """Build the single (PARAM_ROWS, 128) f32 parameter slab once.

    Folds per-timestep embeddings into the block biases and the per-step DDIM
    c_eps coefficient into the eps-head weights/bias at pack time.
    """
    slab = jnp.zeros((PARAM_ROWS, 128), jnp.float32)

    def put(s, row, arr):
        arr = jnp.asarray(arr, jnp.float32)
        if arr.ndim == 1:
            arr = arr[None, :]
        return s.at[row:row + arr.shape[0], :arr.shape[1]].set(arr)

    slab = put(slab, VAE_W_ROW, params["vae_w"])
    slab = put(slab, VAE_B_ROW, params["vae_b"])
    slab = put(slab, W1_ROW, params["w1"])
    slab = put(slab, W2_ROW, params["w2"])
    for i, t in enumerate(SCHED_TIMESTEPS):
        temb = timestep_embedding(t)
        b1 = params["b1"][0] + temb @ params["wt1"] + params["bt1"]
        b2 = params["b2"][0] + temb @ params["wt2"] + params["bt2"]
        slab = put(slab, B1T_ROW + i, b1)
        slab = put(slab, B2T_ROW + i, b2)
        slab = put(slab, W3T_ROW + i * HID, DDIM_CEPS[i] * params["w3"])
        slab = put(slab, B3T_ROW + i, DDIM_CEPS[i] * params["b3"])
    return slab


@jax.jit
def diffusion_extractor_forward(images, vae_noise, packed_params):
    """images: NCHW (B, 3, IMG_H, IMG_W) -> (feats, outputs)

    feats   : (B, len(save_timestep), 2*HID, OUT_H, OUT_W)   (bf16)
    outputs : (B, LAT_C, LAT_H, LAT_W)  final latent of the diffusion run
    """
    # im2col for the stride-8 VAE patch conv, cast to bf16 (halves HBM traffic
    # into the kernel).  TODO(synk): single small XLA op; could be moved
    # in-kernel or avoided by feeding NHWC upstream.
    patches = images.reshape(B, IMG_C, LAT_H, PATCH, LAT_W, PATCH)
    patches = patches.transpose(0, 2, 4, 1, 3, 5).reshape(ROWS, PATCH_DIM)
    patches = patches.astype(jnp.bfloat16)

    # one fused pallas_call: VAE encode + all DDIM steps + feature hooks
    feats_slab, x_out = fused_forward(packed_params, patches, vae_noise)

    # collect_and_resize_feats: features already at output_resolution
    # (LAT_H == OUT_H), so resize is the identity; reshape to NCHW-style.
    if tuple(SAVE_TIMESTEP) != tuple(range(NUM_TIMESTEPS)):
        feats_slab = feats_slab[jnp.asarray(SAVE_TIMESTEP)]
    feats = feats_slab.reshape(len(SAVE_TIMESTEP), B, LAT_H, LAT_W, 2 * HID)
    feats = feats.transpose(1, 0, 4, 2, 3)                  # (B, T, C, H, W)

    outputs = x_out.reshape(B, LAT_H, LAT_W, LAT_C).transpose(0, 3, 1, 2)
    return feats, outputs


# ----------------------------------- main -----------------------------------
if __name__ == "__main__":
    key = jax.random.PRNGKey(0)
    k_img, k_noise, k_param = jax.random.split(key, 3)

    images = jax.random.normal(k_img, (B, IMG_C, IMG_H, IMG_W),
                               dtype=jnp.float32)            # NCHW
    vae_noise = jax.random.normal(k_noise, (ROWS, LAT_C), dtype=jnp.float32)
    params = make_params(k_param)
    packed_params = pack_params(params)                      # built once

    feats, outputs = diffusion_extractor_forward(images, vae_noise, packed_params)
    jax.block_until_ready((feats, outputs))

    assert feats.shape == (B, len(SAVE_TIMESTEP), 2 * HID, OUT_H, OUT_W)
    assert outputs.shape == (B, LAT_C, LAT_H, LAT_W)
    assert bool(jnp.all(jnp.isfinite(feats.astype(jnp.float32))))
    assert bool(jnp.all(jnp.isfinite(outputs)))
    print("KERNEL_OK")
</pallas_src>

<mosaic_0001>
module attributes {stable_mosaic.version = 11 : i64} {
  func.func @fused_diffusion_kernel(%arg0: i32, %arg1: memref<488x128xf32, #tpu.memory_space<vmem>>, %arg2: memref<256x192xbf16, #tpu.memory_space<vmem>>, %arg3: memref<256x4xf32, #tpu.memory_space<vmem>>, %arg4: memref<3x256x128xbf16, #tpu.memory_space<vmem>>, %arg5: memref<256x4xf32, #tpu.memory_space<vmem>>) attributes {dimension_semantics = [#tpu.dimension_semantics<parallel>], iteration_bounds = array<i64: 2>, scalar_prefetch = 0 : i64, scratch_operands = 0 : i64, tpu.core_type = #tpu.core_type<tc>, window_params = [{pipeline_mode = #tpu.pipeline_mode<synchronous>, transform_indices = @transform_0, window_bounds = array<i64: 488, 128>}, {transform_indices = @transform_1, window_bounds = array<i64: 256, 192>}, {transform_indices = @transform_2, window_bounds = array<i64: 256, 4>}, {transform_indices = @transform_3, window_bounds = array<i64: 3, 256, 128>}, {transform_indices = @transform_4, window_bounds = array<i64: 256, 4>}]} {
    %c0 = arith.constant 0 : index
    %c0_0 = arith.constant 0 : index
    %0 = vector.load %arg1[%c0, %c0_0] : memref<488x128xf32, #tpu.memory_space<vmem>>, vector<192x8xf32>
    %1 = arith.truncf %0 : vector<192x8xf32> to vector<192x8xbf16>
    %c192 = arith.constant 192 : index
    %c0_1 = arith.constant 0 : index
    %2 = vector.load %arg1[%c192, %c0_1] : memref<488x128xf32, #tpu.memory_space<vmem>>, vector<1x8xf32>
    %c200 = arith.constant 200 : index
    %c0_2 = arith.constant 0 : index
    %3 = vector.load %arg1[%c200, %c0_2] : memref<488x128xf32, #tpu.memory_space<vmem>>, vector<4x64xf32>
    %c208 = arith.constant 208 : index
    %c0_3 = arith.constant 0 : index
    %4 = vector.load %arg1[%c208, %c0_3] : memref<488x128xf32, #tpu.memory_space<vmem>>, vector<64x64xf32>
    %c0_4 = arith.constant 0 : index
    %c0_5 = arith.constant 0 : index
    %5 = vector.load %arg2[%c0_4, %c0_5] : memref<256x192xbf16, #tpu.memory_space<vmem>>, vector<256x192xbf16>
    %cst = arith.constant dense<0.000000e+00> : vector<256x8xf32>
    %6 = tpu.matmul %5, %1, %cst {dimension_numbers = #tpu.dot_dimension_numbers<[1], [0], [0], [1], [0, 0, 1, 1], [], []>} : vector<256x192xbf16>, vector<192x8xbf16>, vector<256x8xf32> -> vector<256x8xf32>
    %7 = vector.broadcast %2 : vector<1x8xf32> to vector<256x8xf32>
    %8 = arith.addf %6, %7 : vector<256x8xf32>
    %9 = vector.extract_strided_slice %8 {offsets = [0, 0], sizes = [256, 4], strides = [1, 1]} : vector<256x8xf32> to vector<256x4xf32>
    %10 = vector.extract_strided_slice %8 {offsets = [0, 4], sizes = [256, 4], strides = [1, 1]} : vector<256x8xf32> to vector<256x4xf32>
    %cst_6 = arith.constant -3.000000e+01 : f32
    %cst_7 = arith.constant 2.000000e+01 : f32
    %11 = vector.broadcast %cst_6 : f32 to vector<256x4xf32>
    %12 = arith.maximumf %11, %10 : vector<256x4xf32>
    %13 = vector.broadcast %cst_7 : f32 to vector<256x4xf32>
    %14 = arith.minimumf %13, %12 : vector<256x4xf32>
    %cst_8 = arith.constant 5.000000e-01 : f32
    %15 = vector.broadcast %cst_8 : f32 to vector<256x4xf32>
    %16 = arith.mulf %15, %14 : vector<256x4xf32>
    %17 = math.exp %16 : vector<256x4xf32>
    %c0_9 = arith.constant 0 : index
    %c0_10 = arith.constant 0 : index
    %18 = vector.load %arg3[%c0_9, %c0_10] : memref<256x4xf32, #tpu.memory_space<vmem>>, vector<256x4xf32>
    %19 = arith.mulf %17, %18 : vector<256x4xf32>
    %20 = arith.addf %9, %19 : vector<256x4xf32>
    %cst_11 = arith.constant 1.821500e-01 : f32
    %21 = vector.broadcast %cst_11 : f32 to vector<256x4xf32>
    %22 = arith.mulf %20, %21 : vector<256x4xf32>
    %c464 = arith.constant 464 : index
    %c0_12 = arith.constant 0 : index
    %23 = vector.load %arg1[%c464, %c0_12] : memref<488x128xf32, #tpu.memory_space<vmem>>, vector<1x64xf32>
    %c472 = arith.constant 472 : index
    %c0_13 = arith.constant 0 : index
    %24 = vector.load %arg1[%c472, %c0_13] : memref<488x128xf32, #tpu.memory_space<vmem>>, vector<1x64xf32>
    %c272 = arith.constant 272 : index
    %c0_14 = arith.constant 0 : index
    %25 = vector.load %arg1[%c272, %c0_14] : memref<488x128xf32, #tpu.memory_space<vmem>>, vector<64x4xf32>
    %c480 = arith.constant 480 : index
    %c0_15 = arith.constant 0 : index
    %26 = vector.load %arg1[%c480, %c0_15] : memref<488x128xf32, #tpu.memory_space<vmem>>, vector<1x4xf32>
    %cst_16 = arith.constant dense<0.000000e+00> : vector<256x64xf32>
    %27 = tpu.matmul %22, %3, %cst_16 {dimension_numbers = #tpu.dot_dimension_numbers<[1], [0], [0], [1], [0, 0, 1, 1], [], []>} : vector<256x4xf32>, vector<4x64xf32>, vector<256x64xf32> -> vector<256x64xf32>
    %28 = vector.broadcast %23 : vector<1x64xf32> to vector<256x64xf32>
    %29 = arith.addf %27, %28 : vector<256x64xf32>
    %30 = arith.negf %29 : vector<256x64xf32>
    %31 = math.exp %30 : vector<256x64xf32>
    %cst_17 = arith.constant 1.000000e+00 : f32
    %32 = vector.broadcast %cst_17 : f32 to vector<256x64xf32>
    %33 = arith.addf %32, %31 : vector<256x64xf32>
    %34 = arith.divf %32, %33 : vector<256x64xf32>
    %35 = arith.mulf %29, %34 : vector<256x64xf32>
    %cst_18 = arith.constant dense<0.000000e+00> : vector<256x64xf32>
    %36 = tpu.matmul %35, %4, %cst_18 {dimension_numbers = #tpu.dot_dimension_numbers<[1], [0], [0], [1], [0, 0, 1, 1], [], []>} : vector<256x64xf32>, vector<64x64xf32>, vector<256x64xf32> -> vector<256x64xf32>
    %37 = vector.broadcast %24 : vector<1x64xf32> to vector<256x64xf32>
    %38 = arith.addf %36, %37 : vector<256x64xf32>
    %39 = arith.negf %38 : vector<256x64xf32>
    %40 = math.exp %39 : vector<256x64xf32>
    %cst_19 = arith.constant 1.000000e+00 : f32
    %41 = vector.broadcast %cst_19 : f32 to vector<256x64xf32>
    %42 = arith.addf %41, %40 : vector<256x64xf32>
    %43 = arith.divf %41, %42 : vector<256x64xf32>
    %44 = arith.mulf %38, %43 : vector<256x64xf32>
    %cst_20 = arith.constant dense<0.000000e+00> : vector<256x4xf32>
    %45 = tpu.matmul %44, %25, %cst_20 {dimension_numbers = #tpu.dot_dimension_numbers<[1], [0], [0], [1], [0, 0, 1, 1], [], []>} : vector<256x64xf32>, vector<64x4xf32>, vector<256x4xf32> -> vector<256x4xf32>
    %46 = vector.broadcast %26 : vector<1x4xf32> to vector<256x4xf32>
    %47 = arith.addf %45, %46 : vector<256x4xf32>
    %48 = tpu.concatenate %35, %44 in 1 : vector<256x64xf32>, vector<256x64xf32> -> vector<256x128xf32>
    %49 = arith.truncf %48 : vector<256x128xf32> to vector<256x128xbf16>
    %c0_21 = arith.constant 0 : index
    %c0_22 = arith.constant 0 : index
    %c0_23 = arith.constant 0 : index
    %50 = vector.load %arg4[%c0_21, %c0_22, %c0_23] : memref<3x256x128xbf16, #tpu.memory_space<vmem>>, vector<1x256x128xbf16>
    %51 = vector.shape_cast %50 : vector<1x256x128xbf16> to vector<256x128xbf16>
    %52 = vector.shape_cast %49 : vector<256x128xbf16> to vector<1x256x128xbf16>
    tpu.vector_store %arg4[%c0_21, %c0_22, %c0_23], %52 {strides = array<i32>} : memref<3x256x128xbf16, #tpu.memory_space<vmem>>, vector<1x256x128xbf16>,
    %cst_24 = arith.constant 1.91946447 : f32
    %53 = vector.broadcast %cst_24 : f32 to vector<256x4xf32>
    %54 = arith.mulf %53, %22 : vector<256x4xf32>
    %55 = arith.addf %54, %47 : vector<256x4xf32>
    %c465 = arith.constant 465 : index
    %c0_25 = arith.constant 0 : index
    %56 = vector.load %arg1[%c465, %c0_25] : memref<488x128xf32, #tpu.memory_space<vmem>>, vector<1x64xf32>
    %c473 = arith.constant 473 : index
    %c0_26 = arith.constant 0 : index
    %57 = vector.load %arg1[%c473, %c0_26] : memref<488x128xf32, #tpu.memory_space<vmem>>, vector<1x64xf32>
    %c336 = arith.constant 336 : index
    %c0_27 = arith.constant 0 : index
    %58 = vector.load %arg1[%c336, %c0_27] : memref<488x128xf32, #tpu.memory_space<vmem>>, vector<64x4xf32>
    %c481 = arith.constant 481 : index
    %c0_28 = arith.constant 0 : index
    %59 = vector.load %arg1[%c481, %c0_28] : memref<488x128xf32, #tpu.memory_space<vmem>>, vector<1x4xf32>
    %cst_29 = arith.constant dense<0.000000e+00> : vector<256x64xf32>
    %60 = tpu.matmul %55, %3, %cst_29 {dimension_numbers = #tpu.dot_dimension_numbers<[1], [0], [0], [1], [0, 0, 1, 1], [], []>} : vector<256x4xf32>, vector<4x64xf32>, vector<256x64xf32> -> vector<256x64xf32>
    %61 = vector.broadcast %56 : vector<1x64xf32> to vector<256x64xf32>
    %62 = arith.addf %60, %61 : vector<256x64xf32>
    %63 = arith.negf %62 : vector<256x64xf32>
    %64 = math.exp %63 : vector<256x64xf32>
    %cst_30 = arith.constant 1.000000e+00 : f32
    %65 = vector.broadcast %cst_30 : f32 to vector<256x64xf32>
    %66 = arith.addf %65, %64 : vector<256x64xf32>
    %67 = arith.divf %65, %66 : vector<256x64xf32>
    %68 = arith.mulf %62, %67 : vector<256x64xf32>
    %cst_31 = arith.constant dense<0.000000e+00> : vector<256x64xf32>
    %69 = tpu.matmul %68, %4, %cst_31 {dimension_numbers = #tpu.dot_dimension_numbers<[1], [0], [0], [1], [0, 0, 1, 1], [], []>} : vector<256x64xf32>, vector<64x64xf32>, vector<256x64xf32> -> vector<256x64xf32>
    %70 = vector.broadcast %57 : vector<1x64xf32> to vector<256x64xf32>
    %71 = arith.addf %69, %70 : vector<256x64xf32>
    %72 = arith.negf %71 : vector<256x64xf32>
    %73 = math.exp %72 : vector<256x64xf32>
    %cst_32 = arith.constant 1.000000e+00 : f32
    %74 = vector.broadcast %cst_32 : f32 to vector<256x64xf32>
    %75 = arith.addf %74, %73 : vector<256x64xf32>
    %76 = arith.divf %74, %75 : vector<256x64xf32>
    %77 = arith.mulf %71, %76 : vector<256x64xf32>
    %cst_33 = arith.constant dense<0.000000e+00> : vector<256x4xf32>
    %78 = tpu.matmul %77, %58, %cst_33 {dimension_numbers = #tpu.dot_dimension_numbers<[1], [0], [0], [1], [0, 0, 1, 1], [], []>} : vector<256x64xf32>, vector<64x4xf32>, vector<256x4xf32> -> vector<256x4xf32>
    %79 = vector.broadcast %59 : vector<1x4xf32> to vector<256x4xf32>
    %80 = arith.addf %78, %79 : vector<256x4xf32>
    %81 = tpu.concatenate %68, %77 in 1 : vector<256x64xf32>, vector<256x64xf32> -> vector<256x128xf32>
    %82 = arith.truncf %81 : vector<256x128xf32> to vector<256x128xbf16>
    %c1 = arith.constant 1 : index
    %c0_34 = arith.constant 0 : index
    %c0_35 = arith.constant 0 : index
    %83 = vector.load %arg4[%c1, %c0_34, %c0_35] : memref<3x256x128xbf16, #tpu.memory_space<vmem>>, vector<1x256x128xbf16>
    %84 = vector.shape_cast %83 : vector<1x256x128xbf16> to vector<256x128xbf16>
    %85 = vector.shape_cast %82 : vector<256x128xbf16> to vector<1x256x128xbf16>
    tpu.vector_store %arg4[%c1, %c0_34, %c0_35], %85 {strides = array<i32>} : memref<3x256x128xbf16, #tpu.memory_space<vmem>>, vector<1x256x128xbf16>,
    %cst_36 = arith.constant 1.30208361 : f32
    %86 = vector.broadcast %cst_36 : f32 to vector<256x4xf32>
    %87 = arith.mulf %86, %55 : vector<256x4xf32>
    %88 = arith.addf %87, %80 : vector<256x4xf32>
    %c466 = arith.constant 466 : index
    %c0_37 = arith.constant 0 : index
    %89 = vector.load %arg1[%c466, %c0_37] : memref<488x128xf32, #tpu.memory_space<vmem>>, vector<1x64xf32>
    %c474 = arith.constant 474 : index
    %c0_38 = arith.constant 0 : index
    %90 = vector.load %arg1[%c474, %c0_38] : memref<488x128xf32, #tpu.memory_space<vmem>>, vector<1x64xf32>
    %c400 = arith.constant 400 : index
    %c0_39 = arith.constant 0 : index
    %91 = vector.load %arg1[%c400, %c0_39] : memref<488x128xf32, #tpu.memory_space<vmem>>, vector<64x4xf32>
    %c482 = arith.constant 482 : index
    %c0_40 = arith.constant 0 : index
    %92 = vector.load %arg1[%c482, %c0_40] : memref<488x128xf32, #tpu.memory_space<vmem>>, vector<1x4xf32>
    %cst_41 = arith.constant dense<0.000000e+00> : vector<256x64xf32>
    %93 = tpu.matmul %88, %3, %cst_41 {dimension_numbers = #tpu.dot_dimension_numbers<[1], [0], [0], [1], [0, 0, 1, 1], [], []>} : vector<256x4xf32>, vector<4x64xf32>, vector<256x64xf32> -> vector<256x64xf32>
    %94 = vector.broadcast %89 : vector<1x64xf32> to vector<256x64xf32>
    %95 = arith.addf %93, %94 : vector<256x64xf32>
    %96 = arith.negf %95 : vector<256x64xf32>
    %97 = math.exp %96 : vector<256x64xf32>
    %cst_42 = arith.constant 1.000000e+00 : f32
    %98 = vector.broadcast %cst_42 : f32 to vector<256x64xf32>
    %99 = arith.addf %98, %97 : vector<256x64xf32>
    %100 = arith.divf %98, %99 : vector<256x64xf32>
    %101 = arith.mulf %95, %100 : vector<256x64xf32>
    %cst_43 = arith.constant dense<0.000000e+00> : vector<256x64xf32>
    %102 = tpu.matmul %101, %4, %cst_43 {dimension_numbers = #tpu.dot_dimension_numbers<[1], [0], [0], [1], [0, 0, 1, 1], [], []>} : vector<256x64xf32>, vector<64x64xf32>, vector<256x64xf32> -> vector<256x64xf32>
    %103 = vector.broadcast %90 : vector<1x64xf32> to vector<256x64xf32>
    %104 = arith.addf %102, %103 : vector<256x64xf32>
    %105 = arith.negf %104 : vector<256x64xf32>
    %106 = math.exp %105 : vector<256x64xf32>
    %cst_44 = arith.constant 1.000000e+00 : f32
    %107 = vector.broadcast %cst_44 : f32 to vector<256x64xf32>
    %108 = arith.addf %107, %106 : vector<256x64xf32>
    %109 = arith.divf %107, %108 : vector<256x64xf32>
    %110 = arith.mulf %104, %109 : vector<256x64xf32>
    %cst_45 = arith.constant dense<0.000000e+00> : vector<256x4xf32>
    %111 = tpu.matmul %110, %91, %cst_45 {dimension_numbers = #tpu.dot_dimension_numbers<[1], [0], [0], [1], [0, 0, 1, 1], [], []>} : vector<256x64xf32>, vector<64x4xf32>, vector<256x4xf32> -> vector<256x4xf32>
    %112 = vector.broadcast %92 : vector<1x4xf32> to vector<256x4xf32>
    %113 = arith.addf %111, %112 : vector<256x4xf32>
    %114 = tpu.concatenate %101, %110 in 1 : vector<256x64xf32>, vector<256x64xf32> -> vector<256x128xf32>
    %115 = arith.truncf %114 : vector<256x128xf32> to vector<256x128xbf16>
    %c2 = arith.constant 2 : index
    %c0_46 = arith.constant 0 : index
    %c0_47 = arith.constant 0 : index
    %116 = vector.load %arg4[%c2, %c0_46, %c0_47] : memref<3x256x128xbf16, #tpu.memory_space<vmem>>, vector<1x256x128xbf16>
    %117 = vector.shape_cast %116 : vector<1x256x128xbf16> to vector<256x128xbf16>
    %118 = vector.shape_cast %115 : vector<256x128xbf16> to vector<1x256x128xbf16>
    tpu.vector_store %arg4[%c2, %c0_46, %c0_47], %118 {strides = array<i32>} : memref<3x256x128xbf16, #tpu.memory_space<vmem>>, vector<1x256x128xbf16>,
    %cst_48 = arith.constant 1.00085306 : f32
    %119 = vector.broadcast %cst_48 : f32 to vector<256x4xf32>
    %120 = arith.mulf %119, %88 : vector<256x4xf32>
    %121 = arith.addf %120, %113 : vector<256x4xf32>
    %c0_49 = arith.constant 0 : index
    %c0_50 = arith.constant 0 : index
    %122 = vector.load %arg5[%c0_49, %c0_50] : memref<256x4xf32, #tpu.memory_space<vmem>>, vector<256x4xf32>
    tpu.vector_store %arg5[%c0_49, %c0_50], %121 {strides = array<i32>} : memref<256x4xf32, #tpu.memory_space<vmem>>, vector<256x4xf32>,
    return
  }
  func.func @transform_0(%arg0: i32) -> (i32, i32) {
    %c0_i32 = arith.constant 0 : i32
    %c0_i32_0 = arith.constant 0 : i32
    %c0_i32_1 = arith.constant 0 : i32
    return %c0_i32, %c0_i32_0 : i32, i32
  }
  func.func @transform_1(%arg0: i32) -> (i32, i32) {
    %c0_i32 = arith.constant 0 : i32
    %c0_i32_0 = arith.constant 0 : i32
    return %arg0, %c0_i32 : i32, i32
  }
  func.func @transform_2(%arg0: i32) -> (i32, i32) {
    %c0_i32 = arith.constant 0 : i32
    %c0_i32_0 = arith.constant 0 : i32
    return %arg0, %c0_i32 : i32, i32
  }
  func.func @transform_3(%arg0: i32) -> (i32, i32, i32) {
    %c0_i32 = arith.constant 0 : i32
    %c0_i32_0 = arith.constant 0 : i32
    %c0_i32_1 = arith.constant 0 : i32
    return %c0_i32, %arg0, %c0_i32_0 : i32, i32, i32
  }
  func.func @transform_4(%arg0: i32) -> (i32, i32) {
    %c0_i32 = arith.constant 0 : i32
    %c0_i32_0 = arith.constant 0 : i32
    return %arg0, %c0_i32 : i32, i32
  }
}

</mosaic_0001>

<llo_original>
// kernel: diffusion_extractor_forward.1
$region0: #{diffusion_extractor_forward.1}
  #allocation0 [shape = 'u32[]', space=smem, size = 0x4, offset = 0x4, fixed_abs, tag = 'smem constant byte address 0x4 - core index']
  #allocation1 [shape = 'u32[144,128]{1,0:T(1,128)}', space=vmem, size = 0x12000, scoped, tag = 'internal scratch']
  %s0 = inlined_call_operand.vmem [shape: f32[488,128], index: 0, kind: input, shape index: {}]
  %s1 = inlined_call_operand.vmem [shape: bf16[512,192], index: 1, kind: input, shape index: {}]
  %s2 = inlined_call_operand.vmem [shape: f32[512,4], index: 2, kind: input, shape index: {}]
  %s3 = inlined_call_operand.vmem [shape: bf16[3,512,128], index: 3, kind: output, shape index: {0}]
  %s4 = inlined_call_operand.vmem [shape: f32[512,4], index: 4, kind: output, shape index: {1}]
  %5 = xla_tuple %s3, %s4
  %s6 = sld [smem:[#allocation0]]
  $region90: #{diffusion_extractor_forward.1} parent=0
    _
  %s8 = ssub.s32 1, %s6
  %s9 = scalar_select 0, %s8, %s6
  $region1: #{diffusion_extractor_forward.1} parent=0
    #allocation2 [shape = 'u8[393216]{0}', space=vmem, size = 0x60000, scoped, tag = 'output window, operand 0']
    loop: start=0, step=1, limit=4
    $region2: #{diffusion_extractor_forward.1} parent=1 // loop_pre_header
      _
    $region3: #{diffusion_extractor_forward.1} parent=1 // loop_header
      %s11 = sphi 0, %s15
      %p12 = scmp.ge.s32.totalorder %s11, 4
      %s19 = sphi 0, %s19
      %s21 = sphi 0, %s19
      %s22 = sphi 0, %s21
      %s36 = sphi 0, %s22
      %s42 = sphi 0, %s44
      %s45 = sphi 0, %s42
      %s46 = sphi 0, %s45
      %s62 = sphi 0, %s46
      %s68 = sphi 0, %s70
      %s71 = sphi 0, %s68
      %s72 = sphi 0, %s71
      %s88 = sphi 0, %s72
      %s94 = sphi 0, %s96
      %s97 = sphi 0, %s94
      %s98 = sphi 0, %s97
      %s114 = sphi 0, %s98
      %s120 = sphi 0, %s122
      %s123 = sphi 0, %s120
      %s124 = sphi 0, %s123
      %s140 = sphi 0, %s124
    $region4: #{diffusion_extractor_forward.1} parent=1 // loop_header_branch
      %14 = sbr.rel (%p12) target = $region8
    $region5: #{diffusion_extractor_forward.1} parent=1 // loop_body
      %s16 = ssub.s32 %s11, 1
      %s17 = ssub.s32 %s11, 2
      %s18 = sadd.s32 %s11, 1
      %s20 = sadd.s32 %s19, 1
      %p23 = scmp.eq.s32.totalorder %s11, 1
      %p24 = scmp.ne.s32.totalorder %s19, %s21
      %p25 = scmp.eq.s32.totalorder %s11, 0
      %p26 = por %p24, %p25
      %p27 = scmp.ne.s32.totalorder %s19, %s21
      %p28 = scmp.eq.s32.totalorder %s16, 1
      %p29 = por %p27, %p28
      %p30 = scmp.ne.s32.totalorder %s21, %s22
      %p31 = scmp.eq.s32.totalorder %s16, 0
      %p32 = por %p30, %p31
      %p33 = scmp.ne.s32.totalorder %s21, %s22
      %p34 = scmp.eq.s32.totalorder %s17, 1
      %p35 = por %p33, %p34
      %p37 = scmp.ne.s32.totalorder %s22, %s36
      %p38 = scmp.eq.s32.totalorder %s17, 0
      %p39 = por %p37, %p38
      %s40 = ssub.s32 %s11, %s18
      %p41 = scmp.eq.s32.totalorder %s40, 0
      %s43 = sadd.s32 %s42, 1
      %s44 = scalar_select %p41, %s42, %s43
      %p47 = pneg %p41
      %p48 = scmp.eq.s32.totalorder %s11, 1
      %p49 = por %p47, %p48
      %p50 = scmp.ne.s32.totalorder %s42, %s45
      %p51 = scmp.eq.s32.totalorder %s11, 0
      %p52 = por %p50, %p51
      %p53 = scmp.ne.s32.totalorder %s42, %s45
      %p54 = scmp.eq.s32.totalorder %s16, 1
      %p55 = por %p53, %p54
      %p56 = scmp.ne.s32.totalorder %s45, %s46
      %p57 = scmp.eq.s32.totalorder %s16, 0
      %p58 = por %p56, %p57
      %p59 = scmp.ne.s32.totalorder %s45, %s46
      %p60 = scmp.eq.s32.totalorder %s17, 1
      %p61 = por %p59, %p60
      %p63 = scmp.ne.s32.totalorder %s46, %s62
      %p64 = scmp.eq.s32.totalorder %s17, 0
      %p65 = por %p63, %p64
      %s66 = ssub.s32 %s11, %s18
      %p67 = scmp.eq.s32.totalorder %s66, 0
      %s69 = sadd.s32 %s68, 1
      %s70 = scalar_select %p67, %s68, %s69
      %p73 = pneg %p67
      %p74 = scmp.eq.s32.totalorder %s11, 1
      %p75 = por %p73, %p74
      %p76 = scmp.ne.s32.totalorder %s68, %s71
      %p77 = scmp.eq.s32.totalorder %s11, 0
      %p78 = por %p76, %p77
      %p79 = scmp.ne.s32.totalorder %s68, %s71
      %p80 = scmp.eq.s32.totalorder %s16, 1
      %p81 = por %p79, %p80
      %p82 = scmp.ne.s32.totalorder %s71, %s72
      %p83 = scmp.eq.s32.totalorder %s16, 0
      %p84 = por %p82, %p83
      %p85 = scmp.ne.s32.totalorder %s71, %s72
      %p86 = scmp.eq.s32.totalorder %s17, 1
      %p87 = por %p85, %p86
      %p89 = scmp.ne.s32.totalorder %s72, %s88
      %p90 = scmp.eq.s32.totalorder %s17, 0
      %p91 = por %p89, %p90
      %s92 = ssub.s32 %s11, %s18
      %p93 = scmp.eq.s32.totalorder %s92, 0
      %s95 = sadd.s32 %s94, 1
      %s96 = scalar_select %p93, %s94, %s95
      %p99 = pneg %p93
      %p100 = scmp.eq.s32.totalorder %s11, 1
      %p101 = por %p99, %p100
      %p102 = scmp.ne.s32.totalorder %s94, %s97
      %p103 = scmp.eq.s32.totalorder %s11, 0
      %p104 = por %p102, %p103
      %p105 = scmp.ne.s32.totalorder %s94, %s97
      %p106 = scmp.eq.s32.totalorder %s16, 1
      %p107 = por %p105, %p106
      %p108 = scmp.ne.s32.totalorder %s97, %s98
      %p109 = scmp.eq.s32.totalorder %s16, 0
      %p110 = por %p108, %p109
      %p111 = scmp.ne.s32.totalorder %s97, %s98
      %p112 = scmp.eq.s32.totalorder %s17, 1
      %p113 = por %p111, %p112
      %p115 = scmp.ne.s32.totalorder %s98, %s114
      %p116 = scmp.eq.s32.totalorder %s17, 0
      %p117 = por %p115, %p116
      %s118 = ssub.s32 %s11, %s18
      %p119 = scmp.eq.s32.totalorder %s118, 0
      %s121 = sadd.s32 %s120, 1
      %s122 = scalar_select %p119, %s120, %s121
      %p125 = pneg %p119
      %p126 = scmp.eq.s32.totalorder %s11, 1
      %p127 = por %p125, %p126
      %p128 = scmp.ne.s32.totalorder %s120, %s123
      %p129 = scmp.eq.s32.totalorder %s11, 0
      %p130 = por %p128, %p129
      %p131 = scmp.ne.s32.totalorder %s120, %s123
      %p132 = scmp.eq.s32.totalorder %s16, 1
      %p133 = por %p131, %p132
      %p134 = scmp.ne.s32.totalorder %s123, %s124
      %p135 = scmp.eq.s32.totalorder %s16, 0
      %p136 = por %p134, %p135
      %p137 = scmp.ne.s32.totalorder %s123, %s124
      %p138 = scmp.eq.s32.totalorder %s17, 1
      %p139 = por %p137, %p138
      %p141 = scmp.ne.s32.totalorder %s124, %s140
      %p142 = scmp.eq.s32.totalorder %s17, 0
      %p143 = por %p141, %p142
      %p144 = scmp.le.s32.totalorder 1, %s11
      %p145 = scmp.lt.s32.totalorder %s11, 3
      %p146 = pnand %p144, %p145
      %p147 = pneg %p146
      // Predicated region
      $region9: #{diffusion_extractor_forward.1} parent=5 // pred_check
        _
      $region10: #{diffusion_extractor_forward.1} parent=5 // pred_check_branch
        %149 = sbr.rel (%p146) target = $region12
      $region11: #{diffusion_extractor_forward.1} parent=5 // pred_region
        %s150 = ssub.s32 %s11, 1
        // Predicated region
        $region13: #{diffusion_extractor_forward.1} parent=11 // pred_check
          %p151 = pneg %p32
        $region14: #{diffusion_extractor_forward.1} parent=11 // pred_check_branch
          %153 = sbr.rel (%p151) target = $region16
        $region15: #{diffusion_extractor_forward.1} parent=11 // pred_region
          _
        $region16: #{diffusion_extractor_forward.1} parent=11 // pred_fallthru
          _
      $region12: #{diffusion_extractor_forward.1} parent=5 // pred_fallthru
        _
      %p154 = scmp.lt.s32.totalorder %s11, 2
      // Predicated region
      $region17: #{diffusion_extractor_forward.1} parent=5 // pred_check
        %p155 = pneg %p154
      $region18: #{diffusion_extractor_forward.1} parent=5 // pred_check_branch
        %157 = sbr.rel (%p155) target = $region20
      $region19: #{diffusion_extractor_forward.1} parent=5 // pred_region
        // Predicated region
        $region21: #{diffusion_extractor_forward.1} parent=19 // pred_check
          %p158 = pneg %p52
        $region22: #{diffusion_extractor_forward.1} parent=19 // pred_check_branch
          %160 = sbr.rel (%p158) target = $region24
        $region23: #{diffusion_extractor_forward.1} parent=19 // pred_region
          %s161 = smul.u32 32, %s11
          %p162 = scmp.lt.s32.totalorder %s161, 63
          %s163 = scalar_select %p162, %s161, 63
          %s164 = smul.addr %s163, 2
          %s165 = smul.addr %s164, 4
          %s166 = scalar_lea.vmem %s1, %s165
          %s167 = smul.u32 32, %s11
        $region24: #{diffusion_extractor_forward.1} parent=19 // pred_fallthru
          _
        // Predicated region
        $region25: #{diffusion_extractor_forward.1} parent=19 // pred_check
          %p168 = pneg %p78
        $region26: #{diffusion_extractor_forward.1} parent=19 // pred_check_branch
          %170 = sbr.rel (%p168) target = $region28
        $region27: #{diffusion_extractor_forward.1} parent=19 // pred_region
          %s171 = smul.u32 32, %s11
          %p172 = scmp.lt.s32.totalorder %s171, 63
          %s173 = scalar_select %p172, %s171, 63
          %s174 = smul.addr %s173, 8
          %s175 = scalar_lea.vmem %s2, %s174
          %s176 = smul.u32 32, %s11
        $region28: #{diffusion_extractor_forward.1} parent=19 // pred_fallthru
          _
      $region20: #{diffusion_extractor_forward.1} parent=5 // pred_fallthru
        _
      %p177 = scmp.le.s32.totalorder 1, %s11
      %p178 = scmp.lt.s32.totalorder %s11, 3
      %p179 = pnand %p177, %p178
      %p180 = pneg %p179
      // Predicated region
      $region29: #{diffusion_extractor_forward.1} parent=5 // pred_check
        _
      $region30: #{diffusion_extractor_forward.1} parent=5 // pred_check_branch
        %182 = sbr.rel (%p179) target = $region32
      $region31: #{diffusion_extractor_forward.1} parent=5 // pred_region
        %s183 = ssub.s32 %s11, 1
        %p184 = pneg %p32
        %p185 = pneg %p29
        %s186 = smul.u32 32, %s16
        %p187 = scmp.lt.s32.totalorder %s186, 63
        %s188 = scalar_select %p187, %s186, 63
        %s189 = smul.addr %s188, 2
        %s190 = smul.addr %s189, 4
        %s191 = scalar_lea.vmem %s1, %s190
        %p192 = pneg %p58
        %p193 = pneg %p55
        %s194 = smul.u32 32, %s16
        %p195 = scmp.lt.s32.totalorder %s194, 63
        %s196 = scalar_select %p195, %s194, 63
        %s197 = smul.addr %s196, 8
        %s198 = scalar_lea.vmem %s2, %s197
        %p199 = pneg %p84
        %p200 = pneg %p81
        %p201 = pneg %p110
        %p202 = pneg %p107
        %s203 = sand.u32 %s97, 1
        %s204 = sand.u32 %s97, 1
        %s205 = smul.addr %s204, 384
        %s206 = scalar_lea.vmem [#allocation2], %s205
        %p207 = pneg %p136
        %p208 = pneg %p133
        %s209 = smul.u32 32, %s16
        %p210 = scmp.lt.s32.totalorder %s209, 63
        %s211 = scalar_select %p210, %s209, 63
        %s212 = smul.addr %s211, 8
        %s213 = scalar_lea.vmem %s4, %s212
        %s214 = smul.u32 32, %s16
        %p215 = scmp.lt.s32.totalorder %s214, 63
        %s216 = scalar_select %p215, %s214, 63
        %s217 = smul.addr %s216, 2
        %s218 = smul.addr %s217, 4
        %s219 = scalar_lea.vmem %s1, %s218
        %s220 = smul.u32 32, %s16
        %s221 = smul.u32 32, %s16
        %p222 = scmp.lt.s32.totalorder %s221, 63
        %s223 = scalar_select %p222, %s221, 63
        %s224 = smul.addr %s223, 8
        %s225 = scalar_lea.vmem %s2, %s224
        %s226 = smul.u32 32, %s16
        %s227 = smul.u32 32, %s16
        %s228 = smul.u32 32, %s16
        %p229 = scmp.lt.s32.totalorder %s228, 63
        %s230 = scalar_select %p229, %s228, 63
        %s231 = smul.addr %s230, 8
        %s232 = scalar_lea.vmem %s4, %s231
        %s233 = smul.u32 32, %s16
        %v235 = vld [vmem:[%s0] sm:$0xff]
        %v236 = vld [vmem:[%s0 + $0x8] sm:$0xff]
        %v237 = vld [vmem:[%s0 + $0x10] sm:$0xff]
        %v238 = vld [vmem:[%s0 + $0x18] sm:$0xff]
        %v239 = vld [vmem:[%s0 + $0x20] sm:$0xff]
        %v240 = vld [vmem:[%s0 + $0x28] sm:$0xff]
        %v241 = vld [vmem:[%s0 + $0x30] sm:$0xff]
        %v242 = vld [vmem:[%s0 + $0x38] sm:$0xff]
        %v243 = vld [vmem:[%s0 + $0x40] sm:$0xff]
        %v244 = vld [vmem:[%s0 + $0x48] sm:$0xff]
        %v245 = vld [vmem:[%s0 + $0x50] sm:$0xff]
        %v246 = vld [vmem:[%s0 + $0x58] sm:$0xff]
        %v247 = vld [vmem:[%s0 + $0x60] sm:$0xff]
        %v248 = vld [vmem:[%s0 + $0x68] sm:$0xff]
        %v249 = vld [vmem:[%s0 + $0x70] sm:$0xff]
        %v250 = vld [vmem:[%s0 + $0x78] sm:$0xff]
        %v251 = vld [vmem:[%s0 + $0x80] sm:$0xff]
        %v252 = vld [vmem:[%s0 + $0x88] sm:$0xff]
        %v253 = vld [vmem:[%s0 + $0x90] sm:$0xff]
        %v254 = vld [vmem:[%s0 + $0x98] sm:$0xff]
        %v255 = vld [vmem:[%s0 + $0xa0] sm:$0xff]
        %v256 = vld [vmem:[%s0 + $0xa8] sm:$0xff]
        %v257 = vld [vmem:[%s0 + $0xb0] sm:$0xff]
        %v258 = vld [vmem:[%s0 + $0xb8] sm:$0xff]
        %v259 = vpack.c.bf16 %v236, %v235
        %v260 = vpack.c.bf16 %v238, %v237
        %v261 = vpack.c.bf16 %v240, %v239
        %v262 = vpack.c.bf16 %v242, %v241
        %v263 = vpack.c.bf16 %v244, %v243
        %v264 = vpack.c.bf16 %v246, %v245
        %v265 = vpack.c.bf16 %v248, %v247
        %v266 = vpack.c.bf16 %v250, %v249
        %v267 = vpack.c.bf16 %v252, %v251
        %v268 = vpack.c.bf16 %v254, %v253
        %v269 = vpack.c.bf16 %v256, %v255
        %v270 = vpack.c.bf16 %v258, %v257
        %v271 = vld [vmem:[%s0 + $0xc0] sm:$0x1]
        %v272 = vld [vmem:[%s0 + $0xc8] sm:$0xf]
        %v273 = vld [vmem:[%s0 + $0xd0] sm:$0xff]
        %v274 = vld [vmem:[%s0 + $0xd8] sm:$0xff]
        %v275 = vld [vmem:[%s0 + $0xe0] sm:$0xff]
        %v276 = vld [vmem:[%s0 + $0xe8] sm:$0xff]
        %v277 = vld [vmem:[%s0 + $0xf0] sm:$0xff]
        %v278 = vld [vmem:[%s0 + $0xf8] sm:$0xff]
        %v279 = vld [vmem:[%s0 + $0x100] sm:$0xff]
        %v280 = vld [vmem:[%s0 + $0x108] sm:$0xff]
        %v281 = vld [vmem:[%s219] sm:$0xff]
        %v282 = vld [vmem:[%s219 + $0x8] sm:$0xff]
        %v283 = vld [vmem:[%s219 + $0x10] sm:$0xff]
        %v284 = vld [vmem:[%s219 + $0x18] sm:$0xff]
        %v285 = vld [vmem:[%s219 + $0x20] sm:$0xff]
        %v286 = vld [vmem:[%s219 + $0x28] sm:$0xff]
        %v287 = vld [vmem:[%s219 + $0x30] sm:$0xff]
        %v288 = vld [vmem:[%s219 + $0x38] sm:$0xff]
        %v289 = vld [vmem:[%s219 + $0x40] sm:$0xff]
        %v290 = vld [vmem:[%s219 + $0x48] sm:$0xff]
        %v291 = vld [vmem:[%s219 + $0x50] sm:$0xff]
        %v292 = vld [vmem:[%s219 + $0x58] sm:$0xff]
        %v293 = vld [vmem:[%s219 + $0x60] sm:$0xff]
        %v294 = vld [vmem:[%s219 + $0x68] sm:$0xff]
        %v295 = vld [vmem:[%s219 + $0x70] sm:$0xff]
        %v296 = vld [vmem:[%s219 + $0x78] sm:$0xff]
        %v297 = vld [vmem:[%s219 + $0x80] sm:$0xff]
        %v298 = vld [vmem:[%s219 + $0x88] sm:$0xff]
        %v299 = vld [vmem:[%s219 + $0x90] sm:$0xff]
        %v300 = vld [vmem:[%s219 + $0x98] sm:$0xff]
        %v301 = vld [vmem:[%s219 + $0xa0] sm:$0xff]
        %v302 = vld [vmem:[%s219 + $0xa8] sm:$0xff]
        %v303 = vld [vmem:[%s219 + $0xb0] sm:$0xff]
        %v304 = vld [vmem:[%s219 + $0xb8] sm:$0xff]
        %v305 = vld [vmem:[%s219 + $0xc0] sm:$0xff]
        %v306 = vld [vmem:[%s219 + $0xc8] sm:$0xff]
        %v307 = vld [vmem:[%s219 + $0xd0] sm:$0xff]
        %v308 = vld [vmem:[%s219 + $0xd8] sm:$0xff]
        %v309 = vld [vmem:[%s219 + $0xe0] sm:$0xff]
        %v310 = vld [vmem:[%s219 + $0xe8] sm:$0xff]
        %v311 = vld [vmem:[%s219 + $0xf0] sm:$0xff]
        %v312 = vld [vmem:[%s219 + $0xf8] sm:$0xff]
        %v313 = vlaneseq
        %v314 = vshrl.u32 %v313, 7
        %v315 = vsub.s32 0, %v314
        %v316 = vrot.slane %v271, %v315
        %v349 = vunpack.c.l.b16 %v281
        %v350 = vunpack.c.h.b16 %v281
        %v351 = vunpack.c.l.b16 %v282
        %v352 = vunpack.c.h.b16 %v282
        %v353 = vunpack.c.l.b16 %v283
        %v354 = vunpack.c.h.b16 %v283
        %v355 = vunpack.c.l.b16 %v284
        %v356 = vunpack.c.h.b16 %v284
        %v357 = vunpack.c.l.b16 %v285
        %v358 = vunpack.c.h.b16 %v285
        %v359 = vunpack.c.l.b16 %v286
        %v360 = vunpack.c.h.b16 %v286
        %v361 = vunpack.c.l.b16 %v287
        %v362 = vunpack.c.h.b16 %v287
        %v363 = vunpack.c.l.b16 %v288
        %v364 = vunpack.c.h.b16 %v288
        %v365 = vunpack.c.l.b16 %v289
        %v366 = vunpack.c.h.b16 %v289
        %v367 = vunpack.c.l.b16 %v290
        %v368 = vunpack.c.h.b16 %v290
        %v369 = vunpack.c.l.b16 %v291
        %v370 = vunpack.c.h.b16 %v291
        %v371 = vunpack.c.l.b16 %v292
        %v372 = vunpack.c.h.b16 %v292
        %v373 = vunpack.c.l.b16 %v293
        %v374 = vunpack.c.h.b16 %v293
        %v375 = vunpack.c.l.b16 %v294
        %v376 = vunpack.c.h.b16 %v294
        %v377 = vunpack.c.l.b16 %v295
        %v378 = vunpack.c.h.b16 %v295
        %v379 = vunpack.c.l.b16 %v296
        %v380 = vunpack.c.h.b16 %v296
        %v381 = vunpack.c.l.b16 %v297
        %v382 = vunpack.c.h.b16 %v297
        %v383 = vunpack.c.l.b16 %v298
        %v384 = vunpack.c.h.b16 %v298
        %v385 = vunpack.c.l.b16 %v299
        %v386 = vunpack.c.h.b16 %v299
        %v387 = vunpack.c.l.b16 %v300
        %v388 = vunpack.c.h.b16 %v300
        %v389 = vunpack.c.l.b16 %v301
        %v390 = vunpack.c.h.b16 %v301
        %v391 = vunpack.c.l.b16 %v302
        %v392 = vunpack.c.h.b16 %v302
        %v393 = vunpack.c.l.b16 %v303
        %v394 = vunpack.c.h.b16 %v303
        %v395 = vunpack.c.l.b16 %v304
        %v396 = vunpack.c.h.b16 %v304
        %v397 = vunpack.c.l.b16 %v305
        %v398 = vunpack.c.h.b16 %v305
        %v399 = vunpack.c.l.b16 %v306
        %v400 = vunpack.c.h.b16 %v306
        %v401 = vunpack.c.l.b16 %v307
        %v402 = vunpack.c.h.b16 %v307
        %v403 = vunpack.c.l.b16 %v308
        %v404 = vunpack.c.h.b16 %v308
        %v405 = vunpack.c.l.b16 %v309
        %v406 = vunpack.c.h.b16 %v309
        %v407 = vunpack.c.l.b16 %v310
        %v408 = vunpack.c.h.b16 %v310
        %v409 = vunpack.c.l.b16 %v311
        %v410 = vunpack.c.h.b16 %v311
        %v411 = vunpack.c.l.b16 %v312
        %v412 = vunpack.c.h.b16 %v312
        %v413 = vpack.c.b16 %v351, %v349
        %v414 = vpack.c.b16 %v352, %v350
        %v415 = vpack.c.b16 %v355, %v353
        %v416 = vpack.c.b16 %v356, %v354
        %v417 = vpack.c.b16 %v359, %v357
        %v418 = vpack.c.b16 %v360, %v358
        %v419 = vpack.c.b16 %v363, %v361
        %v420 = vpack.c.b16 %v364, %v362
        %v421 = vpack.c.b16 %v367, %v365
        %v422 = vpack.c.b16 %v368, %v366
        %v423 = vpack.c.b16 %v371, %v369
        %v424 = vpack.c.b16 %v372, %v370
        %v425 = vpack.c.b16 %v375, %v373
        %v426 = vpack.c.b16 %v376, %v374
        %v427 = vpack.c.b16 %v379, %v377
        %v428 = vpack.c.b16 %v380, %v378
        %v429 = vpack.c.b16 %v383, %v381
        %v430 = vpack.c.b16 %v384, %v382
        %v431 = vpack.c.b16 %v387, %v385
        %v432 = vpack.c.b16 %v388, %v386
        %v433 = vpack.c.b16 %v391, %v389
        %v434 = vpack.c.b16 %v392, %v390
        %v435 = vpack.c.b16 %v395, %v393
        %v436 = vpack.c.b16 %v396, %v394
        %v437 = vpack.c.b16 %v399, %v397
        %v438 = vpack.c.b16 %v400, %v398
        %v439 = vpack.c.b16 %v403, %v401
        %v440 = vpack.c.b16 %v404, %v402
        %v441 = vpack.c.b16 %v407, %v405
        %v442 = vpack.c.b16 %v408, %v406
        %v443 = vpack.c.b16 %v411, %v409
        %v444 = vpack.c.b16 %v412, %v410
        %vm461 = vcmask 523264
        %v463 = vsel %vm461, %v414, 0
        %v466 = vsel %vm461, %v416, 0
        %v469 = vsel %vm461, %v418, 0
        %v472 = vsel %vm461, %v420, 0
        %v475 = vsel %vm461, %v422, 0
        %v478 = vsel %vm461, %v424, 0
        %v481 = vsel %vm461, %v426, 0
        %v484 = vsel %vm461, %v428, 0
        %v487 = vsel %vm461, %v430, 0
        %v490 = vsel %vm461, %v432, 0
        %v493 = vsel %vm461, %v434, 0
        %v496 = vsel %vm461, %v436, 0
        %v499 = vsel %vm461, %v438, 0
        %v502 = vsel %vm461, %v440, 0
        %v505 = vsel %vm461, %v442, 0
        %v508 = vsel %vm461, %v444, 0
        %510 = vmatprep.subr.bf16.mxu0 0
        %511 = vmatpush1.bf16.msra.mxu0 %v259
        %512 = vmatprep.subr.bf16.mxu0 0
        %513 = vmatpush1.bf16.msra.mxu0 %v260
        %514 = vmatprep.subr.bf16.mxu0 0
        %515 = vmatpush1.bf16.msra.mxu0 %v261
        %516 = vmatprep.subr.bf16.mxu0 0
        %517 = vmatpush1.bf16.msra.mxu0 %v262
        %518 = vmatprep.subr.bf16.mxu0 0
        %519 = vmatpush1.bf16.msra.mxu0 %v263
        %520 = vmatprep.subr.bf16.mxu0 0
        %521 = vmatpush1.bf16.msra.mxu0 %v264
        %522 = vmatprep.subr.bf16.mxu0 0
        %523 = vmatpush1.bf16.msra.mxu0 %v265
        %524 = vmatprep.subr.bf16.mxu0 0
        %525 = vmatpush1.bf16.msra.mxu0 %v266
        %526 = vmatprep.subr.bf16.mxu0 0
        %527 = vmatpush1.bf16.msra.mxu0 %v267
        %528 = vmatprep.subr.bf16.mxu0 0
        %529 = vmatpush1.bf16.msra.mxu0 %v268
        %530 = vmatprep.subr.bf16.mxu0 0
        %531 = vmatpush1.bf16.msra.mxu0 %v269
        %532 = vmatprep.subr.bf16.mxu0 0
        %533 = vmatpush1.bf16.msra.mxu0 %v270
        %534 = vmatprep.subr.bf16.mxu0 0
        %535 = vmatpush1.bf16.msra.mxu0 0
        %536 = vmatprep.subr.bf16.mxu0 0
        %537 = vmatpush1.bf16.msra.mxu0 0
        %538 = vmatprep.subr.bf16.mxu0 0
        %539 = vmatpush1.bf16.msra.mxu0 0
        %540 = vmatprep.subr.bf16.mxu0 0
        %541 = vmatpush1.bf16.msra.mxu0 0
        %542 = vmatprep.mubr.bf16.mxu0 %v463
        %543 = vmatmul.mubr.bf16.gmra.mrb[0].mxu0 %v413
        %v544 = vpop.f32.mrb[0].mxu0
        %v545 = vadd.f32 %v316, %v544
        %v546 = vpop.f32.mrb[0].mxu0
        %v547 = vpop.f32.mrb[0].mxu0
        %v548 = vadd.f32 %v316, %v547
        %v549 = vpop.f32.mrb[0].mxu0
        %550 = vmatprep.mubr.bf16.mxu0 %v466
        %551 = vmatmul.mubr.bf16.gmra.mrb[0].mxu0 %v415
        %v552 = vpop.f32.mrb[0].mxu0
        %v553 = vadd.f32 %v316, %v552
        %v554 = vpop.f32.mrb[0].mxu0
        %v555 = vpop.f32.mrb[0].mxu0
        %v556 = vadd.f32 %v316, %v555
        %v557 = vpop.f32.mrb[0].mxu0
        %558 = vmatprep.mubr.bf16.mxu0 %v469
        %559 = vmatmul.mubr.bf16.gmra.mrb[0].mxu0 %v417
        %v560 = vpop.f32.mrb[0].mxu0
        %v561 = vadd.f32 %v316, %v560
        %v562 = vpop.f32.mrb[0].mxu0
        %v563 = vpop.f32.mrb[0].mxu0
        %v564 = vadd.f32 %v316, %v563
        %v565 = vpop.f32.mrb[0].mxu0
        %566 = vmatprep.mubr.bf16.mxu0 %v472
        %567 = vmatmul.mubr.bf16.gmra.mrb[0].mxu0 %v419
        %v568 = vpop.f32.mrb[0].mxu0
        %v569 = vadd.f32 %v316, %v568
        %v570 = vpop.f32.mrb[0].mxu0
        %v571 = vpop.f32.mrb[0].mxu0
        %v572 = vadd.f32 %v316, %v571
        %v573 = vpop.f32.mrb[0].mxu0
        %574 = vmatprep.mubr.bf16.mxu0 %v475
        %575 = vmatmul.mubr.bf16.gmra.mrb[0].mxu0 %v421
        %v576 = vpop.f32.mrb[0].mxu0
        %v577 = vadd.f32 %v316, %v576
        %v578 = vpop.f32.mrb[0].mxu0
        %v579 = vpop.f32.mrb[0].mxu0
        %v580 = vadd.f32 %v316, %v579
        %v581 = vpop.f32.mrb[0].mxu0
        %582 = vmatprep.mubr.bf16.mxu0 %v478
        %583 = vmatmul.mubr.bf16.gmra.mrb[0].mxu0 %v423
        %v584 = vpop.f32.mrb[0].mxu0
        %v585 = vadd.f32 %v316, %v584
        %v586 = vpop.f32.mrb[0].mxu0
        %v587 = vpop.f32.mrb[0].mxu0
        %v588 = vadd.f32 %v316, %v587
        %v589 = vpop.f32.mrb[0].mxu0
        %590 = vmatprep.mubr.bf16.mxu0 %v481
        %591 = vmatmul.mubr.bf16.gmra.mrb[0].mxu0 %v425
        %v592 = vpop.f32.mrb[0].mxu0
        %v593 = vadd.f32 %v316, %v592
        %v594 = vpop.f32.mrb[0].mxu0
        %v595 = vpop.f32.mrb[0].mxu0
        %v596 = vadd.f32 %v316, %v595
        %v597 = vpop.f32.mrb[0].mxu0
        %598 = vmatprep.mubr.bf16.mxu0 %v484
        %599 = vmatmul.mubr.bf16.gmra.mrb[0].mxu0 %v427
        %v600 = vpop.f32.mrb[0].mxu0
        %v601 = vadd.f32 %v316, %v600
        %v602 = vpop.f32.mrb[0].mxu0
        %v603 = vpop.f32.mrb[0].mxu0
        %v604 = vadd.f32 %v316, %v603
        %v605 = vpop.f32.mrb[0].mxu0
        %606 = vmatprep.mubr.bf16.mxu0 %v487
        %607 = vmatmul.mubr.bf16.gmra.mrb[0].mxu0 %v429
        %v608 = vpop.f32.mrb[0].mxu0
        %v609 = vadd.f32 %v316, %v608
        %v610 = vpop.f32.mrb[0].mxu0
        %v611 = vpop.f32.mrb[0].mxu0
        %v612 = vadd.f32 %v316, %v611
        %v613 = vpop.f32.mrb[0].mxu0
        %614 = vmatprep.mubr.bf16.mxu0 %v490
        %615 = vmatmul.mubr.bf16.gmra.mrb[0].mxu0 %v431
        %v616 = vpop.f32.mrb[0].mxu0
        %v617 = vadd.f32 %v316, %v616
        %v618 = vpop.f32.mrb[0].mxu0
        %v619 = vpop.f32.mrb[0].mxu0
        %v620 = vadd.f32 %v316, %v619
        %v621 = vpop.f32.mrb[0].mxu0
        %622 = vmatprep.mubr.bf16.mxu0 %v493
        %623 = vmatmul.mubr.bf16.gmra.mrb[0].mxu0 %v433
        %v624 = vpop.f32.mrb[0].mxu0
        %v625 = vadd.f32 %v316, %v624
        %v626 = vpop.f32.mrb[0].mxu0
        %v627 = vpop.f32.mrb[0].mxu0
        %v628 = vadd.f32 %v316, %v627
        %v629 = vpop.f32.mrb[0].mxu0
        %630 = vmatprep.mubr.bf16.mxu0 %v496
        %631 = vmatmul.mubr.bf16.gmra.mrb[0].mxu0 %v435
        %v632 = vpop.f32.mrb[0].mxu0
        %v633 = vadd.f32 %v316, %v632
        %v634 = vpop.f32.mrb[0].mxu0
        %v635 = vpop.f32.mrb[0].mxu0
        %v636 = vadd.f32 %v316, %v635
        %v637 = vpop.f32.mrb[0].mxu0
        %638 = vmatprep.mubr.bf16.mxu0 %v499
        %639 = vmatmul.mubr.bf16.gmra.mrb[0].mxu0 %v437
        %v640 = vpop.f32.mrb[0].mxu0
        %v641 = vadd.f32 %v316, %v640
        %v642 = vpop.f32.mrb[0].mxu0
        %v643 = vpop.f32.mrb[0].mxu0
        %v644 = vadd.f32 %v316, %v643
        %v645 = vpop.f32.mrb[0].mxu0
        %646 = vmatprep.mubr.bf16.mxu0 %v502
        %647 = vmatmul.mubr.bf16.gmra.mrb[0].mxu0 %v439
        %v648 = vpop.f32.mrb[0].mxu0
        %v649 = vadd.f32 %v316, %v648
        %v650 = vpop.f32.mrb[0].mxu0
        %v651 = vpop.f32.mrb[0].mxu0
        %v652 = vadd.f32 %v316, %v651
        %v653 = vpop.f32.mrb[0].mxu0
        %654 = vmatprep.mubr.bf16.mxu0 %v505
        %655 = vmatmul.mubr.bf16.gmra.mrb[0].mxu0 %v441
        %v656 = vpop.f32.mrb[0].mxu0
        %v657 = vadd.f32 %v316, %v656
        %v658 = vpop.f32.mrb[0].mxu0
        %v659 = vpop.f32.mrb[0].mxu0
        %v660 = vadd.f32 %v316, %v659
        %v661 = vpop.f32.mrb[0].mxu0
        %662 = vmatprep.mubr.bf16.mxu0 %v508
        %663 = vmatmul.mubr.bf16.gmra.mrb[0].mxu0 %v443
        %v664 = vpop.f32.mrb[0].mxu0
        %v665 = vadd.f32 %v316, %v664
        %v666 = vpop.f32.mrb[0].mxu0
        %v667 = vpop.f32.mrb[0].mxu0
        %v668 = vadd.f32 %v316, %v667
        %v669 = vpop.f32.mrb[0].mxu0
        %670 = vdwg.mxu0
        %v671 = vmax.f32 %v545, -30.0
        %v672 = vmax.f32 %v548, -30.0
        %v673 = vmax.f32 %v553, -30.0
        %v674 = vmax.f32 %v556, -30.0
        %v675 = vmax.f32 %v561, -30.0
        %v676 = vmax.f32 %v564, -30.0
        %v677 = vmax.f32 %v569, -30.0
        %v678 = vmax.f32 %v572, -30.0
        %v679 = vmax.f32 %v577, -30.0
        %v680 = vmax.f32 %v580, -30.0
        %v681 = vmax.f32 %v585, -30.0
        %v682 = vmax.f32 %v588, -30.0
        %v683 = vmax.f32 %v593, -30.0
        %v684 = vmax.f32 %v596, -30.0
        %v685 = vmax.f32 %v601, -30.0
        %v686 = vmax.f32 %v604, -30.0
        %v687 = vmax.f32 %v609, -30.0
        %v688 = vmax.f32 %v612, -30.0
        %v689 = vmax.f32 %v617, -30.0
        %v690 = vmax.f32 %v620, -30.0
        %v691 = vmax.f32 %v625, -30.0
        %v692 = vmax.f32 %v628, -30.0
        %v693 = vmax.f32 %v633, -30.0
        %v694 = vmax.f32 %v636, -30.0
        %v695 = vmax.f32 %v641, -30.0
        %v696 = vmax.f32 %v644, -30.0
        %v697 = vmax.f32 %v649, -30.0
        %v698 = vmax.f32 %v652, -30.0
        %v699 = vmax.f32 %v657, -30.0
        %v700 = vmax.f32 %v660, -30.0
        %v701 = vmax.f32 %v665, -30.0
        %v702 = vmax.f32 %v668, -30.0
        %v703 = vmin.f32 %v671, 20.0
        %v704 = vmin.f32 %v672, 20.0
        %v705 = vmin.f32 %v673, 20.0
        %v706 = vmin.f32 %v674, 20.0
        %v707 = vmin.f32 %v675, 20.0
        %v708 = vmin.f32 %v676, 20.0
        %v709 = vmin.f32 %v677, 20.0
        %v710 = vmin.f32 %v678, 20.0
        %v711 = vmin.f32 %v679, 20.0
        %v712 = vmin.f32 %v680, 20.0
        %v713 = vmin.f32 %v681, 20.0
        %v714 = vmin.f32 %v682, 20.0
        %v715 = vmin.f32 %v683, 20.0
        %v716 = vmin.f32 %v684, 20.0
        %v717 = vmin.f32 %v685, 20.0
        %v718 = vmin.f32 %v686, 20.0
        %v719 = vmin.f32 %v687, 20.0
        %v720 = vmin.f32 %v688, 20.0
        %v721 = vmin.f32 %v689, 20.0
        %v722 = vmin.f32 %v690, 20.0
        %v723 = vmin.f32 %v691, 20.0
        %v724 = vmin.f32 %v692, 20.0
        %v725 = vmin.f32 %v693, 20.0
        %v726 = vmin.f32 %v694, 20.0
        %v727 = vmin.f32 %v695, 20.0
        %v728 = vmin.f32 %v696, 20.0
        %v729 = vmin.f32 %v697, 20.0
        %v730 = vmin.f32 %v698, 20.0
        %v731 = vmin.f32 %v699, 20.0
        %v732 = vmin.f32 %v700, 20.0
        %v733 = vmin.f32 %v701, 20.0
        %v734 = vmin.f32 %v702, 20.0
        %v735 = vmul.f32 %v703, 0.5
        %v736 = vmul.f32 %v704, 0.5
        %v737 = vmul.f32 %v705, 0.5
        %v738 = vmul.f32 %v706, 0.5
        %v739 = vmul.f32 %v707, 0.5
        %v740 = vmul.f32 %v708, 0.5
        %v741 = vmul.f32 %v709, 0.5
        %v742 = vmul.f32 %v710, 0.5
        %v743 = vmul.f32 %v711, 0.5
        %v744 = vmul.f32 %v712, 0.5
        %v745 = vmul.f32 %v713, 0.5
        %v746 = vmul.f32 %v714, 0.5
        %v747 = vmul.f32 %v715, 0.5
        %v748 = vmul.f32 %v716, 0.5
        %v749 = vmul.f32 %v717, 0.5
        %v750 = vmul.f32 %v718, 0.5
        %v751 = vmul.f32 %v719, 0.5
        %v752 = vmul.f32 %v720, 0.5
        %v753 = vmul.f32 %v721, 0.5
        %v754 = vmul.f32 %v722, 0.5
        %v755 = vmul.f32 %v723, 0.5
        %v756 = vmul.f32 %v724, 0.5
        %v757 = vmul.f32 %v725, 0.5
        %v758 = vmul.f32 %v726, 0.5
        %v759 = vmul.f32 %v727, 0.5
        %v760 = vmul.f32 %v728, 0.5
        %v761 = vmul.f32 %v729, 0.5
        %v762 = vmul.f32 %v730, 0.5
        %v763 = vmul.f32 %v731, 0.5
        %v764 = vmul.f32 %v732, 0.5
        %v765 = vmul.f32 %v733, 0.5
        %v766 = vmul.f32 %v734, 0.5
        %v767 = vmul.f32 %v735, 1.442695
        %v768 = vpow.pop %v767
        %v769 = vmul.f32 %v736, 1.442695
        %v770 = vpow.pop %v769
        %v771 = vmul.f32 %v737, 1.442695
        %v772 = vpow.pop %v771
        %v773 = vmul.f32 %v738, 1.442695
        %v774 = vpow.pop %v773
        %v775 = vmul.f32 %v739, 1.442695
        %v776 = vpow.pop %v775
        %v777 = vmul.f32 %v740, 1.442695
        %v778 = vpow.pop %v777
        %v779 = vmul.f32 %v741, 1.442695
        %v780 = vpow.pop %v779
        %v781 = vmul.f32 %v742, 1.442695
        %v782 = vpow.pop %v781
        %v783 = vmul.f32 %v743, 1.442695
        %v784 = vpow.pop %v783
        %v785 = vmul.f32 %v744, 1.442695
        %v786 = vpow.pop %v785
        %v787 = vmul.f32 %v745, 1.442695
        %v788 = vpow.pop %v787
        %v789 = vmul.f32 %v746, 1.442695
        %v790 = vpow.pop %v789
        %v791 = vmul.f32 %v747, 1.442695
        %v792 = vpow.pop %v791
        %v793 = vmul.f32 %v748, 1.442695
        %v794 = vpow.pop %v793
        %v795 = vmul.f32 %v749, 1.442695
        %v796 = vpow.pop %v795
        %v797 = vmul.f32 %v750, 1.442695
        %v798 = vpow.pop %v797
        %v799 = vmul.f32 %v751, 1.442695
        %v800 = vpow.pop %v799
        %v801 = vmul.f32 %v752, 1.442695
        %v802 = vpow.pop %v801
        %v803 = vmul.f32 %v753, 1.442695
        %v804 = vpow.pop %v803
        %v805 = vmul.f32 %v754, 1.442695
        %v806 = vpow.pop %v805
        %v807 = vmul.f32 %v755, 1.442695
        %v808 = vpow.pop %v807
        %v809 = vmul.f32 %v756, 1.442695
        %v810 = vpow.pop %v809
        %v811 = vmul.f32 %v757, 1.442695
        %v812 = vpow.pop %v811
        %v813 = vmul.f32 %v758, 1.442695
        %v814 = vpow.pop %v813
        %v815 = vmul.f32 %v759, 1.442695
        %v816 = vpow.pop %v815
        %v817 = vmul.f32 %v760, 1.442695
        %v818 = vpow.pop %v817
        %v819 = vmul.f32 %v761, 1.442695
        %v820 = vpow.pop %v819
        %v821 = vmul.f32 %v762, 1.442695
        %v822 = vpow.pop %v821
        %v823 = vmul.f32 %v763, 1.442695
        %v824 = vpow.pop %v823
        %v825 = vmul.f32 %v764, 1.442695
        %v826 = vpow.pop %v825
        %v827 = vmul.f32 %v765, 1.442695
        %v828 = vpow.pop %v827
        %v829 = vmul.f32 %v766, 1.442695
        %v830 = vpow.pop %v829
        %v831 = vld [vmem:[%s225] sm:$0xff]
        %v832 = vld [vmem:[%s225 + $0x8] sm:$0xff]
        %v833 = vld [vmem:[%s225 + $0x10] sm:$0xff]
        %v834 = vld [vmem:[%s225 + $0x18] sm:$0xff]
        %v835 = vld [vmem:[%s225 + $0x20] sm:$0xff]
        %v836 = vld [vmem:[%s225 + $0x28] sm:$0xff]
        %v837 = vld [vmem:[%s225 + $0x30] sm:$0xff]
        %v838 = vld [vmem:[%s225 + $0x38] sm:$0xff]
        %v839 = vld [vmem:[%s225 + $0x40] sm:$0xff]
        %v840 = vld [vmem:[%s225 + $0x48] sm:$0xff]
        %v841 = vld [vmem:[%s225 + $0x50] sm:$0xff]
        %v842 = vld [vmem:[%s225 + $0x58] sm:$0xff]
        %v843 = vld [vmem:[%s225 + $0x60] sm:$0xff]
        %v844 = vld [vmem:[%s225 + $0x68] sm:$0xff]
        %v845 = vld [vmem:[%s225 + $0x70] sm:$0xff]
        %v846 = vld [vmem:[%s225 + $0x78] sm:$0xff]
        %v847 = vld [vmem:[%s225 + $0x80] sm:$0xff]
        %v848 = vld [vmem:[%s225 + $0x88] sm:$0xff]
        %v849 = vld [vmem:[%s225 + $0x90] sm:$0xff]
        %v850 = vld [vmem:[%s225 + $0x98] sm:$0xff]
        %v851 = vld [vmem:[%s225 + $0xa0] sm:$0xff]
        %v852 = vld [vmem:[%s225 + $0xa8] sm:$0xff]
        %v853 = vld [vmem:[%s225 + $0xb0] sm:$0xff]
        %v854 = vld [vmem:[%s225 + $0xb8] sm:$0xff]
        %v855 = vld [vmem:[%s225 + $0xc0] sm:$0xff]
        %v856 = vld [vmem:[%s225 + $0xc8] sm:$0xff]
        %v857 = vld [vmem:[%s225 + $0xd0] sm:$0xff]
        %v858 = vld [vmem:[%s225 + $0xd8] sm:$0xff]
        %v859 = vld [vmem:[%s225 + $0xe0] sm:$0xff]
        %v860 = vld [vmem:[%s225 + $0xe8] sm:$0xff]
        %v861 = vld [vmem:[%s225 + $0xf0] sm:$0xff]
        %v862 = vld [vmem:[%s225 + $0xf8] sm:$0xff]
        %895 = vrot.lane.b32.xlu0 %v831, 4
        %v896 = vpop.permute.xlu0 %895
        %897 = vrot.lane.b32.xlu0 %v832, 4
        %v898 = vpop.permute.xlu0 %897
        %899 = vrot.lane.b32.xlu0 %v833, 4
        %v900 = vpop.permute.xlu0 %899
        %901 = vrot.lane.b32.xlu0 %v834, 4
        %v902 = vpop.permute.xlu0 %901
        %903 = vrot.lane.b32.xlu0 %v835, 4
        %v904 = vpop.permute.xlu0 %903
        %905 = vrot.lane.b32.xlu0 %v836, 4
        %v906 = vpop.permute.xlu0 %905
        %907 = vrot.lane.b32.xlu0 %v837, 4
        %v908 = vpop.permute.xlu0 %907
        %909 = vrot.lane.b32.xlu0 %v838, 4
        %v910 = vpop.permute.xlu0 %909
        %911 = vrot.lane.b32.xlu0 %v839, 4
        %v912 = vpop.permute.xlu0 %911
        %913 = vrot.lane.b32.xlu0 %v840, 4
        %v914 = vpop.permute.xlu0 %913
        %915 = vrot.lane.b32.xlu0 %v841, 4
        %v916 = vpop.permute.xlu0 %915
        %917 = vrot.lane.b32.xlu0 %v842, 4
        %v918 = vpop.permute.xlu0 %917
        %919 = vrot.lane.b32.xlu0 %v843, 4
        %v920 = vpop.permute.xlu0 %919
        %921 = vrot.lane.b32.xlu0 %v844, 4
        %v922 = vpop.permute.xlu0 %921
        %923 = vrot.lane.b32.xlu0 %v845, 4
        %v924 = vpop.permute.xlu0 %923
        %925 = vrot.lane.b32.xlu0 %v846, 4
        %v926 = vpop.permute.xlu0 %925
        %927 = vrot.lane.b32.xlu0 %v847, 4
        %v928 = vpop.permute.xlu0 %927
        %929 = vrot.lane.b32.xlu0 %v848, 4
        %v930 = vpop.permute.xlu0 %929
        %931 = vrot.lane.b32.xlu0 %v849, 4
        %v932 = vpop.permute.xlu0 %931
        %933 = vrot.lane.b32.xlu0 %v850, 4
        %v934 = vpop.permute.xlu0 %933
        %935 = vrot.lane.b32.xlu0 %v851, 4
        %v936 = vpop.permute.xlu0 %935
        %937 = vrot.lane.b32.xlu0 %v852, 4
        %v938 = vpop.permute.xlu0 %937
        %939 = vrot.lane.b32.xlu0 %v853, 4
        %v940 = vpop.permute.xlu0 %939
        %941 = vrot.lane.b32.xlu0 %v854, 4
        %v942 = vpop.permute.xlu0 %941
        %943 = vrot.lane.b32.xlu0 %v855, 4
        %v944 = vpop.permute.xlu0 %943
        %945 = vrot.lane.b32.xlu0 %v856, 4
        %v946 = vpop.permute.xlu0 %945
        %947 = vrot.lane.b32.xlu0 %v857, 4
        %v948 = vpop.permute.xlu0 %947
        %949 = vrot.lane.b32.xlu0 %v858, 4
        %v950 = vpop.permute.xlu0 %949
        %951 = vrot.lane.b32.xlu0 %v859, 4
        %v952 = vpop.permute.xlu0 %951
        %953 = vrot.lane.b32.xlu0 %v860, 4
        %v954 = vpop.permute.xlu0 %953
        %955 = vrot.lane.b32.xlu0 %v861, 4
        %v956 = vpop.permute.xlu0 %955
        %957 = vrot.lane.b32.xlu0 %v862, 4
        %v958 = vpop.permute.xlu0 %957
        %v991 = vmul.f32 %v768, %v896
        %v992 = vmul.f32 %v770, %v898
        %v993 = vmul.f32 %v772, %v900
        %v994 = vmul.f32 %v774, %v902
        %v995 = vmul.f32 %v776, %v904
        %v996 = vmul.f32 %v778, %v906
        %v997 = vmul.f32 %v780, %v908
        %v998 = vmul.f32 %v782, %v910
        %v999 = vmul.f32 %v784, %v912
        %v1000 = vmul.f32 %v786, %v914
        %v1001 = vmul.f32 %v788, %v916
        %v1002 = vmul.f32 %v790, %v918
        %v1003 = vmul.f32 %v792, %v920
        %v1004 = vmul.f32 %v794, %v922
        %v1005 = vmul.f32 %v796, %v924
        %v1006 = vmul.f32 %v798, %v926
        %v1007 = vmul.f32 %v800, %v928
        %v1008 = vmul.f32 %v802, %v930
        %v1009 = vmul.f32 %v804, %v932
        %v1010 = vmul.f32 %v806, %v934
        %v1011 = vmul.f32 %v808, %v936
        %v1012 = vmul.f32 %v810, %v938
        %v1013 = vmul.f32 %v812, %v940
        %v1014 = vmul.f32 %v814, %v942
        %v1015 = vmul.f32 %v816, %v944
        %v1016 = vmul.f32 %v818, %v946
        %v1017 = vmul.f32 %v820, %v948
        %v1018 = vmul.f32 %v822, %v950
        %v1019 = vmul.f32 %v824, %v952
        %v1020 = vmul.f32 %v826, %v954
        %v1021 = vmul.f32 %v828, %v956
        %v1022 = vmul.f32 %v830, %v958
        %1055 = vrot.lane.b32.xlu0 %v991, 124
        %v1056 = vpop.permute.xlu0 %1055
        %1057 = vrot.lane.b32.xlu0 %v992, 124
        %v1058 = vpop.permute.xlu0 %1057
        %1059 = vrot.lane.b32.xlu0 %v993, 124
        %v1060 = vpop.permute.xlu0 %1059
        %1061 = vrot.lane.b32.xlu0 %v994, 124
        %v1062 = vpop.permute.xlu0 %1061
        %1063 = vrot.lane.b32.xlu0 %v995, 124
        %v1064 = vpop.permute.xlu0 %1063
        %1065 = vrot.lane.b32.xlu0 %v996, 124
        %v1066 = vpop.permute.xlu0 %1065
        %1067 = vrot.lane.b32.xlu0 %v997, 124
        %v1068 = vpop.permute.xlu0 %1067
        %1069 = vrot.lane.b32.xlu0 %v998, 124
        %v1070 = vpop.permute.xlu0 %1069
        %1071 = vrot.lane.b32.xlu0 %v999, 124
        %v1072 = vpop.permute.xlu0 %1071
        %1073 = vrot.lane.b32.xlu0 %v1000, 124
        %v1074 = vpop.permute.xlu0 %1073
        %1075 = vrot.lane.b32.xlu0 %v1001, 124
        %v1076 = vpop.permute.xlu0 %1075
        %1077 = vrot.lane.b32.xlu0 %v1002, 124
        %v1078 = vpop.permute.xlu0 %1077
        %1079 = vrot.lane.b32.xlu0 %v1003, 124
        %v1080 = vpop.permute.xlu0 %1079
        %1081 = vrot.lane.b32.xlu0 %v1004, 124
        %v1082 = vpop.permute.xlu0 %1081
        %1083 = vrot.lane.b32.xlu0 %v1005, 124
        %v1084 = vpop.permute.xlu0 %1083
        %1085 = vrot.lane.b32.xlu0 %v1006, 124
        %v1086 = vpop.permute.xlu0 %1085
        %1087 = vrot.lane.b32.xlu0 %v1007, 124
        %v1088 = vpop.permute.xlu0 %1087
        %1089 = vrot.lane.b32.xlu0 %v1008, 124
        %v1090 = vpop.permute.xlu0 %1089
        %1091 = vrot.lane.b32.xlu0 %v1009, 124
        %v1092 = vpop.permute.xlu0 %1091
        %1093 = vrot.lane.b32.xlu0 %v1010, 124
        %v1094 = vpop.permute.xlu0 %1093
        %1095 = vrot.lane.b32.xlu0 %v1011, 124
        %v1096 = vpop.permute.xlu0 %1095
        %1097 = vrot.lane.b32.xlu0 %v1012, 124
        %v1098 = vpop.permute.xlu0 %1097
        %1099 = vrot.lane.b32.xlu0 %v1013, 124
        %v1100 = vpop.permute.xlu0 %1099
        %1101 = vrot.lane.b32.xlu0 %v1014, 124
        %v1102 = vpop.permute.xlu0 %1101
        %1103 = vrot.lane.b32.xlu0 %v1015, 124
        %v1104 = vpop.permute.xlu0 %1103
        %1105 = vrot.lane.b32.xlu0 %v1016, 124
        %v1106 = vpop.permute.xlu0 %1105
        %1107 = vrot.lane.b32.xlu0 %v1017, 124
        %v1108 = vpop.permute.xlu0 %1107
        %1109 = vrot.lane.b32.xlu0 %v1018, 124
        %v1110 = vpop.permute.xlu0 %1109
        %1111 = vrot.lane.b32.xlu0 %v1019, 124
        %v1112 = vpop.permute.xlu0 %1111
        %1113 = vrot.lane.b32.xlu0 %v1020, 124
        %v1114 = vpop.permute.xlu0 %1113
        %1115 = vrot.lane.b32.xlu0 %v1021, 124
        %v1116 = vpop.permute.xlu0 %1115
        %1117 = vrot.lane.b32.xlu0 %v1022, 124
        %v1118 = vpop.permute.xlu0 %1117
        %v1151 = vadd.f32 %v545, %v1056
        %v1152 = vadd.f32 %v548, %v1058
        %v1153 = vadd.f32 %v553, %v1060
        %v1154 = vadd.f32 %v556, %v1062
        %v1155 = vadd.f32 %v561, %v1064
        %v1156 = vadd.f32 %v564, %v1066
        %v1157 = vadd.f32 %v569, %v1068
        %v1158 = vadd.f32 %v572, %v1070
        %v1159 = vadd.f32 %v577, %v1072
        %v1160 = vadd.f32 %v580, %v1074
        %v1161 = vadd.f32 %v585, %v1076
        %v1162 = vadd.f32 %v588, %v1078
        %v1163 = vadd.f32 %v593, %v1080
        %v1164 = vadd.f32 %v596, %v1082
        %v1165 = vadd.f32 %v601, %v1084
        %v1166 = vadd.f32 %v604, %v1086
        %v1167 = vadd.f32 %v609, %v1088
        %v1168 = vadd.f32 %v612, %v1090
        %v1169 = vadd.f32 %v617, %v1092
        %v1170 = vadd.f32 %v620, %v1094
        %v1171 = vadd.f32 %v625, %v1096
        %v1172 = vadd.f32 %v628, %v1098
        %v1173 = vadd.f32 %v633, %v1100
        %v1174 = vadd.f32 %v636, %v1102
        %v1175 = vadd.f32 %v641, %v1104
        %v1176 = vadd.f32 %v644, %v1106
        %v1177 = vadd.f32 %v649, %v1108
        %v1178 = vadd.f32 %v652, %v1110
        %v1179 = vadd.f32 %v657, %v1112
        %v1180 = vadd.f32 %v660, %v1114
        %v1181 = vadd.f32 %v665, %v1116
        %v1182 = vadd.f32 %v668, %v1118
        %v1183 = vmul.f32 %v1151, 0.18215
        %v1184 = vmul.f32 %v1152, 0.18215
        %v1185 = vmul.f32 %v1153, 0.18215
        %v1186 = vmul.f32 %v1154, 0.18215
        %v1187 = vmul.f32 %v1155, 0.18215
        %v1188 = vmul.f32 %v1156, 0.18215
        %v1189 = vmul.f32 %v1157, 0.18215
        %v1190 = vmul.f32 %v1158, 0.18215
        %v1191 = vmul.f32 %v1159, 0.18215
        %v1192 = vmul.f32 %v1160, 0.18215
        %v1193 = vmul.f32 %v1161, 0.18215
        %v1194 = vmul.f32 %v1162, 0.18215
        %v1195 = vmul.f32 %v1163, 0.18215
        %v1196 = vmul.f32 %v1164, 0.18215
        %v1197 = vmul.f32 %v1165, 0.18215
        %v1198 = vmul.f32 %v1166, 0.18215
        %v1199 = vmul.f32 %v1167, 0.18215
        %v1200 = vmul.f32 %v1168, 0.18215
        %v1201 = vmul.f32 %v1169, 0.18215
        %v1202 = vmul.f32 %v1170, 0.18215
        %v1203 = vmul.f32 %v1171, 0.18215
        %v1204 = vmul.f32 %v1172, 0.18215
        %v1205 = vmul.f32 %v1173, 0.18215
        %v1206 = vmul.f32 %v1174, 0.18215
        %v1207 = vmul.f32 %v1175, 0.18215
        %v1208 = vmul.f32 %v1176, 0.18215
        %v1209 = vmul.f32 %v1177, 0.18215
        %v1210 = vmul.f32 %v1178, 0.18215
        %v1211 = vmul.f32 %v1179, 0.18215
        %v1212 = vmul.f32 %v1180, 0.18215
        %v1213 = vmul.f32 %v1181, 0.18215
        %v1214 = vmul.f32 %v1182, 0.18215
        %v1215 = vld [vmem:[%s0 + $0x1d0] sm:$0x1]
        %v1216 = vld [vmem:[%s0 + $0x1d8] sm:$0x1]
        %v1217 = vld [vmem:[%s0 + $0x110] sm:$0xff]
        %v1218 = vld [vmem:[%s0 + $0x118] sm:$0xff]
        %v1219 = vld [vmem:[%s0 + $0x120] sm:$0xff]
        %v1220 = vld [vmem:[%s0 + $0x128] sm:$0xff]
        %v1221 = vld [vmem:[%s0 + $0x130] sm:$0xff]
        %v1222 = vld [vmem:[%s0 + $0x138] sm:$0xff]
        %v1223 = vld [vmem:[%s0 + $0x140] sm:$0xff]
        %v1224 = vld [vmem:[%s0 + $0x148] sm:$0xff]
        %v1225 = vld [vmem:[%s0 + $0x1e0] sm:$0x1]
        %v1226 = vlaneseq
        %v1227 = vshrl.u32 %v1226, 7
        %v1228 = vsub.s32 0, %v1227
        %v1229 = vrot.slane %v1215, %v1228
        %vm1230 = vcmask 31744
        %v1232 = vsel %vm1230, %v1183, 0
        %v1235 = vsel %vm1230, %v1184, 0
        %v1238 = vsel %vm1230, %v1185, 0
        %v1241 = vsel %vm1230, %v1186, 0
        %v1244 = vsel %vm1230, %v1187, 0
        %v1247 = vsel %vm1230, %v1188, 0
        %v1250 = vsel %vm1230, %v1189, 0
        %v1253 = vsel %vm1230, %v1190, 0
        %v1256 = vsel %vm1230, %v1191, 0
        %v1259 = vsel %vm1230, %v1192, 0
        %v1262 = vsel %vm1230, %v1193, 0
        %v1265 = vsel %vm1230, %v1194, 0
        %v1268 = vsel %vm1230, %v1195, 0
        %v1271 = vsel %vm1230, %v1196, 0
        %v1274 = vsel %vm1230, %v1197, 0
        %v1277 = vsel %vm1230, %v1198, 0
        %v1280 = vsel %vm1230, %v1199, 0
        %v1283 = vsel %vm1230, %v1200, 0
        %v1286 = vsel %vm1230, %v1201, 0
        %v1289 = vsel %vm1230, %v1202, 0
        %v1292 = vsel %vm1230, %v1203, 0
        %v1295 = vsel %vm1230, %v1204, 0
        %v1298 = vsel %vm1230, %v1205, 0
        %v1301 = vsel %vm1230, %v1206, 0
        %v1304 = vsel %vm1230, %v1207, 0
        %v1307 = vsel %vm1230, %v1208, 0
        %v1310 = vsel %vm1230, %v1209, 0
        %v1313 = vsel %vm1230, %v1210, 0
        %v1316 = vsel %vm1230, %v1211, 0
        %v1319 = vsel %vm1230, %v1212, 0
        %v1322 = vsel %vm1230, %v1213, 0
        %v1325 = vsel %vm1230, %v1214, 0
        %vm1327 = vcmask 1043456
        %v1329 = vsel %vm1327, %v272, 0
        %1331 = vmatprep.subr.mxu0 0.0
        %1332 = vmatpush1.msra.mxu0 %v1329
        %1333 = vmatprep.subr.mxu0 0.0
        %1334 = vmatpush1.msra.mxu0 0.0
        %1335 = vmatprep.subr.mxu0 0.0
        %1336 = vmatpush1.msra.mxu0 0.0
        %1337 = vmatprep.subr.mxu0 0.0
        %1338 = vmatpush1.msra.mxu0 0.0
        %1339 = vmatprep.subr.mxu0 0.0
        %1340 = vmatpush1.msra.mxu0 0.0
        %1341 = vmatprep.subr.mxu0 0.0
        %1342 = vmatpush1.msra.mxu0 0.0
        %1343 = vmatprep.subr.mxu0 0.0
        %1344 = vmatpush1.msra.mxu0 0.0
        %1345 = vmatprep.subr.mxu0 0.0
        %1346 = vmatpush1.msra.mxu0 0.0
        %1347 = vmatprep.subr.mxu0 0.0
        %1348 = vmatpush1.msra.mxu0 0.0
        %1349 = vmatprep.subr.mxu0 0.0
        %1350 = vmatpush1.msra.mxu0 0.0
        %1351 = vmatprep.subr.mxu0 0.0
        %1352 = vmatpush1.msra.mxu0 0.0
        %1353 = vmatprep.subr.mxu0 0.0
        %1354 = vmatpush1.msra.mxu0 0.0
        %1355 = vmatprep.subr.mxu0 0.0
        %1356 = vmatpush1.msra.mxu0 0.0
        %1357 = vmatprep.subr.mxu0 0.0
        %1358 = vmatpush1.msra.mxu0 0.0
        %1359 = vmatprep.subr.mxu0 0.0
        %1360 = vmatpush1.msra.mxu0 0.0
        %1361 = vmatprep.subr.mxu0 0.0
        %1362 = vmatpush1.msra.mxu0 0.0
        %1363 = vmatprep.subr.mxu0 0.0
        %1364 = vmatpush1.msra.mxu0 0.0
        %1365 = vmatprep.subr.mxu0 0.0
        %1366 = vmatpush1.msra.mxu0 0.0
        %1367 = vmatprep.subr.mxu0 0.0
        %1368 = vmatpush1.msra.mxu0 0.0
        %1369 = vmatprep.subr.mxu0 0.0
        %1370 = vmatpush1.msra.mxu0 0.0
        %1371 = vmatprep.subr.mxu0 0.0
        %1372 = vmatpush1.msra.mxu0 0.0
        %1373 = vmatprep.subr.mxu0 0.0
        %1374 = vmatpush1.msra.mxu0 0.0
        %1375 = vmatprep.subr.mxu0 0.0
        %1376 = vmatpush1.msra.mxu0 0.0
        %1377 = vmatprep.subr.mxu0 0.0
        %1378 = vmatpush1.msra.mxu0 0.0
        %1379 = vmatprep.subr.mxu0 0.0
        %1380 = vmatpush1.msra.mxu0 0.0
        %1381 = vmatprep.subr.mxu0 0.0
        %1382 = vmatpush1.msra.mxu0 0.0
        %1383 = vmatprep.subr.mxu0 0.0
        %1384 = vmatpush1.msra.mxu0 0.0
        %1385 = vmatprep.subr.mxu0 0.0
        %1386 = vmatpush1.msra.mxu0 0.0
        %1387 = vmatprep.subr.mxu0 0.0
        %1388 = vmatpush1.msra.mxu0 0.0
        %1389 = vmatprep.subr.mxu0 0.0
        %1390 = vmatpush1.msra.mxu0 0.0
        %1391 = vmatprep.subr.mxu0 0.0
        %1392 = vmatpush1.msra.mxu0 0.0
        %1393 = vmatprep.subr.mxu0 0.0
        %1394 = vmatpush1.msra.mxu0 0.0
        %1395 = vmatprep.mubr.f32.mxu0 0.0
        %1396 = vmatmul.mubr.f32.gmra.mrb[0].mxu0 %v1232
        %v1397 = vpop.f32.mrb[0].mxu0
        %v1398 = vadd.f32 %v1229, %v1397
        %v1399 = vpop.f32.mrb[0].mxu0
        %1400 = vmatprep.mubr.f32.mxu0 0.0
        %1401 = vmatmul.mubr.f32.gmra.mrb[0].mxu0 %v1235
        %v1402 = vpop.f32.mrb[0].mxu0
        %v1403 = vadd.f32 %v1229, %v1402
        %v1404 = vpop.f32.mrb[0].mxu0
        %1405 = vmatprep.mubr.f32.mxu0 0.0
        %1406 = vmatmul.mubr.f32.gmra.mrb[0].mxu0 %v1238
        %v1407 = vpop.f32.mrb[0].mxu0
        %v1408 = vadd.f32 %v1229, %v1407
        %v1409 = vpop.f32.mrb[0].mxu0
        %1410 = vmatprep.mubr.f32.mxu0 0.0
        %1411 = vmatmul.mubr.f32.gmra.mrb[0].mxu0 %v1241
        %v1412 = vpop.f32.mrb[0].mxu0
        %v1413 = vadd.f32 %v1229, %v1412
        %v1414 = vpop.f32.mrb[0].mxu0
        %1415 = vmatprep.mubr.f32.mxu0 0.0
        %1416 = vmatmul.mubr.f32.gmra.mrb[0].mxu0 %v1244
        %v1417 = vpop.f32.mrb[0].mxu0
        %v1418 = vadd.f32 %v1229, %v1417
        %v1419 = vpop.f32.mrb[0].mxu0
        %1420 = vmatprep.mubr.f32.mxu0 0.0
        %1421 = vmatmul.mubr.f32.gmra.mrb[0].mxu0 %v1247
        %v1422 = vpop.f32.mrb[0].mxu0
        %v1423 = vadd.f32 %v1229, %v1422
        %v1424 = vpop.f32.mrb[0].mxu0
        %1425 = vmatprep.mubr.f32.mxu0 0.0
        %1426 = vmatmul.mubr.f32.gmra.mrb[0].mxu0 %v1250
        %v1427 = vpop.f32.mrb[0].mxu0
        %v1428 = vadd.f32 %v1229, %v1427
        %v1429 = vpop.f32.mrb[0].mxu0
        %1430 = vmatprep.mubr.f32.mxu0 0.0
        %1431 = vmatmul.mubr.f32.gmra.mrb[0].mxu0 %v1253
        %v1432 = vpop.f32.mrb[0].mxu0
        %v1433 = vadd.f32 %v1229, %v1432
        %v1434 = vpop.f32.mrb[0].mxu0
        %1435 = vmatprep.mubr.f32.mxu0 0.0
        %1436 = vmatmul.mubr.f32.gmra.mrb[0].mxu0 %v1256
        %v1437 = vpop.f32.mrb[0].mxu0
        %v1438 = vadd.f32 %v1229, %v1437
        %v1439 = vpop.f32.mrb[0].mxu0
        %1440 = vmatprep.mubr.f32.mxu0 0.0
        %1441 = vmatmul.mubr.f32.gmra.mrb[0].mxu0 %v1259
        %v1442 = vpop.f32.mrb[0].mxu0
        %v1443 = vadd.f32 %v1229, %v1442
        %v1444 = vpop.f32.mrb[0].mxu0
        %1445 = vmatprep.mubr.f32.mxu0 0.0
        %1446 = vmatmul.mubr.f32.gmra.mrb[0].mxu0 %v1262
        %v1447 = vpop.f32.mrb[0].mxu0
        %v1448 = vadd.f32 %v1229, %v1447
        %v1449 = vpop.f32.mrb[0].mxu0
        %1450 = vmatprep.mubr.f32.mxu0 0.0
        %1451 = vmatmul.mubr.f32.gmra.mrb[0].mxu0 %v1265
        %v1452 = vpop.f32.mrb[0].mxu0
        %v1453 = vadd.f32 %v1229, %v1452
        %v1454 = vpop.f32.mrb[0].mxu0
        %1455 = vmatprep.mubr.f32.mxu0 0.0
        %1456 = vmatmul.mubr.f32.gmra.mrb[0].mxu0 %v1268
        %v1457 = vpop.f32.mrb[0].mxu0
        %v1458 = vadd.f32 %v1229, %v1457
        %v1459 = vpop.f32.mrb[0].mxu0
        %1460 = vmatprep.mubr.f32.mxu0 0.0
        %1461 = vmatmul.mubr.f32.gmra.mrb[0].mxu0 %v1271
        %v1462 = vpop.f32.mrb[0].mxu0
        %v1463 = vadd.f32 %v1229, %v1462
        %v1464 = vpop.f32.mrb[0].mxu0
        %1465 = vmatprep.mubr.f32.mxu0 0.0
        %1466 = vmatmul.mubr.f32.gmra.mrb[0].mxu0 %v1274
        %v1467 = vpop.f32.mrb[0].mxu0
        %v1468 = vadd.f32 %v1229, %v1467
        %v1469 = vpop.f32.mrb[0].mxu0
        %1470 = vmatprep.mubr.f32.mxu0 0.0
        %1471 = vmatmul.mubr.f32.gmra.mrb[0].mxu0 %v1277
        %v1472 = vpop.f32.mrb[0].mxu0
        %v1473 = vadd.f32 %v1229, %v1472
        %v1474 = vpop.f32.mrb[0].mxu0
        %1475 = vmatprep.mubr.f32.mxu0 0.0
        %1476 = vmatmul.mubr.f32.gmra.mrb[0].mxu0 %v1280
        %v1477 = vpop.f32.mrb[0].mxu0
        %v1478 = vadd.f32 %v1229, %v1477
        %v1479 = vpop.f32.mrb[0].mxu0
        %1480 = vmatprep.mubr.f32.mxu0 0.0
        %1481 = vmatmul.mubr.f32.gmra.mrb[0].mxu0 %v1283
        %v1482 = vpop.f32.mrb[0].mxu0
        %v1483 = vadd.f32 %v1229, %v1482
        %v1484 = vpop.f32.mrb[0].mxu0
        %1485 = vmatprep.mubr.f32.mxu0 0.0
        %1486 = vmatmul.mubr.f32.gmra.mrb[0].mxu0 %v1286
        %v1487 = vpop.f32.mrb[0].mxu0
        %v1488 = vadd.f32 %v1229, %v1487
        %v1489 = vpop.f32.mrb[0].mxu0
        %1490 = vmatprep.mubr.f32.mxu0 0.0
        %1491 = vmatmul.mubr.f32.gmra.mrb[0].mxu0 %v1289
        %v1492 = vpop.f32.mrb[0].mxu0
        %v1493 = vadd.f32 %v1229, %v1492
        %v1494 = vpop.f32.mrb[0].mxu0
        %1495 = vmatprep.mubr.f32.mxu0 0.0
        %1496 = vmatmul.mubr.f32.gmra.mrb[0].mxu0 %v1292
        %v1497 = vpop.f32.mrb[0].mxu0
        %v1498 = vadd.f32 %v1229, %v1497
        %v1499 = vpop.f32.mrb[0].mxu0
        %1500 = vmatprep.mubr.f32.mxu0 0.0
        %1501 = vmatmul.mubr.f32.gmra.mrb[0].mxu0 %v1295
        %v1502 = vpop.f32.mrb[0].mxu0
        %v1503 = vadd.f32 %v1229, %v1502
        %v1504 = vpop.f32.mrb[0].mxu0
        %1505 = vmatprep.mubr.f32.mxu0 0.0
        %1506 = vmatmul.mubr.f32.gmra.mrb[0].mxu0 %v1298
        %v1507 = vpop.f32.mrb[0].mxu0
        %v1508 = vadd.f32 %v1229, %v1507
        %v1509 = vpop.f32.mrb[0].mxu0
        %1510 = vmatprep.mubr.f32.mxu0 0.0
        %1511 = vmatmul.mubr.f32.gmra.mrb[0].mxu0 %v1301
        %v1512 = vpop.f32.mrb[0].mxu0
        %v1513 = vadd.f32 %v1229, %v1512
        %v1514 = vpop.f32.mrb[0].mxu0
        %1515 = vmatprep.mubr.f32.mxu0 0.0
        %1516 = vmatmul.mubr.f32.gmra.mrb[0].mxu0 %v1304
        %v1517 = vpop.f32.mrb[0].mxu0
        %v1518 = vadd.f32 %v1229, %v1517
        %v1519 = vpop.f32.mrb[0].mxu0
        %1520 = vmatprep.mubr.f32.mxu0 0.0
        %1521 = vmatmul.mubr.f32.gmra.mrb[0].mxu0 %v1307
        %v1522 = vpop.f32.mrb[0].mxu0
        %v1523 = vadd.f32 %v1229, %v1522
        %v1524 = vpop.f32.mrb[0].mxu0
        %1525 = vmatprep.mubr.f32.mxu0 0.0
        %1526 = vmatmul.mubr.f32.gmra.mrb[0].mxu0 %v1310
        %v1527 = vpop.f32.mrb[0].mxu0
        %v1528 = vadd.f32 %v1229, %v1527
        %v1529 = vpop.f32.mrb[0].mxu0
        %1530 = vmatprep.mubr.f32.mxu0 0.0
        %1531 = vmatmul.mubr.f32.gmra.mrb[0].mxu0 %v1313
        %v1532 = vpop.f32.mrb[0].mxu0
        %v1533 = vadd.f32 %v1229, %v1532
        %v1534 = vpop.f32.mrb[0].mxu0
        %1535 = vmatprep.mubr.f32.mxu0 0.0
        %1536 = vmatmul.mubr.f32.gmra.mrb[0].mxu0 %v1316
        %v1537 = vpop.f32.mrb[0].mxu0
        %v1538 = vadd.f32 %v1229, %v1537
        %v1539 = vpop.f32.mrb[0].mxu0
        %1540 = vmatprep.mubr.f32.mxu0 0.0
        %1541 = vmatmul.mubr.f32.gmra.mrb[0].mxu0 %v1319
        %v1542 = vpop.f32.mrb[0].mxu0
        %v1543 = vadd.f32 %v1229, %v1542
        %v1544 = vpop.f32.mrb[0].mxu0
        %1545 = vmatprep.mubr.f32.mxu0 0.0
        %1546 = vmatmul.mubr.f32.gmra.mrb[0].mxu0 %v1322
        %v1547 = vpop.f32.mrb[0].mxu0
        %v1548 = vadd.f32 %v1229, %v1547
        %v1549 = vpop.f32.mrb[0].mxu0
        %1550 = vmatprep.mubr.f32.mxu0 0.0
        %1551 = vmatmul.mubr.f32.gmra.mrb[0].mxu0 %v1325
        %v1552 = vpop.f32.mrb[0].mxu0
        %v1553 = vadd.f32 %v1229, %v1552
        %v1554 = vpop.f32.mrb[0].mxu0
        %1555 = vdwg.mxu0
        %v1556 = vxor.u32 %v1398, 2147483648
        %v1557 = vxor.u32 %v1403, 2147483648
        %v1558 = vxor.u32 %v1408, 2147483648
        %v1559 = vxor.u32 %v1413, 2147483648
        %v1560 = vxor.u32 %v1418, 2147483648
        %v1561 = vxor.u32 %v1423, 2147483648
        %v1562 = vxor.u32 %v1428, 2147483648
        %v1563 = vxor.u32 %v1433, 2147483648
        %v1564 = vxor.u32 %v1438, 2147483648
        %v1565 = vxor.u32 %v1443, 2147483648
        %v1566 = vxor.u32 %v1448, 2147483648
        %v1567 = vxor.u32 %v1453, 2147483648
        %v1568 = vxor.u32 %v1458, 2147483648
        %v1569 = vxor.u32 %v1463, 2147483648
        %v1570 = vxor.u32 %v1468, 2147483648
        %v1571 = vxor.u32 %v1473, 2147483648
        %v1572 = vxor.u32 %v1478, 2147483648
        %v1573 = vxor.u32 %v1483, 2147483648
        %v1574 = vxor.u32 %v1488, 2147483648
        %v1575 = vxor.u32 %v1493, 2147483648
        %v1576 = vxor.u32 %v1498, 2147483648
        %v1577 = vxor.u32 %v1503, 2147483648
        %v1578 = vxor.u32 %v1508, 2147483648
        %v1579 = vxor.u32 %v1513, 2147483648
        %v1580 = vxor.u32 %v1518, 2147483648
        %v1581 = vxor.u32 %v1523, 2147483648
        %v1582 = vxor.u32 %v1528, 2147483648
        %v1583 = vxor.u32 %v1533, 2147483648
        %v1584 = vxor.u32 %v1538, 2147483648
        %v1585 = vxor.u32 %v1543, 2147483648
        %v1586 = vxor.u32 %v1548, 2147483648
        %v1587 = vxor.u32 %v1553, 2147483648
        %v1588 = vmul.f32 %v1556, 1.442695
        %v1589 = vpow.pop %v1588
        %v1590 = vmul.f32 %v1557, 1.442695
        %v1591 = vpow.pop %v1590
        %v1592 = vmul.f32 %v1558, 1.442695
        %v1593 = vpow.pop %v1592
        %v1594 = vmul.f32 %v1559, 1.442695
        %v1595 = vpow.pop %v1594
        %v1596 = vmul.f32 %v1560, 1.442695
        %v1597 = vpow.pop %v1596
        %v1598 = vmul.f32 %v1561, 1.442695
        %v1599 = vpow.pop %v1598
        %v1600 = vmul.f32 %v1562, 1.442695
        %v1601 = vpow.pop %v1600
        %v1602 = vmul.f32 %v1563, 1.442695
        %v1603 = vpow.pop %v1602
        %v1604 = vmul.f32 %v1564, 1.442695
        %v1605 = vpow.pop %v1604
        %v1606 = vmul.f32 %v1565, 1.442695
        %v1607 = vpow.pop %v1606
        %v1608 = vmul.f32 %v1566, 1.442695
        %v1609 = vpow.pop %v1608
        %v1610 = vmul.f32 %v1567, 1.442695
        %v1611 = vpow.pop %v1610
        %v1612 = vmul.f32 %v1568, 1.442695
        %v1613 = vpow.pop %v1612
        %v1614 = vmul.f32 %v1569, 1.442695
        %v1615 = vpow.pop %v1614
        %v1616 = vmul.f32 %v1570, 1.442695
        %v1617 = vpow.pop %v1616
        %v1618 = vmul.f32 %v1571, 1.442695
        %v1619 = vpow.pop %v1618
        %v1620 = vmul.f32 %v1572, 1.442695
        %v1621 = vpow.pop %v1620
        %v1622 = vmul.f32 %v1573, 1.442695
        %v1623 = vpow.pop %v1622
        %v1624 = vmul.f32 %v1574, 1.442695
        %v1625 = vpow.pop %v1624
        %v1626 = vmul.f32 %v1575, 1.442695
        %v1627 = vpow.pop %v1626
        %v1628 = vmul.f32 %v1576, 1.442695
        %v1629 = vpow.pop %v1628
        %v1630 = vmul.f32 %v1577, 1.442695
        %v1631 = vpow.pop %v1630
        %v1632 = vmul.f32 %v1578, 1.442695
        %v1633 = vpow.pop %v1632
        %v1634 = vmul.f32 %v1579, 1.442695
        %v1635 = vpow.pop %v1634
        %v1636 = vmul.f32 %v1580, 1.442695
        %v1637 = vpow.pop %v1636
        %v1638 = vmul.f32 %v1581, 1.442695
        %v1639 = vpow.pop %v1638
        %v1640 = vmul.f32 %v1582, 1.442695
        %v1641 = vpow.pop %v1640
        %v1642 = vmul.f32 %v1583, 1.442695
        %v1643 = vpow.pop %v1642
        %v1644 = vmul.f32 %v1584, 1.442695
        %v1645 = vpow.pop %v1644
        %v1646 = vmul.f32 %v1585, 1.442695
        %v1647 = vpow.pop %v1646
        %v1648 = vmul.f32 %v1586, 1.442695
        %v1649 = vpow.pop %v1648
        %v1650 = vmul.f32 %v1587, 1.442695
        %v1651 = vpow.pop %v1650
        %v1652 = vadd.f32 %v1589, 1.0
        %v1653 = vadd.f32 %v1591, 1.0
        %v1654 = vadd.f32 %v1593, 1.0
        %v1655 = vadd.f32 %v1595, 1.0
        %v1656 = vadd.f32 %v1597, 1.0
        %v1657 = vadd.f32 %v1599, 1.0
        %v1658 = vadd.f32 %v1601, 1.0
        %v1659 = vadd.f32 %v1603, 1.0
        %v1660 = vadd.f32 %v1605, 1.0
        %v1661 = vadd.f32 %v1607, 1.0
        %v1662 = vadd.f32 %v1609, 1.0
        %v1663 = vadd.f32 %v1611, 1.0
        %v1664 = vadd.f32 %v1613, 1.0
        %v1665 = vadd.f32 %v1615, 1.0
        %v1666 = vadd.f32 %v1617, 1.0
        %v1667 = vadd.f32 %v1619, 1.0
        %v1668 = vadd.f32 %v1621, 1.0
        %v1669 = vadd.f32 %v1623, 1.0
        %v1670 = vadd.f32 %v1625, 1.0
        %v1671 = vadd.f32 %v1627, 1.0
        %v1672 = vadd.f32 %v1629, 1.0
        %v1673 = vadd.f32 %v1631, 1.0
        %v1674 = vadd.f32 %v1633, 1.0
        %v1675 = vadd.f32 %v1635, 1.0
        %v1676 = vadd.f32 %v1637, 1.0
        %v1677 = vadd.f32 %v1639, 1.0
        %v1678 = vadd.f32 %v1641, 1.0
        %v1679 = vadd.f32 %v1643, 1.0
        %v1680 = vadd.f32 %v1645, 1.0
        %v1681 = vadd.f32 %v1647, 1.0
        %v1682 = vadd.f32 %v1649, 1.0
        %v1683 = vadd.f32 %v1651, 1.0
        %v1684 = vrcp.pop %v1652
        %v1685 = vmul.f32 1.0, %v1684
        %v1686 = vrcp.pop %v1653
        %v1687 = vmul.f32 1.0, %v1686
        %v1688 = vrcp.pop %v1654
        %v1689 = vmul.f32 1.0, %v1688
        %v1690 = vrcp.pop %v1655
        %v1691 = vmul.f32 1.0, %v1690
        %v1692 = vrcp.pop %v1656
        %v1693 = vmul.f32 1.0, %v1692
        %v1694 = vrcp.pop %v1657
        %v1695 = vmul.f32 1.0, %v1694
        %v1696 = vrcp.pop %v1658
        %v1697 = vmul.f32 1.0, %v1696
        %v1698 = vrcp.pop %v1659
        %v1699 = vmul.f32 1.0, %v1698
        %v1700 = vrcp.pop %v1660
        %v1701 = vmul.f32 1.0, %v1700
        %v1702 = vrcp.pop %v1661
        %v1703 = vmul.f32 1.0, %v1702
        %v1704 = vrcp.pop %v1662
        %v1705 = vmul.f32 1.0, %v1704
        %v1706 = vrcp.pop %v1663
        %v1707 = vmul.f32 1.0, %v1706
        %v1708 = vrcp.pop %v1664
        %v1709 = vmul.f32 1.0, %v1708
        %v1710 = vrcp.pop %v1665
        %v1711 = vmul.f32 1.0, %v1710
        %v1712 = vrcp.pop %v1666
        %v1713 = vmul.f32 1.0, %v1712
        %v1714 = vrcp.pop %v1667
        %v1715 = vmul.f32 1.0, %v1714
        %v1716 = vrcp.pop %v1668
        %v1717 = vmul.f32 1.0, %v1716
        %v1718 = vrcp.pop %v1669
        %v1719 = vmul.f32 1.0, %v1718
        %v1720 = vrcp.pop %v1670
        %v1721 = vmul.f32 1.0, %v1720
        %v1722 = vrcp.pop %v1671
        %v1723 = vmul.f32 1.0, %v1722
        %v1724 = vrcp.pop %v1672
        %v1725 = vmul.f32 1.0, %v1724
        %v1726 = vrcp.pop %v1673
        %v1727 = vmul.f32 1.0, %v1726
        %v1728 = vrcp.pop %v1674
        %v1729 = vmul.f32 1.0, %v1728
        %v1730 = vrcp.pop %v1675
        %v1731 = vmul.f32 1.0, %v1730
        %v1732 = vrcp.pop %v1676
        %v1733 = vmul.f32 1.0, %v1732
        %v1734 = vrcp.pop %v1677
        %v1735 = vmul.f32 1.0, %v1734
        %v1736 = vrcp.pop %v1678
        %v1737 = vmul.f32 1.0, %v1736
        %v1738 = vrcp.pop %v1679
        %v1739 = vmul.f32 1.0, %v1738
        %v1740 = vrcp.pop %v1680
        %v1741 = vmul.f32 1.0, %v1740
        %v1742 = vrcp.pop %v1681
        %v1743 = vmul.f32 1.0, %v1742
        %v1744 = vrcp.pop %v1682
        %v1745 = vmul.f32 1.0, %v1744
        %v1746 = vrcp.pop %v1683
        %v1747 = vmul.f32 1.0, %v1746
        %v1748 = vmul.f32 %v1398, %v1685
        %v1749 = vmul.f32 %v1403, %v1687
        %v1750 = vmul.f32 %v1408, %v1689
        %v1751 = vmul.f32 %v1413, %v1691
        %v1752 = vmul.f32 %v1418, %v1693
        %v1753 = vmul.f32 %v1423, %v1695
        %v1754 = vmul.f32 %v1428, %v1697
        %v1755 = vmul.f32 %v1433, %v1699
        %v1756 = vmul.f32 %v1438, %v1701
        %v1757 = vmul.f32 %v1443, %v1703
        %v1758 = vmul.f32 %v1448, %v1705
        %v1759 = vmul.f32 %v1453, %v1707
        %v1760 = vmul.f32 %v1458, %v1709
        %v1761 = vmul.f32 %v1463, %v1711
        %v1762 = vmul.f32 %v1468, %v1713
        %v1763 = vmul.f32 %v1473, %v1715
        %v1764 = vmul.f32 %v1478, %v1717
        %v1765 = vmul.f32 %v1483, %v1719
        %v1766 = vmul.f32 %v1488, %v1721
        %v1767 = vmul.f32 %v1493, %v1723
        %v1768 = vmul.f32 %v1498, %v1725
        %v1769 = vmul.f32 %v1503, %v1727
        %v1770 = vmul.f32 %v1508, %v1729
        %v1771 = vmul.f32 %v1513, %v1731
        %v1772 = vmul.f32 %v1518, %v1733
        %v1773 = vmul.f32 %v1523, %v1735
        %v1774 = vmul.f32 %v1528, %v1737
        %v1775 = vmul.f32 %v1533, %v1739
        %v1776 = vmul.f32 %v1538, %v1741
        %v1777 = vmul.f32 %v1543, %v1743
        %v1778 = vmul.f32 %v1548, %v1745
        %v1779 = vmul.f32 %v1553, %v1747
        %v1780 = vlaneseq
        %v1781 = vshrl.u32 %v1780, 7
        %v1782 = vsub.s32 0, %v1781
        %v1783 = vrot.slane %v1216, %v1782
        %v1785 = vsel %vm461, %v1748, 0
        %v1788 = vsel %vm461, %v1749, 0
        %v1791 = vsel %vm461, %v1750, 0
        %v1794 = vsel %vm461, %v1751, 0
        %v1797 = vsel %vm461, %v1752, 0
        %v1800 = vsel %vm461, %v1753, 0
        %v1803 = vsel %vm461, %v1754, 0
        %v1806 = vsel %vm461, %v1755, 0
        %v1809 = vsel %vm461, %v1756, 0
        %v1812 = vsel %vm461, %v1757, 0
        %v1815 = vsel %vm461, %v1758, 0
        %v1818 = vsel %vm461, %v1759, 0
        %v1821 = vsel %vm461, %v1760, 0
        %v1824 = vsel %vm461, %v1761, 0
        %v1827 = vsel %vm461, %v1762, 0
        %v1830 = vsel %vm461, %v1763, 0
        %v1833 = vsel %vm461, %v1764, 0
        %v1836 = vsel %vm461, %v1765, 0
        %v1839 = vsel %vm461, %v1766, 0
        %v1842 = vsel %vm461, %v1767, 0
        %v1845 = vsel %vm461, %v1768, 0
        %v1848 = vsel %vm461, %v1769, 0
        %v1851 = vsel %vm461, %v1770, 0
        %v1854 = vsel %vm461, %v1771, 0
        %v1857 = vsel %vm461, %v1772, 0
        %v1860 = vsel %vm461, %v1773, 0
        %v1863 = vsel %vm461, %v1774, 0
        %v1866 = vsel %vm461, %v1775, 0
        %v1869 = vsel %vm461, %v1776, 0
        %v1872 = vsel %vm461, %v1777, 0
        %v1875 = vsel %vm461, %v1778, 0
        %v1878 = vsel %vm461, %v1779, 0
        %1880 = vmatprep.subr.mxu0 0.0
        %1881 = vmatpush1.msra.mxu0 %v273
        %1882 = vmatprep.subr.mxu0 0.0
        %1883 = vmatpush1.msra.mxu0 %v274
        %1884 = vmatprep.subr.mxu0 0.0
        %1885 = vmatpush1.msra.mxu0 %v275
        %1886 = vmatprep.subr.mxu0 0.0
        %1887 = vmatpush1.msra.mxu0 %v276
        %1888 = vmatprep.subr.mxu0 0.0
        %1889 = vmatpush1.msra.mxu0 %v277
        %1890 = vmatprep.subr.mxu0 0.0
        %1891 = vmatpush1.msra.mxu0 %v278
        %1892 = vmatprep.subr.mxu0 0.0
        %1893 = vmatpush1.msra.mxu0 %v279
        %1894 = vmatprep.subr.mxu0 0.0
        %1895 = vmatpush1.msra.mxu0 %v280
        %1896 = vmatprep.subr.mxu0 0.0
        %1897 = vmatpush1.msra.mxu0 0.0
        %1898 = vmatprep.subr.mxu0 0.0
        %1899 = vmatpush1.msra.mxu0 0.0
        %1900 = vmatprep.subr.mxu0 0.0
        %1901 = vmatpush1.msra.mxu0 0.0
        %1902 = vmatprep.subr.mxu0 0.0
        %1903 = vmatpush1.msra.mxu0 0.0
        %1904 = vmatprep.subr.mxu0 0.0
        %1905 = vmatpush1.msra.mxu0 0.0
        %1906 = vmatprep.subr.mxu0 0.0
        %1907 = vmatpush1.msra.mxu0 0.0
        %1908 = vmatprep.subr.mxu0 0.0
        %1909 = vmatpush1.msra.mxu0 0.0
        %1910 = vmatprep.subr.mxu0 0.0
        %1911 = vmatpush1.msra.mxu0 0.0
        %1912 = vmatprep.subr.mxu0 0.0
        %1913 = vmatpush1.msra.mxu0 0.0
        %1914 = vmatprep.subr.mxu0 0.0
        %1915 = vmatpush1.msra.mxu0 0.0
        %1916 = vmatprep.subr.mxu0 0.0
        %1917 = vmatpush1.msra.mxu0 0.0
        %1918 = vmatprep.subr.mxu0 0.0
        %1919 = vmatpush1.msra.mxu0 0.0
        %1920 = vmatprep.subr.mxu0 0.0
        %1921 = vmatpush1.msra.mxu0 0.0
        %1922 = vmatprep.subr.mxu0 0.0
        %1923 = vmatpush1.msra.mxu0 0.0
        %1924 = vmatprep.subr.mxu0 0.0
        %1925 = vmatpush1.msra.mxu0 0.0
        %1926 = vmatprep.subr.mxu0 0.0
        %1927 = vmatpush1.msra.mxu0 0.0
        %1928 = vmatprep.subr.mxu0 0.0
        %1929 = vmatpush1.msra.mxu0 0.0
        %1930 = vmatprep.subr.mxu0 0.0
        %1931 = vmatpush1.msra.mxu0 0.0
        %1932 = vmatprep.subr.mxu0 0.0
        %1933 = vmatpush1.msra.mxu0 0.0
        %1934 = vmatprep.subr.mxu0 0.0
        %1935 = vmatpush1.msra.mxu0 0.0
        %1936 = vmatprep.subr.mxu0 0.0
        %1937 = vmatpush1.msra.mxu0 0.0
        %1938 = vmatprep.subr.mxu0 0.0
        %1939 = vmatpush1.msra.mxu0 0.0
        %1940 = vmatprep.subr.mxu0 0.0
        %1941 = vmatpush1.msra.mxu0 0.0
        %1942 = vmatprep.subr.mxu0 0.0
        %1943 = vmatpush1.msra.mxu0 0.0
        %1944 = vmatprep.mubr.f32.mxu0 0.0
        %1945 = vmatmul.mubr.f32.gmra.mrb[0].mxu0 %v1785
        %v1946 = vpop.f32.mrb[0].mxu0
        %v1947 = vadd.f32 %v1783, %v1946
        %v1948 = vpop.f32.mrb[0].mxu0
        %1949 = vmatprep.mubr.f32.mxu0 0.0
        %1950 = vmatmul.mubr.f32.gmra.mrb[0].mxu0 %v1788
        %v1951 = vpop.f32.mrb[0].mxu0
        %v1952 = vadd.f32 %v1783, %v1951
        %v1953 = vpop.f32.mrb[0].mxu0
        %1954 = vmatprep.mubr.f32.mxu0 0.0
        %1955 = vmatmul.mubr.f32.gmra.mrb[0].mxu0 %v1791
        %v1956 = vpop.f32.mrb[0].mxu0
        %v1957 = vadd.f32 %v1783, %v1956
        %v1958 = vpop.f32.mrb[0].mxu0
        %1959 = vmatprep.mubr.f32.mxu0 0.0
        %1960 = vmatmul.mubr.f32.gmra.mrb[0].mxu0 %v1794
        %v1961 = vpop.f32.mrb[0].mxu0
        %v1962 = vadd.f32 %v1783, %v1961
        %v1963 = vpop.f32.mrb[0].mxu0
        %1964 = vmatprep.mubr.f32.mxu0 0.0
        %1965 = vmatmul.mubr.f32.gmra.mrb[0].mxu0 %v1797
        %v1966 = vpop.f32.mrb[0].mxu0
        %v1967 = vadd.f32 %v1783, %v1966
        %v1968 = vpop.f32.mrb[0].mxu0
        %1969 = vmatprep.mubr.f32.mxu0 0.0
        %1970 = vmatmul.mubr.f32.gmra.mrb[0].mxu0 %v1800
        %v1971 = vpop.f32.mrb[0].mxu0
        %v1972 = vadd.f32 %v1783, %v1971
        %v1973 = vpop.f32.mrb[0].mxu0
        %1974 = vmatprep.mubr.f32.mxu0 0.0
        %1975 = vmatmul.mubr.f32.gmra.mrb[0].mxu0 %v1803
        %v1976 = vpop.f32.mrb[0].mxu0
        %v1977 = vadd.f32 %v1783, %v1976
        %v1978 = vpop.f32.mrb[0].mxu0
        %1979 = vmatprep.mubr.f32.mxu0 0.0
        %1980 = vmatmul.mubr.f32.gmra.mrb[0].mxu0 %v1806
        %v1981 = vpop.f32.mrb[0].mxu0
        %v1982 = vadd.f32 %v1783, %v1981
        %v1983 = vpop.f32.mrb[0].mxu0
        %1984 = vmatprep.mubr.f32.mxu0 0.0
        %1985 = vmatmul.mubr.f32.gmra.mrb[0].mxu0 %v1809
        %v1986 = vpop.f32.mrb[0].mxu0
        %v1987 = vadd.f32 %v1783, %v1986
        %v1988 = vpop.f32.mrb[0].mxu0
        %1989 = vmatprep.mubr.f32.mxu0 0.0
        %1990 = vmatmul.mubr.f32.gmra.mrb[0].mxu0 %v1812
        %v1991 = vpop.f32.mrb[0].mxu0
        %v1992 = vadd.f32 %v1783, %v1991
        %v1993 = vpop.f32.mrb[0].mxu0
        %1994 = vmatprep.mubr.f32.mxu0 0.0
        %1995 = vmatmul.mubr.f32.gmra.mrb[0].mxu0 %v1815
        %v1996 = vpop.f32.mrb[0].mxu0
        %v1997 = vadd.f32 %v1783, %v1996
        %v1998 = vpop.f32.mrb[0].mxu0
        %1999 = vmatprep.mubr.f32.mxu0 0.0
        %2000 = vmatmul.mubr.f32.gmra.mrb[0].mxu0 %v1818
        %v2001 = vpop.f32.mrb[0].mxu0
        %v2002 = vadd.f32 %v1783, %v2001
        %v2003 = vpop.f32.mrb[0].mxu0
        %2004 = vmatprep.mubr.f32.mxu0 0.0
        %2005 = vmatmul.mubr.f32.gmra.mrb[0].mxu0 %v1821
        %v2006 = vpop.f32.mrb[0].mxu0
        %v2007 = vadd.f32 %v1783, %v2006
        %v2008 = vpop.f32.mrb[0].mxu0
        %2009 = vmatprep.mubr.f32.mxu0 0.0
        %2010 = vmatmul.mubr.f32.gmra.mrb[0].mxu0 %v1824
        %v2011 = vpop.f32.mrb[0].mxu0
        %v2012 = vadd.f32 %v1783, %v2011
        %v2013 = vpop.f32.mrb[0].mxu0
        %2014 = vmatprep.mubr.f32.mxu0 0.0
        %2015 = vmatmul.mubr.f32.gmra.mrb[0].mxu0 %v1827
        %v2016 = vpop.f32.mrb[0].mxu0
        %v2017 = vadd.f32 %v1783, %v2016
        %v2018 = vpop.f32.mrb[0].mxu0
        %2019 = vmatprep.mubr.f32.mxu0 0.0
        %2020 = vmatmul.mubr.f32.gmra.mrb[0].mxu0 %v1830
        %v2021 = vpop.f32.mrb[0].mxu0
        %v2022 = vadd.f32 %v1783, %v2021
        %v2023 = vpop.f32.mrb[0].mxu0
        %2024 = vmatprep.mubr.f32.mxu0 0.0
        %2025 = vmatmul.mubr.f32.gmra.mrb[0].mxu0 %v1833
        %v2026 = vpop.f32.mrb[0].mxu0
        %v2027 = vadd.f32 %v1783, %v2026
        %v2028 = vpop.f32.mrb[0].mxu0
        %2029 = vmatprep.mubr.f32.mxu0 0.0
        %2030 = vmatmul.mubr.f32.gmra.mrb[0].mxu0 %v1836
        %v2031 = vpop.f32.mrb[0].mxu0
        %v2032 = vadd.f32 %v1783, %v2031
        %v2033 = vpop.f32.mrb[0].mxu0
        %2034 = vmatprep.mubr.f32.mxu0 0.0
        %2035 = vmatmul.mubr.f32.gmra.mrb[0].mxu0 %v1839
        %v2036 = vpop.f32.mrb[0].mxu0
        %v2037 = vadd.f32 %v1783, %v2036
        %v2038 = vpop.f32.mrb[0].mxu0
        %2039 = vmatprep.mubr.f32.mxu0 0.0
        %2040 = vmatmul.mubr.f32.gmra.mrb[0].mxu0 %v1842
        %v2041 = vpop.f32.mrb[0].mxu0
        %v2042 = vadd.f32 %v1783, %v2041
        %v2043 = vpop.f32.mrb[0].mxu0
        %2044 = vmatprep.mubr.f32.mxu0 0.0
        %2045 = vmatmul.mubr.f32.gmra.mrb[0].mxu0 %v1845
        %v2046 = vpop.f32.mrb[0].mxu0
        %v2047 = vadd.f32 %v1783, %v2046
        %v2048 = vpop.f32.mrb[0].mxu0
        %2049 = vmatprep.mubr.f32.mxu0 0.0
        %2050 = vmatmul.mubr.f32.gmra.mrb[0].mxu0 %v1848
        %v2051 = vpop.f32.mrb[0].mxu0
        %v2052 = vadd.f32 %v1783, %v2051
        %v2053 = vpop.f32.mrb[0].mxu0
        %2054 = vmatprep.mubr.f32.mxu0 0.0
        %2055 = vmatmul.mubr.f32.gmra.mrb[0].mxu0 %v1851
        %v2056 = vpop.f32.mrb[0].mxu0
        %v2057 = vadd.f32 %v1783, %v2056
        %v2058 = vpop.f32.mrb[0].mxu0
        %2059 = vmatprep.mubr.f32.mxu0 0.0
        %2060 = vmatmul.mubr.f32.gmra.mrb[0].mxu0 %v1854
        %v2061 = vpop.f32.mrb[0].mxu0
        %v2062 = vadd.f32 %v1783, %v2061
        %v2063 = vpop.f32.mrb[0].mxu0
        %2064 = vmatprep.mubr.f32.mxu0 0.0
        %2065 = vmatmul.mubr.f32.gmra.mrb[0].mxu0 %v1857
        %v2066 = vpop.f32.mrb[0].mxu0
        %v2067 = vadd.f32 %v1783, %v2066
        %v2068 = vpop.f32.mrb[0].mxu0
        %2069 = vmatprep.mubr.f32.mxu0 0.0
        %2070 = vmatmul.mubr.f32.gmra.mrb[0].mxu0 %v1860
        %v2071 = vpop.f32.mrb[0].mxu0
        %v2072 = vadd.f32 %v1783, %v2071
        %v2073 = vpop.f32.mrb[0].mxu0
        %2074 = vmatprep.mubr.f32.mxu0 0.0
        %2075 = vmatmul.mubr.f32.gmra.mrb[0].mxu0 %v1863
        %v2076 = vpop.f32.mrb[0].mxu0
        %v2077 = vadd.f32 %v1783, %v2076
        %v2078 = vpop.f32.mrb[0].mxu0
        %2079 = vmatprep.mubr.f32.mxu0 0.0
        %2080 = vmatmul.mubr.f32.gmra.mrb[0].mxu0 %v1866
        %v2081 = vpop.f32.mrb[0].mxu0
        %v2082 = vadd.f32 %v1783, %v2081
        %v2083 = vpop.f32.mrb[0].mxu0
        %2084 = vmatprep.mubr.f32.mxu0 0.0
        %2085 = vmatmul.mubr.f32.gmra.mrb[0].mxu0 %v1869
        %v2086 = vpop.f32.mrb[0].mxu0
        %v2087 = vadd.f32 %v1783, %v2086
        %v2088 = vpop.f32.mrb[0].mxu0
        %2089 = vmatprep.mubr.f32.mxu0 0.0
        %2090 = vmatmul.mubr.f32.gmra.mrb[0].mxu0 %v1872
        %v2091 = vpop.f32.mrb[0].mxu0
        %v2092 = vadd.f32 %v1783, %v2091
        %v2093 = vpop.f32.mrb[0].mxu0
        %2094 = vmatprep.mubr.f32.mxu0 0.0
        %2095 = vmatmul.mubr.f32.gmra.mrb[0].mxu0 %v1875
        %v2096 = vpop.f32.mrb[0].mxu0
        %v2097 = vadd.f32 %v1783, %v2096
        %v2098 = vpop.f32.mrb[0].mxu0
        %2099 = vmatprep.mubr.f32.mxu0 0.0
        %2100 = vmatmul.mubr.f32.gmra.mrb[0].mxu0 %v1878
        %v2101 = vpop.f32.mrb[0].mxu0
        %v2102 = vadd.f32 %v1783, %v2101
        %v2103 = vpop.f32.mrb[0].mxu0
        %2104 = vdwg.mxu0
        %v2105 = vxor.u32 %v1947, 2147483648
        %v2106 = vxor.u32 %v1952, 2147483648
        %v2107 = vxor.u32 %v1957, 2147483648
        %v2108 = vxor.u32 %v1962, 2147483648
        %v2109 = vxor.u32 %v1967, 2147483648
        %v2110 = vxor.u32 %v1972, 2147483648
        %v2111 = vxor.u32 %v1977, 2147483648
        %v2112 = vxor.u32 %v1982, 2147483648
        %v2113 = vxor.u32 %v1987, 2147483648
        %v2114 = vxor.u32 %v1992, 2147483648
        %v2115 = vxor.u32 %v1997, 2147483648
        %v2116 = vxor.u32 %v2002, 2147483648
        %v2117 = vxor.u32 %v2007, 2147483648
        %v2118 = vxor.u32 %v2012, 2147483648
        %v2119 = vxor.u32 %v2017, 2147483648
        %v2120 = vxor.u32 %v2022, 2147483648
        %v2121 = vxor.u32 %v2027, 2147483648
        %v2122 = vxor.u32 %v2032, 2147483648
        %v2123 = vxor.u32 %v2037, 2147483648
        %v2124 = vxor.u32 %v2042, 2147483648
        %v2125 = vxor.u32 %v2047, 2147483648
        %v2126 = vxor.u32 %v2052, 2147483648
        %v2127 = vxor.u32 %v2057, 2147483648
        %v2128 = vxor.u32 %v2062, 2147483648
        %v2129 = vxor.u32 %v2067, 2147483648
        %v2130 = vxor.u32 %v2072, 2147483648
        %v2131 = vxor.u32 %v2077, 2147483648
        %v2132 = vxor.u32 %v2082, 2147483648
        %v2133 = vxor.u32 %v2087, 2147483648
        %v2134 = vxor.u32 %v2092, 2147483648
        %v2135 = vxor.u32 %v2097, 2147483648
        %v2136 = vxor.u32 %v2102, 2147483648
        %v2137 = vmul.f32 %v2105, 1.442695
        %v2138 = vpow.pop %v2137
        %v2139 = vmul.f32 %v2106, 1.442695
        %v2140 = vpow.pop %v2139
        %v2141 = vmul.f32 %v2107, 1.442695
        %v2142 = vpow.pop %v2141
        %v2143 = vmul.f32 %v2108, 1.442695
        %v2144 = vpow.pop %v2143
        %v2145 = vmul.f32 %v2109, 1.442695
        %v2146 = vpow.pop %v2145
        %v2147 = vmul.f32 %v2110, 1.442695
        %v2148 = vpow.pop %v2147
        %v2149 = vmul.f32 %v2111, 1.442695
        %v2150 = vpow.pop %v2149
        %v2151 = vmul.f32 %v2112, 1.442695
        %v2152 = vpow.pop %v2151
        %v2153 = vmul.f32 %v2113, 1.442695
        %v2154 = vpow.pop %v2153
        %v2155 = vmul.f32 %v2114, 1.442695
        %v2156 = vpow.pop %v2155
        %v2157 = vmul.f32 %v2115, 1.442695
        %v2158 = vpow.pop %v2157
        %v2159 = vmul.f32 %v2116, 1.442695
        %v2160 = vpow.pop %v2159
        %v2161 = vmul.f32 %v2117, 1.442695
        %v2162 = vpow.pop %v2161
        %v2163 = vmul.f32 %v2118, 1.442695
        %v2164 = vpow.pop %v2163
        %v2165 = vmul.f32 %v2119, 1.442695
        %v2166 = vpow.pop %v2165
        %v2167 = vmul.f32 %v2120, 1.442695
        %v2168 = vpow.pop %v2167
        %v2169 = vmul.f32 %v2121, 1.442695
        %v2170 = vpow.pop %v2169
        %v2171 = vmul.f32 %v2122, 1.442695
        %v2172 = vpow.pop %v2171
        %v2173 = vmul.f32 %v2123, 1.442695
        %v2174 = vpow.pop %v2173
        %v2175 = vmul.f32 %v2124, 1.442695
        %v2176 = vpow.pop %v2175
        %v2177 = vmul.f32 %v2125, 1.442695
        %v2178 = vpow.pop %v2177
        %v2179 = vmul.f32 %v2126, 1.442695
        %v2180 = vpow.pop %v2179
        %v2181 = vmul.f32 %v2127, 1.442695
        %v2182 = vpow.pop %v2181
        %v2183 = vmul.f32 %v2128, 1.442695
        %v2184 = vpow.pop %v2183
        %v2185 = vmul.f32 %v2129, 1.442695
        %v2186 = vpow.pop %v2185
        %v2187 = vmul.f32 %v2130, 1.442695
        %v2188 = vpow.pop %v2187
        %v2189 = vmul.f32 %v2131, 1.442695
        %v2190 = vpow.pop %v2189
        %v2191 = vmul.f32 %v2132, 1.442695
        %v2192 = vpow.pop %v2191
        %v2193 = vmul.f32 %v2133, 1.442695
        %v2194 = vpow.pop %v2193
        %v2195 = vmul.f32 %v2134, 1.442695
        %v2196 = vpow.pop %v2195
        %v2197 = vmul.f32 %v2135, 1.442695
        %v2198 = vpow.pop %v2197
        %v2199 = vmul.f32 %v2136, 1.442695
        %v2200 = vpow.pop %v2199
        %v2201 = vadd.f32 %v2138, 1.0
        %v2202 = vadd.f32 %v2140, 1.0
        %v2203 = vadd.f32 %v2142, 1.0
        %v2204 = vadd.f32 %v2144, 1.0
        %v2205 = vadd.f32 %v2146, 1.0
        %v2206 = vadd.f32 %v2148, 1.0
        %v2207 = vadd.f32 %v2150, 1.0
        %v2208 = vadd.f32 %v2152, 1.0
        %v2209 = vadd.f32 %v2154, 1.0
        %v2210 = vadd.f32 %v2156, 1.0
        %v2211 = vadd.f32 %v2158, 1.0
        %v2212 = vadd.f32 %v2160, 1.0
        %v2213 = vadd.f32 %v2162, 1.0
        %v2214 = vadd.f32 %v2164, 1.0
        %v2215 = vadd.f32 %v2166, 1.0
        %v2216 = vadd.f32 %v2168, 1.0
        %v2217 = vadd.f32 %v2170, 1.0
        %v2218 = vadd.f32 %v2172, 1.0
        %v2219 = vadd.f32 %v2174, 1.0
        %v2220 = vadd.f32 %v2176, 1.0
        %v2221 = vadd.f32 %v2178, 1.0
        %v2222 = vadd.f32 %v2180, 1.0
        %v2223 = vadd.f32 %v2182, 1.0
        %v2224 = vadd.f32 %v2184, 1.0
        %v2225 = vadd.f32 %v2186, 1.0
        %v2226 = vadd.f32 %v2188, 1.0
        %v2227 = vadd.f32 %v2190, 1.0
        %v2228 = vadd.f32 %v2192, 1.0
        %v2229 = vadd.f32 %v2194, 1.0
        %v2230 = vadd.f32 %v2196, 1.0
        %v2231 = vadd.f32 %v2198, 1.0
        %v2232 = vadd.f32 %v2200, 1.0
        %v2233 = vrcp.pop %v2201
        %v2234 = vmul.f32 1.0, %v2233
        %v2235 = vrcp.pop %v2202
        %v2236 = vmul.f32 1.0, %v2235
        %v2237 = vrcp.pop %v2203
        %v2238 = vmul.f32 1.0, %v2237
        %v2239 = vrcp.pop %v2204
        %v2240 = vmul.f32 1.0, %v2239
        %v2241 = vrcp.pop %v2205
        %v2242 = vmul.f32 1.0, %v2241
        %v2243 = vrcp.pop %v2206
        %v2244 = vmul.f32 1.0, %v2243
        %v2245 = vrcp.pop %v2207
        %v2246 = vmul.f32 1.0, %v2245
        %v2247 = vrcp.pop %v2208
        %v2248 = vmul.f32 1.0, %v2247
        %v2249 = vrcp.pop %v2209
        %v2250 = vmul.f32 1.0, %v2249
        %v2251 = vrcp.pop %v2210
        %v2252 = vmul.f32 1.0, %v2251
        %v2253 = vrcp.pop %v2211
        %v2254 = vmul.f32 1.0, %v2253
        %v2255 = vrcp.pop %v2212
        %v2256 = vmul.f32 1.0, %v2255
        %v2257 = vrcp.pop %v2213
        %v2258 = vmul.f32 1.0, %v2257
        %v2259 = vrcp.pop %v2214
        %v2260 = vmul.f32 1.0, %v2259
        %v2261 = vrcp.pop %v2215
        %v2262 = vmul.f32 1.0, %v2261
        %v2263 = vrcp.pop %v2216
        %v2264 = vmul.f32 1.0, %v2263
        %v2265 = vrcp.pop %v2217
        %v2266 = vmul.f32 1.0, %v2265
        %v2267 = vrcp.pop %v2218
        %v2268 = vmul.f32 1.0, %v2267
        %v2269 = vrcp.pop %v2219
        %v2270 = vmul.f32 1.0, %v2269
        %v2271 = vrcp.pop %v2220
        %v2272 = vmul.f32 1.0, %v2271
        %v2273 = vrcp.pop %v2221
        %v2274 = vmul.f32 1.0, %v2273
        %v2275 = vrcp.pop %v2222
        %v2276 = vmul.f32 1.0, %v2275
        %v2277 = vrcp.pop %v2223
        %v2278 = vmul.f32 1.0, %v2277
        %v2279 = vrcp.pop %v2224
        %v2280 = vmul.f32 1.0, %v2279
        %v2281 = vrcp.pop %v2225
        %v2282 = vmul.f32 1.0, %v2281
        %v2283 = vrcp.pop %v2226
        %v2284 = vmul.f32 1.0, %v2283
        %v2285 = vrcp.pop %v2227
        %v2286 = vmul.f32 1.0, %v2285
        %v2287 = vrcp.pop %v2228
        %v2288 = vmul.f32 1.0, %v2287
        %v2289 = vrcp.pop %v2229
        %v2290 = vmul.f32 1.0, %v2289
        %v2291 = vrcp.pop %v2230
        %v2292 = vmul.f32 1.0, %v2291
        %v2293 = vrcp.pop %v2231
        %v2294 = vmul.f32 1.0, %v2293
        %v2295 = vrcp.pop %v2232
        %v2296 = vmul.f32 1.0, %v2295
        %v2297 = vmul.f32 %v1947, %v2234
        %v2298 = vmul.f32 %v1952, %v2236
        %v2299 = vmul.f32 %v1957, %v2238
        %v2300 = vmul.f32 %v1962, %v2240
        %v2301 = vmul.f32 %v1967, %v2242
        %v2302 = vmul.f32 %v1972, %v2244
        %v2303 = vmul.f32 %v1977, %v2246
        %v2304 = vmul.f32 %v1982, %v2248
        %v2305 = vmul.f32 %v1987, %v2250
        %v2306 = vmul.f32 %v1992, %v2252
        %v2307 = vmul.f32 %v1997, %v2254
        %v2308 = vmul.f32 %v2002, %v2256
        %v2309 = vmul.f32 %v2007, %v2258
        %v2310 = vmul.f32 %v2012, %v2260
        %v2311 = vmul.f32 %v2017, %v2262
        %v2312 = vmul.f32 %v2022, %v2264
        %v2313 = vmul.f32 %v2027, %v2266
        %v2314 = vmul.f32 %v2032, %v2268
        %v2315 = vmul.f32 %v2037, %v2270
        %v2316 = vmul.f32 %v2042, %v2272
        %v2317 = vmul.f32 %v2047, %v2274
        %v2318 = vmul.f32 %v2052, %v2276
        %v2319 = vmul.f32 %v2057, %v2278
        %v2320 = vmul.f32 %v2062, %v2280
        %v2321 = vmul.f32 %v2067, %v2282
        %v2322 = vmul.f32 %v2072, %v2284
        %v2323 = vmul.f32 %v2077, %v2286
        %v2324 = vmul.f32 %v2082, %v2288
        %v2325 = vmul.f32 %v2087, %v2290
        %v2326 = vmul.f32 %v2092, %v2292
        %v2327 = vmul.f32 %v2097, %v2294
        %v2328 = vmul.f32 %v2102, %v2296
        %v2329 = vlaneseq
        %v2330 = vshrl.u32 %v2329, 7
        %v2331 = vsub.s32 0, %v2330
        %v2332 = vrot.slane %v1225, %v2331
        %v2334 = vsel %vm461, %v2297, 0
        %v2337 = vsel %vm461, %v2298, 0
        %v2340 = vsel %vm461, %v2299, 0
        %v2343 = vsel %vm461, %v2300, 0
        %v2346 = vsel %vm461, %v2301, 0
        %v2349 = vsel %vm461, %v2302, 0
        %v2352 = vsel %vm461, %v2303, 0
        %v2355 = vsel %vm461, %v2304, 0
        %v2358 = vsel %vm461, %v2305, 0
        %v2361 = vsel %vm461, %v2306, 0
        %v2364 = vsel %vm461, %v2307, 0
        %v2367 = vsel %vm461, %v2308, 0
        %v2370 = vsel %vm461, %v2309, 0
        %v2373 = vsel %vm461, %v2310, 0
        %v2376 = vsel %vm461, %v2311, 0
        %v2379 = vsel %vm461, %v2312, 0
        %v2382 = vsel %vm461, %v2313, 0
        %v2385 = vsel %vm461, %v2314, 0
        %v2388 = vsel %vm461, %v2315, 0
        %v2391 = vsel %vm461, %v2316, 0
        %v2394 = vsel %vm461, %v2317, 0
        %v2397 = vsel %vm461, %v2318, 0
        %v2400 = vsel %vm461, %v2319, 0
        %v2403 = vsel %vm461, %v2320, 0
        %v2406 = vsel %vm461, %v2321, 0
        %v2409 = vsel %vm461, %v2322, 0
        %v2412 = vsel %vm461, %v2323, 0
        %v2415 = vsel %vm461, %v2324, 0
        %v2418 = vsel %vm461, %v2325, 0
        %v2421 = vsel %vm461, %v2326, 0
        %v2424 = vsel %vm461, %v2327, 0
        %v2427 = vsel %vm461, %v2328, 0
        %2429 = vmatprep.subr.mxu0 0.0
        %2430 = vmatpush1.msra.mxu0 %v1217
        %2431 = vmatprep.subr.mxu0 0.0
        %2432 = vmatpush1.msra.mxu0 %v1218
        %2433 = vmatprep.subr.mxu0 0.0
        %2434 = vmatpush1.msra.mxu0 %v1219
        %2435 = vmatprep.subr.mxu0 0.0
        %2436 = vmatpush1.msra.mxu0 %v1220
        %2437 = vmatprep.subr.mxu0 0.0
        %2438 = vmatpush1.msra.mxu0 %v1221
        %2439 = vmatprep.subr.mxu0 0.0
        %2440 = vmatpush1.msra.mxu0 %v1222
        %2441 = vmatprep.subr.mxu0 0.0
        %2442 = vmatpush1.msra.mxu0 %v1223
        %2443 = vmatprep.subr.mxu0 0.0
        %2444 = vmatpush1.msra.mxu0 %v1224
        %2445 = vmatprep.subr.mxu0 0.0
        %2446 = vmatpush1.msra.mxu0 0.0
        %2447 = vmatprep.subr.mxu0 0.0
        %2448 = vmatpush1.msra.mxu0 0.0
        %2449 = vmatprep.subr.mxu0 0.0
        %2450 = vmatpush1.msra.mxu0 0.0
        %2451 = vmatprep.subr.mxu0 0.0
        %2452 = vmatpush1.msra.mxu0 0.0
        %2453 = vmatprep.subr.mxu0 0.0
        %2454 = vmatpush1.msra.mxu0 0.0
        %2455 = vmatprep.subr.mxu0 0.0
        %2456 = vmatpush1.msra.mxu0 0.0
        %2457 = vmatprep.subr.mxu0 0.0
        %2458 = vmatpush1.msra.mxu0 0.0
        %2459 = vmatprep.subr.mxu0 0.0
        %2460 = vmatpush1.msra.mxu0 0.0
        %2461 = vmatprep.subr.mxu0 0.0
        %2462 = vmatpush1.msra.mxu0 0.0
        %2463 = vmatprep.subr.mxu0 0.0
        %2464 = vmatpush1.msra.mxu0 0.0
        %2465 = vmatprep.subr.mxu0 0.0
        %2466 = vmatpush1.msra.mxu0 0.0
        %2467 = vmatprep.subr.mxu0 0.0
        %2468 = vmatpush1.msra.mxu0 0.0
        %2469 = vmatprep.subr.mxu0 0.0
        %2470 = vmatpush1.msra.mxu0 0.0
        %2471 = vmatprep.subr.mxu0 0.0
        %2472 = vmatpush1.msra.mxu0 0.0
        %2473 = vmatprep.subr.mxu0 0.0
        %2474 = vmatpush1.msra.mxu0 0.0
        %2475 = vmatprep.subr.mxu0 0.0
        %2476 = vmatpush1.msra.mxu0 0.0
        %2477 = vmatprep.subr.mxu0 0.0
        %2478 = vmatpush1.msra.mxu0 0.0
        %2479 = vmatprep.subr.mxu0 0.0
        %2480 = vmatpush1.msra.mxu0 0.0
        %2481 = vmatprep.subr.mxu0 0.0
        %2482 = vmatpush1.msra.mxu0 0.0
        %2483 = vmatprep.subr.mxu0 0.0
        %2484 = vmatpush1.msra.mxu0 0.0
        %2485 = vmatprep.subr.mxu0 0.0
        %2486 = vmatpush1.msra.mxu0 0.0
        %2487 = vmatprep.subr.mxu0 0.0
        %2488 = vmatpush1.msra.mxu0 0.0
        %2489 = vmatprep.subr.mxu0 0.0
        %2490 = vmatpush1.msra.mxu0 0.0
        %2491 = vmatprep.subr.mxu0 0.0
        %2492 = vmatpush1.msra.mxu0 0.0
        %2493 = vmatprep.mubr.f32.mxu0 0.0
        %2494 = vmatmul.mubr.f32.gmra.mrb[0].mxu0 %v2334
        %v2495 = vpop.f32.mrb[0].mxu0
        %v2496 = vadd.f32 %v2332, %v2495
        %v2497 = vpop.f32.mrb[0].mxu0
        %2498 = vmatprep.mubr.f32.mxu0 0.0
        %2499 = vmatmul.mubr.f32.gmra.mrb[0].mxu0 %v2337
        %v2500 = vpop.f32.mrb[0].mxu0
        %v2501 = vadd.f32 %v2332, %v2500
        %v2502 = vpop.f32.mrb[0].mxu0
        %2503 = vmatprep.mubr.f32.mxu0 0.0
        %2504 = vmatmul.mubr.f32.gmra.mrb[0].mxu0 %v2340
        %v2505 = vpop.f32.mrb[0].mxu0
        %v2506 = vadd.f32 %v2332, %v2505
        %v2507 = vpop.f32.mrb[0].mxu0
        %2508 = vmatprep.mubr.f32.mxu0 0.0
        %2509 = vmatmul.mubr.f32.gmra.mrb[0].mxu0 %v2343
        %v2510 = vpop.f32.mrb[0].mxu0
        %v2511 = vadd.f32 %v2332, %v2510
        %v2512 = vpop.f32.mrb[0].mxu0
        %2513 = vmatprep.mubr.f32.mxu0 0.0
        %2514 = vmatmul.mubr.f32.gmra.mrb[0].mxu0 %v2346
        %v2515 = vpop.f32.mrb[0].mxu0
        %v2516 = vadd.f32 %v2332, %v2515
        %v2517 = vpop.f32.mrb[0].mxu0
        %2518 = vmatprep.mubr.f32.mxu0 0.0
        %2519 = vmatmul.mubr.f32.gmra.mrb[0].mxu0 %v2349
        %v2520 = vpop.f32.mrb[0].mxu0
        %v2521 = vadd.f32 %v2332, %v2520
        %v2522 = vpop.f32.mrb[0].mxu0
        %2523 = vmatprep.mubr.f32.mxu0 0.0
        %2524 = vmatmul.mubr.f32.gmra.mrb[0].mxu0 %v2352
        %v2525 = vpop.f32.mrb[0].mxu0
        %v2526 = vadd.f32 %v2332, %v2525
        %v2527 = vpop.f32.mrb[0].mxu0
        %2528 = vmatprep.mubr.f32.mxu0 0.0
        %2529 = vmatmul.mubr.f32.gmra.mrb[0].mxu0 %v2355
        %v2530 = vpop.f32.mrb[0].mxu0
        %v2531 = vadd.f32 %v2332, %v2530
        %v2532 = vpop.f32.mrb[0].mxu0
        %2533 = vmatprep.mubr.f32.mxu0 0.0
        %2534 = vmatmul.mubr.f32.gmra.mrb[0].mxu0 %v2358
        %v2535 = vpop.f32.mrb[0].mxu0
        %v2536 = vadd.f32 %v2332, %v2535
        %v2537 = vpop.f32.mrb[0].mxu0
        %2538 = vmatprep.mubr.f32.mxu0 0.0
        %2539 = vmatmul.mubr.f32.gmra.mrb[0].mxu0 %v2361
        %v2540 = vpop.f32.mrb[0].mxu0
        %v2541 = vadd.f32 %v2332, %v2540
        %v2542 = vpop.f32.mrb[0].mxu0
        %2543 = vmatprep.mubr.f32.mxu0 0.0
        %2544 = vmatmul.mubr.f32.gmra.mrb[0].mxu0 %v2364
        %v2545 = vpop.f32.mrb[0].mxu0
        %v2546 = vadd.f32 %v2332, %v2545
        %v2547 = vpop.f32.mrb[0].mxu0
        %2548 = vmatprep.mubr.f32.mxu0 0.0
        %2549 = vmatmul.mubr.f32.gmra.mrb[0].mxu0 %v2367
        %v2550 = vpop.f32.mrb[0].mxu0
        %v2551 = vadd.f32 %v2332, %v2550
        %v2552 = vpop.f32.mrb[0].mxu0
        %2553 = vmatprep.mubr.f32.mxu0 0.0
        %2554 = vmatmul.mubr.f32.gmra.mrb[0].mxu0 %v2370
        %v2555 = vpop.f32.mrb[0].mxu0
        %v2556 = vadd.f32 %v2332, %v2555
        %v2557 = vpop.f32.mrb[0].mxu0
        %2558 = vmatprep.mubr.f32.mxu0 0.0
        %2559 = vmatmul.mubr.f32.gmra.mrb[0].mxu0 %v2373
        %v2560 = vpop.f32.mrb[0].mxu0
        %v2561 = vadd.f32 %v2332, %v2560
        %v2562 = vpop.f32.mrb[0].mxu0
        %2563 = vmatprep.mubr.f32.mxu0 0.0
        %2564 = vmatmul.mubr.f32.gmra.mrb[0].mxu0 %v2376
        %v2565 = vpop.f32.mrb[0].mxu0
        %v2566 = vadd.f32 %v2332, %v2565
        %v2567 = vpop.f32.mrb[0].mxu0
        %2568 = vmatprep.mubr.f32.mxu0 0.0
        %2569 = vmatmul.mubr.f32.gmra.mrb[0].mxu0 %v2379
        %v2570 = vpop.f32.mrb[0].mxu0
        %v2571 = vadd.f32 %v2332, %v2570
        %v2572 = vpop.f32.mrb[0].mxu0
        %2573 = vmatprep.mubr.f32.mxu0 0.0
        %2574 = vmatmul.mubr.f32.gmra.mrb[0].mxu0 %v2382
        %v2575 = vpop.f32.mrb[0].mxu0
        %v2576 = vadd.f32 %v2332, %v2575
        %v2577 = vpop.f32.mrb[0].mxu0
        %2578 = vmatprep.mubr.f32.mxu0 0.0
        %2579 = vmatmul.mubr.f32.gmra.mrb[0].mxu0 %v2385
        %v2580 = vpop.f32.mrb[0].mxu0
        %v2581 = vadd.f32 %v2332, %v2580
        %v2582 = vpop.f32.mrb[0].mxu0
        %2583 = vmatprep.mubr.f32.mxu0 0.0
        %2584 = vmatmul.mubr.f32.gmra.mrb[0].mxu0 %v2388
        %v2585 = vpop.f32.mrb[0].mxu0
        %v2586 = vadd.f32 %v2332, %v2585
        %v2587 = vpop.f32.mrb[0].mxu0
        %2588 = vmatprep.mubr.f32.mxu0 0.0
        %2589 = vmatmul.mubr.f32.gmra.mrb[0].mxu0 %v2391
        %v2590 = vpop.f32.mrb[0].mxu0
        %v2591 = vadd.f32 %v2332, %v2590
        %v2592 = vpop.f32.mrb[0].mxu0
        %2593 = vmatprep.mubr.f32.mxu0 0.0
        %2594 = vmatmul.mubr.f32.gmra.mrb[0].mxu0 %v2394
        %v2595 = vpop.f32.mrb[0].mxu0
        %v2596 = vadd.f32 %v2332, %v2595
        %v2597 = vpop.f32.mrb[0].mxu0
        %2598 = vmatprep.mubr.f32.mxu0 0.0
        %2599 = vmatmul.mubr.f32.gmra.mrb[0].mxu0 %v2397
        %v2600 = vpop.f32.mrb[0].mxu0
        %v2601 = vadd.f32 %v2332, %v2600
        %v2602 = vpop.f32.mrb[0].mxu0
        %2603 = vmatprep.mubr.f32.mxu0 0.0
        %2604 = vmatmul.mubr.f32.gmra.mrb[0].mxu0 %v2400
        %v2605 = vpop.f32.mrb[0].mxu0
        %v2606 = vadd.f32 %v2332, %v2605
        %v2607 = vpop.f32.mrb[0].mxu0
        %2608 = vmatprep.mubr.f32.mxu0 0.0
        %2609 = vmatmul.mubr.f32.gmra.mrb[0].mxu0 %v2403
        %v2610 = vpop.f32.mrb[0].mxu0
        %v2611 = vadd.f32 %v2332, %v2610
        %v2612 = vpop.f32.mrb[0].mxu0
        %2613 = vmatprep.mubr.f32.mxu0 0.0
        %2614 = vmatmul.mubr.f32.gmra.mrb[0].mxu0 %v2406
        %v2615 = vpop.f32.mrb[0].mxu0
        %v2616 = vadd.f32 %v2332, %v2615
        %v2617 = vpop.f32.mrb[0].mxu0
        %2618 = vmatprep.mubr.f32.mxu0 0.0
        %2619 = vmatmul.mubr.f32.gmra.mrb[0].mxu0 %v2409
        %v2620 = vpop.f32.mrb[0].mxu0
        %v2621 = vadd.f32 %v2332, %v2620
        %v2622 = vpop.f32.mrb[0].mxu0
        %2623 = vmatprep.mubr.f32.mxu0 0.0
        %2624 = vmatmul.mubr.f32.gmra.mrb[0].mxu0 %v2412
        %v2625 = vpop.f32.mrb[0].mxu0
        %v2626 = vadd.f32 %v2332, %v2625
        %v2627 = vpop.f32.mrb[0].mxu0
        %2628 = vmatprep.mubr.f32.mxu0 0.0
        %2629 = vmatmul.mubr.f32.gmra.mrb[0].mxu0 %v2415
        %v2630 = vpop.f32.mrb[0].mxu0
        %v2631 = vadd.f32 %v2332, %v2630
        %v2632 = vpop.f32.mrb[0].mxu0
        %2633 = vmatprep.mubr.f32.mxu0 0.0
        %2634 = vmatmul.mubr.f32.gmra.mrb[0].mxu0 %v2418
        %v2635 = vpop.f32.mrb[0].mxu0
        %v2636 = vadd.f32 %v2332, %v2635
        %v2637 = vpop.f32.mrb[0].mxu0
        %2638 = vmatprep.mubr.f32.mxu0 0.0
        %2639 = vmatmul.mubr.f32.gmra.mrb[0].mxu0 %v2421
        %v2640 = vpop.f32.mrb[0].mxu0
        %v2641 = vadd.f32 %v2332, %v2640
        %v2642 = vpop.f32.mrb[0].mxu0
        %2643 = vmatprep.mubr.f32.mxu0 0.0
        %2644 = vmatmul.mubr.f32.gmra.mrb[0].mxu0 %v2424
        %v2645 = vpop.f32.mrb[0].mxu0
        %v2646 = vadd.f32 %v2332, %v2645
        %v2647 = vpop.f32.mrb[0].mxu0
        %2648 = vmatprep.mubr.f32.mxu0 0.0
        %2649 = vmatmul.mubr.f32.gmra.mrb[0].mxu0 %v2427
        %v2650 = vpop.f32.mrb[0].mxu0
        %v2651 = vadd.f32 %v2332, %v2650
        %v2652 = vpop.f32.mrb[0].mxu0
        %2653 = vdwg.mxu0
        %2654 = vrot.lane.b32.xlu0 %v2297, 64
        %v2655 = vpop.permute.xlu0 %2654
        %2656 = vrot.lane.b32.xlu0 %v2298, 64
        %v2657 = vpop.permute.xlu0 %2656
        %2658 = vrot.lane.b32.xlu0 %v2299, 64
        %v2659 = vpop.permute.xlu0 %2658
        %2660 = vrot.lane.b32.xlu0 %v2300, 64
        %v2661 = vpop.permute.xlu0 %2660
        %2662 = vrot.lane.b32.xlu0 %v2301, 64
        %v2663 = vpop.permute.xlu0 %2662
        %2664 = vrot.lane.b32.xlu0 %v2302, 64
        %v2665 = vpop.permute.xlu0 %2664
        %2666 = vrot.lane.b32.xlu0 %v2303, 64
        %v2667 = vpop.permute.xlu0 %2666
        %2668 = vrot.lane.b32.xlu0 %v2304, 64
        %v2669 = vpop.permute.xlu0 %2668
        %2670 = vrot.lane.b32.xlu0 %v2305, 64
        %v2671 = vpop.permute.xlu0 %2670
        %2672 = vrot.lane.b32.xlu0 %v2306, 64
        %v2673 = vpop.permute.xlu0 %2672
        %2674 = vrot.lane.b32.xlu0 %v2307, 64
        %v2675 = vpop.permute.xlu0 %2674
        %2676 = vrot.lane.b32.xlu0 %v2308, 64
        %v2677 = vpop.permute.xlu0 %2676
        %2678 = vrot.lane.b32.xlu0 %v2309, 64
        %v2679 = vpop.permute.xlu0 %2678
        %2680 = vrot.lane.b32.xlu0 %v2310, 64
        %v2681 = vpop.permute.xlu0 %2680
        %2682 = vrot.lane.b32.xlu0 %v2311, 64
        %v2683 = vpop.permute.xlu0 %2682
        %2684 = vrot.lane.b32.xlu0 %v2312, 64
        %v2685 = vpop.permute.xlu0 %2684
        %2686 = vrot.lane.b32.xlu0 %v2313, 64
        %v2687 = vpop.permute.xlu0 %2686
        %2688 = vrot.lane.b32.xlu0 %v2314, 64
        %v2689 = vpop.permute.xlu0 %2688
        %2690 = vrot.lane.b32.xlu0 %v2315, 64
        %v2691 = vpop.permute.xlu0 %2690
        %2692 = vrot.lane.b32.xlu0 %v2316, 64
        %v2693 = vpop.permute.xlu0 %2692
        %2694 = vrot.lane.b32.xlu0 %v2317, 64
        %v2695 = vpop.permute.xlu0 %2694
        %2696 = vrot.lane.b32.xlu0 %v2318, 64
        %v2697 = vpop.permute.xlu0 %2696
        %2698 = vrot.lane.b32.xlu0 %v2319, 64
        %v2699 = vpop.permute.xlu0 %2698
        %2700 = vrot.lane.b32.xlu0 %v2320, 64
        %v2701 = vpop.permute.xlu0 %2700
        %2702 = vrot.lane.b32.xlu0 %v2321, 64
        %v2703 = vpop.permute.xlu0 %2702
        %2704 = vrot.lane.b32.xlu0 %v2322, 64
        %v2705 = vpop.permute.xlu0 %2704
        %2706 = vrot.lane.b32.xlu0 %v2323, 64
        %v2707 = vpop.permute.xlu0 %2706
        %2708 = vrot.lane.b32.xlu0 %v2324, 64
        %v2709 = vpop.permute.xlu0 %2708
        %2710 = vrot.lane.b32.xlu0 %v2325, 64
        %v2711 = vpop.permute.xlu0 %2710
        %2712 = vrot.lane.b32.xlu0 %v2326, 64
        %v2713 = vpop.permute.xlu0 %2712
        %2714 = vrot.lane.b32.xlu0 %v2327, 64
        %v2715 = vpop.permute.xlu0 %2714
        %2716 = vrot.lane.b32.xlu0 %v2328, 64
        %v2717 = vpop.permute.xlu0 %2716
        %v2750 = vsel %vm461, %v1748, %v2655
        %v2751 = vsel %vm461, %v1749, %v2657
        %v2752 = vsel %vm461, %v1750, %v2659
        %v2753 = vsel %vm461, %v1751, %v2661
        %v2754 = vsel %vm461, %v1752, %v2663
        %v2755 = vsel %vm461, %v1753, %v2665
        %v2756 = vsel %vm461, %v1754, %v2667
        %v2757 = vsel %vm461, %v1755, %v2669
        %v2758 = vsel %vm461, %v1756, %v2671
        %v2759 = vsel %vm461, %v1757, %v2673
        %v2760 = vsel %vm461, %v1758, %v2675
        %v2761 = vsel %vm461, %v1759, %v2677
        %v2762 = vsel %vm461, %v1760, %v2679
        %v2763 = vsel %vm461, %v1761, %v2681
        %v2764 = vsel %vm461, %v1762, %v2683
        %v2765 = vsel %vm461, %v1763, %v2685
        %v2766 = vsel %vm461, %v1764, %v2687
        %v2767 = vsel %vm461, %v1765, %v2689
        %v2768 = vsel %vm461, %v1766, %v2691
        %v2769 = vsel %vm461, %v1767, %v2693
        %v2770 = vsel %vm461, %v1768, %v2695
        %v2771 = vsel %vm461, %v1769, %v2697
        %v2772 = vsel %vm461, %v1770, %v2699
        %v2773 = vsel %vm461, %v1771, %v2701
        %v2774 = vsel %vm461, %v1772, %v2703
        %v2775 = vsel %vm461, %v1773, %v2705
        %v2776 = vsel %vm461, %v1774, %v2707
        %v2777 = vsel %vm461, %v1775, %v2709
        %v2778 = vsel %vm461, %v1776, %v2711
        %v2779 = vsel %vm461, %v1777, %v2713
        %v2780 = vsel %vm461, %v1778, %v2715
        %v2781 = vsel %vm461, %v1779, %v2717
        %v2782 = vpack.c.bf16 %v2751, %v2750
        %v2783 = vpack.c.bf16 %v2753, %v2752
        %v2784 = vpack.c.bf16 %v2755, %v2754
        %v2785 = vpack.c.bf16 %v2757, %v2756
        %v2786 = vpack.c.bf16 %v2759, %v2758
        %v2787 = vpack.c.bf16 %v2761, %v2760
        %v2788 = vpack.c.bf16 %v2763, %v2762
        %v2789 = vpack.c.bf16 %v2765, %v2764
        %v2790 = vpack.c.bf16 %v2767, %v2766
        %v2791 = vpack.c.bf16 %v2769, %v2768
        %v2792 = vpack.c.bf16 %v2771, %v2770
        %v2793 = vpack.c.bf16 %v2773, %v2772
        %v2794 = vpack.c.bf16 %v2775, %v2774
        %v2795 = vpack.c.bf16 %v2777, %v2776
        %v2796 = vpack.c.bf16 %v2779, %v2778
        %v2797 = vpack.c.bf16 %v2781, %v2780
        %v2814 = vunpack.c.l.b16 %v2782
        %v2815 = vunpack.c.h.b16 %v2782
        %v2816 = vunpack.c.l.b16 %v2783
        %v2817 = vunpack.c.h.b16 %v2783
        %v2818 = vunpack.c.l.b16 %v2784
        %v2819 = vunpack.c.h.b16 %v2784
        %v2820 = vunpack.c.l.b16 %v2785
        %v2821 = vunpack.c.h.b16 %v2785
        %v2822 = vunpack.c.l.b16 %v2786
        %v2823 = vunpack.c.h.b16 %v2786
        %v2824 = vunpack.c.l.b16 %v2787
        %v2825 = vunpack.c.h.b16 %v2787
        %v2826 = vunpack.c.l.b16 %v2788
        %v2827 = vunpack.c.h.b16 %v2788
        %v2828 = vunpack.c.l.b16 %v2789
        %v2829 = vunpack.c.h.b16 %v2789
        %v2830 = vunpack.c.l.b16 %v2790
        %v2831 = vunpack.c.h.b16 %v2790
        %v2832 = vunpack.c.l.b16 %v2791
        %v2833 = vunpack.c.h.b16 %v2791
        %v2834 = vunpack.c.l.b16 %v2792
        %v2835 = vunpack.c.h.b16 %v2792
        %v2836 = vunpack.c.l.b16 %v2793
        %v2837 = vunpack.c.h.b16 %v2793
        %v2838 = vunpack.c.l.b16 %v2794
        %v2839 = vunpack.c.h.b16 %v2794
        %v2840 = vunpack.c.l.b16 %v2795
        %v2841 = vunpack.c.h.b16 %v2795
        %v2842 = vunpack.c.l.b16 %v2796
        %v2843 = vunpack.c.h.b16 %v2796
        %v2844 = vunpack.c.l.b16 %v2797
        %v2845 = vunpack.c.h.b16 %v2797
        %v2846 = vpack.c.b16 %v2814, %v2814
        %v2847 = vpack.c.b16 %v2815, %v2815
        %v2848 = vpack.c.b16 %v2816, %v2816
        %v2849 = vpack.c.b16 %v2817, %v2817
        %v2850 = vpack.c.b16 %v2818, %v2818
        %v2851 = vpack.c.b16 %v2819, %v2819
        %v2852 = vpack.c.b16 %v2820, %v2820
        %v2853 = vpack.c.b16 %v2821, %v2821
        %v2854 = vpack.c.b16 %v2822, %v2822
        %v2855 = vpack.c.b16 %v2823, %v2823
        %v2856 = vpack.c.b16 %v2824, %v2824
        %v2857 = vpack.c.b16 %v2825, %v2825
        %v2858 = vpack.c.b16 %v2826, %v2826
        %v2859 = vpack.c.b16 %v2827, %v2827
        %v2860 = vpack.c.b16 %v2828, %v2828
        %v2861 = vpack.c.b16 %v2829, %v2829
        %v2862 = vpack.c.b16 %v2830, %v2830
        %v2863 = vpack.c.b16 %v2831, %v2831
        %v2864 = vpack.c.b16 %v2832, %v2832
        %v2865 = vpack.c.b16 %v2833, %v2833
        %v2866 = vpack.c.b16 %v2834, %v2834
        %v2867 = vpack.c.b16 %v2835, %v2835
        %v2868 = vpack.c.b16 %v2836, %v2836
        %v2869 = vpack.c.b16 %v2837, %v2837
        %v2870 = vpack.c.b16 %v2838, %v2838
        %v2871 = vpack.c.b16 %v2839, %v2839
        %v2872 = vpack.c.b16 %v2840, %v2840
        %v2873 = vpack.c.b16 %v2841, %v2841
        %v2874 = vpack.c.b16 %v2842, %v2842
        %v2875 = vpack.c.b16 %v2843, %v2843
        %v2876 = vpack.c.b16 %v2844, %v2844
        %v2877 = vpack.c.b16 %v2845, %v2845
        %2910 = vst [vmem:[%s206] sm:$0xf] %v2846
        %2911 = vst [vmem:[%s206 + $0x4] sm:$0xf] %v2847
        %2912 = vst [vmem:[%s206 + $0x8] sm:$0xf] %v2848
        %2913 = vst [vmem:[%s206 + $0xc] sm:$0xf] %v2849
        %2914 = vst [vmem:[%s206 + $0x10] sm:$0xf] %v2850
        %2915 = vst [vmem:[%s206 + $0x14] sm:$0xf] %v2851
        %2916 = vst [vmem:[%s206 + $0x18] sm:$0xf] %v2852
        %2917 = vst [vmem:[%s206 + $0x1c] sm:$0xf] %v2853
        %2918 = vst [vmem:[%s206 + $0x20] sm:$0xf] %v2854
        %2919 = vst [vmem:[%s206 + $0x24] sm:$0xf] %v2855
        %2920 = vst [vmem:[%s206 + $0x28] sm:$0xf] %v2856
        %2921 = vst [vmem:[%s206 + $0x2c] sm:$0xf] %v2857
        %2922 = vst [vmem:[%s206 + $0x30] sm:$0xf] %v2858
        %2923 = vst [vmem:[%s206 + $0x34] sm:$0xf] %v2859
        %2924 = vst [vmem:[%s206 + $0x38] sm:$0xf] %v2860
        %2925 = vst [vmem:[%s206 + $0x3c] sm:$0xf] %v2861
        %2926 = vst [vmem:[%s206 + $0x40] sm:$0xf] %v2862
        %2927 = vst [vmem:[%s206 + $0x44] sm:$0xf] %v2863
        %2928 = vst [vmem:[%s206 + $0x48] sm:$0xf] %v2864
        %2929 = vst [vmem:[%s206 + $0x4c] sm:$0xf] %v2865
        %2930 = vst [vmem:[%s206 + $0x50] sm:$0xf] %v2866
        %2931 = vst [vmem:[%s206 + $0x54] sm:$0xf] %v2867
        %2932 = vst [vmem:[%s206 + $0x58] sm:$0xf] %v2868
        %2933 = vst [vmem:[%s206 + $0x5c] sm:$0xf] %v2869
        %2934 = vst [vmem:[%s206 + $0x60] sm:$0xf] %v2870
        %2935 = vst [vmem:[%s206 + $0x64] sm:$0xf] %v2871
        %2936 = vst [vmem:[%s206 + $0x68] sm:$0xf] %v2872
        %2937 = vst [vmem:[%s206 + $0x6c] sm:$0xf] %v2873
        %2938 = vst [vmem:[%s206 + $0x70] sm:$0xf] %v2874
        %2939 = vst [vmem:[%s206 + $0x74] sm:$0xf] %v2875
        %2940 = vst [vmem:[%s206 + $0x78] sm:$0xf] %v2876
        %2941 = vst [vmem:[%s206 + $0x7c] sm:$0xf] %v2877
        %v2942 = vmul.f32 %v1183, 1.9194645
        %v2943 = vmul.f32 %v1184, 1.9194645
        %v2944 = vmul.f32 %v1185, 1.9194645
        %v2945 = vmul.f32 %v1186, 1.9194645
        %v2946 = vmul.f32 %v1187, 1.9194645
        %v2947 = vmul.f32 %v1188, 1.9194645
        %v2948 = vmul.f32 %v1189, 1.9194645
        %v2949 = vmul.f32 %v1190, 1.9194645
        %v2950 = vmul.f32 %v1191, 1.9194645
        %v2951 = vmul.f32 %v1192, 1.9194645
        %v2952 = vmul.f32 %v1193, 1.9194645
        %v2953 = vmul.f32 %v1194, 1.9194645
        %v2954 = vmul.f32 %v1195, 1.9194645
        %v2955 = vmul.f32 %v1196, 1.9194645
        %v2956 = vmul.f32 %v1197, 1.9194645
        %v2957 = vmul.f32 %v1198, 1.9194645
        %v2958 = vmul.f32 %v1199, 1.9194645
        %v2959 = vmul.f32 %v1200, 1.9194645
        %v2960 = vmul.f32 %v1201, 1.9194645
        %v2961 = vmul.f32 %v1202, 1.9194645
        %v2962 = vmul.f32 %v1203, 1.9194645
        %v2963 = vmul.f32 %v1204, 1.9194645
        %v2964 = vmul.f32 %v1205, 1.9194645
        %v2965 = vmul.f32 %v1206, 1.9194645
        %v2966 = vmul.f32 %v1207, 1.9194645
        %v2967 = vmul.f32 %v1208, 1.9194645
        %v2968 = vmul.f32 %v1209, 1.9194645
        %v2969 = vmul.f32 %v1210, 1.9194645
        %v2970 = vmul.f32 %v1211, 1.9194645
        %v2971 = vmul.f32 %v1212, 1.9194645
        %v2972 = vmul.f32 %v1213, 1.9194645
        %v2973 = vmul.f32 %v1214, 1.9194645
        %v2974 = vadd.f32 %v2942, %v2496
        %v2975 = vadd.f32 %v2943, %v2501
        %v2976 = vadd.f32 %v2944, %v2506
        %v2977 = vadd.f32 %v2945, %v2511
        %v2978 = vadd.f32 %v2946, %v2516
        %v2979 = vadd.f32 %v2947, %v2521
        %v2980 = vadd.f32 %v2948, %v2526
        %v2981 = vadd.f32 %v2949, %v2531
        %v2982 = vadd.f32 %v2950, %v2536
        %v2983 = vadd.f32 %v2951, %v2541
        %v2984 = vadd.f32 %v2952, %v2546
        %v2985 = vadd.f32 %v2953, %v2551
        %v2986 = vadd.f32 %v2954, %v2556
        %v2987 = vadd.f32 %v2955, %v2561
        %v2988 = vadd.f32 %v2956, %v2566
        %v2989 = vadd.f32 %v2957, %v2571
        %v2990 = vadd.f32 %v2958, %v2576
        %v2991 = vadd.f32 %v2959, %v2581
        %v2992 = vadd.f32 %v2960, %v2586
        %v2993 = vadd.f32 %v2961, %v2591
        %v2994 = vadd.f32 %v2962, %v2596
        %v2995 = vadd.f32 %v2963, %v2601
        %v2996 = vadd.f32 %v2964, %v2606
        %v2997 = vadd.f32 %v2965, %v2611
        %v2998 = vadd.f32 %v2966, %v2616
        %v2999 = vadd.f32 %v2967, %v2621
        %v3000 = vadd.f32 %v2968, %v2626
        %v3001 = vadd.f32 %v2969, %v2631
        %v3002 = vadd.f32 %v2970, %v2636
        %v3003 = vadd.f32 %v2971, %v2641
        %v3004 = vadd.f32 %v2972, %v2646
        %v3005 = vadd.f32 %v2973, %v2651
        %v3006 = vld [vmem:[%s0 + $0x1d1] sm:$0x1]
        %v3007 = vld [vmem:[%s0 + $0x1d9] sm:$0x1]
        %v3008 = vld [vmem:[%s0 + $0x150] sm:$0xff]
        %v3009 = vld [vmem:[%s0 + $0x158] sm:$0xff]
        %v3010 = vld [vmem:[%s0 + $0x160] sm:$0xff]
        %v3011 = vld [vmem:[%s0 + $0x168] sm:$0xff]
        %v3012 = vld [vmem:[%s0 + $0x170] sm:$0xff]
        %v3013 = vld [vmem:[%s0 + $0x178] sm:$0xff]
        %v3014 = vld [vmem:[%s0 + $0x180] sm:$0xff]
        %v3015 = vld [vmem:[%s0 + $0x188] sm:$0xff]
        %v3016 = vld [vmem:[%s0 + $0x1e1] sm:$0x1]
        %v3017 = vlaneseq
        %v3018 = vshrl.u32 %v3017, 7
        %v3019 = vsub.s32 0, %v3018
        %v3020 = vrot.slane %v3006, %v3019
        %v3022 = vsel %vm1230, %v2974, 0
        %v3025 = vsel %vm1230, %v2975, 0
        %v3028 = vsel %vm1230, %v2976, 0
        %v3031 = vsel %vm1230, %v2977, 0
        %v3034 = vsel %vm1230, %v2978, 0
        %v3037 = vsel %vm1230, %v2979, 0
        %v3040 = vsel %vm1230, %v2980, 0
        %v3043 = vsel %vm1230, %v2981, 0
        %v3046 = vsel %vm1230, %v2982, 0
        %v3049 = vsel %vm1230, %v2983, 0
        %v3052 = vsel %vm1230, %v2984, 0
        %v3055 = vsel %vm1230, %v2985, 0
        %v3058 = vsel %vm1230, %v2986, 0
        %v3061 = vsel %vm1230, %v2987, 0
        %v3064 = vsel %vm1230, %v2988, 0
        %v3067 = vsel %vm1230, %v2989, 0
        %v3070 = vsel %vm1230, %v2990, 0
        %v3073 = vsel %vm1230, %v2991, 0
        %v3076 = vsel %vm1230, %v2992, 0
        %v3079 = vsel %vm1230, %v2993, 0
        %v3082 = vsel %vm1230, %v2994, 0
        %v3085 = vsel %vm1230, %v2995, 0
        %v3088 = vsel %vm1230, %v2996, 0
        %v3091 = vsel %vm1230, %v2997, 0
        %v3094 = vsel %vm1230, %v2998, 0
        %v3097 = vsel %vm1230, %v2999, 0
        %v3100 = vsel %vm1230, %v3000, 0
        %v3103 = vsel %vm1230, %v3001, 0
        %v3106 = vsel %vm1230, %v3002, 0
        %v3109 = vsel %vm1230, %v3003, 0
        %v3112 = vsel %vm1230, %v3004, 0
        %v3115 = vsel %vm1230, %v3005, 0
        %3117 = vmatprep.subr.mxu0 0.0
        %3118 = vmatpush1.msra.mxu0 %v1329
        %3119 = vmatprep.subr.mxu0 0.0
        %3120 = vmatpush1.msra.mxu0 0.0
        %3121 = vmatprep.subr.mxu0 0.0
        %3122 = vmatpush1.msra.mxu0 0.0
        %3123 = vmatprep.subr.mxu0 0.0
        %3124 = vmatpush1.msra.mxu0 0.0
        %3125 = vmatprep.subr.mxu0 0.0
        %3126 = vmatpush1.msra.mxu0 0.0
        %3127 = vmatprep.subr.mxu0 0.0
        %3128 = vmatpush1.msra.mxu0 0.0
        %3129 = vmatprep.subr.mxu0 0.0
        %3130 = vmatpush1.msra.mxu0 0.0
        %3131 = vmatprep.subr.mxu0 0.0
        %3132 = vmatpush1.msra.mxu0 0.0
        %3133 = vmatprep.subr.mxu0 0.0
        %3134 = vmatpush1.msra.mxu0 0.0
        %3135 = vmatprep.subr.mxu0 0.0
        %3136 = vmatpush1.msra.mxu0 0.0
        %3137 = vmatprep.subr.mxu0 0.0
        %3138 = vmatpush1.msra.mxu0 0.0
        %3139 = vmatprep.subr.mxu0 0.0
        %3140 = vmatpush1.msra.mxu0 0.0
        %3141 = vmatprep.subr.mxu0 0.0
        %3142 = vmatpush1.msra.mxu0 0.0
        %3143 = vmatprep.subr.mxu0 0.0
        %3144 = vmatpush1.msra.mxu0 0.0
        %3145 = vmatprep.subr.mxu0 0.0
        %3146 = vmatpush1.msra.mxu0 0.0
        %3147 = vmatprep.subr.mxu0 0.0
        %3148 = vmatpush1.msra.mxu0 0.0
        %3149 = vmatprep.subr.mxu0 0.0
        %3150 = vmatpush1.msra.mxu0 0.0
        %3151 = vmatprep.subr.mxu0 0.0
        %3152 = vmatpush1.msra.mxu0 0.0
        %3153 = vmatprep.subr.mxu0 0.0
        %3154 = vmatpush1.msra.mxu0 0.0
        %3155 = vmatprep.subr.mxu0 0.0
        %3156 = vmatpush1.msra.mxu0 0.0
        %3157 = vmatprep.subr.mxu0 0.0
        %3158 = vmatpush1.msra.mxu0 0.0
        %3159 = vmatprep.subr.mxu0 0.0
        %3160 = vmatpush1.msra.mxu0 0.0
        %3161 = vmatprep.subr.mxu0 0.0
        %3162 = vmatpush1.msra.mxu0 0.0
        %3163 = vmatprep.subr.mxu0 0.0
        %3164 = vmatpush1.msra.mxu0 0.0
        %3165 = vmatprep.subr.mxu0 0.0
        %3166 = vmatpush1.msra.mxu0 0.0
        %3167 = vmatprep.subr.mxu0 0.0
        %3168 = vmatpush1.msra.mxu0 0.0
        %3169 = vmatprep.subr.mxu0 0.0
        %3170 = vmatpush1.msra.mxu0 0.0
        %3171 = vmatprep.subr.mxu0 0.0
        %3172 = vmatpush1.msra.mxu0 0.0
        %3173 = vmatprep.subr.mxu0 0.0
        %3174 = vmatpush1.msra.mxu0 0.0
        %3175 = vmatprep.subr.mxu0 0.0
        %3176 = vmatpush1.msra.mxu0 0.0
        %3177 = vmatprep.subr.mxu0 0.0
        %3178 = vmatpush1.msra.mxu0 0.0
        %3179 = vmatprep.subr.mxu0 0.0
        %3180 = vmatpush1.msra.mxu0 0.0
        %3181 = vmatprep.mubr.f32.mxu0 0.0
        %3182 = vmatmul.mubr.f32.gmra.mrb[0].mxu0 %v3022
        %v3183 = vpop.f32.mrb[0].mxu0
        %v3184 = vadd.f32 %v3020, %v3183
        %v3185 = vpop.f32.mrb[0].mxu0
        %3186 = vmatprep.mubr.f32.mxu0 0.0
        %3187 = vmatmul.mubr.f32.gmra.mrb[0].mxu0 %v3025
        %v3188 = vpop.f32.mrb[0].mxu0
        %v3189 = vadd.f32 %v3020, %v3188
        %v3190 = vpop.f32.mrb[0].mxu0
        %3191 = vmatprep.mubr.f32.mxu0 0.0
        %3192 = vmatmul.mubr.f32.gmra.mrb[0].mxu0 %v3028
        %v3193 = vpop.f32.mrb[0].mxu0
        %v3194 = vadd.f32 %v3020, %v3193
        %v3195 = vpop.f32.mrb[0].mxu0
        %3196 = vmatprep.mubr.f32.mxu0 0.0
        %3197 = vmatmul.mubr.f32.gmra.mrb[0].mxu0 %v3031
        %v3198 = vpop.f32.mrb[0].mxu0
        %v3199 = vadd.f32 %v3020, %v3198
        %v3200 = vpop.f32.mrb[0].mxu0
        %3201 = vmatprep.mubr.f32.mxu0 0.0
        %3202 = vmatmul.mubr.f32.gmra.mrb[0].mxu0 %v3034
        %v3203 = vpop.f32.mrb[0].mxu0
        %v3204 = vadd.f32 %v3020, %v3203
        %v3205 = vpop.f32.mrb[0].mxu0
        %3206 = vmatprep.mubr.f32.mxu0 0.0
        %3207 = vmatmul.mubr.f32.gmra.mrb[0].mxu0 %v3037
        %v3208 = vpop.f32.mrb[0].mxu0
        %v3209 = vadd.f32 %v3020, %v3208
        %v3210 = vpop.f32.mrb[0].mxu0
        %3211 = vmatprep.mubr.f32.mxu0 0.0
        %3212 = vmatmul.mubr.f32.gmra.mrb[0].mxu0 %v3040
        %v3213 = vpop.f32.mrb[0].mxu0
        %v3214 = vadd.f32 %v3020, %v3213
        %v3215 = vpop.f32.mrb[0].mxu0
        %3216 = vmatprep.mubr.f32.mxu0 0.0
        %3217 = vmatmul.mubr.f32.gmra.mrb[0].mxu0 %v3043
        %v3218 = vpop.f32.mrb[0].mxu0
        %v3219 = vadd.f32 %v3020, %v3218
        %v3220 = vpop.f32.mrb[0].mxu0
        %3221 = vmatprep.mubr.f32.mxu0 0.0
        %3222 = vmatmul.mubr.f32.gmra.mrb[0].mxu0 %v3046
        %v3223 = vpop.f32.mrb[0].mxu0
        %v3224 = vadd.f32 %v3020, %v3223
        %v3225 = vpop.f32.mrb[0].mxu0
        %3226 = vmatprep.mubr.f32.mxu0 0.0
        %3227 = vmatmul.mubr.f32.gmra.mrb[0].mxu0 %v3049
        %v3228 = vpop.f32.mrb[0].mxu0
        %v3229 = vadd.f32 %v3020, %v3228
        %v3230 = vpop.f32.mrb[0].mxu0
        %3231 = vmatprep.mubr.f32.mxu0 0.0
        %3232 = vmatmul.mubr.f32.gmra.mrb[0].mxu0 %v3052
        %v3233 = vpop.f32.mrb[0].mxu0
        %v3234 = vadd.f32 %v3020, %v3233
        %v3235 = vpop.f32.mrb[0].mxu0
        %3236 = vmatprep.mubr.f32.mxu0 0.0
        %3237 = vmatmul.mubr.f32.gmra.mrb[0].mxu0 %v3055
        %v3238 = vpop.f32.mrb[0].mxu0
        %v3239 = vadd.f32 %v3020, %v3238
        %v3240 = vpop.f32.mrb[0].mxu0
        %3241 = vmatprep.mubr.f32.mxu0 0.0
        %3242 = vmatmul.mubr.f32.gmra.mrb[0].mxu0 %v3058
        %v3243 = vpop.f32.mrb[0].mxu0
        %v3244 = vadd.f32 %v3020, %v3243
        %v3245 = vpop.f32.mrb[0].mxu0
        %3246 = vmatprep.mubr.f32.mxu0 0.0
        %3247 = vmatmul.mubr.f32.gmra.mrb[0].mxu0 %v3061
        %v3248 = vpop.f32.mrb[0].mxu0
        %v3249 = vadd.f32 %v3020, %v3248
        %v3250 = vpop.f32.mrb[0].mxu0
        %3251 = vmatprep.mubr.f32.mxu0 0.0
        %3252 = vmatmul.mubr.f32.gmra.mrb[0].mxu0 %v3064
        %v3253 = vpop.f32.mrb[0].mxu0
        %v3254 = vadd.f32 %v3020, %v3253
        %v3255 = vpop.f32.mrb[0].mxu0
        %3256 = vmatprep.mubr.f32.mxu0 0.0
        %3257 = vmatmul.mubr.f32.gmra.mrb[0].mxu0 %v3067
        %v3258 = vpop.f32.mrb[0].mxu0
        %v3259 = vadd.f32 %v3020, %v3258
        %v3260 = vpop.f32.mrb[0].mxu0
        %3261 = vmatprep.mubr.f32.mxu0 0.0
        %3262 = vmatmul.mubr.f32.gmra.mrb[0].mxu0 %v3070
        %v3263 = vpop.f32.mrb[0].mxu0
        %v3264 = vadd.f32 %v3020, %v3263
        %v3265 = vpop.f32.mrb[0].mxu0
        %3266 = vmatprep.mubr.f32.mxu0 0.0
        %3267 = vmatmul.mubr.f32.gmra.mrb[0].mxu0 %v3073
        %v3268 = vpop.f32.mrb[0].mxu0
        %v3269 = vadd.f32 %v3020, %v3268
        %v3270 = vpop.f32.mrb[0].mxu0
        %3271 = vmatprep.mubr.f32.mxu0 0.0
        %3272 = vmatmul.mubr.f32.gmra.mrb[0].mxu0 %v3076
        %v3273 = vpop.f32.mrb[0].mxu0
        %v3274 = vadd.f32 %v3020, %v3273
        %v3275 = vpop.f32.mrb[0].mxu0
        %3276 = vmatprep.mubr.f32.mxu0 0.0
        %3277 = vmatmul.mubr.f32.gmra.mrb[0].mxu0 %v3079
        %v3278 = vpop.f32.mrb[0].mxu0
        %v3279 = vadd.f32 %v3020, %v3278
        %v3280 = vpop.f32.mrb[0].mxu0
        %3281 = vmatprep.mubr.f32.mxu0 0.0
        %3282 = vmatmul.mubr.f32.gmra.mrb[0].mxu0 %v3082
        %v3283 = vpop.f32.mrb[0].mxu0
        %v3284 = vadd.f32 %v3020, %v3283
        %v3285 = vpop.f32.mrb[0].mxu0
        %3286 = vmatprep.mubr.f32.mxu0 0.0
        %3287 = vmatmul.mubr.f32.gmra.mrb[0].mxu0 %v3085
        %v3288 = vpop.f32.mrb[0].mxu0
        %v3289 = vadd.f32 %v3020, %v3288
        %v3290 = vpop.f32.mrb[0].mxu0
        %3291 = vmatprep.mubr.f32.mxu0 0.0
        %3292 = vmatmul.mubr.f32.gmra.mrb[0].mxu0 %v3088
        %v3293 = vpop.f32.mrb[0].mxu0
        %v3294 = vadd.f32 %v3020, %v3293
        %v3295 = vpop.f32.mrb[0].mxu0
        %3296 = vmatprep.mubr.f32.mxu0 0.0
        %3297 = vmatmul.mubr.f32.gmra.mrb[0].mxu0 %v3091
        %v3298 = vpop.f32.mrb[0].mxu0
        %v3299 = vadd.f32 %v3020, %v3298
        %v3300 = vpop.f32.mrb[0].mxu0
        %3301 = vmatprep.mubr.f32.mxu0 0.0
        %3302 = vmatmul.mubr.f32.gmra.mrb[0].mxu0 %v3094
        %v3303 = vpop.f32.mrb[0].mxu0
        %v3304 = vadd.f32 %v3020, %v3303
        %v3305 = vpop.f32.mrb[0].mxu0
        %3306 = vmatprep.mubr.f32.mxu0 0.0
        %3307 = vmatmul.mubr.f32.gmra.mrb[0].mxu0 %v3097
        %v3308 = vpop.f32.mrb[0].mxu0
        %v3309 = vadd.f32 %v3020, %v3308
        %v3310 = vpop.f32.mrb[0].mxu0
        %3311 = vmatprep.mubr.f32.mxu0 0.0
        %3312 = vmatmul.mubr.f32.gmra.mrb[0].mxu0 %v3100
        %v3313 = vpop.f32.mrb[0].mxu0
        %v3314 = vadd.f32 %v3020, %v3313
        %v3315 = vpop.f32.mrb[0].mxu0
        %3316 = vmatprep.mubr.f32.mxu0 0.0
        %3317 = vmatmul.mubr.f32.gmra.mrb[0].mxu0 %v3103
        %v3318 = vpop.f32.mrb[0].mxu0
        %v3319 = vadd.f32 %v3020, %v3318
        %v3320 = vpop.f32.mrb[0].mxu0
        %3321 = vmatprep.mubr.f32.mxu0 0.0
        %3322 = vmatmul.mubr.f32.gmra.mrb[0].mxu0 %v3106
        %v3323 = vpop.f32.mrb[0].mxu0
        %v3324 = vadd.f32 %v3020, %v3323
        %v3325 = vpop.f32.mrb[0].mxu0
        %3326 = vmatprep.mubr.f32.mxu0 0.0
        %3327 = vmatmul.mubr.f32.gmra.mrb[0].mxu0 %v3109
        %v3328 = vpop.f32.mrb[0].mxu0
        %v3329 = vadd.f32 %v3020, %v3328
        %v3330 = vpop.f32.mrb[0].mxu0
        %3331 = vmatprep.mubr.f32.mxu0 0.0
        %3332 = vmatmul.mubr.f32.gmra.mrb[0].mxu0 %v3112
        %v3333 = vpop.f32.mrb[0].mxu0
        %v3334 = vadd.f32 %v3020, %v3333
        %v3335 = vpop.f32.mrb[0].mxu0
        %3336 = vmatprep.mubr.f32.mxu0 0.0
        %3337 = vmatmul.mubr.f32.gmra.mrb[0].mxu0 %v3115
        %v3338 = vpop.f32.mrb[0].mxu0
        %v3339 = vadd.f32 %v3020, %v3338
        %v3340 = vpop.f32.mrb[0].mxu0
        %3341 = vdwg.mxu0
        %v3342 = vxor.u32 %v3184, 2147483648
        %v3343 = vxor.u32 %v3189, 2147483648
        %v3344 = vxor.u32 %v3194, 2147483648
        %v3345 = vxor.u32 %v3199, 2147483648
        %v3346 = vxor.u32 %v3204, 2147483648
        %v3347 = vxor.u32 %v3209, 2147483648
        %v3348 = vxor.u32 %v3214, 2147483648
        %v3349 = vxor.u32 %v3219, 2147483648
        %v3350 = vxor.u32 %v3224, 2147483648
        %v3351 = vxor.u32 %v3229, 2147483648
        %v3352 = vxor.u32 %v3234, 2147483648
        %v3353 = vxor.u32 %v3239, 2147483648
        %v3354 = vxor.u32 %v3244, 2147483648
        %v3355 = vxor.u32 %v3249, 2147483648
        %v3356 = vxor.u32 %v3254, 2147483648
        %v3357 = vxor.u32 %v3259, 2147483648
        %v3358 = vxor.u32 %v3264, 2147483648
        %v3359 = vxor.u32 %v3269, 2147483648
        %v3360 = vxor.u32 %v3274, 2147483648
        %v3361 = vxor.u32 %v3279, 2147483648
        %v3362 = vxor.u32 %v3284, 2147483648
        %v3363 = vxor.u32 %v3289, 2147483648
        %v3364 = vxor.u32 %v3294, 2147483648
        %v3365 = vxor.u32 %v3299, 2147483648
        %v3366 = vxor.u32 %v3304, 2147483648
        %v3367 = vxor.u32 %v3309, 2147483648
        %v3368 = vxor.u32 %v3314, 2147483648
        %v3369 = vxor.u32 %v3319, 2147483648
        %v3370 = vxor.u32 %v3324, 2147483648
        %v3371 = vxor.u32 %v3329, 2147483648
        %v3372 = vxor.u32 %v3334, 2147483648
        %v3373 = vxor.u32 %v3339, 2147483648
        %v3374 = vmul.f32 %v3342, 1.442695
        %v3375 = vpow.pop %v3374
        %v3376 = vmul.f32 %v3343, 1.442695
        %v3377 = vpow.pop %v3376
        %v3378 = vmul.f32 %v3344, 1.442695
        %v3379 = vpow.pop %v3378
        %v3380 = vmul.f32 %v3345, 1.442695
        %v3381 = vpow.pop %v3380
        %v3382 = vmul.f32 %v3346, 1.442695
        %v3383 = vpow.pop %v3382
        %v3384 = vmul.f32 %v3347, 1.442695
        %v3385 = vpow.pop %v3384
        %v3386 = vmul.f32 %v3348, 1.442695
        %v3387 = vpow.pop %v3386
        %v3388 = vmul.f32 %v3349, 1.442695
        %v3389 = vpow.pop %v3388
        %v3390 = vmul.f32 %v3350, 1.442695
        %v3391 = vpow.pop %v3390
        %v3392 = vmul.f32 %v3351, 1.442695
        %v3393 = vpow.pop %v3392
        %v3394 = vmul.f32 %v3352, 1.442695
        %v3395 = vpow.pop %v3394
        %v3396 = vmul.f32 %v3353, 1.442695
        %v3397 = vpow.pop %v3396
        %v3398 = vmul.f32 %v3354, 1.442695
        %v3399 = vpow.pop %v3398
        %v3400 = vmul.f32 %v3355, 1.442695
        %v3401 = vpow.pop %v3400
        %v3402 = vmul.f32 %v3356, 1.442695
        %v3403 = vpow.pop %v3402
        %v3404 = vmul.f32 %v3357, 1.442695
        %v3405 = vpow.pop %v3404
        %v3406 = vmul.f32 %v3358, 1.442695
        %v3407 = vpow.pop %v3406
        %v3408 = vmul.f32 %v3359, 1.442695
        %v3409 = vpow.pop %v3408
        %v3410 = vmul.f32 %v3360, 1.442695
        %v3411 = vpow.pop %v3410
        %v3412 = vmul.f32 %v3361, 1.442695
        %v3413 = vpow.pop %v3412
        %v3414 = vmul.f32 %v3362, 1.442695
        %v3415 = vpow.pop %v3414
        %v3416 = vmul.f32 %v3363, 1.442695
        %v3417 = vpow.pop %v3416
        %v3418 = vmul.f32 %v3364, 1.442695
        %v3419 = vpow.pop %v3418
        %v3420 = vmul.f32 %v3365, 1.442695
        %v3421 = vpow.pop %v3420
        %v3422 = vmul.f32 %v3366, 1.442695
        %v3423 = vpow.pop %v3422
        %v3424 = vmul.f32 %v3367, 1.442695
        %v3425 = vpow.pop %v3424
        %v3426 = vmul.f32 %v3368, 1.442695
        %v3427 = vpow.pop %v3426
        %v3428 = vmul.f32 %v3369, 1.442695
        %v3429 = vpow.pop %v3428
        %v3430 = vmul.f32 %v3370, 1.442695
        %v3431 = vpow.pop %v3430
        %v3432 = vmul.f32 %v3371, 1.442695
        %v3433 = vpow.pop %v3432
        %v3434 = vmul.f32 %v3372, 1.442695
        %v3435 = vpow.pop %v3434
        %v3436 = vmul.f32 %v3373, 1.442695
        %v3437 = vpow.pop %v3436
        %v3438 = vadd.f32 %v3375, 1.0
        %v3439 = vadd.f32 %v3377, 1.0
        %v3440 = vadd.f32 %v3379, 1.0
        %v3441 = vadd.f32 %v3381, 1.0
        %v3442 = vadd.f32 %v3383, 1.0
        %v3443 = vadd.f32 %v3385, 1.0
        %v3444 = vadd.f32 %v3387, 1.0
        %v3445 = vadd.f32 %v3389, 1.0
        %v3446 = vadd.f32 %v3391, 1.0
        %v3447 = vadd.f32 %v3393, 1.0
        %v3448 = vadd.f32 %v3395, 1.0
        %v3449 = vadd.f32 %v3397, 1.0
        %v3450 = vadd.f32 %v3399, 1.0
        %v3451 = vadd.f32 %v3401, 1.0
        %v3452 = vadd.f32 %v3403, 1.0
        %v3453 = vadd.f32 %v3405, 1.0
        %v3454 = vadd.f32 %v3407, 1.0
        %v3455 = vadd.f32 %v3409, 1.0
        %v3456 = vadd.f32 %v3411, 1.0
        %v3457 = vadd.f32 %v3413, 1.0
        %v3458 = vadd.f32 %v3415, 1.0
        %v3459 = vadd.f32 %v3417, 1.0
        %v3460 = vadd.f32 %v3419, 1.0
        %v3461 = vadd.f32 %v3421, 1.0
        %v3462 = vadd.f32 %v3423, 1.0
        %v3463 = vadd.f32 %v3425, 1.0
        %v3464 = vadd.f32 %v3427, 1.0
        %v3465 = vadd.f32 %v3429, 1.0
        %v3466 = vadd.f32 %v3431, 1.0
        %v3467 = vadd.f32 %v3433, 1.0
        %v3468 = vadd.f32 %v3435, 1.0
        %v3469 = vadd.f32 %v3437, 1.0
        %v3470 = vrcp.pop %v3438
        %v3471 = vmul.f32 1.0, %v3470
        %v3472 = vrcp.pop %v3439
        %v3473 = vmul.f32 1.0, %v3472
        %v3474 = vrcp.pop %v3440
        %v3475 = vmul.f32 1.0, %v3474
        %v3476 = vrcp.pop %v3441
        %v3477 = vmul.f32 1.0, %v3476
        %v3478 = vrcp.pop %v3442
        %v3479 = vmul.f32 1.0, %v3478
        %v3480 = vrcp.pop %v3443
        %v3481 = vmul.f32 1.0, %v3480
        %v3482 = vrcp.pop %v3444
        %v3483 = vmul.f32 1.0, %v3482
        %v3484 = vrcp.pop %v3445
        %v3485 = vmul.f32 1.0, %v3484
        %v3486 = vrcp.pop %v3446
        %v3487 = vmul.f32 1.0, %v3486
        %v3488 = vrcp.pop %v3447
        %v3489 = vmul.f32 1.0, %v3488
        %v3490 = vrcp.pop %v3448
        %v3491 = vmul.f32 1.0, %v3490
        %v3492 = vrcp.pop %v3449
        %v3493 = vmul.f32 1.0, %v3492
        %v3494 = vrcp.pop %v3450
        %v3495 = vmul.f32 1.0, %v3494
        %v3496 = vrcp.pop %v3451
        %v3497 = vmul.f32 1.0, %v3496
        %v3498 = vrcp.pop %v3452
        %v3499 = vmul.f32 1.0, %v3498
        %v3500 = vrcp.pop %v3453
        %v3501 = vmul.f32 1.0, %v3500
        %v3502 = vrcp.pop %v3454
        %v3503 = vmul.f32 1.0, %v3502
        %v3504 = vrcp.pop %v3455
        %v3505 = vmul.f32 1.0, %v3504
        %v3506 = vrcp.pop %v3456
        %v3507 = vmul.f32 1.0, %v3506
        %v3508 = vrcp.pop %v3457
        %v3509 = vmul.f32 1.0, %v3508
        %v3510 = vrcp.pop %v3458
        %v3511 = vmul.f32 1.0, %v3510
        %v3512 = vrcp.pop %v3459
        %v3513 = vmul.f32 1.0, %v3512
        %v3514 = vrcp.pop %v3460
        %v3515 = vmul.f32 1.0, %v3514
        %v3516 = vrcp.pop %v3461
        %v3517 = vmul.f32 1.0, %v3516
        %v3518 = vrcp.pop %v3462
        %v3519 = vmul.f32 1.0, %v3518
        %v3520 = vrcp.pop %v3463
        %v3521 = vmul.f32 1.0, %v3520
        %v3522 = vrcp.pop %v3464
        %v3523 = vmul.f32 1.0, %v3522
        %v3524 = vrcp.pop %v3465
        %v3525 = vmul.f32 1.0, %v3524
        %v3526 = vrcp.pop %v3466
        %v3527 = vmul.f32 1.0, %v3526
        %v3528 = vrcp.pop %v3467
        %v3529 = vmul.f32 1.0, %v3528
        %v3530 = vrcp.pop %v3468
        %v3531 = vmul.f32 1.0, %v3530
        %v3532 = vrcp.pop %v3469
        %v3533 = vmul.f32 1.0, %v3532
        %v3534 = vmul.f32 %v3184, %v3471
        %v3535 = vmul.f32 %v3189, %v3473
        %v3536 = vmul.f32 %v3194, %v3475
        %v3537 = vmul.f32 %v3199, %v3477
        %v3538 = vmul.f32 %v3204, %v3479
        %v3539 = vmul.f32 %v3209, %v3481
        %v3540 = vmul.f32 %v3214, %v3483
        %v3541 = vmul.f32 %v3219, %v3485
        %v3542 = vmul.f32 %v3224, %v3487
        %v3543 = vmul.f32 %v3229, %v3489
        %v3544 = vmul.f32 %v3234, %v3491
        %v3545 = vmul.f32 %v3239, %v3493
        %v3546 = vmul.f32 %v3244, %v3495
        %v3547 = vmul.f32 %v3249, %v3497
        %v3548 = vmul.f32 %v3254, %v3499
        %v3549 = vmul.f32 %v3259, %v3501
        %v3550 = vmul.f32 %v3264, %v3503
        %v3551 = vmul.f32 %v3269, %v3505
        %v3552 = vmul.f32 %v3274, %v3507
        %v3553 = vmul.f32 %v3279, %v3509
        %v3554 = vmul.f32 %v3284, %v3511
        %v3555 = vmul.f32 %v3289, %v3513
        %v3556 = vmul.f32 %v3294, %v3515
        %v3557 = vmul.f32 %v3299, %v3517
        %v3558 = vmul.f32 %v3304, %v3519
        %v3559 = vmul.f32 %v3309, %v3521
        %v3560 = vmul.f32 %v3314, %v3523
        %v3561 = vmul.f32 %v3319, %v3525
        %v3562 = vmul.f32 %v3324, %v3527
        %v3563 = vmul.f32 %v3329, %v3529
        %v3564 = vmul.f32 %v3334, %v3531
        %v3565 = vmul.f32 %v3339, %v3533
        %v3566 = vlaneseq
        %v3567 = vshrl.u32 %v3566, 7
        %v3568 = vsub.s32 0, %v3567
        %v3569 = vrot.slane %v3007, %v3568
        %v3571 = vsel %vm461, %v3534, 0
        %v3574 = vsel %vm461, %v3535, 0
        %v3577 = vsel %vm461, %v3536, 0
        %v3580 = vsel %vm461, %v3537, 0
        %v3583 = vsel %vm461, %v3538, 0
        %v3586 = vsel %vm461, %v3539, 0
        %v3589 = vsel %vm461, %v3540, 0
        %v3592 = vsel %vm461, %v3541, 0
        %v3595 = vsel %vm461, %v3542, 0
        %v3598 = vsel %vm461, %v3543, 0
        %v3601 = vsel %vm461, %v3544, 0
        %v3604 = vsel %vm461, %v3545, 0
        %v3607 = vsel %vm461, %v3546, 0
        %v3610 = vsel %vm461, %v3547, 0
        %v3613 = vsel %vm461, %v3548, 0
        %v3616 = vsel %vm461, %v3549, 0
        %v3619 = vsel %vm461, %v3550, 0
        %v3622 = vsel %vm461, %v3551, 0
        %v3625 = vsel %vm461, %v3552, 0
        %v3628 = vsel %vm461, %v3553, 0
        %v3631 = vsel %vm461, %v3554, 0
        %v3634 = vsel %vm461, %v3555, 0
        %v3637 = vsel %vm461, %v3556, 0
        %v3640 = vsel %vm461, %v3557, 0
        %v3643 = vsel %vm461, %v3558, 0
        %v3646 = vsel %vm461, %v3559, 0
        %v3649 = vsel %vm461, %v3560, 0
        %v3652 = vsel %vm461, %v3561, 0
        %v3655 = vsel %vm461, %v3562, 0
        %v3658 = vsel %vm461, %v3563, 0
        %v3661 = vsel %vm461, %v3564, 0
        %v3664 = vsel %vm461, %v3565, 0
        %3666 = vmatprep.subr.mxu0 0.0
        %3667 = vmatpush1.msra.mxu0 %v273
        %3668 = vmatprep.subr.mxu0 0.0
        %3669 = vmatpush1.msra.mxu0 %v274
        %3670 = vmatprep.subr.mxu0 0.0
        %3671 = vmatpush1.msra.mxu0 %v275
        %3672 = vmatprep.subr.mxu0 0.0
        %3673 = vmatpush1.msra.mxu0 %v276
        %3674 = vmatprep.subr.mxu0 0.0
        %3675 = vmatpush1.msra.mxu0 %v277
        %3676 = vmatprep.subr.mxu0 0.0
        %3677 = vmatpush1.msra.mxu0 %v278
        %3678 = vmatprep.subr.mxu0 0.0
        %3679 = vmatpush1.msra.mxu0 %v279
        %3680 = vmatprep.subr.mxu0 0.0
        %3681 = vmatpush1.msra.mxu0 %v280
        %3682 = vmatprep.subr.mxu0 0.0
        %3683 = vmatpush1.msra.mxu0 0.0
        %3684 = vmatprep.subr.mxu0 0.0
        %3685 = vmatpush1.msra.mxu0 0.0
        %3686 = vmatprep.subr.mxu0 0.0
        %3687 = vmatpush1.msra.mxu0 0.0
        %3688 = vmatprep.subr.mxu0 0.0
        %3689 = vmatpush1.msra.mxu0 0.0
        %3690 = vmatprep.subr.mxu0 0.0
        %3691 = vmatpush1.msra.mxu0 0.0
        %3692 = vmatprep.subr.mxu0 0.0
        %3693 = vmatpush1.msra.mxu0 0.0
        %3694 = vmatprep.subr.mxu0 0.0
        %3695 = vmatpush1.msra.mxu0 0.0
        %3696 = vmatprep.subr.mxu0 0.0
        %3697 = vmatpush1.msra.mxu0 0.0
        %3698 = vmatprep.subr.mxu0 0.0
        %3699 = vmatpush1.msra.mxu0 0.0
        %3700 = vmatprep.subr.mxu0 0.0
        %3701 = vmatpush1.msra.mxu0 0.0
        %3702 = vmatprep.subr.mxu0 0.0
        %3703 = vmatpush1.msra.mxu0 0.0
        %3704 = vmatprep.subr.mxu0 0.0
        %3705 = vmatpush1.msra.mxu0 0.0
        %3706 = vmatprep.subr.mxu0 0.0
        %3707 = vmatpush1.msra.mxu0 0.0
        %3708 = vmatprep.subr.mxu0 0.0
        %3709 = vmatpush1.msra.mxu0 0.0
        %3710 = vmatprep.subr.mxu0 0.0
        %3711 = vmatpush1.msra.mxu0 0.0
        %3712 = vmatprep.subr.mxu0 0.0
        %3713 = vmatpush1.msra.mxu0 0.0
        %3714 = vmatprep.subr.mxu0 0.0
        %3715 = vmatpush1.msra.mxu0 0.0
        %3716 = vmatprep.subr.mxu0 0.0
        %3717 = vmatpush1.msra.mxu0 0.0
        %3718 = vmatprep.subr.mxu0 0.0
        %3719 = vmatpush1.msra.mxu0 0.0
        %3720 = vmatprep.subr.mxu0 0.0
        %3721 = vmatpush1.msra.mxu0 0.0
        %3722 = vmatprep.subr.mxu0 0.0
        %3723 = vmatpush1.msra.mxu0 0.0
        %3724 = vmatprep.subr.mxu0 0.0
        %3725 = vmatpush1.msra.mxu0 0.0
        %3726 = vmatprep.subr.mxu0 0.0
        %3727 = vmatpush1.msra.mxu0 0.0
        %3728 = vmatprep.subr.mxu0 0.0
        %3729 = vmatpush1.msra.mxu0 0.0
        %3730 = vmatprep.mubr.f32.mxu0 0.0
        %3731 = vmatmul.mubr.f32.gmra.mrb[0].mxu0 %v3571
        %v3732 = vpop.f32.mrb[0].mxu0
        %v3733 = vadd.f32 %v3569, %v3732
        %v3734 = vpop.f32.mrb[0].mxu0
        %3735 = vmatprep.mubr.f32.mxu0 0.0
        %3736 = vmatmul.mubr.f32.gmra.mrb[0].mxu0 %v3574
        %v3737 = vpop.f32.mrb[0].mxu0
        %v3738 = vadd.f32 %v3569, %v3737
        %v3739 = vpop.f32.mrb[0].mxu0
        %3740 = vmatprep.mubr.f32.mxu0 0.0
        %3741 = vmatmul.mubr.f32.gmra.mrb[0].mxu0 %v3577
        %v3742 = vpop.f32.mrb[0].mxu0
        %v3743 = vadd.f32 %v3569, %v3742
        %v3744 = vpop.f32.mrb[0].mxu0
        %3745 = vmatprep.mubr.f32.mxu0 0.0
        %3746 = vmatmul.mubr.f32.gmra.mrb[0].mxu0 %v3580
        %v3747 = vpop.f32.mrb[0].mxu0
        %v3748 = vadd.f32 %v3569, %v3747
        %v3749 = vpop.f32.mrb[0].mxu0
        %3750 = vmatprep.mubr.f32.mxu0 0.0
        %3751 = vmatmul.mubr.f32.gmra.mrb[0].mxu0 %v3583
        %v3752 = vpop.f32.mrb[0].mxu0
        %v3753 = vadd.f32 %v3569, %v3752
        %v3754 = vpop.f32.mrb[0].mxu0
        %3755 = vmatprep.mubr.f32.mxu0 0.0
        %3756 = vmatmul.mubr.f32.gmra.mrb[0].mxu0 %v3586
        %v3757 = vpop.f32.mrb[0].mxu0
        %v3758 = vadd.f32 %v3569, %v3757
        %v3759 = vpop.f32.mrb[0].mxu0
        %3760 = vmatprep.mubr.f32.mxu0 0.0
        %3761 = vmatmul.mubr.f32.gmra.mrb[0].mxu0 %v3589
        %v3762 = vpop.f32.mrb[0].mxu0
        %v3763 = vadd.f32 %v3569, %v3762
        %v3764 = vpop.f32.mrb[0].mxu0
        %3765 = vmatprep.mubr.f32.mxu0 0.0
        %3766 = vmatmul.mubr.f32.gmra.mrb[0].mxu0 %v3592
        %v3767 = vpop.f32.mrb[0].mxu0
        %v3768 = vadd.f32 %v3569, %v3767
        %v3769 = vpop.f32.mrb[0].mxu0
        %3770 = vmatprep.mubr.f32.mxu0 0.0
        %3771 = vmatmul.mubr.f32.gmra.mrb[0].mxu0 %v3595
        %v3772 = vpop.f32.mrb[0].mxu0
        %v3773 = vadd.f32 %v3569, %v3772
        %v3774 = vpop.f32.mrb[0].mxu0
        %3775 = vmatprep.mubr.f32.mxu0 0.0
        %3776 = vmatmul.mubr.f32.gmra.mrb[0].mxu0 %v3598
        %v3777 = vpop.f32.mrb[0].mxu0
        %v3778 = vadd.f32 %v3569, %v3777
        %v3779 = vpop.f32.mrb[0].mxu0
        %3780 = vmatprep.mubr.f32.mxu0 0.0
        %3781 = vmatmul.mubr.f32.gmra.mrb[0].mxu0 %v3601
        %v3782 = vpop.f32.mrb[0].mxu0
        %v3783 = vadd.f32 %v3569, %v3782
        %v3784 = vpop.f32.mrb[0].mxu0
        %3785 = vmatprep.mubr.f32.mxu0 0.0
        %3786 = vmatmul.mubr.f32.gmra.mrb[0].mxu0 %v3604
        %v3787 = vpop.f32.mrb[0].mxu0
        %v3788 = vadd.f32 %v3569, %v3787
        %v3789 = vpop.f32.mrb[0].mxu0
        %3790 = vmatprep.mubr.f32.mxu0 0.0
        %3791 = vmatmul.mubr.f32.gmra.mrb[0].mxu0 %v3607
        %v3792 = vpop.f32.mrb[0].mxu0
        %v3793 = vadd.f32 %v3569, %v3792
        %v3794 = vpop.f32.mrb[0].mxu0
        %3795 = vmatprep.mubr.f32.mxu0 0.0
        %3796 = vmatmul.mubr.f32.gmra.mrb[0].mxu0 %v3610
        %v3797 = vpop.f32.mrb[0].mxu0
        %v3798 = vadd.f32 %v3569, %v3797
        %v3799 = vpop.f32.mrb[0].mxu0
        %3800 = vmatprep.mubr.f32.mxu0 0.0
        %3801 = vmatmul.mubr.f32.gmra.mrb[0].mxu0 %v3613
        %v3802 = vpop.f32.mrb[0].mxu0
        %v3803 = vadd.f32 %v3569, %v3802
        %v3804 = vpop.f32.mrb[0].mxu0
        %3805 = vmatprep.mubr.f32.mxu0 0.0
        %3806 = vmatmul.mubr.f32.gmra.mrb[0].mxu0 %v3616
        %v3807 = vpop.f32.mrb[0].mxu0
        %v3808 = vadd.f32 %v3569, %v3807
        %v3809 = vpop.f32.mrb[0].mxu0
        %3810 = vmatprep.mubr.f32.mxu0 0.0
        %3811 = vmatmul.mubr.f32.gmra.mrb[0].mxu0 %v3619
        %v3812 = vpop.f32.mrb[0].mxu0
        %v3813 = vadd.f32 %v3569, %v3812
        %v3814 = vpop.f32.mrb[0].mxu0
        %3815 = vmatprep.mubr.f32.mxu0 0.0
        %3816 = vmatmul.mubr.f32.gmra.mrb[0].mxu0 %v3622
        %v3817 = vpop.f32.mrb[0].mxu0
        %v3818 = vadd.f32 %v3569, %v3817
        %v3819 = vpop.f32.mrb[0].mxu0
        %3820 = vmatprep.mubr.f32.mxu0 0.0
        %3821 = vmatmul.mubr.f32.gmra.mrb[0].mxu0 %v3625
        %v3822 = vpop.f32.mrb[0].mxu0
        %v3823 = vadd.f32 %v3569, %v3822
        %v3824 = vpop.f32.mrb[0].mxu0
        %3825 = vmatprep.mubr.f32.mxu0 0.0
        %3826 = vmatmul.mubr.f32.gmra.mrb[0].mxu0 %v3628
        %v3827 = vpop.f32.mrb[0].mxu0
        %v3828 = vadd.f32 %v3569, %v3827
        %v3829 = vpop.f32.mrb[0].mxu0
        %3830 = vmatprep.mubr.f32.mxu0 0.0
        %3831 = vmatmul.mubr.f32.gmra.mrb[0].mxu0 %v3631
        %v3832 = vpop.f32.mrb[0].mxu0
        %v3833 = vadd.f32 %v3569, %v3832
        %v3834 = vpop.f32.mrb[0].mxu0
        %3835 = vmatprep.mubr.f32.mxu0 0.0
        %3836 = vmatmul.mubr.f32.gmra.mrb[0].mxu0 %v3634
        %v3837 = vpop.f32.mrb[0].mxu0
        %v3838 = vadd.f32 %v3569, %v3837
        %v3839 = vpop.f32.mrb[0].mxu0
        %3840 = vmatprep.mubr.f32.mxu0 0.0
        %3841 = vmatmul.mubr.f32.gmra.mrb[0].mxu0 %v3637
        %v3842 = vpop.f32.mrb[0].mxu0
        %v3843 = vadd.f32 %v3569, %v3842
        %v3844 = vpop.f32.mrb[0].mxu0
        %3845 = vmatprep.mubr.f32.mxu0 0.0
        %3846 = vmatmul.mubr.f32.gmra.mrb[0].mxu0 %v3640
        %v3847 = vpop.f32.mrb[0].mxu0
        %v3848 = vadd.f32 %v3569, %v3847
        %v3849 = vpop.f32.mrb[0].mxu0
        %3850 = vmatprep.mubr.f32.mxu0 0.0
        %3851 = vmatmul.mubr.f32.gmra.mrb[0].mxu0 %v3643
        %v3852 = vpop.f32.mrb[0].mxu0
        %v3853 = vadd.f32 %v3569, %v3852
        %v3854 = vpop.f32.mrb[0].mxu0
        %3855 = vmatprep.mubr.f32.mxu0 0.0
        %3856 = vmatmul.mubr.f32.gmra.mrb[0].mxu0 %v3646
        %v3857 = vpop.f32.mrb[0].mxu0
        %v3858 = vadd.f32 %v3569, %v3857
        %v3859 = vpop.f32.mrb[0].mxu0
        %3860 = vmatprep.mubr.f32.mxu0 0.0
        %3861 = vmatmul.mubr.f32.gmra.mrb[0].mxu0 %v3649
        %v3862 = vpop.f32.mrb[0].mxu0
        %v3863 = vadd.f32 %v3569, %v3862
        %v3864 = vpop.f32.mrb[0].mxu0
        %3865 = vmatprep.mubr.f32.mxu0 0.0
        %3866 = vmatmul.mubr.f32.gmra.mrb[0].mxu0 %v3652
        %v3867 = vpop.f32.mrb[0].mxu0
        %v3868 = vadd.f32 %v3569, %v3867
        %v3869 = vpop.f32.mrb[0].mxu0
        %3870 = vmatprep.mubr.f32.mxu0 0.0
        %3871 = vmatmul.mubr.f32.gmra.mrb[0].mxu0 %v3655
        %v3872 = vpop.f32.mrb[0].mxu0
        %v3873 = vadd.f32 %v3569, %v3872
        %v3874 = vpop.f32.mrb[0].mxu0
        %3875 = vmatprep.mubr.f32.mxu0 0.0
        %3876 = vmatmul.mubr.f32.gmra.mrb[0].mxu0 %v3658
        %v3877 = vpop.f32.mrb[0].mxu0
        %v3878 = vadd.f32 %v3569, %v3877
        %v3879 = vpop.f32.mrb[0].mxu0
        %3880 = vmatprep.mubr.f32.mxu0 0.0
        %3881 = vmatmul.mubr.f32.gmra.mrb[0].mxu0 %v3661
        %v3882 = vpop.f32.mrb[0].mxu0
        %v3883 = vadd.f32 %v3569, %v3882
        %v3884 = vpop.f32.mrb[0].mxu0
        %3885 = vmatprep.mubr.f32.mxu0 0.0
        %3886 = vmatmul.mubr.f32.gmra.mrb[0].mxu0 %v3664
        %v3887 = vpop.f32.mrb[0].mxu0
        %v3888 = vadd.f32 %v3569, %v3887
        %v3889 = vpop.f32.mrb[0].mxu0
        %3890 = vdwg.mxu0
        %v3891 = vxor.u32 %v3733, 2147483648
        %v3892 = vxor.u32 %v3738, 2147483648
        %v3893 = vxor.u32 %v3743, 2147483648
        %v3894 = vxor.u32 %v3748, 2147483648
        %v3895 = vxor.u32 %v3753, 2147483648
        %v3896 = vxor.u32 %v3758, 2147483648
        %v3897 = vxor.u32 %v3763, 2147483648
        %v3898 = vxor.u32 %v3768, 2147483648
        %v3899 = vxor.u32 %v3773, 2147483648
        %v3900 = vxor.u32 %v3778, 2147483648
        %v3901 = vxor.u32 %v3783, 2147483648
        %v3902 = vxor.u32 %v3788, 2147483648
        %v3903 = vxor.u32 %v3793, 2147483648
        %v3904 = vxor.u32 %v3798, 2147483648
        %v3905 = vxor.u32 %v3803, 2147483648
        %v3906 = vxor.u32 %v3808, 2147483648
        %v3907 = vxor.u32 %v3813, 2147483648
        %v3908 = vxor.u32 %v3818, 2147483648
        %v3909 = vxor.u32 %v3823, 2147483648
        %v3910 = vxor.u32 %v3828, 2147483648
        %v3911 = vxor.u32 %v3833, 2147483648
        %v3912 = vxor.u32 %v3838, 2147483648
        %v3913 = vxor.u32 %v3843, 2147483648
        %v3914 = vxor.u32 %v3848, 2147483648
        %v3915 = vxor.u32 %v3853, 2147483648
        %v3916 = vxor.u32 %v3858, 2147483648
        %v3917 = vxor.u32 %v3863, 2147483648
        %v3918 = vxor.u32 %v3868, 2147483648
        %v3919 = vxor.u32 %v3873, 2147483648
        %v3920 = vxor.u32 %v3878, 2147483648
        %v3921 = vxor.u32 %v3883, 2147483648
        %v3922 = vxor.u32 %v3888, 2147483648
        %v3923 = vmul.f32 %v3891, 1.442695
        %v3924 = vpow.pop %v3923
        %v3925 = vmul.f32 %v3892, 1.442695
        %v3926 = vpow.pop %v3925
        %v3927 = vmul.f32 %v3893, 1.442695
        %v3928 = vpow.pop %v3927
        %v3929 = vmul.f32 %v3894, 1.442695
        %v3930 = vpow.pop %v3929
        %v3931 = vmul.f32 %v3895, 1.442695
        %v3932 = vpow.pop %v3931
        %v3933 = vmul.f32 %v3896, 1.442695
        %v3934 = vpow.pop %v3933
        %v3935 = vmul.f32 %v3897, 1.442695
        %v3936 = vpow.pop %v3935
        %v3937 = vmul.f32 %v3898, 1.442695
        %v3938 = vpow.pop %v3937
        %v3939 = vmul.f32 %v3899, 1.442695
        %v3940 = vpow.pop %v3939
        %v3941 = vmul.f32 %v3900, 1.442695
        %v3942 = vpow.pop %v3941
        %v3943 = vmul.f32 %v3901, 1.442695
        %v3944 = vpow.pop %v3943
        %v3945 = vmul.f32 %v3902, 1.442695
        %v3946 = vpow.pop %v3945
        %v3947 = vmul.f32 %v3903, 1.442695
        %v3948 = vpow.pop %v3947
        %v3949 = vmul.f32 %v3904, 1.442695
        %v3950 = vpow.pop %v3949
        %v3951 = vmul.f32 %v3905, 1.442695
        %v3952 = vpow.pop %v3951
        %v3953 = vmul.f32 %v3906, 1.442695
        %v3954 = vpow.pop %v3953
        %v3955 = vmul.f32 %v3907, 1.442695
        %v3956 = vpow.pop %v3955
        %v3957 = vmul.f32 %v3908, 1.442695
        %v3958 = vpow.pop %v3957
        %v3959 = vmul.f32 %v3909, 1.442695
        %v3960 = vpow.pop %v3959
        %v3961 = vmul.f32 %v3910, 1.442695
        %v3962 = vpow.pop %v3961
        %v3963 = vmul.f32 %v3911, 1.442695
        %v3964 = vpow.pop %v3963
        %v3965 = vmul.f32 %v3912, 1.442695
        %v3966 = vpow.pop %v3965
        %v3967 = vmul.f32 %v3913, 1.442695
        %v3968 = vpow.pop %v3967
        %v3969 = vmul.f32 %v3914, 1.442695
        %v3970 = vpow.pop %v3969
        %v3971 = vmul.f32 %v3915, 1.442695
        %v3972 = vpow.pop %v3971
        %v3973 = vmul.f32 %v3916, 1.442695
        %v3974 = vpow.pop %v3973
        %v3975 = vmul.f32 %v3917, 1.442695
        %v3976 = vpow.pop %v3975
        %v3977 = vmul.f32 %v3918, 1.442695
        %v3978 = vpow.pop %v3977
        %v3979 = vmul.f32 %v3919, 1.442695
        %v3980 = vpow.pop %v3979
        %v3981 = vmul.f32 %v3920, 1.442695
        %v3982 = vpow.pop %v3981
        %v3983 = vmul.f32 %v3921, 1.442695
        %v3984 = vpow.pop %v3983
        %v3985 = vmul.f32 %v3922, 1.442695
        %v3986 = vpow.pop %v3985
        %v3987 = vadd.f32 %v3924, 1.0
        %v3988 = vadd.f32 %v3926, 1.0
        %v3989 = vadd.f32 %v3928, 1.0
        %v3990 = vadd.f32 %v3930, 1.0
        %v3991 = vadd.f32 %v3932, 1.0
        %v3992 = vadd.f32 %v3934, 1.0
        %v3993 = vadd.f32 %v3936, 1.0
        %v3994 = vadd.f32 %v3938, 1.0
        %v3995 = vadd.f32 %v3940, 1.0
        %v3996 = vadd.f32 %v3942, 1.0
        %v3997 = vadd.f32 %v3944, 1.0
        %v3998 = vadd.f32 %v3946, 1.0
        %v3999 = vadd.f32 %v3948, 1.0
        %v4000 = vadd.f32 %v3950, 1.0
        %v4001 = vadd.f32 %v3952, 1.0
        %v4002 = vadd.f32 %v3954, 1.0
        %v4003 = vadd.f32 %v3956, 1.0
        %v4004 = vadd.f32 %v3958, 1.0
        %v4005 = vadd.f32 %v3960, 1.0
        %v4006 = vadd.f32 %v3962, 1.0
        %v4007 = vadd.f32 %v3964, 1.0
        %v4008 = vadd.f32 %v3966, 1.0
        %v4009 = vadd.f32 %v3968, 1.0
        %v4010 = vadd.f32 %v3970, 1.0
        %v4011 = vadd.f32 %v3972, 1.0
        %v4012 = vadd.f32 %v3974, 1.0
        %v4013 = vadd.f32 %v3976, 1.0
        %v4014 = vadd.f32 %v3978, 1.0
        %v4015 = vadd.f32 %v3980, 1.0
        %v4016 = vadd.f32 %v3982, 1.0
        %v4017 = vadd.f32 %v3984, 1.0
        %v4018 = vadd.f32 %v3986, 1.0
        %v4019 = vrcp.pop %v3987
        %v4020 = vmul.f32 1.0, %v4019
        %v4021 = vrcp.pop %v3988
        %v4022 = vmul.f32 1.0, %v4021
        %v4023 = vrcp.pop %v3989
        %v4024 = vmul.f32 1.0, %v4023
        %v4025 = vrcp.pop %v3990
        %v4026 = vmul.f32 1.0, %v4025
        %v4027 = vrcp.pop %v3991
        %v4028 = vmul.f32 1.0, %v4027
        %v4029 = vrcp.pop %v3992
        %v4030 = vmul.f32 1.0, %v4029
        %v4031 = vrcp.pop %v3993
        %v4032 = vmul.f32 1.0, %v4031
        %v4033 = vrcp.pop %v3994
        %v4034 = vmul.f32 1.0, %v4033
        %v4035 = vrcp.pop %v3995
        %v4036 = vmul.f32 1.0, %v4035
        %v4037 = vrcp.pop %v3996
        %v4038 = vmul.f32 1.0, %v4037
        %v4039 = vrcp.pop %v3997
        %v4040 = vmul.f32 1.0, %v4039
        %v4041 = vrcp.pop %v3998
        %v4042 = vmul.f32 1.0, %v4041
        %v4043 = vrcp.pop %v3999
        %v4044 = vmul.f32 1.0, %v4043
        %v4045 = vrcp.pop %v4000
        %v4046 = vmul.f32 1.0, %v4045
        %v4047 = vrcp.pop %v4001
        %v4048 = vmul.f32 1.0, %v4047
        %v4049 = vrcp.pop %v4002
        %v4050 = vmul.f32 1.0, %v4049
        %v4051 = vrcp.pop %v4003
        %v4052 = vmul.f32 1.0, %v4051
        %v4053 = vrcp.pop %v4004
        %v4054 = vmul.f32 1.0, %v4053
        %v4055 = vrcp.pop %v4005
        %v4056 = vmul.f32 1.0, %v4055
        %v4057 = vrcp.pop %v4006
        %v4058 = vmul.f32 1.0, %v4057
        %v4059 = vrcp.pop %v4007
        %v4060 = vmul.f32 1.0, %v4059
        %v4061 = vrcp.pop %v4008
        %v4062 = vmul.f32 1.0, %v4061
        %v4063 = vrcp.pop %v4009
        %v4064 = vmul.f32 1.0, %v4063
        %v4065 = vrcp.pop %v4010
        %v4066 = vmul.f32 1.0, %v4065
        %v4067 = vrcp.pop %v4011
        %v4068 = vmul.f32 1.0, %v4067
        %v4069 = vrcp.pop %v4012
        %v4070 = vmul.f32 1.0, %v4069
        %v4071 = vrcp.pop %v4013
        %v4072 = vmul.f32 1.0, %v4071
        %v4073 = vrcp.pop %v4014
        %v4074 = vmul.f32 1.0, %v4073
        %v4075 = vrcp.pop %v4015
        %v4076 = vmul.f32 1.0, %v4075
        %v4077 = vrcp.pop %v4016
        %v4078 = vmul.f32 1.0, %v4077
        %v4079 = vrcp.pop %v4017
        %v4080 = vmul.f32 1.0, %v4079
        %v4081 = vrcp.pop %v4018
        %v4082 = vmul.f32 1.0, %v4081
        %v4083 = vmul.f32 %v3733, %v4020
        %v4084 = vmul.f32 %v3738, %v4022
        %v4085 = vmul.f32 %v3743, %v4024
        %v4086 = vmul.f32 %v3748, %v4026
        %v4087 = vmul.f32 %v3753, %v4028
        %v4088 = vmul.f32 %v3758, %v4030
        %v4089 = vmul.f32 %v3763, %v4032
        %v4090 = vmul.f32 %v3768, %v4034
        %v4091 = vmul.f32 %v3773, %v4036
        %v4092 = vmul.f32 %v3778, %v4038
        %v4093 = vmul.f32 %v3783, %v4040
        %v4094 = vmul.f32 %v3788, %v4042
        %v4095 = vmul.f32 %v3793, %v4044
        %v4096 = vmul.f32 %v3798, %v4046
        %v4097 = vmul.f32 %v3803, %v4048
        %v4098 = vmul.f32 %v3808, %v4050
        %v4099 = vmul.f32 %v3813, %v4052
        %v4100 = vmul.f32 %v3818, %v4054
        %v4101 = vmul.f32 %v3823, %v4056
        %v4102 = vmul.f32 %v3828, %v4058
        %v4103 = vmul.f32 %v3833, %v4060
        %v4104 = vmul.f32 %v3838, %v4062
        %v4105 = vmul.f32 %v3843, %v4064
        %v4106 = vmul.f32 %v3848, %v4066
        %v4107 = vmul.f32 %v3853, %v4068
        %v4108 = vmul.f32 %v3858, %v4070
        %v4109 = vmul.f32 %v3863, %v4072
        %v4110 = vmul.f32 %v3868, %v4074
        %v4111 = vmul.f32 %v3873, %v4076
        %v4112 = vmul.f32 %v3878, %v4078
        %v4113 = vmul.f32 %v3883, %v4080
        %v4114 = vmul.f32 %v3888, %v4082
        %v4115 = vlaneseq
        %v4116 = vshrl.u32 %v4115, 7
        %v4117 = vsub.s32 0, %v4116
        %v4118 = vrot.slane %v3016, %v4117
        %v4120 = vsel %vm461, %v4083, 0
        %v4123 = vsel %vm461, %v4084, 0
        %v4126 = vsel %vm461, %v4085, 0
        %v4129 = vsel %vm461, %v4086, 0
        %v4132 = vsel %vm461, %v4087, 0
        %v4135 = vsel %vm461, %v4088, 0
        %v4138 = vsel %vm461, %v4089, 0
        %v4141 = vsel %vm461, %v4090, 0
        %v4144 = vsel %vm461, %v4091, 0
        %v4147 = vsel %vm461, %v4092, 0
        %v4150 = vsel %vm461, %v4093, 0
        %v4153 = vsel %vm461, %v4094, 0
        %v4156 = vsel %vm461, %v4095, 0
        %v4159 = vsel %vm461, %v4096, 0
        %v4162 = vsel %vm461, %v4097, 0
        %v4165 = vsel %vm461, %v4098, 0
        %v4168 = vsel %vm461, %v4099, 0
        %v4171 = vsel %vm461, %v4100, 0
        %v4174 = vsel %vm461, %v4101, 0
        %v4177 = vsel %vm461, %v4102, 0
        %v4180 = vsel %vm461, %v4103, 0
        %v4183 = vsel %vm461, %v4104, 0
        %v4186 = vsel %vm461, %v4105, 0
        %v4189 = vsel %vm461, %v4106, 0
        %v4192 = vsel %vm461, %v4107, 0
        %v4195 = vsel %vm461, %v4108, 0
        %v4198 = vsel %vm461, %v4109, 0
        %v4201 = vsel %vm461, %v4110, 0
        %v4204 = vsel %vm461, %v4111, 0
        %v4207 = vsel %vm461, %v4112, 0
        %v4210 = vsel %vm461, %v4113, 0
        %v4213 = vsel %vm461, %v4114, 0
        %4215 = vmatprep.subr.mxu0 0.0
        %4216 = vmatpush1.msra.mxu0 %v3008
        %4217 = vmatprep.subr.mxu0 0.0
        %4218 = vmatpush1.msra.mxu0 %v3009
        %4219 = vmatprep.subr.mxu0 0.0
        %4220 = vmatpush1.msra.mxu0 %v3010
        %4221 = vmatprep.subr.mxu0 0.0
        %4222 = vmatpush1.msra.mxu0 %v3011
        %4223 = vmatprep.subr.mxu0 0.0
        %4224 = vmatpush1.msra.mxu0 %v3012
        %4225 = vmatprep.subr.mxu0 0.0
        %4226 = vmatpush1.msra.mxu0 %v3013
        %4227 = vmatprep.subr.mxu0 0.0
        %4228 = vmatpush1.msra.mxu0 %v3014
        %4229 = vmatprep.subr.mxu0 0.0
        %4230 = vmatpush1.msra.mxu0 %v3015
        %4231 = vmatprep.subr.mxu0 0.0
        %4232 = vmatpush1.msra.mxu0 0.0
        %4233 = vmatprep.subr.mxu0 0.0
        %4234 = vmatpush1.msra.mxu0 0.0
        %4235 = vmatprep.subr.mxu0 0.0
        %4236 = vmatpush1.msra.mxu0 0.0
        %4237 = vmatprep.subr.mxu0 0.0
        %4238 = vmatpush1.msra.mxu0 0.0
        %4239 = vmatprep.subr.mxu0 0.0
        %4240 = vmatpush1.msra.mxu0 0.0
        %4241 = vmatprep.subr.mxu0 0.0
        %4242 = vmatpush1.msra.mxu0 0.0
        %4243 = vmatprep.subr.mxu0 0.0
        %4244 = vmatpush1.msra.mxu0 0.0
        %4245 = vmatprep.subr.mxu0 0.0
        %4246 = vmatpush1.msra.mxu0 0.0
        %4247 = vmatprep.subr.mxu0 0.0
        %4248 = vmatpush1.msra.mxu0 0.0
        %4249 = vmatprep.subr.mxu0 0.0
        %4250 = vmatpush1.msra.mxu0 0.0
        %4251 = vmatprep.subr.mxu0 0.0
        %4252 = vmatpush1.msra.mxu0 0.0
        %4253 = vmatprep.subr.mxu0 0.0
        %4254 = vmatpush1.msra.mxu0 0.0
        %4255 = vmatprep.subr.mxu0 0.0
        %4256 = vmatpush1.msra.mxu0 0.0
        %4257 = vmatprep.subr.mxu0 0.0
        %4258 = vmatpush1.msra.mxu0 0.0
        %4259 = vmatprep.subr.mxu0 0.0
        %4260 = vmatpush1.msra.mxu0 0.0
        %4261 = vmatprep.subr.mxu0 0.0
        %4262 = vmatpush1.msra.mxu0 0.0
        %4263 = vmatprep.subr.mxu0 0.0
        %4264 = vmatpush1.msra.mxu0 0.0
        %4265 = vmatprep.subr.mxu0 0.0
        %4266 = vmatpush1.msra.mxu0 0.0
        %4267 = vmatprep.subr.mxu0 0.0
        %4268 = vmatpush1.msra.mxu0 0.0
        %4269 = vmatprep.subr.mxu0 0.0
        %4270 = vmatpush1.msra.mxu0 0.0
        %4271 = vmatprep.subr.mxu0 0.0
        %4272 = vmatpush1.msra.mxu0 0.0
        %4273 = vmatprep.subr.mxu0 0.0
        %4274 = vmatpush1.msra.mxu0 0.0
        %4275 = vmatprep.subr.mxu0 0.0
        %4276 = vmatpush1.msra.mxu0 0.0
        %4277 = vmatprep.subr.mxu0 0.0
        %4278 = vmatpush1.msra.mxu0 0.0
        %4279 = vmatprep.mubr.f32.mxu0 0.0
        %4280 = vmatmul.mubr.f32.gmra.mrb[0].mxu0 %v4120
        %v4281 = vpop.f32.mrb[0].mxu0
        %v4282 = vadd.f32 %v4118, %v4281
        %v4283 = vpop.f32.mrb[0].mxu0
        %4284 = vmatprep.mubr.f32.mxu0 0.0
        %4285 = vmatmul.mubr.f32.gmra.mrb[0].mxu0 %v4123
        %v4286 = vpop.f32.mrb[0].mxu0
        %v4287 = vadd.f32 %v4118, %v4286
        %v4288 = vpop.f32.mrb[0].mxu0
        %4289 = vmatprep.mubr.f32.mxu0 0.0
        %4290 = vmatmul.mubr.f32.gmra.mrb[0].mxu0 %v4126
        %v4291 = vpop.f32.mrb[0].mxu0
        %v4292 = vadd.f32 %v4118, %v4291
        %v4293 = vpop.f32.mrb[0].mxu0
        %4294 = vmatprep.mubr.f32.mxu0 0.0
        %4295 = vmatmul.mubr.f32.gmra.mrb[0].mxu0 %v4129
        %v4296 = vpop.f32.mrb[0].mxu0
        %v4297 = vadd.f32 %v4118, %v4296
        %v4298 = vpop.f32.mrb[0].mxu0
        %4299 = vmatprep.mubr.f32.mxu0 0.0
        %4300 = vmatmul.mubr.f32.gmra.mrb[0].mxu0 %v4132
        %v4301 = vpop.f32.mrb[0].mxu0
        %v4302 = vadd.f32 %v4118, %v4301
        %v4303 = vpop.f32.mrb[0].mxu0
        %4304 = vmatprep.mubr.f32.mxu0 0.0
        %4305 = vmatmul.mubr.f32.gmra.mrb[0].mxu0 %v4135
        %v4306 = vpop.f32.mrb[0].mxu0
        %v4307 = vadd.f32 %v4118, %v4306
        %v4308 = vpop.f32.mrb[0].mxu0
        %4309 = vmatprep.mubr.f32.mxu0 0.0
        %4310 = vmatmul.mubr.f32.gmra.mrb[0].mxu0 %v4138
        %v4311 = vpop.f32.mrb[0].mxu0
        %v4312 = vadd.f32 %v4118, %v4311
        %v4313 = vpop.f32.mrb[0].mxu0
        %4314 = vmatprep.mubr.f32.mxu0 0.0
        %4315 = vmatmul.mubr.f32.gmra.mrb[0].mxu0 %v4141
        %v4316 = vpop.f32.mrb[0].mxu0
        %v4317 = vadd.f32 %v4118, %v4316
        %v4318 = vpop.f32.mrb[0].mxu0
        %4319 = vmatprep.mubr.f32.mxu0 0.0
        %4320 = vmatmul.mubr.f32.gmra.mrb[0].mxu0 %v4144
        %v4321 = vpop.f32.mrb[0].mxu0
        %v4322 = vadd.f32 %v4118, %v4321
        %v4323 = vpop.f32.mrb[0].mxu0
        %4324 = vmatprep.mubr.f32.mxu0 0.0
        %4325 = vmatmul.mubr.f32.gmra.mrb[0].mxu0 %v4147
        %v4326 = vpop.f32.mrb[0].mxu0
        %v4327 = vadd.f32 %v4118, %v4326
        %v4328 = vpop.f32.mrb[0].mxu0
        %4329 = vmatprep.mubr.f32.mxu0 0.0
        %4330 = vmatmul.mubr.f32.gmra.mrb[0].mxu0 %v4150
        %v4331 = vpop.f32.mrb[0].mxu0
        %v4332 = vadd.f32 %v4118, %v4331
        %v4333 = vpop.f32.mrb[0].mxu0
        %4334 = vmatprep.mubr.f32.mxu0 0.0
        %4335 = vmatmul.mubr.f32.gmra.mrb[0].mxu0 %v4153
        %v4336 = vpop.f32.mrb[0].mxu0
        %v4337 = vadd.f32 %v4118, %v4336
        %v4338 = vpop.f32.mrb[0].mxu0
        %4339 = vmatprep.mubr.f32.mxu0 0.0
        %4340 = vmatmul.mubr.f32.gmra.mrb[0].mxu0 %v4156
        %v4341 = vpop.f32.mrb[0].mxu0
        %v4342 = vadd.f32 %v4118, %v4341
        %v4343 = vpop.f32.mrb[0].mxu0
        %4344 = vmatprep.mubr.f32.mxu0 0.0
        %4345 = vmatmul.mubr.f32.gmra.mrb[0].mxu0 %v4159
        %v4346 = vpop.f32.mrb[0].mxu0
        %v4347 = vadd.f32 %v4118, %v4346
        %v4348 = vpop.f32.mrb[0].mxu0
        %4349 = vmatprep.mubr.f32.mxu0 0.0
        %4350 = vmatmul.mubr.f32.gmra.mrb[0].mxu0 %v4162
        %v4351 = vpop.f32.mrb[0].mxu0
        %v4352 = vadd.f32 %v4118, %v4351
        %v4353 = vpop.f32.mrb[0].mxu0
        %4354 = vmatprep.mubr.f32.mxu0 0.0
        %4355 = vmatmul.mubr.f32.gmra.mrb[0].mxu0 %v4165
        %v4356 = vpop.f32.mrb[0].mxu0
        %v4357 = vadd.f32 %v4118, %v4356
        %v4358 = vpop.f32.mrb[0].mxu0
        %4359 = vmatprep.mubr.f32.mxu0 0.0
        %4360 = vmatmul.mubr.f32.gmra.mrb[0].mxu0 %v4168
        %v4361 = vpop.f32.mrb[0].mxu0
        %v4362 = vadd.f32 %v4118, %v4361
        %v4363 = vpop.f32.mrb[0].mxu0
        %4364 = vmatprep.mubr.f32.mxu0 0.0
        %4365 = vmatmul.mubr.f32.gmra.mrb[0].mxu0 %v4171
        %v4366 = vpop.f32.mrb[0].mxu0
        %v4367 = vadd.f32 %v4118, %v4366
        %v4368 = vpop.f32.mrb[0].mxu0
        %4369 = vmatprep.mubr.f32.mxu0 0.0
        %4370 = vmatmul.mubr.f32.gmra.mrb[0].mxu0 %v4174
        %v4371 = vpop.f32.mrb[0].mxu0
        %v4372 = vadd.f32 %v4118, %v4371
        %v4373 = vpop.f32.mrb[0].mxu0
        %4374 = vmatprep.mubr.f32.mxu0 0.0
        %4375 = vmatmul.mubr.f32.gmra.mrb[0].mxu0 %v4177
        %v4376 = vpop.f32.mrb[0].mxu0
        %v4377 = vadd.f32 %v4118, %v4376
        %v4378 = vpop.f32.mrb[0].mxu0
        %4379 = vmatprep.mubr.f32.mxu0 0.0
        %4380 = vmatmul.mubr.f32.gmra.mrb[0].mxu0 %v4180
        %v4381 = vpop.f32.mrb[0].mxu0
        %v4382 = vadd.f32 %v4118, %v4381
        %v4383 = vpop.f32.mrb[0].mxu0
        %4384 = vmatprep.mubr.f32.mxu0 0.0
        %4385 = vmatmul.mubr.f32.gmra.mrb[0].mxu0 %v4183
        %v4386 = vpop.f32.mrb[0].mxu0
        %v4387 = vadd.f32 %v4118, %v4386
        %v4388 = vpop.f32.mrb[0].mxu0
        %4389 = vmatprep.mubr.f32.mxu0 0.0
        %4390 = vmatmul.mubr.f32.gmra.mrb[0].mxu0 %v4186
        %v4391 = vpop.f32.mrb[0].mxu0
        %v4392 = vadd.f32 %v4118, %v4391
        %v4393 = vpop.f32.mrb[0].mxu0
        %4394 = vmatprep.mubr.f32.mxu0 0.0
        %4395 = vmatmul.mubr.f32.gmra.mrb[0].mxu0 %v4189
        %v4396 = vpop.f32.mrb[0].mxu0
        %v4397 = vadd.f32 %v4118, %v4396
        %v4398 = vpop.f32.mrb[0].mxu0
        %4399 = vmatprep.mubr.f32.mxu0 0.0
        %4400 = vmatmul.mubr.f32.gmra.mrb[0].mxu0 %v4192
        %v4401 = vpop.f32.mrb[0].mxu0
        %v4402 = vadd.f32 %v4118, %v4401
        %v4403 = vpop.f32.mrb[0].mxu0
        %4404 = vmatprep.mubr.f32.mxu0 0.0
        %4405 = vmatmul.mubr.f32.gmra.mrb[0].mxu0 %v4195
        %v4406 = vpop.f32.mrb[0].mxu0
        %v4407 = vadd.f32 %v4118, %v4406
        %v4408 = vpop.f32.mrb[0].mxu0
        %4409 = vmatprep.mubr.f32.mxu0 0.0
        %4410 = vmatmul.mubr.f32.gmra.mrb[0].mxu0 %v4198
        %v4411 = vpop.f32.mrb[0].mxu0
        %v4412 = vadd.f32 %v4118, %v4411
        %v4413 = vpop.f32.mrb[0].mxu0
        %4414 = vmatprep.mubr.f32.mxu0 0.0
        %4415 = vmatmul.mubr.f32.gmra.mrb[0].mxu0 %v4201
        %v4416 = vpop.f32.mrb[0].mxu0
        %v4417 = vadd.f32 %v4118, %v4416
        %v4418 = vpop.f32.mrb[0].mxu0
        %4419 = vmatprep.mubr.f32.mxu0 0.0
        %4420 = vmatmul.mubr.f32.gmra.mrb[0].mxu0 %v4204
        %v4421 = vpop.f32.mrb[0].mxu0
        %v4422 = vadd.f32 %v4118, %v4421
        %v4423 = vpop.f32.mrb[0].mxu0
        %4424 = vmatprep.mubr.f32.mxu0 0.0
        %4425 = vmatmul.mubr.f32.gmra.mrb[0].mxu0 %v4207
        %v4426 = vpop.f32.mrb[0].mxu0
        %v4427 = vadd.f32 %v4118, %v4426
        %v4428 = vpop.f32.mrb[0].mxu0
        %4429 = vmatprep.mubr.f32.mxu0 0.0
        %4430 = vmatmul.mubr.f32.gmra.mrb[0].mxu0 %v4210
        %v4431 = vpop.f32.mrb[0].mxu0
        %v4432 = vadd.f32 %v4118, %v4431
        %v4433 = vpop.f32.mrb[0].mxu0
        %4434 = vmatprep.mubr.f32.mxu0 0.0
        %4435 = vmatmul.mubr.f32.gmra.mrb[0].mxu0 %v4213
        %v4436 = vpop.f32.mrb[0].mxu0
        %v4437 = vadd.f32 %v4118, %v4436
        %v4438 = vpop.f32.mrb[0].mxu0
        %4439 = vdwg.mxu0
        %4440 = vrot.lane.b32.xlu0 %v4083, 64
        %v4441 = vpop.permute.xlu0 %4440
        %4442 = vrot.lane.b32.xlu0 %v4084, 64
        %v4443 = vpop.permute.xlu0 %4442
        %4444 = vrot.lane.b32.xlu0 %v4085, 64
        %v4445 = vpop.permute.xlu0 %4444
        %4446 = vrot.lane.b32.xlu0 %v4086, 64
        %v4447 = vpop.permute.xlu0 %4446
        %4448 = vrot.lane.b32.xlu0 %v4087, 64
        %v4449 = vpop.permute.xlu0 %4448
        %4450 = vrot.lane.b32.xlu0 %v4088, 64
        %v4451 = vpop.permute.xlu0 %4450
        %4452 = vrot.lane.b32.xlu0 %v4089, 64
        %v4453 = vpop.permute.xlu0 %4452
        %4454 = vrot.lane.b32.xlu0 %v4090, 64
        %v4455 = vpop.permute.xlu0 %4454
        %4456 = vrot.lane.b32.xlu0 %v4091, 64
        %v4457 = vpop.permute.xlu0 %4456
        %4458 = vrot.lane.b32.xlu0 %v4092, 64
        %v4459 = vpop.permute.xlu0 %4458
        %4460 = vrot.lane.b32.xlu0 %v4093, 64
        %v4461 = vpop.permute.xlu0 %4460
        %4462 = vrot.lane.b32.xlu0 %v4094, 64
        %v4463 = vpop.permute.xlu0 %4462
        %4464 = vrot.lane.b32.xlu0 %v4095, 64
        %v4465 = vpop.permute.xlu0 %4464
        %4466 = vrot.lane.b32.xlu0 %v4096, 64
        %v4467 = vpop.permute.xlu0 %4466
        %4468 = vrot.lane.b32.xlu0 %v4097, 64
        %v4469 = vpop.permute.xlu0 %4468
        %4470 = vrot.lane.b32.xlu0 %v4098, 64
        %v4471 = vpop.permute.xlu0 %4470
        %4472 = vrot.lane.b32.xlu0 %v4099, 64
        %v4473 = vpop.permute.xlu0 %4472
        %4474 = vrot.lane.b32.xlu0 %v4100, 64
        %v4475 = vpop.permute.xlu0 %4474
        %4476 = vrot.lane.b32.xlu0 %v4101, 64
        %v4477 = vpop.permute.xlu0 %4476
        %4478 = vrot.lane.b32.xlu0 %v4102, 64
        %v4479 = vpop.permute.xlu0 %4478
        %4480 = vrot.lane.b32.xlu0 %v4103, 64
        %v4481 = vpop.permute.xlu0 %4480
        %4482 = vrot.lane.b32.xlu0 %v4104, 64
        %v4483 = vpop.permute.xlu0 %4482
        %4484 = vrot.lane.b32.xlu0 %v4105, 64
        %v4485 = vpop.permute.xlu0 %4484
        %4486 = vrot.lane.b32.xlu0 %v4106, 64
        %v4487 = vpop.permute.xlu0 %4486
        %4488 = vrot.lane.b32.xlu0 %v4107, 64
        %v4489 = vpop.permute.xlu0 %4488
        %4490 = vrot.lane.b32.xlu0 %v4108, 64
        %v4491 = vpop.permute.xlu0 %4490
        %4492 = vrot.lane.b32.xlu0 %v4109, 64
        %v4493 = vpop.permute.xlu0 %4492
        %4494 = vrot.lane.b32.xlu0 %v4110, 64
        %v4495 = vpop.permute.xlu0 %4494
        %4496 = vrot.lane.b32.xlu0 %v4111, 64
        %v4497 = vpop.permute.xlu0 %4496
        %4498 = vrot.lane.b32.xlu0 %v4112, 64
        %v4499 = vpop.permute.xlu0 %4498
        %4500 = vrot.lane.b32.xlu0 %v4113, 64
        %v4501 = vpop.permute.xlu0 %4500
        %4502 = vrot.lane.b32.xlu0 %v4114, 64
        %v4503 = vpop.permute.xlu0 %4502
        %v4536 = vsel %vm461, %v3534, %v4441
        %v4537 = vsel %vm461, %v3535, %v4443
        %v4538 = vsel %vm461, %v3536, %v4445
        %v4539 = vsel %vm461, %v3537, %v4447
        %v4540 = vsel %vm461, %v3538, %v4449
        %v4541 = vsel %vm461, %v3539, %v4451
        %v4542 = vsel %vm461, %v3540, %v4453
        %v4543 = vsel %vm461, %v3541, %v4455
        %v4544 = vsel %vm461, %v3542, %v4457
        %v4545 = vsel %vm461, %v3543, %v4459
        %v4546 = vsel %vm461, %v3544, %v4461
        %v4547 = vsel %vm461, %v3545, %v4463
        %v4548 = vsel %vm461, %v3546, %v4465
        %v4549 = vsel %vm461, %v3547, %v4467
        %v4550 = vsel %vm461, %v3548, %v4469
        %v4551 = vsel %vm461, %v3549, %v4471
        %v4552 = vsel %vm461, %v3550, %v4473
        %v4553 = vsel %vm461, %v3551, %v4475
        %v4554 = vsel %vm461, %v3552, %v4477
        %v4555 = vsel %vm461, %v3553, %v4479
        %v4556 = vsel %vm461, %v3554, %v4481
        %v4557 = vsel %vm461, %v3555, %v4483
        %v4558 = vsel %vm461, %v3556, %v4485
        %v4559 = vsel %vm461, %v3557, %v4487
        %v4560 = vsel %vm461, %v3558, %v4489
        %v4561 = vsel %vm461, %v3559, %v4491
        %v4562 = vsel %vm461, %v3560, %v4493
        %v4563 = vsel %vm461, %v3561, %v4495
        %v4564 = vsel %vm461, %v3562, %v4497
        %v4565 = vsel %vm461, %v3563, %v4499
        %v4566 = vsel %vm461, %v3564, %v4501
        %v4567 = vsel %vm461, %v3565, %v4503
        %v4568 = vpack.c.bf16 %v4537, %v4536
        %v4569 = vpack.c.bf16 %v4539, %v4538
        %v4570 = vpack.c.bf16 %v4541, %v4540
        %v4571 = vpack.c.bf16 %v4543, %v4542
        %v4572 = vpack.c.bf16 %v4545, %v4544
        %v4573 = vpack.c.bf16 %v4547, %v4546
        %v4574 = vpack.c.bf16 %v4549, %v4548
        %v4575 = vpack.c.bf16 %v4551, %v4550
        %v4576 = vpack.c.bf16 %v4553, %v4552
        %v4577 = vpack.c.bf16 %v4555, %v4554
        %v4578 = vpack.c.bf16 %v4557, %v4556
        %v4579 = vpack.c.bf16 %v4559, %v4558
        %v4580 = vpack.c.bf16 %v4561, %v4560
        %v4581 = vpack.c.bf16 %v4563, %v4562
        %v4582 = vpack.c.bf16 %v4565, %v4564
        %v4583 = vpack.c.bf16 %v4567, %v4566
        %v4600 = vunpack.c.l.b16 %v4568
        %v4601 = vunpack.c.h.b16 %v4568
        %v4602 = vunpack.c.l.b16 %v4569
        %v4603 = vunpack.c.h.b16 %v4569
        %v4604 = vunpack.c.l.b16 %v4570
        %v4605 = vunpack.c.h.b16 %v4570
        %v4606 = vunpack.c.l.b16 %v4571
        %v4607 = vunpack.c.h.b16 %v4571
        %v4608 = vunpack.c.l.b16 %v4572
        %v4609 = vunpack.c.h.b16 %v4572
        %v4610 = vunpack.c.l.b16 %v4573
        %v4611 = vunpack.c.h.b16 %v4573
        %v4612 = vunpack.c.l.b16 %v4574
        %v4613 = vunpack.c.h.b16 %v4574
        %v4614 = vunpack.c.l.b16 %v4575
        %v4615 = vunpack.c.h.b16 %v4575
        %v4616 = vunpack.c.l.b16 %v4576
        %v4617 = vunpack.c.h.b16 %v4576
        %v4618 = vunpack.c.l.b16 %v4577
        %v4619 = vunpack.c.h.b16 %v4577
        %v4620 = vunpack.c.l.b16 %v4578
        %v4621 = vunpack.c.h.b16 %v4578
        %v4622 = vunpack.c.l.b16 %v4579
        %v4623 = vunpack.c.h.b16 %v4579
        %v4624 = vunpack.c.l.b16 %v4580
        %v4625 = vunpack.c.h.b16 %v4580
        %v4626 = vunpack.c.l.b16 %v4581
        %v4627 = vunpack.c.h.b16 %v4581
        %v4628 = vunpack.c.l.b16 %v4582
        %v4629 = vunpack.c.h.b16 %v4582
        %v4630 = vunpack.c.l.b16 %v4583
        %v4631 = vunpack.c.h.b16 %v4583
        %v4632 = vpack.c.b16 %v4600, %v4600
        %v4633 = vpack.c.b16 %v4601, %v4601
        %v4634 = vpack.c.b16 %v4602, %v4602
        %v4635 = vpack.c.b16 %v4603, %v4603
        %v4636 = vpack.c.b16 %v4604, %v4604
        %v4637 = vpack.c.b16 %v4605, %v4605
        %v4638 = vpack.c.b16 %v4606, %v4606
        %v4639 = vpack.c.b16 %v4607, %v4607
        %v4640 = vpack.c.b16 %v4608, %v4608
        %v4641 = vpack.c.b16 %v4609, %v4609
        %v4642 = vpack.c.b16 %v4610, %v4610
        %v4643 = vpack.c.b16 %v4611, %v4611
        %v4644 = vpack.c.b16 %v4612, %v4612
        %v4645 = vpack.c.b16 %v4613, %v4613
        %v4646 = vpack.c.b16 %v4614, %v4614
        %v4647 = vpack.c.b16 %v4615, %v4615
        %v4648 = vpack.c.b16 %v4616, %v4616
        %v4649 = vpack.c.b16 %v4617, %v4617
        %v4650 = vpack.c.b16 %v4618, %v4618
        %v4651 = vpack.c.b16 %v4619, %v4619
        %v4652 = vpack.c.b16 %v4620, %v4620
        %v4653 = vpack.c.b16 %v4621, %v4621
        %v4654 = vpack.c.b16 %v4622, %v4622
        %v4655 = vpack.c.b16 %v4623, %v4623
        %v4656 = vpack.c.b16 %v4624, %v4624
        %v4657 = vpack.c.b16 %v4625, %v4625
        %v4658 = vpack.c.b16 %v4626, %v4626
        %v4659 = vpack.c.b16 %v4627, %v4627
        %v4660 = vpack.c.b16 %v4628, %v4628
        %v4661 = vpack.c.b16 %v4629, %v4629
        %v4662 = vpack.c.b16 %v4630, %v4630
        %v4663 = vpack.c.b16 %v4631, %v4631
        %s4696 = scalar_lea.vmem %s206, 128 [#allocation2]
        %4697 = vst [vmem:[%s4696] sm:$0xf] %v4632
        %4698 = vst [vmem:[%s4696 + $0x4] sm:$0xf] %v4633
        %4699 = vst [vmem:[%s4696 + $0x8] sm:$0xf] %v4634
        %4700 = vst [vmem:[%s4696 + $0xc] sm:$0xf] %v4635
        %4701 = vst [vmem:[%s4696 + $0x10] sm:$0xf] %v4636
        %4702 = vst [vmem:[%s4696 + $0x14] sm:$0xf] %v4637
        %4703 = vst [vmem:[%s4696 + $0x18] sm:$0xf] %v4638
        %4704 = vst [vmem:[%s4696 + $0x1c] sm:$0xf] %v4639
        %4705 = vst [vmem:[%s4696 + $0x20] sm:$0xf] %v4640
        %4706 = vst [vmem:[%s4696 + $0x24] sm:$0xf] %v4641
        %4707 = vst [vmem:[%s4696 + $0x28] sm:$0xf] %v4642
        %4708 = vst [vmem:[%s4696 + $0x2c] sm:$0xf] %v4643
        %4709 = vst [vmem:[%s4696 + $0x30] sm:$0xf] %v4644
        %4710 = vst [vmem:[%s4696 + $0x34] sm:$0xf] %v4645
        %4711 = vst [vmem:[%s4696 + $0x38] sm:$0xf] %v4646
        %4712 = vst [vmem:[%s4696 + $0x3c] sm:$0xf] %v4647
        %4713 = vst [vmem:[%s4696 + $0x40] sm:$0xf] %v4648
        %4714 = vst [vmem:[%s4696 + $0x44] sm:$0xf] %v4649
        %4715 = vst [vmem:[%s4696 + $0x48] sm:$0xf] %v4650
        %4716 = vst [vmem:[%s4696 + $0x4c] sm:$0xf] %v4651
        %4717 = vst [vmem:[%s4696 + $0x50] sm:$0xf] %v4652
        %4718 = vst [vmem:[%s4696 + $0x54] sm:$0xf] %v4653
        %4719 = vst [vmem:[%s4696 + $0x58] sm:$0xf] %v4654
        %4720 = vst [vmem:[%s4696 + $0x5c] sm:$0xf] %v4655
        %4721 = vst [vmem:[%s4696 + $0x60] sm:$0xf] %v4656
        %4722 = vst [vmem:[%s4696 + $0x64] sm:$0xf] %v4657
        %4723 = vst [vmem:[%s4696 + $0x68] sm:$0xf] %v4658
        %4724 = vst [vmem:[%s4696 + $0x6c] sm:$0xf] %v4659
        %4725 = vst [vmem:[%s4696 + $0x70] sm:$0xf] %v4660
        %4726 = vst [vmem:[%s4696 + $0x74] sm:$0xf] %v4661
        %4727 = vst [vmem:[%s4696 + $0x78] sm:$0xf] %v4662
        %4728 = vst [vmem:[%s4696 + $0x7c] sm:$0xf] %v4663
        %v4729 = vmul.f32 %v2974, 1.3020836
        %v4730 = vmul.f32 %v2975, 1.3020836
        %v4731 = vmul.f32 %v2976, 1.3020836
        %v4732 = vmul.f32 %v2977, 1.3020836
        %v4733 = vmul.f32 %v2978, 1.3020836
        %v4734 = vmul.f32 %v2979, 1.3020836
        %v4735 = vmul.f32 %v2980, 1.3020836
        %v4736 = vmul.f32 %v2981, 1.3020836
        %v4737 = vmul.f32 %v2982, 1.3020836
        %v4738 = vmul.f32 %v2983, 1.3020836
        %v4739 = vmul.f32 %v2984, 1.3020836
        %v4740 = vmul.f32 %v2985, 1.3020836
        %v4741 = vmul.f32 %v2986, 1.3020836
        %v4742 = vmul.f32 %v2987, 1.3020836
        %v4743 = vmul.f32 %v2988, 1.3020836
        %v4744 = vmul.f32 %v2989, 1.3020836
        %v4745 = vmul.f32 %v2990, 1.3020836
        %v4746 = vmul.f32 %v2991, 1.3020836
        %v4747 = vmul.f32 %v2992, 1.3020836
        %v4748 = vmul.f32 %v2993, 1.3020836
        %v4749 = vmul.f32 %v2994, 1.3020836
        %v4750 = vmul.f32 %v2995, 1.3020836
        %v4751 = vmul.f32 %v2996, 1.3020836
        %v4752 = vmul.f32 %v2997, 1.3020836
        %v4753 = vmul.f32 %v2998, 1.3020836
        %v4754 = vmul.f32 %v2999, 1.3020836
        %v4755 = vmul.f32 %v3000, 1.3020836
        %v4756 = vmul.f32 %v3001, 1.3020836
        %v4757 = vmul.f32 %v3002, 1.3020836
        %v4758 = vmul.f32 %v3003, 1.3020836
        %v4759 = vmul.f32 %v3004, 1.3020836
        %v4760 = vmul.f32 %v3005, 1.3020836
        %v4761 = vadd.f32 %v4729, %v4282
        %v4762 = vadd.f32 %v4730, %v4287
        %v4763 = vadd.f32 %v4731, %v4292
        %v4764 = vadd.f32 %v4732, %v4297
        %v4765 = vadd.f32 %v4733, %v4302
        %v4766 = vadd.f32 %v4734, %v4307
        %v4767 = vadd.f32 %v4735, %v4312
        %v4768 = vadd.f32 %v4736, %v4317
        %v4769 = vadd.f32 %v4737, %v4322
        %v4770 = vadd.f32 %v4738, %v4327
        %v4771 = vadd.f32 %v4739, %v4332
        %v4772 = vadd.f32 %v4740, %v4337
        %v4773 = vadd.f32 %v4741, %v4342
        %v4774 = vadd.f32 %v4742, %v4347
        %v4775 = vadd.f32 %v4743, %v4352
        %v4776 = vadd.f32 %v4744, %v4357
        %v4777 = vadd.f32 %v4745, %v4362
        %v4778 = vadd.f32 %v4746, %v4367
        %v4779 = vadd.f32 %v4747, %v4372
        %v4780 = vadd.f32 %v4748, %v4377
        %v4781 = vadd.f32 %v4749, %v4382
        %v4782 = vadd.f32 %v4750, %v4387
        %v4783 = vadd.f32 %v4751, %v4392
        %v4784 = vadd.f32 %v4752, %v4397
        %v4785 = vadd.f32 %v4753, %v4402
        %v4786 = vadd.f32 %v4754, %v4407
        %v4787 = vadd.f32 %v4755, %v4412
        %v4788 = vadd.f32 %v4756, %v4417
        %v4789 = vadd.f32 %v4757, %v4422
        %v4790 = vadd.f32 %v4758, %v4427
        %v4791 = vadd.f32 %v4759, %v4432
        %v4792 = vadd.f32 %v4760, %v4437
        %v4793 = vld [vmem:[%s0 + $0x1d2] sm:$0x1]
        %v4794 = vld [vmem:[%s0 + $0x1da] sm:$0x1]
        %v4795 = vld [vmem:[%s0 + $0x190] sm:$0xff]
        %v4796 = vld [vmem:[%s0 + $0x198] sm:$0xff]
        %v4797 = vld [vmem:[%s0 + $0x1a0] sm:$0xff]
        %v4798 = vld [vmem:[%s0 + $0x1a8] sm:$0xff]
        %v4799 = vld [vmem:[%s0 + $0x1b0] sm:$0xff]
        %v4800 = vld [vmem:[%s0 + $0x1b8] sm:$0xff]
        %v4801 = vld [vmem:[%s0 + $0x1c0] sm:$0xff]
        %v4802 = vld [vmem:[%s0 + $0x1c8] sm:$0xff]
        %v4803 = vld [vmem:[%s0 + $0x1e2] sm:$0x1]
        %v4804 = vlaneseq
        %v4805 = vshrl.u32 %v4804, 7
        %v4806 = vsub.s32 0, %v4805
        %v4807 = vrot.slane %v4793, %v4806
        %v4809 = vsel %vm1230, %v4761, 0
        %v4812 = vsel %vm1230, %v4762, 0
        %v4815 = vsel %vm1230, %v4763, 0
        %v4818 = vsel %vm1230, %v4764, 0
        %v4821 = vsel %vm1230, %v4765, 0
        %v4824 = vsel %vm1230, %v4766, 0
        %v4827 = vsel %vm1230, %v4767, 0
        %v4830 = vsel %vm1230, %v4768, 0
        %v4833 = vsel %vm1230, %v4769, 0
        %v4836 = vsel %vm1230, %v4770, 0
        %v4839 = vsel %vm1230, %v4771, 0
        %v4842 = vsel %vm1230, %v4772, 0
        %v4845 = vsel %vm1230, %v4773, 0
        %v4848 = vsel %vm1230, %v4774, 0
        %v4851 = vsel %vm1230, %v4775, 0
        %v4854 = vsel %vm1230, %v4776, 0
        %v4857 = vsel %vm1230, %v4777, 0
        %v4860 = vsel %vm1230, %v4778, 0
        %v4863 = vsel %vm1230, %v4779, 0
        %v4866 = vsel %vm1230, %v4780, 0
        %v4869 = vsel %vm1230, %v4781, 0
        %v4872 = vsel %vm1230, %v4782, 0
        %v4875 = vsel %vm1230, %v4783, 0
        %v4878 = vsel %vm1230, %v4784, 0
        %v4881 = vsel %vm1230, %v4785, 0
        %v4884 = vsel %vm1230, %v4786, 0
        %v4887 = vsel %vm1230, %v4787, 0
        %v4890 = vsel %vm1230, %v4788, 0
        %v4893 = vsel %vm1230, %v4789, 0
        %v4896 = vsel %vm1230, %v4790, 0
        %v4899 = vsel %vm1230, %v4791, 0
        %v4902 = vsel %vm1230, %v4792, 0
        %4904 = vmatprep.subr.mxu0 0.0
        %4905 = vmatpush1.msra.mxu0 %v1329
        %4906 = vmatprep.subr.mxu0 0.0
        %4907 = vmatpush1.msra.mxu0 0.0
        %4908 = vmatprep.subr.mxu0 0.0
        %4909 = vmatpush1.msra.mxu0 0.0
        %4910 = vmatprep.subr.mxu0 0.0
        %4911 = vmatpush1.msra.mxu0 0.0
        %4912 = vmatprep.subr.mxu0 0.0
        %4913 = vmatpush1.msra.mxu0 0.0
        %4914 = vmatprep.subr.mxu0 0.0
        %4915 = vmatpush1.msra.mxu0 0.0
        %4916 = vmatprep.subr.mxu0 0.0
        %4917 = vmatpush1.msra.mxu0 0.0
        %4918 = vmatprep.subr.mxu0 0.0
        %4919 = vmatpush1.msra.mxu0 0.0
        %4920 = vmatprep.subr.mxu0 0.0
        %4921 = vmatpush1.msra.mxu0 0.0
        %4922 = vmatprep.subr.mxu0 0.0
        %4923 = vmatpush1.msra.mxu0 0.0
        %4924 = vmatprep.subr.mxu0 0.0
        %4925 = vmatpush1.msra.mxu0 0.0
        %4926 = vmatprep.subr.mxu0 0.0
        %4927 = vmatpush1.msra.mxu0 0.0
        %4928 = vmatprep.subr.mxu0 0.0
        %4929 = vmatpush1.msra.mxu0 0.0
        %4930 = vmatprep.subr.mxu0 0.0
        %4931 = vmatpush1.msra.mxu0 0.0
        %4932 = vmatprep.subr.mxu0 0.0
        %4933 = vmatpush1.msra.mxu0 0.0
        %4934 = vmatprep.subr.mxu0 0.0
        %4935 = vmatpush1.msra.mxu0 0.0
        %4936 = vmatprep.subr.mxu0 0.0
        %4937 = vmatpush1.msra.mxu0 0.0
        %4938 = vmatprep.subr.mxu0 0.0
        %4939 = vmatpush1.msra.mxu0 0.0
        %4940 = vmatprep.subr.mxu0 0.0
        %4941 = vmatpush1.msra.mxu0 0.0
        %4942 = vmatprep.subr.mxu0 0.0
        %4943 = vmatpush1.msra.mxu0 0.0
        %4944 = vmatprep.subr.mxu0 0.0
        %4945 = vmatpush1.msra.mxu0 0.0
        %4946 = vmatprep.subr.mxu0 0.0
        %4947 = vmatpush1.msra.mxu0 0.0
        %4948 = vmatprep.subr.mxu0 0.0
        %4949 = vmatpush1.msra.mxu0 0.0
        %4950 = vmatprep.subr.mxu0 0.0
        %4951 = vmatpush1.msra.mxu0 0.0
        %4952 = vmatprep.subr.mxu0 0.0
        %4953 = vmatpush1.msra.mxu0 0.0
        %4954 = vmatprep.subr.mxu0 0.0
        %4955 = vmatpush1.msra.mxu0 0.0
        %4956 = vmatprep.subr.mxu0 0.0
        %4957 = vmatpush1.msra.mxu0 0.0
        %4958 = vmatprep.subr.mxu0 0.0
        %4959 = vmatpush1.msra.mxu0 0.0
        %4960 = vmatprep.subr.mxu0 0.0
        %4961 = vmatpush1.msra.mxu0 0.0
        %4962 = vmatprep.subr.mxu0 0.0
        %4963 = vmatpush1.msra.mxu0 0.0
        %4964 = vmatprep.subr.mxu0 0.0
        %4965 = vmatpush1.msra.mxu0 0.0
        %4966 = vmatprep.subr.mxu0 0.0
        %4967 = vmatpush1.msra.mxu0 0.0
        %4968 = vmatprep.mubr.f32.mxu0 0.0
        %4969 = vmatmul.mubr.f32.gmra.mrb[0].mxu0 %v4809
        %v4970 = vpop.f32.mrb[0].mxu0
        %v4971 = vadd.f32 %v4807, %v4970
        %v4972 = vpop.f32.mrb[0].mxu0
        %4973 = vmatprep.mubr.f32.mxu0 0.0
        %4974 = vmatmul.mubr.f32.gmra.mrb[0].mxu0 %v4812
        %v4975 = vpop.f32.mrb[0].mxu0
        %v4976 = vadd.f32 %v4807, %v4975
        %v4977 = vpop.f32.mrb[0].mxu0
        %4978 = vmatprep.mubr.f32.mxu0 0.0
        %4979 = vmatmul.mubr.f32.gmra.mrb[0].mxu0 %v4815
        %v4980 = vpop.f32.mrb[0].mxu0
        %v4981 = vadd.f32 %v4807, %v4980
        %v4982 = vpop.f32.mrb[0].mxu0
        %4983 = vmatprep.mubr.f32.mxu0 0.0
        %4984 = vmatmul.mubr.f32.gmra.mrb[0].mxu0 %v4818
        %v4985 = vpop.f32.mrb[0].mxu0
        %v4986 = vadd.f32 %v4807, %v4985
        %v4987 = vpop.f32.mrb[0].mxu0
        %4988 = vmatprep.mubr.f32.mxu0 0.0
        %4989 = vmatmul.mubr.f32.gmra.mrb[0].mxu0 %v4821
        %v4990 = vpop.f32.mrb[0].mxu0
        %v4991 = vadd.f32 %v4807, %v4990
        %v4992 = vpop.f32.mrb[0].mxu0
        %4993 = vmatprep.mubr.f32.mxu0 0.0
        %4994 = vmatmul.mubr.f32.gmra.mrb[0].mxu0 %v4824
        %v4995 = vpop.f32.mrb[0].mxu0
        %v4996 = vadd.f32 %v4807, %v4995
        %v4997 = vpop.f32.mrb[0].mxu0
        %4998 = vmatprep.mubr.f32.mxu0 0.0
        %4999 = vmatmul.mubr.f32.gmra.mrb[0].mxu0 %v4827
        %v5000 = vpop.f32.mrb[0].mxu0
        %v5001 = vadd.f32 %v4807, %v5000
        %v5002 = vpop.f32.mrb[0].mxu0
        %5003 = vmatprep.mubr.f32.mxu0 0.0
        %5004 = vmatmul.mubr.f32.gmra.mrb[0].mxu0 %v4830
        %v5005 = vpop.f32.mrb[0].mxu0
        %v5006 = vadd.f32 %v4807, %v5005
        %v5007 = vpop.f32.mrb[0].mxu0
        %5008 = vmatprep.mubr.f32.mxu0 0.0
        %5009 = vmatmul.mubr.f32.gmra.mrb[0].mxu0 %v4833
        %v5010 = vpop.f32.mrb[0].mxu0
        %v5011 = vadd.f32 %v4807, %v5010
        %v5012 = vpop.f32.mrb[0].mxu0
        %5013 = vmatprep.mubr.f32.mxu0 0.0
        %5014 = vmatmul.mubr.f32.gmra.mrb[0].mxu0 %v4836
        %v5015 = vpop.f32.mrb[0].mxu0
        %v5016 = vadd.f32 %v4807, %v5015
        %v5017 = vpop.f32.mrb[0].mxu0
        %5018 = vmatprep.mubr.f32.mxu0 0.0
        %5019 = vmatmul.mubr.f32.gmra.mrb[0].mxu0 %v4839
        %v5020 = vpop.f32.mrb[0].mxu0
        %v5021 = vadd.f32 %v4807, %v5020
        %v5022 = vpop.f32.mrb[0].mxu0
        %5023 = vmatprep.mubr.f32.mxu0 0.0
        %5024 = vmatmul.mubr.f32.gmra.mrb[0].mxu0 %v4842
        %v5025 = vpop.f32.mrb[0].mxu0
        %v5026 = vadd.f32 %v4807, %v5025
        %v5027 = vpop.f32.mrb[0].mxu0
        %5028 = vmatprep.mubr.f32.mxu0 0.0
        %5029 = vmatmul.mubr.f32.gmra.mrb[0].mxu0 %v4845
        %v5030 = vpop.f32.mrb[0].mxu0
        %v5031 = vadd.f32 %v4807, %v5030
        %v5032 = vpop.f32.mrb[0].mxu0
        %5033 = vmatprep.mubr.f32.mxu0 0.0
        %5034 = vmatmul.mubr.f32.gmra.mrb[0].mxu0 %v4848
        %v5035 = vpop.f32.mrb[0].mxu0
        %v5036 = vadd.f32 %v4807, %v5035
        %v5037 = vpop.f32.mrb[0].mxu0
        %5038 = vmatprep.mubr.f32.mxu0 0.0
        %5039 = vmatmul.mubr.f32.gmra.mrb[0].mxu0 %v4851
        %v5040 = vpop.f32.mrb[0].mxu0
        %v5041 = vadd.f32 %v4807, %v5040
        %v5042 = vpop.f32.mrb[0].mxu0
        %5043 = vmatprep.mubr.f32.mxu0 0.0
        %5044 = vmatmul.mubr.f32.gmra.mrb[0].mxu0 %v4854
        %v5045 = vpop.f32.mrb[0].mxu0
        %v5046 = vadd.f32 %v4807, %v5045
        %v5047 = vpop.f32.mrb[0].mxu0
        %5048 = vmatprep.mubr.f32.mxu0 0.0
        %5049 = vmatmul.mubr.f32.gmra.mrb[0].mxu0 %v4857
        %v5050 = vpop.f32.mrb[0].mxu0
        %v5051 = vadd.f32 %v4807, %v5050
        %v5052 = vpop.f32.mrb[0].mxu0
        %5053 = vmatprep.mubr.f32.mxu0 0.0
        %5054 = vmatmul.mubr.f32.gmra.mrb[0].mxu0 %v4860
        %v5055 = vpop.f32.mrb[0].mxu0
        %v5056 = vadd.f32 %v4807, %v5055
        %v5057 = vpop.f32.mrb[0].mxu0
        %5058 = vmatprep.mubr.f32.mxu0 0.0
        %5059 = vmatmul.mubr.f32.gmra.mrb[0].mxu0 %v4863
        %v5060 = vpop.f32.mrb[0].mxu0
        %v5061 = vadd.f32 %v4807, %v5060
        %v5062 = vpop.f32.mrb[0].mxu0
        %5063 = vmatprep.mubr.f32.mxu0 0.0
        %5064 = vmatmul.mubr.f32.gmra.mrb[0].mxu0 %v4866
        %v5065 = vpop.f32.mrb[0].mxu0
        %v5066 = vadd.f32 %v4807, %v5065
        %v5067 = vpop.f32.mrb[0].mxu0
        %5068 = vmatprep.mubr.f32.mxu0 0.0
        %5069 = vmatmul.mubr.f32.gmra.mrb[0].mxu0 %v4869
        %v5070 = vpop.f32.mrb[0].mxu0
        %v5071 = vadd.f32 %v4807, %v5070
        %v5072 = vpop.f32.mrb[0].mxu0
        %5073 = vmatprep.mubr.f32.mxu0 0.0
        %5074 = vmatmul.mubr.f32.gmra.mrb[0].mxu0 %v4872
        %v5075 = vpop.f32.mrb[0].mxu0
        %v5076 = vadd.f32 %v4807, %v5075
        %v5077 = vpop.f32.mrb[0].mxu0
        %5078 = vmatprep.mubr.f32.mxu0 0.0
        %5079 = vmatmul.mubr.f32.gmra.mrb[0].mxu0 %v4875
        %v5080 = vpop.f32.mrb[0].mxu0
        %v5081 = vadd.f32 %v4807, %v5080
        %v5082 = vpop.f32.mrb[0].mxu0
        %5083 = vmatprep.mubr.f32.mxu0 0.0
        %5084 = vmatmul.mubr.f32.gmra.mrb[0].mxu0 %v4878
        %v5085 = vpop.f32.mrb[0].mxu0
        %v5086 = vadd.f32 %v4807, %v5085
        %v5087 = vpop.f32.mrb[0].mxu0
        %5088 = vmatprep.mubr.f32.mxu0 0.0
        %5089 = vmatmul.mubr.f32.gmra.mrb[0].mxu0 %v4881
        %v5090 = vpop.f32.mrb[0].mxu0
        %v5091 = vadd.f32 %v4807, %v5090
        %v5092 = vpop.f32.mrb[0].mxu0
        %5093 = vmatprep.mubr.f32.mxu0 0.0
        %5094 = vmatmul.mubr.f32.gmra.mrb[0].mxu0 %v4884
        %v5095 = vpop.f32.mrb[0].mxu0
        %v5096 = vadd.f32 %v4807, %v5095
        %v5097 = vpop.f32.mrb[0].mxu0
        %5098 = vmatprep.mubr.f32.mxu0 0.0
        %5099 = vmatmul.mubr.f32.gmra.mrb[0].mxu0 %v4887
        %v5100 = vpop.f32.mrb[0].mxu0
        %v5101 = vadd.f32 %v4807, %v5100
        %v5102 = vpop.f32.mrb[0].mxu0
        %5103 = vmatprep.mubr.f32.mxu0 0.0
        %5104 = vmatmul.mubr.f32.gmra.mrb[0].mxu0 %v4890
        %v5105 = vpop.f32.mrb[0].mxu0
        %v5106 = vadd.f32 %v4807, %v5105
        %v5107 = vpop.f32.mrb[0].mxu0
        %5108 = vmatprep.mubr.f32.mxu0 0.0
        %5109 = vmatmul.mubr.f32.gmra.mrb[0].mxu0 %v4893
        %v5110 = vpop.f32.mrb[0].mxu0
        %v5111 = vadd.f32 %v4807, %v5110
        %v5112 = vpop.f32.mrb[0].mxu0
        %5113 = vmatprep.mubr.f32.mxu0 0.0
        %5114 = vmatmul.mubr.f32.gmra.mrb[0].mxu0 %v4896
        %v5115 = vpop.f32.mrb[0].mxu0
        %v5116 = vadd.f32 %v4807, %v5115
        %v5117 = vpop.f32.mrb[0].mxu0
        %5118 = vmatprep.mubr.f32.mxu0 0.0
        %5119 = vmatmul.mubr.f32.gmra.mrb[0].mxu0 %v4899
        %v5120 = vpop.f32.mrb[0].mxu0
        %v5121 = vadd.f32 %v4807, %v5120
        %v5122 = vpop.f32.mrb[0].mxu0
        %5123 = vmatprep.mubr.f32.mxu0 0.0
        %5124 = vmatmul.mubr.f32.gmra.mrb[0].mxu0 %v4902
        %v5125 = vpop.f32.mrb[0].mxu0
        %v5126 = vadd.f32 %v4807, %v5125
        %v5127 = vpop.f32.mrb[0].mxu0
        %5128 = vdwg.mxu0
        %v5129 = vxor.u32 %v4971, 2147483648
        %v5130 = vxor.u32 %v4976, 2147483648
        %v5131 = vxor.u32 %v4981, 2147483648
        %v5132 = vxor.u32 %v4986, 2147483648
        %v5133 = vxor.u32 %v4991, 2147483648
        %v5134 = vxor.u32 %v4996, 2147483648
        %v5135 = vxor.u32 %v5001, 2147483648
        %v5136 = vxor.u32 %v5006, 2147483648
        %v5137 = vxor.u32 %v5011, 2147483648
        %v5138 = vxor.u32 %v5016, 2147483648
        %v5139 = vxor.u32 %v5021, 2147483648
        %v5140 = vxor.u32 %v5026, 2147483648
        %v5141 = vxor.u32 %v5031, 2147483648
        %v5142 = vxor.u32 %v5036, 2147483648
        %v5143 = vxor.u32 %v5041, 2147483648
        %v5144 = vxor.u32 %v5046, 2147483648
        %v5145 = vxor.u32 %v5051, 2147483648
        %v5146 = vxor.u32 %v5056, 2147483648
        %v5147 = vxor.u32 %v5061, 2147483648
        %v5148 = vxor.u32 %v5066, 2147483648
        %v5149 = vxor.u32 %v5071, 2147483648
        %v5150 = vxor.u32 %v5076, 2147483648
        %v5151 = vxor.u32 %v5081, 2147483648
        %v5152 = vxor.u32 %v5086, 2147483648
        %v5153 = vxor.u32 %v5091, 2147483648
        %v5154 = vxor.u32 %v5096, 2147483648
        %v5155 = vxor.u32 %v5101, 2147483648
        %v5156 = vxor.u32 %v5106, 2147483648
        %v5157 = vxor.u32 %v5111, 2147483648
        %v5158 = vxor.u32 %v5116, 2147483648
        %v5159 = vxor.u32 %v5121, 2147483648
        %v5160 = vxor.u32 %v5126, 2147483648
        %v5161 = vmul.f32 %v5129, 1.442695
        %v5162 = vpow.pop %v5161
        %v5163 = vmul.f32 %v5130, 1.442695
        %v5164 = vpow.pop %v5163
        %v5165 = vmul.f32 %v5131, 1.442695
        %v5166 = vpow.pop %v5165
        %v5167 = vmul.f32 %v5132, 1.442695
        %v5168 = vpow.pop %v5167
        %v5169 = vmul.f32 %v5133, 1.442695
        %v5170 = vpow.pop %v5169
        %v5171 = vmul.f32 %v5134, 1.442695
        %v5172 = vpow.pop %v5171
        %v5173 = vmul.f32 %v5135, 1.442695
        %v5174 = vpow.pop %v5173
        %v5175 = vmul.f32 %v5136, 1.442695
        %v5176 = vpow.pop %v5175
        %v5177 = vmul.f32 %v5137, 1.442695
        %v5178 = vpow.pop %v5177
        %v5179 = vmul.f32 %v5138, 1.442695
        %v5180 = vpow.pop %v5179
        %v5181 = vmul.f32 %v5139, 1.442695
        %v5182 = vpow.pop %v5181
        %v5183 = vmul.f32 %v5140, 1.442695
        %v5184 = vpow.pop %v5183
        %v5185 = vmul.f32 %v5141, 1.442695
        %v5186 = vpow.pop %v5185
        %v5187 = vmul.f32 %v5142, 1.442695
        %v5188 = vpow.pop %v5187
        %v5189 = vmul.f32 %v5143, 1.442695
        %v5190 = vpow.pop %v5189
        %v5191 = vmul.f32 %v5144, 1.442695
        %v5192 = vpow.pop %v5191
        %v5193 = vmul.f32 %v5145, 1.442695
        %v5194 = vpow.pop %v5193
        %v5195 = vmul.f32 %v5146, 1.442695
        %v5196 = vpow.pop %v5195
        %v5197 = vmul.f32 %v5147, 1.442695
        %v5198 = vpow.pop %v5197
        %v5199 = vmul.f32 %v5148, 1.442695
        %v5200 = vpow.pop %v5199
        %v5201 = vmul.f32 %v5149, 1.442695
        %v5202 = vpow.pop %v5201
        %v5203 = vmul.f32 %v5150, 1.442695
        %v5204 = vpow.pop %v5203
        %v5205 = vmul.f32 %v5151, 1.442695
        %v5206 = vpow.pop %v5205
        %v5207 = vmul.f32 %v5152, 1.442695
        %v5208 = vpow.pop %v5207
        %v5209 = vmul.f32 %v5153, 1.442695
        %v5210 = vpow.pop %v5209
        %v5211 = vmul.f32 %v5154, 1.442695
        %v5212 = vpow.pop %v5211
        %v5213 = vmul.f32 %v5155, 1.442695
        %v5214 = vpow.pop %v5213
        %v5215 = vmul.f32 %v5156, 1.442695
        %v5216 = vpow.pop %v5215
        %v5217 = vmul.f32 %v5157, 1.442695
        %v5218 = vpow.pop %v5217
        %v5219 = vmul.f32 %v5158, 1.442695
        %v5220 = vpow.pop %v5219
        %v5221 = vmul.f32 %v5159, 1.442695
        %v5222 = vpow.pop %v5221
        %v5223 = vmul.f32 %v5160, 1.442695
        %v5224 = vpow.pop %v5223
        %v5225 = vadd.f32 %v5162, 1.0
        %v5226 = vadd.f32 %v5164, 1.0
        %v5227 = vadd.f32 %v5166, 1.0
        %v5228 = vadd.f32 %v5168, 1.0
        %v5229 = vadd.f32 %v5170, 1.0
        %v5230 = vadd.f32 %v5172, 1.0
        %v5231 = vadd.f32 %v5174, 1.0
        %v5232 = vadd.f32 %v5176, 1.0
        %v5233 = vadd.f32 %v5178, 1.0
        %v5234 = vadd.f32 %v5180, 1.0
        %v5235 = vadd.f32 %v5182, 1.0
        %v5236 = vadd.f32 %v5184, 1.0
        %v5237 = vadd.f32 %v5186, 1.0
        %v5238 = vadd.f32 %v5188, 1.0
        %v5239 = vadd.f32 %v5190, 1.0
        %v5240 = vadd.f32 %v5192, 1.0
        %v5241 = vadd.f32 %v5194, 1.0
        %v5242 = vadd.f32 %v5196, 1.0
        %v5243 = vadd.f32 %v5198, 1.0
        %v5244 = vadd.f32 %v5200, 1.0
        %v5245 = vadd.f32 %v5202, 1.0
        %v5246 = vadd.f32 %v5204, 1.0
        %v5247 = vadd.f32 %v5206, 1.0
        %v5248 = vadd.f32 %v5208, 1.0
        %v5249 = vadd.f32 %v5210, 1.0
        %v5250 = vadd.f32 %v5212, 1.0
        %v5251 = vadd.f32 %v5214, 1.0
        %v5252 = vadd.f32 %v5216, 1.0
        %v5253 = vadd.f32 %v5218, 1.0
        %v5254 = vadd.f32 %v5220, 1.0
        %v5255 = vadd.f32 %v5222, 1.0
        %v5256 = vadd.f32 %v5224, 1.0
        %v5257 = vrcp.pop %v5225
        %v5258 = vmul.f32 1.0, %v5257
        %v5259 = vrcp.pop %v5226
        %v5260 = vmul.f32 1.0, %v5259
        %v5261 = vrcp.pop %v5227
        %v5262 = vmul.f32 1.0, %v5261
        %v5263 = vrcp.pop %v5228
        %v5264 = vmul.f32 1.0, %v5263
        %v5265 = vrcp.pop %v5229
        %v5266 = vmul.f32 1.0, %v5265
        %v5267 = vrcp.pop %v5230
        %v5268 = vmul.f32 1.0, %v5267
        %v5269 = vrcp.pop %v5231
        %v5270 = vmul.f32 1.0, %v5269
        %v5271 = vrcp.pop %v5232
        %v5272 = vmul.f32 1.0, %v5271
        %v5273 = vrcp.pop %v5233
        %v5274 = vmul.f32 1.0, %v5273
        %v5275 = vrcp.pop %v5234
        %v5276 = vmul.f32 1.0, %v5275
        %v5277 = vrcp.pop %v5235
        %v5278 = vmul.f32 1.0, %v5277
        %v5279 = vrcp.pop %v5236
        %v5280 = vmul.f32 1.0, %v5279
        %v5281 = vrcp.pop %v5237
        %v5282 = vmul.f32 1.0, %v5281
        %v5283 = vrcp.pop %v5238
        %v5284 = vmul.f32 1.0, %v5283
        %v5285 = vrcp.pop %v5239
        %v5286 = vmul.f32 1.0, %v5285
        %v5287 = vrcp.pop %v5240
        %v5288 = vmul.f32 1.0, %v5287
        %v5289 = vrcp.pop %v5241
        %v5290 = vmul.f32 1.0, %v5289
        %v5291 = vrcp.pop %v5242
        %v5292 = vmul.f32 1.0, %v5291
        %v5293 = vrcp.pop %v5243
        %v5294 = vmul.f32 1.0, %v5293
        %v5295 = vrcp.pop %v5244
        %v5296 = vmul.f32 1.0, %v5295
        %v5297 = vrcp.pop %v5245
        %v5298 = vmul.f32 1.0, %v5297
        %v5299 = vrcp.pop %v5246
        %v5300 = vmul.f32 1.0, %v5299
        %v5301 = vrcp.pop %v5247
        %v5302 = vmul.f32 1.0, %v5301
        %v5303 = vrcp.pop %v5248
        %v5304 = vmul.f32 1.0, %v5303
        %v5305 = vrcp.pop %v5249
        %v5306 = vmul.f32 1.0, %v5305
        %v5307 = vrcp.pop %v5250
        %v5308 = vmul.f32 1.0, %v5307
        %v5309 = vrcp.pop %v5251
        %v5310 = vmul.f32 1.0, %v5309
        %v5311 = vrcp.pop %v5252
        %v5312 = vmul.f32 1.0, %v5311
        %v5313 = vrcp.pop %v5253
        %v5314 = vmul.f32 1.0, %v5313
        %v5315 = vrcp.pop %v5254
        %v5316 = vmul.f32 1.0, %v5315
        %v5317 = vrcp.pop %v5255
        %v5318 = vmul.f32 1.0, %v5317
        %v5319 = vrcp.pop %v5256
        %v5320 = vmul.f32 1.0, %v5319
        %v5321 = vmul.f32 %v4971, %v5258
        %v5322 = vmul.f32 %v4976, %v5260
        %v5323 = vmul.f32 %v4981, %v5262
        %v5324 = vmul.f32 %v4986, %v5264
        %v5325 = vmul.f32 %v4991, %v5266
        %v5326 = vmul.f32 %v4996, %v5268
        %v5327 = vmul.f32 %v5001, %v5270
        %v5328 = vmul.f32 %v5006, %v5272
        %v5329 = vmul.f32 %v5011, %v5274
        %v5330 = vmul.f32 %v5016, %v5276
        %v5331 = vmul.f32 %v5021, %v5278
        %v5332 = vmul.f32 %v5026, %v5280
        %v5333 = vmul.f32 %v5031, %v5282
        %v5334 = vmul.f32 %v5036, %v5284
        %v5335 = vmul.f32 %v5041, %v5286
        %v5336 = vmul.f32 %v5046, %v5288
        %v5337 = vmul.f32 %v5051, %v5290
        %v5338 = vmul.f32 %v5056, %v5292
        %v5339 = vmul.f32 %v5061, %v5294
        %v5340 = vmul.f32 %v5066, %v5296
        %v5341 = vmul.f32 %v5071, %v5298
        %v5342 = vmul.f32 %v5076, %v5300
        %v5343 = vmul.f32 %v5081, %v5302
        %v5344 = vmul.f32 %v5086, %v5304
        %v5345 = vmul.f32 %v5091, %v5306
        %v5346 = vmul.f32 %v5096, %v5308
        %v5347 = vmul.f32 %v5101, %v5310
        %v5348 = vmul.f32 %v5106, %v5312
        %v5349 = vmul.f32 %v5111, %v5314
        %v5350 = vmul.f32 %v5116, %v5316
        %v5351 = vmul.f32 %v5121, %v5318
        %v5352 = vmul.f32 %v5126, %v5320
        %v5353 = vlaneseq
        %v5354 = vshrl.u32 %v5353, 7
        %v5355 = vsub.s32 0, %v5354
        %v5356 = vrot.slane %v4794, %v5355
        %v5358 = vsel %vm461, %v5321, 0
        %v5361 = vsel %vm461, %v5322, 0
        %v5364 = vsel %vm461, %v5323, 0
        %v5367 = vsel %vm461, %v5324, 0
        %v5370 = vsel %vm461, %v5325, 0
        %v5373 = vsel %vm461, %v5326, 0
        %v5376 = vsel %vm461, %v5327, 0
        %v5379 = vsel %vm461, %v5328, 0
        %v5382 = vsel %vm461, %v5329, 0
        %v5385 = vsel %vm461, %v5330, 0
        %v5388 = vsel %vm461, %v5331, 0
        %v5391 = vsel %vm461, %v5332, 0
        %v5394 = vsel %vm461, %v5333, 0
        %v5397 = vsel %vm461, %v5334, 0
        %v5400 = vsel %vm461, %v5335, 0
        %v5403 = vsel %vm461, %v5336, 0
        %v5406 = vsel %vm461, %v5337, 0
        %v5409 = vsel %vm461, %v5338, 0
        %v5412 = vsel %vm461, %v5339, 0
        %v5415 = vsel %vm461, %v5340, 0
        %v5418 = vsel %vm461, %v5341, 0
        %v5421 = vsel %vm461, %v5342, 0
        %v5424 = vsel %vm461, %v5343, 0
        %v5427 = vsel %vm461, %v5344, 0
        %v5430 = vsel %vm461, %v5345, 0
        %v5433 = vsel %vm461, %v5346, 0
        %v5436 = vsel %vm461, %v5347, 0
        %v5439 = vsel %vm461, %v5348, 0
        %v5442 = vsel %vm461, %v5349, 0
        %v5445 = vsel %vm461, %v5350, 0
        %v5448 = vsel %vm461, %v5351, 0
        %v5451 = vsel %vm461, %v5352, 0
        %5453 = vmatprep.subr.mxu0 0.0
        %5454 = vmatpush1.msra.mxu0 %v273
        %5455 = vmatprep.subr.mxu0 0.0
        %5456 = vmatpush1.msra.mxu0 %v274
        %5457 = vmatprep.subr.mxu0 0.0
        %5458 = vmatpush1.msra.mxu0 %v275
        %5459 = vmatprep.subr.mxu0 0.0
        %5460 = vmatpush1.msra.mxu0 %v276
        %5461 = vmatprep.subr.mxu0 0.0
        %5462 = vmatpush1.msra.mxu0 %v277
        %5463 = vmatprep.subr.mxu0 0.0
        %5464 = vmatpush1.msra.mxu0 %v278
        %5465 = vmatprep.subr.mxu0 0.0
        %5466 = vmatpush1.msra.mxu0 %v279
        %5467 = vmatprep.subr.mxu0 0.0
        %5468 = vmatpush1.msra.mxu0 %v280
        %5469 = vmatprep.subr.mxu0 0.0
        %5470 = vmatpush1.msra.mxu0 0.0
        %5471 = vmatprep.subr.mxu0 0.0
        %5472 = vmatpush1.msra.mxu0 0.0
        %5473 = vmatprep.subr.mxu0 0.0
        %5474 = vmatpush1.msra.mxu0 0.0
        %5475 = vmatprep.subr.mxu0 0.0
        %5476 = vmatpush1.msra.mxu0 0.0
        %5477 = vmatprep.subr.mxu0 0.0
        %5478 = vmatpush1.msra.mxu0 0.0
        %5479 = vmatprep.subr.mxu0 0.0
        %5480 = vmatpush1.msra.mxu0 0.0
        %5481 = vmatprep.subr.mxu0 0.0
        %5482 = vmatpush1.msra.mxu0 0.0
        %5483 = vmatprep.subr.mxu0 0.0
        %5484 = vmatpush1.msra.mxu0 0.0
        %5485 = vmatprep.subr.mxu0 0.0
        %5486 = vmatpush1.msra.mxu0 0.0
        %5487 = vmatprep.subr.mxu0 0.0
        %5488 = vmatpush1.msra.mxu0 0.0
        %5489 = vmatprep.subr.mxu0 0.0
        %5490 = vmatpush1.msra.mxu0 0.0
        %5491 = vmatprep.subr.mxu0 0.0
        %5492 = vmatpush1.msra.mxu0 0.0
        %5493 = vmatprep.subr.mxu0 0.0
        %5494 = vmatpush1.msra.mxu0 0.0
        %5495 = vmatprep.subr.mxu0 0.0
        %5496 = vmatpush1.msra.mxu0 0.0
        %5497 = vmatprep.subr.mxu0 0.0
        %5498 = vmatpush1.msra.mxu0 0.0
        %5499 = vmatprep.subr.mxu0 0.0
        %5500 = vmatpush1.msra.mxu0 0.0
        %5501 = vmatprep.subr.mxu0 0.0
        %5502 = vmatpush1.msra.mxu0 0.0
        %5503 = vmatprep.subr.mxu0 0.0
        %5504 = vmatpush1.msra.mxu0 0.0
        %5505 = vmatprep.subr.mxu0 0.0
        %5506 = vmatpush1.msra.mxu0 0.0
        %5507 = vmatprep.subr.mxu0 0.0
        %5508 = vmatpush1.msra.mxu0 0.0
        %5509 = vmatprep.subr.mxu0 0.0
        %5510 = vmatpush1.msra.mxu0 0.0
        %5511 = vmatprep.subr.mxu0 0.0
        %5512 = vmatpush1.msra.mxu0 0.0
        %5513 = vmatprep.subr.mxu0 0.0
        %5514 = vmatpush1.msra.mxu0 0.0
        %5515 = vmatprep.subr.mxu0 0.0
        %5516 = vmatpush1.msra.mxu0 0.0
        %5517 = vmatprep.mubr.f32.mxu0 0.0
        %5518 = vmatmul.mubr.f32.gmra.mrb[0].mxu0 %v5358
        %v5519 = vpop.f32.mrb[0].mxu0
        %v5520 = vadd.f32 %v5356, %v5519
        %v5521 = vpop.f32.mrb[0].mxu0
        %5522 = vmatprep.mubr.f32.mxu0 0.0
        %5523 = vmatmul.mubr.f32.gmra.mrb[0].mxu0 %v5361
        %v5524 = vpop.f32.mrb[0].mxu0
        %v5525 = vadd.f32 %v5356, %v5524
        %v5526 = vpop.f32.mrb[0].mxu0
        %5527 = vmatprep.mubr.f32.mxu0 0.0
        %5528 = vmatmul.mubr.f32.gmra.mrb[0].mxu0 %v5364
        %v5529 = vpop.f32.mrb[0].mxu0
        %v5530 = vadd.f32 %v5356, %v5529
        %v5531 = vpop.f32.mrb[0].mxu0
        %5532 = vmatprep.mubr.f32.mxu0 0.0
        %5533 = vmatmul.mubr.f32.gmra.mrb[0].mxu0 %v5367
        %v5534 = vpop.f32.mrb[0].mxu0
        %v5535 = vadd.f32 %v5356, %v5534
        %v5536 = vpop.f32.mrb[0].mxu0
        %5537 = vmatprep.mubr.f32.mxu0 0.0
        %5538 = vmatmul.mubr.f32.gmra.mrb[0].mxu0 %v5370
        %v5539 = vpop.f32.mrb[0].mxu0
        %v5540 = vadd.f32 %v5356, %v5539
        %v5541 = vpop.f32.mrb[0].mxu0
        %5542 = vmatprep.mubr.f32.mxu0 0.0
        %5543 = vmatmul.mubr.f32.gmra.mrb[0].mxu0 %v5373
        %v5544 = vpop.f32.mrb[0].mxu0
        %v5545 = vadd.f32 %v5356, %v5544
        %v5546 = vpop.f32.mrb[0].mxu0
        %5547 = vmatprep.mubr.f32.mxu0 0.0
        %5548 = vmatmul.mubr.f32.gmra.mrb[0].mxu0 %v5376
        %v5549 = vpop.f32.mrb[0].mxu0
        %v5550 = vadd.f32 %v5356, %v5549
        %v5551 = vpop.f32.mrb[0].mxu0
        %5552 = vmatprep.mubr.f32.mxu0 0.0
        %5553 = vmatmul.mubr.f32.gmra.mrb[0].mxu0 %v5379
        %v5554 = vpop.f32.mrb[0].mxu0
        %v5555 = vadd.f32 %v5356, %v5554
        %v5556 = vpop.f32.mrb[0].mxu0
        %5557 = vmatprep.mubr.f32.mxu0 0.0
        %5558 = vmatmul.mubr.f32.gmra.mrb[0].mxu0 %v5382
        %v5559 = vpop.f32.mrb[0].mxu0
        %v5560 = vadd.f32 %v5356, %v5559
        %v5561 = vpop.f32.mrb[0].mxu0
        %5562 = vmatprep.mubr.f32.mxu0 0.0
        %5563 = vmatmul.mubr.f32.gmra.mrb[0].mxu0 %v5385
        %v5564 = vpop.f32.mrb[0].mxu0
        %v5565 = vadd.f32 %v5356, %v5564
        %v5566 = vpop.f32.mrb[0].mxu0
        %5567 = vmatprep.mubr.f32.mxu0 0.0
        %5568 = vmatmul.mubr.f32.gmra.mrb[0].mxu0 %v5388
        %v5569 = vpop.f32.mrb[0].mxu0
        %v5570 = vadd.f32 %v5356, %v5569
        %v5571 = vpop.f32.mrb[0].mxu0
        %5572 = vmatprep.mubr.f32.mxu0 0.0
        %5573 = vmatmul.mubr.f32.gmra.mrb[0].mxu0 %v5391
        %v5574 = vpop.f32.mrb[0].mxu0
        %v5575 = vadd.f32 %v5356, %v5574
        %v5576 = vpop.f32.mrb[0].mxu0
        %5577 = vmatprep.mubr.f32.mxu0 0.0
        %5578 = vmatmul.mubr.f32.gmra.mrb[0].mxu0 %v5394
        %v5579 = vpop.f32.mrb[0].mxu0
        %v5580 = vadd.f32 %v5356, %v5579
        %v5581 = vpop.f32.mrb[0].mxu0
        %5582 = vmatprep.mubr.f32.mxu0 0.0
        %5583 = vmatmul.mubr.f32.gmra.mrb[0].mxu0 %v5397
        %v5584 = vpop.f32.mrb[0].mxu0
        %v5585 = vadd.f32 %v5356, %v5584
        %v5586 = vpop.f32.mrb[0].mxu0
        %5587 = vmatprep.mubr.f32.mxu0 0.0
        %5588 = vmatmul.mubr.f32.gmra.mrb[0].mxu0 %v5400
        %v5589 = vpop.f32.mrb[0].mxu0
        %v5590 = vadd.f32 %v5356, %v5589
        %v5591 = vpop.f32.mrb[0].mxu0
        %5592 = vmatprep.mubr.f32.mxu0 0.0
        %5593 = vmatmul.mubr.f32.gmra.mrb[0].mxu0 %v5403
        %v5594 = vpop.f32.mrb[0].mxu0
        %v5595 = vadd.f32 %v5356, %v5594
        %v5596 = vpop.f32.mrb[0].mxu0
        %5597 = vmatprep.mubr.f32.mxu0 0.0
        %5598 = vmatmul.mubr.f32.gmra.mrb[0].mxu0 %v5406
        %v5599 = vpop.f32.mrb[0].mxu0
        %v5600 = vadd.f32 %v5356, %v5599
        %v5601 = vpop.f32.mrb[0].mxu0
        %5602 = vmatprep.mubr.f32.mxu0 0.0
        %5603 = vmatmul.mubr.f32.gmra.mrb[0].mxu0 %v5409
        %v5604 = vpop.f32.mrb[0].mxu0
        %v5605 = vadd.f32 %v5356, %v5604
        %v5606 = vpop.f32.mrb[0].mxu0
        %5607 = vmatprep.mubr.f32.mxu0 0.0
        %5608 = vmatmul.mubr.f32.gmra.mrb[0].mxu0 %v5412
        %v5609 = vpop.f32.mrb[0].mxu0
        %v5610 = vadd.f32 %v5356, %v5609
        %v5611 = vpop.f32.mrb[0].mxu0
        %5612 = vmatprep.mubr.f32.mxu0 0.0
        %5613 = vmatmul.mubr.f32.gmra.mrb[0].mxu0 %v5415
        %v5614 = vpop.f32.mrb[0].mxu0
        %v5615 = vadd.f32 %v5356, %v5614
        %v5616 = vpop.f32.mrb[0].mxu0
        %5617 = vmatprep.mubr.f32.mxu0 0.0
        %5618 = vmatmul.mubr.f32.gmra.mrb[0].mxu0 %v5418
        %v5619 = vpop.f32.mrb[0].mxu0
        %v5620 = vadd.f32 %v5356, %v5619
        %v5621 = vpop.f32.mrb[0].mxu0
        %5622 = vmatprep.mubr.f32.mxu0 0.0
        %5623 = vmatmul.mubr.f32.gmra.mrb[0].mxu0 %v5421
        %v5624 = vpop.f32.mrb[0].mxu0
        %v5625 = vadd.f32 %v5356, %v5624
        %v5626 = vpop.f32.mrb[0].mxu0
        %5627 = vmatprep.mubr.f32.mxu0 0.0
        %5628 = vmatmul.mubr.f32.gmra.mrb[0].mxu0 %v5424
        %v5629 = vpop.f32.mrb[0].mxu0
        %v5630 = vadd.f32 %v5356, %v5629
        %v5631 = vpop.f32.mrb[0].mxu0
        %5632 = vmatprep.mubr.f32.mxu0 0.0
        %5633 = vmatmul.mubr.f32.gmra.mrb[0].mxu0 %v5427
        %v5634 = vpop.f32.mrb[0].mxu0
        %v5635 = vadd.f32 %v5356, %v5634
        %v5636 = vpop.f32.mrb[0].mxu0
        %5637 = vmatprep.mubr.f32.mxu0 0.0
        %5638 = vmatmul.mubr.f32.gmra.mrb[0].mxu0 %v5430
        %v5639 = vpop.f32.mrb[0].mxu0
        %v5640 = vadd.f32 %v5356, %v5639
        %v5641 = vpop.f32.mrb[0].mxu0
        %5642 = vmatprep.mubr.f32.mxu0 0.0
        %5643 = vmatmul.mubr.f32.gmra.mrb[0].mxu0 %v5433
        %v5644 = vpop.f32.mrb[0].mxu0
        %v5645 = vadd.f32 %v5356, %v5644
        %v5646 = vpop.f32.mrb[0].mxu0
        %5647 = vmatprep.mubr.f32.mxu0 0.0
        %5648 = vmatmul.mubr.f32.gmra.mrb[0].mxu0 %v5436
        %v5649 = vpop.f32.mrb[0].mxu0
        %v5650 = vadd.f32 %v5356, %v5649
        %v5651 = vpop.f32.mrb[0].mxu0
        %5652 = vmatprep.mubr.f32.mxu0 0.0
        %5653 = vmatmul.mubr.f32.gmra.mrb[0].mxu0 %v5439
        %v5654 = vpop.f32.mrb[0].mxu0
        %v5655 = vadd.f32 %v5356, %v5654
        %v5656 = vpop.f32.mrb[0].mxu0
        %5657 = vmatprep.mubr.f32.mxu0 0.0
        %5658 = vmatmul.mubr.f32.gmra.mrb[0].mxu0 %v5442
        %v5659 = vpop.f32.mrb[0].mxu0
        %v5660 = vadd.f32 %v5356, %v5659
        %v5661 = vpop.f32.mrb[0].mxu0
        %5662 = vmatprep.mubr.f32.mxu0 0.0
        %5663 = vmatmul.mubr.f32.gmra.mrb[0].mxu0 %v5445
        %v5664 = vpop.f32.mrb[0].mxu0
        %v5665 = vadd.f32 %v5356, %v5664
        %v5666 = vpop.f32.mrb[0].mxu0
        %5667 = vmatprep.mubr.f32.mxu0 0.0
        %5668 = vmatmul.mubr.f32.gmra.mrb[0].mxu0 %v5448
        %v5669 = vpop.f32.mrb[0].mxu0
        %v5670 = vadd.f32 %v5356, %v5669
        %v5671 = vpop.f32.mrb[0].mxu0
        %5672 = vmatprep.mubr.f32.mxu0 0.0
        %5673 = vmatmul.mubr.f32.gmra.mrb[0].mxu0 %v5451
        %v5674 = vpop.f32.mrb[0].mxu0
        %v5675 = vadd.f32 %v5356, %v5674
        %v5676 = vpop.f32.mrb[0].mxu0
        %5677 = vdwg.mxu0
        %v5678 = vxor.u32 %v5520, 2147483648
        %v5679 = vxor.u32 %v5525, 2147483648
        %v5680 = vxor.u32 %v5530, 2147483648
        %v5681 = vxor.u32 %v5535, 2147483648
        %v5682 = vxor.u32 %v5540, 2147483648
        %v5683 = vxor.u32 %v5545, 2147483648
        %v5684 = vxor.u32 %v5550, 2147483648
        %v5685 = vxor.u32 %v5555, 2147483648
        %v5686 = vxor.u32 %v5560, 2147483648
        %v5687 = vxor.u32 %v5565, 2147483648
        %v5688 = vxor.u32 %v5570, 2147483648
        %v5689 = vxor.u32 %v5575, 2147483648
        %v5690 = vxor.u32 %v5580, 2147483648
        %v5691 = vxor.u32 %v5585, 2147483648
        %v5692 = vxor.u32 %v5590, 2147483648
        %v5693 = vxor.u32 %v5595, 2147483648
        %v5694 = vxor.u32 %v5600, 2147483648
        %v5695 = vxor.u32 %v5605, 2147483648
        %v5696 = vxor.u32 %v5610, 2147483648
        %v5697 = vxor.u32 %v5615, 2147483648
        %v5698 = vxor.u32 %v5620, 2147483648
        %v5699 = vxor.u32 %v5625, 2147483648
        %v5700 = vxor.u32 %v5630, 2147483648
        %v5701 = vxor.u32 %v5635, 2147483648
        %v5702 = vxor.u32 %v5640, 2147483648
        %v5703 = vxor.u32 %v5645, 2147483648
        %v5704 = vxor.u32 %v5650, 2147483648
        %v5705 = vxor.u32 %v5655, 2147483648
        %v5706 = vxor.u32 %v5660, 2147483648
        %v5707 = vxor.u32 %v5665, 2147483648
        %v5708 = vxor.u32 %v5670, 2147483648
        %v5709 = vxor.u32 %v5675, 2147483648
        %v5710 = vmul.f32 %v5678, 1.442695
        %v5711 = vpow.pop %v5710
        %v5712 = vmul.f32 %v5679, 1.442695
        %v5713 = vpow.pop %v5712
        %v5714 = vmul.f32 %v5680, 1.442695
        %v5715 = vpow.pop %v5714
        %v5716 = vmul.f32 %v5681, 1.442695
        %v5717 = vpow.pop %v5716
        %v5718 = vmul.f32 %v5682, 1.442695
        %v5719 = vpow.pop %v5718
        %v5720 = vmul.f32 %v5683, 1.442695
        %v5721 = vpow.pop %v5720
        %v5722 = vmul.f32 %v5684, 1.442695
        %v5723 = vpow.pop %v5722
        %v5724 = vmul.f32 %v5685, 1.442695
        %v5725 = vpow.pop %v5724
        %v5726 = vmul.f32 %v5686, 1.442695
        %v5727 = vpow.pop %v5726
        %v5728 = vmul.f32 %v5687, 1.442695
        %v5729 = vpow.pop %v5728
        %v5730 = vmul.f32 %v5688, 1.442695
        %v5731 = vpow.pop %v5730
        %v5732 = vmul.f32 %v5689, 1.442695
        %v5733 = vpow.pop %v5732
        %v5734 = vmul.f32 %v5690, 1.442695
        %v5735 = vpow.pop %v5734
        %v5736 = vmul.f32 %v5691, 1.442695
        %v5737 = vpow.pop %v5736
        %v5738 = vmul.f32 %v5692, 1.442695
        %v5739 = vpow.pop %v5738
        %v5740 = vmul.f32 %v5693, 1.442695
        %v5741 = vpow.pop %v5740
        %v5742 = vmul.f32 %v5694, 1.442695
        %v5743 = vpow.pop %v5742
        %v5744 = vmul.f32 %v5695, 1.442695
        %v5745 = vpow.pop %v5744
        %v5746 = vmul.f32 %v5696, 1.442695
        %v5747 = vpow.pop %v5746
        %v5748 = vmul.f32 %v5697, 1.442695
        %v5749 = vpow.pop %v5748
        %v5750 = vmul.f32 %v5698, 1.442695
        %v5751 = vpow.pop %v5750
        %v5752 = vmul.f32 %v5699, 1.442695
        %v5753 = vpow.pop %v5752
        %v5754 = vmul.f32 %v5700, 1.442695
        %v5755 = vpow.pop %v5754
        %v5756 = vmul.f32 %v5701, 1.442695
        %v5757 = vpow.pop %v5756
        %v5758 = vmul.f32 %v5702, 1.442695
        %v5759 = vpow.pop %v5758
        %v5760 = vmul.f32 %v5703, 1.442695
        %v5761 = vpow.pop %v5760
        %v5762 = vmul.f32 %v5704, 1.442695
        %v5763 = vpow.pop %v5762
        %v5764 = vmul.f32 %v5705, 1.442695
        %v5765 = vpow.pop %v5764
        %v5766 = vmul.f32 %v5706, 1.442695
        %v5767 = vpow.pop %v5766
        %v5768 = vmul.f32 %v5707, 1.442695
        %v5769 = vpow.pop %v5768
        %v5770 = vmul.f32 %v5708, 1.442695
        %v5771 = vpow.pop %v5770
        %v5772 = vmul.f32 %v5709, 1.442695
        %v5773 = vpow.pop %v5772
        %v5774 = vadd.f32 %v5711, 1.0
        %v5775 = vadd.f32 %v5713, 1.0
        %v5776 = vadd.f32 %v5715, 1.0
        %v5777 = vadd.f32 %v5717, 1.0
        %v5778 = vadd.f32 %v5719, 1.0
        %v5779 = vadd.f32 %v5721, 1.0
        %v5780 = vadd.f32 %v5723, 1.0
        %v5781 = vadd.f32 %v5725, 1.0
        %v5782 = vadd.f32 %v5727, 1.0
        %v5783 = vadd.f32 %v5729, 1.0
        %v5784 = vadd.f32 %v5731, 1.0
        %v5785 = vadd.f32 %v5733, 1.0
        %v5786 = vadd.f32 %v5735, 1.0
        %v5787 = vadd.f32 %v5737, 1.0
        %v5788 = vadd.f32 %v5739, 1.0
        %v5789 = vadd.f32 %v5741, 1.0
        %v5790 = vadd.f32 %v5743, 1.0
        %v5791 = vadd.f32 %v5745, 1.0
        %v5792 = vadd.f32 %v5747, 1.0
        %v5793 = vadd.f32 %v5749, 1.0
        %v5794 = vadd.f32 %v5751, 1.0
        %v5795 = vadd.f32 %v5753, 1.0
        %v5796 = vadd.f32 %v5755, 1.0
        %v5797 = vadd.f32 %v5757, 1.0
        %v5798 = vadd.f32 %v5759, 1.0
        %v5799 = vadd.f32 %v5761, 1.0
        %v5800 = vadd.f32 %v5763, 1.0
        %v5801 = vadd.f32 %v5765, 1.0
        %v5802 = vadd.f32 %v5767, 1.0
        %v5803 = vadd.f32 %v5769, 1.0
        %v5804 = vadd.f32 %v5771, 1.0
        %v5805 = vadd.f32 %v5773, 1.0
        %v5806 = vrcp.pop %v5774
        %v5807 = vmul.f32 1.0, %v5806
        %v5808 = vrcp.pop %v5775
        %v5809 = vmul.f32 1.0, %v5808
        %v5810 = vrcp.pop %v5776
        %v5811 = vmul.f32 1.0, %v5810
        %v5812 = vrcp.pop %v5777
        %v5813 = vmul.f32 1.0, %v5812
        %v5814 = vrcp.pop %v5778
        %v5815 = vmul.f32 1.0, %v5814
        %v5816 = vrcp.pop %v5779
        %v5817 = vmul.f32 1.0, %v5816
        %v5818 = vrcp.pop %v5780
        %v5819 = vmul.f32 1.0, %v5818
        %v5820 = vrcp.pop %v5781
        %v5821 = vmul.f32 1.0, %v5820
        %v5822 = vrcp.pop %v5782
        %v5823 = vmul.f32 1.0, %v5822
        %v5824 = vrcp.pop %v5783
        %v5825 = vmul.f32 1.0, %v5824
        %v5826 = vrcp.pop %v5784
        %v5827 = vmul.f32 1.0, %v5826
        %v5828 = vrcp.pop %v5785
        %v5829 = vmul.f32 1.0, %v5828
        %v5830 = vrcp.pop %v5786
        %v5831 = vmul.f32 1.0, %v5830
        %v5832 = vrcp.pop %v5787
        %v5833 = vmul.f32 1.0, %v5832
        %v5834 = vrcp.pop %v5788
        %v5835 = vmul.f32 1.0, %v5834
        %v5836 = vrcp.pop %v5789
        %v5837 = vmul.f32 1.0, %v5836
        %v5838 = vrcp.pop %v5790
        %v5839 = vmul.f32 1.0, %v5838
        %v5840 = vrcp.pop %v5791
        %v5841 = vmul.f32 1.0, %v5840
        %v5842 = vrcp.pop %v5792
        %v5843 = vmul.f32 1.0, %v5842
        %v5844 = vrcp.pop %v5793
        %v5845 = vmul.f32 1.0, %v5844
        %v5846 = vrcp.pop %v5794
        %v5847 = vmul.f32 1.0, %v5846
        %v5848 = vrcp.pop %v5795
        %v5849 = vmul.f32 1.0, %v5848
        %v5850 = vrcp.pop %v5796
        %v5851 = vmul.f32 1.0, %v5850
        %v5852 = vrcp.pop %v5797
        %v5853 = vmul.f32 1.0, %v5852
        %v5854 = vrcp.pop %v5798
        %v5855 = vmul.f32 1.0, %v5854
        %v5856 = vrcp.pop %v5799
        %v5857 = vmul.f32 1.0, %v5856
        %v5858 = vrcp.pop %v5800
        %v5859 = vmul.f32 1.0, %v5858
        %v5860 = vrcp.pop %v5801
        %v5861 = vmul.f32 1.0, %v5860
        %v5862 = vrcp.pop %v5802
        %v5863 = vmul.f32 1.0, %v5862
        %v5864 = vrcp.pop %v5803
        %v5865 = vmul.f32 1.0, %v5864
        %v5866 = vrcp.pop %v5804
        %v5867 = vmul.f32 1.0, %v5866
        %v5868 = vrcp.pop %v5805
        %v5869 = vmul.f32 1.0, %v5868
        %v5870 = vmul.f32 %v5520, %v5807
        %v5871 = vmul.f32 %v5525, %v5809
        %v5872 = vmul.f32 %v5530, %v5811
        %v5873 = vmul.f32 %v5535, %v5813
        %v5874 = vmul.f32 %v5540, %v5815
        %v5875 = vmul.f32 %v5545, %v5817
        %v5876 = vmul.f32 %v5550, %v5819
        %v5877 = vmul.f32 %v5555, %v5821
        %v5878 = vmul.f32 %v5560, %v5823
        %v5879 = vmul.f32 %v5565, %v5825
        %v5880 = vmul.f32 %v5570, %v5827
        %v5881 = vmul.f32 %v5575, %v5829
        %v5882 = vmul.f32 %v5580, %v5831
        %v5883 = vmul.f32 %v5585, %v5833
        %v5884 = vmul.f32 %v5590, %v5835
        %v5885 = vmul.f32 %v5595, %v5837
        %v5886 = vmul.f32 %v5600, %v5839
        %v5887 = vmul.f32 %v5605, %v5841
        %v5888 = vmul.f32 %v5610, %v5843
        %v5889 = vmul.f32 %v5615, %v5845
        %v5890 = vmul.f32 %v5620, %v5847
        %v5891 = vmul.f32 %v5625, %v5849
        %v5892 = vmul.f32 %v5630, %v5851
        %v5893 = vmul.f32 %v5635, %v5853
        %v5894 = vmul.f32 %v5640, %v5855
        %v5895 = vmul.f32 %v5645, %v5857
        %v5896 = vmul.f32 %v5650, %v5859
        %v5897 = vmul.f32 %v5655, %v5861
        %v5898 = vmul.f32 %v5660, %v5863
        %v5899 = vmul.f32 %v5665, %v5865
        %v5900 = vmul.f32 %v5670, %v5867
        %v5901 = vmul.f32 %v5675, %v5869
        %v5902 = vlaneseq
        %v5903 = vshrl.u32 %v5902, 7
        %v5904 = vsub.s32 0, %v5903
        %v5905 = vrot.slane %v4803, %v5904
        %v5907 = vsel %vm461, %v5870, 0
        %v5910 = vsel %vm461, %v5871, 0
        %v5913 = vsel %vm461, %v5872, 0
        %v5916 = vsel %vm461, %v5873, 0
        %v5919 = vsel %vm461, %v5874, 0
        %v5922 = vsel %vm461, %v5875, 0
        %v5925 = vsel %vm461, %v5876, 0
        %v5928 = vsel %vm461, %v5877, 0
        %v5931 = vsel %vm461, %v5878, 0
        %v5934 = vsel %vm461, %v5879, 0
        %v5937 = vsel %vm461, %v5880, 0
        %v5940 = vsel %vm461, %v5881, 0
        %v5943 = vsel %vm461, %v5882, 0
        %v5946 = vsel %vm461, %v5883, 0
        %v5949 = vsel %vm461, %v5884, 0
        %v5952 = vsel %vm461, %v5885, 0
        %v5955 = vsel %vm461, %v5886, 0
        %v5958 = vsel %vm461, %v5887, 0
        %v5961 = vsel %vm461, %v5888, 0
        %v5964 = vsel %vm461, %v5889, 0
        %v5967 = vsel %vm461, %v5890, 0
        %v5970 = vsel %vm461, %v5891, 0
        %v5973 = vsel %vm461, %v5892, 0
        %v5976 = vsel %vm461, %v5893, 0
        %v5979 = vsel %vm461, %v5894, 0
        %v5982 = vsel %vm461, %v5895, 0
        %v5985 = vsel %vm461, %v5896, 0
        %v5988 = vsel %vm461, %v5897, 0
        %v5991 = vsel %vm461, %v5898, 0
        %v5994 = vsel %vm461, %v5899, 0
        %v5997 = vsel %vm461, %v5900, 0
        %v6000 = vsel %vm461, %v5901, 0
        %6002 = vmatprep.subr.mxu0 0.0
        %6003 = vmatpush1.msra.mxu0 %v4795
        %6004 = vmatprep.subr.mxu0 0.0
        %6005 = vmatpush1.msra.mxu0 %v4796
        %6006 = vmatprep.subr.mxu0 0.0
        %6007 = vmatpush1.msra.mxu0 %v4797
        %6008 = vmatprep.subr.mxu0 0.0
        %6009 = vmatpush1.msra.mxu0 %v4798
        %6010 = vmatprep.subr.mxu0 0.0
        %6011 = vmatpush1.msra.mxu0 %v4799
        %6012 = vmatprep.subr.mxu0 0.0
        %6013 = vmatpush1.msra.mxu0 %v4800
        %6014 = vmatprep.subr.mxu0 0.0
        %6015 = vmatpush1.msra.mxu0 %v4801
        %6016 = vmatprep.subr.mxu0 0.0
        %6017 = vmatpush1.msra.mxu0 %v4802
        %6018 = vmatprep.subr.mxu0 0.0
        %6019 = vmatpush1.msra.mxu0 0.0
        %6020 = vmatprep.subr.mxu0 0.0
        %6021 = vmatpush1.msra.mxu0 0.0
        %6022 = vmatprep.subr.mxu0 0.0
        %6023 = vmatpush1.msra.mxu0 0.0
        %6024 = vmatprep.subr.mxu0 0.0
        %6025 = vmatpush1.msra.mxu0 0.0
        %6026 = vmatprep.subr.mxu0 0.0
        %6027 = vmatpush1.msra.mxu0 0.0
        %6028 = vmatprep.subr.mxu0 0.0
        %6029 = vmatpush1.msra.mxu0 0.0
        %6030 = vmatprep.subr.mxu0 0.0
        %6031 = vmatpush1.msra.mxu0 0.0
        %6032 = vmatprep.subr.mxu0 0.0
        %6033 = vmatpush1.msra.mxu0 0.0
        %6034 = vmatprep.subr.mxu0 0.0
        %6035 = vmatpush1.msra.mxu0 0.0
        %6036 = vmatprep.subr.mxu0 0.0
        %6037 = vmatpush1.msra.mxu0 0.0
        %6038 = vmatprep.subr.mxu0 0.0
        %6039 = vmatpush1.msra.mxu0 0.0
        %6040 = vmatprep.subr.mxu0 0.0
        %6041 = vmatpush1.msra.mxu0 0.0
        %6042 = vmatprep.subr.mxu0 0.0
        %6043 = vmatpush1.msra.mxu0 0.0
        %6044 = vmatprep.subr.mxu0 0.0
        %6045 = vmatpush1.msra.mxu0 0.0
        %6046 = vmatprep.subr.mxu0 0.0
        %6047 = vmatpush1.msra.mxu0 0.0
        %6048 = vmatprep.subr.mxu0 0.0
        %6049 = vmatpush1.msra.mxu0 0.0
        %6050 = vmatprep.subr.mxu0 0.0
        %6051 = vmatpush1.msra.mxu0 0.0
        %6052 = vmatprep.subr.mxu0 0.0
        %6053 = vmatpush1.msra.mxu0 0.0
        %6054 = vmatprep.subr.mxu0 0.0
        %6055 = vmatpush1.msra.mxu0 0.0
        %6056 = vmatprep.subr.mxu0 0.0
        %6057 = vmatpush1.msra.mxu0 0.0
        %6058 = vmatprep.subr.mxu0 0.0
        %6059 = vmatpush1.msra.mxu0 0.0
        %6060 = vmatprep.subr.mxu0 0.0
        %6061 = vmatpush1.msra.mxu0 0.0
        %6062 = vmatprep.subr.mxu0 0.0
        %6063 = vmatpush1.msra.mxu0 0.0
        %6064 = vmatprep.subr.mxu0 0.0
        %6065 = vmatpush1.msra.mxu0 0.0
        %6066 = vmatprep.mubr.f32.mxu0 0.0
        %6067 = vmatmul.mubr.f32.gmra.mrb[0].mxu0 %v5907
        %v6068 = vpop.f32.mrb[0].mxu0
        %v6069 = vadd.f32 %v5905, %v6068
        %v6070 = vpop.f32.mrb[0].mxu0
        %6071 = vmatprep.mubr.f32.mxu0 0.0
        %6072 = vmatmul.mubr.f32.gmra.mrb[0].mxu0 %v5910
        %v6073 = vpop.f32.mrb[0].mxu0
        %v6074 = vadd.f32 %v5905, %v6073
        %v6075 = vpop.f32.mrb[0].mxu0
        %6076 = vmatprep.mubr.f32.mxu0 0.0
        %6077 = vmatmul.mubr.f32.gmra.mrb[0].mxu0 %v5913
        %v6078 = vpop.f32.mrb[0].mxu0
        %v6079 = vadd.f32 %v5905, %v6078
        %v6080 = vpop.f32.mrb[0].mxu0
        %6081 = vmatprep.mubr.f32.mxu0 0.0
        %6082 = vmatmul.mubr.f32.gmra.mrb[0].mxu0 %v5916
        %v6083 = vpop.f32.mrb[0].mxu0
        %v6084 = vadd.f32 %v5905, %v6083
        %v6085 = vpop.f32.mrb[0].mxu0
        %6086 = vmatprep.mubr.f32.mxu0 0.0
        %6087 = vmatmul.mubr.f32.gmra.mrb[0].mxu0 %v5919
        %v6088 = vpop.f32.mrb[0].mxu0
        %v6089 = vadd.f32 %v5905, %v6088
        %v6090 = vpop.f32.mrb[0].mxu0
        %6091 = vmatprep.mubr.f32.mxu0 0.0
        %6092 = vmatmul.mubr.f32.gmra.mrb[0].mxu0 %v5922
        %v6093 = vpop.f32.mrb[0].mxu0
        %v6094 = vadd.f32 %v5905, %v6093
        %v6095 = vpop.f32.mrb[0].mxu0
        %6096 = vmatprep.mubr.f32.mxu0 0.0
        %6097 = vmatmul.mubr.f32.gmra.mrb[0].mxu0 %v5925
        %v6098 = vpop.f32.mrb[0].mxu0
        %v6099 = vadd.f32 %v5905, %v6098
        %v6100 = vpop.f32.mrb[0].mxu0
        %6101 = vmatprep.mubr.f32.mxu0 0.0
        %6102 = vmatmul.mubr.f32.gmra.mrb[0].mxu0 %v5928
        %v6103 = vpop.f32.mrb[0].mxu0
        %v6104 = vadd.f32 %v5905, %v6103
        %v6105 = vpop.f32.mrb[0].mxu0
        %6106 = vmatprep.mubr.f32.mxu0 0.0
        %6107 = vmatmul.mubr.f32.gmra.mrb[0].mxu0 %v5931
        %v6108 = vpop.f32.mrb[0].mxu0
        %v6109 = vadd.f32 %v5905, %v6108
        %v6110 = vpop.f32.mrb[0].mxu0
        %6111 = vmatprep.mubr.f32.mxu0 0.0
        %6112 = vmatmul.mubr.f32.gmra.mrb[0].mxu0 %v5934
        %v6113 = vpop.f32.mrb[0].mxu0
        %v6114 = vadd.f32 %v5905, %v6113
        %v6115 = vpop.f32.mrb[0].mxu0
        %6116 = vmatprep.mubr.f32.mxu0 0.0
        %6117 = vmatmul.mubr.f32.gmra.mrb[0].mxu0 %v5937
        %v6118 = vpop.f32.mrb[0].mxu0
        %v6119 = vadd.f32 %v5905, %v6118
        %v6120 = vpop.f32.mrb[0].mxu0
        %6121 = vmatprep.mubr.f32.mxu0 0.0
        %6122 = vmatmul.mubr.f32.gmra.mrb[0].mxu0 %v5940
        %v6123 = vpop.f32.mrb[0].mxu0
        %v6124 = vadd.f32 %v5905, %v6123
        %v6125 = vpop.f32.mrb[0].mxu0
        %6126 = vmatprep.mubr.f32.mxu0 0.0
        %6127 = vmatmul.mubr.f32.gmra.mrb[0].mxu0 %v5943
        %v6128 = vpop.f32.mrb[0].mxu0
        %v6129 = vadd.f32 %v5905, %v6128
        %v6130 = vpop.f32.mrb[0].mxu0
        %6131 = vmatprep.mubr.f32.mxu0 0.0
        %6132 = vmatmul.mubr.f32.gmra.mrb[0].mxu0 %v5946
        %v6133 = vpop.f32.mrb[0].mxu0
        %v6134 = vadd.f32 %v5905, %v6133
        %v6135 = vpop.f32.mrb[0].mxu0
        %6136 = vmatprep.mubr.f32.mxu0 0.0
        %6137 = vmatmul.mubr.f32.gmra.mrb[0].mxu0 %v5949
        %v6138 = vpop.f32.mrb[0].mxu0
        %v6139 = vadd.f32 %v5905, %v6138
        %v6140 = vpop.f32.mrb[0].mxu0
        %6141 = vmatprep.mubr.f32.mxu0 0.0
        %6142 = vmatmul.mubr.f32.gmra.mrb[0].mxu0 %v5952
        %v6143 = vpop.f32.mrb[0].mxu0
        %v6144 = vadd.f32 %v5905, %v6143
        %v6145 = vpop.f32.mrb[0].mxu0
        %6146 = vmatprep.mubr.f32.mxu0 0.0
        %6147 = vmatmul.mubr.f32.gmra.mrb[0].mxu0 %v5955
        %v6148 = vpop.f32.mrb[0].mxu0
        %v6149 = vadd.f32 %v5905, %v6148
        %v6150 = vpop.f32.mrb[0].mxu0
        %6151 = vmatprep.mubr.f32.mxu0 0.0
        %6152 = vmatmul.mubr.f32.gmra.mrb[0].mxu0 %v5958
        %v6153 = vpop.f32.mrb[0].mxu0
        %v6154 = vadd.f32 %v5905, %v6153
        %v6155 = vpop.f32.mrb[0].mxu0
        %6156 = vmatprep.mubr.f32.mxu0 0.0
        %6157 = vmatmul.mubr.f32.gmra.mrb[0].mxu0 %v5961
        %v6158 = vpop.f32.mrb[0].mxu0
        %v6159 = vadd.f32 %v5905, %v6158
        %v6160 = vpop.f32.mrb[0].mxu0
        %6161 = vmatprep.mubr.f32.mxu0 0.0
        %6162 = vmatmul.mubr.f32.gmra.mrb[0].mxu0 %v5964
        %v6163 = vpop.f32.mrb[0].mxu0
        %v6164 = vadd.f32 %v5905, %v6163
        %v6165 = vpop.f32.mrb[0].mxu0
        %6166 = vmatprep.mubr.f32.mxu0 0.0
        %6167 = vmatmul.mubr.f32.gmra.mrb[0].mxu0 %v5967
        %v6168 = vpop.f32.mrb[0].mxu0
        %v6169 = vadd.f32 %v5905, %v6168
        %v6170 = vpop.f32.mrb[0].mxu0
        %6171 = vmatprep.mubr.f32.mxu0 0.0
        %6172 = vmatmul.mubr.f32.gmra.mrb[0].mxu0 %v5970
        %v6173 = vpop.f32.mrb[0].mxu0
        %v6174 = vadd.f32 %v5905, %v6173
        %v6175 = vpop.f32.mrb[0].mxu0
        %6176 = vmatprep.mubr.f32.mxu0 0.0
        %6177 = vmatmul.mubr.f32.gmra.mrb[0].mxu0 %v5973
        %v6178 = vpop.f32.mrb[0].mxu0
        %v6179 = vadd.f32 %v5905, %v6178
        %v6180 = vpop.f32.mrb[0].mxu0
        %6181 = vmatprep.mubr.f32.mxu0 0.0
        %6182 = vmatmul.mubr.f32.gmra.mrb[0].mxu0 %v5976
        %v6183 = vpop.f32.mrb[0].mxu0
        %v6184 = vadd.f32 %v5905, %v6183
        %v6185 = vpop.f32.mrb[0].mxu0
        %6186 = vmatprep.mubr.f32.mxu0 0.0
        %6187 = vmatmul.mubr.f32.gmra.mrb[0].mxu0 %v5979
        %v6188 = vpop.f32.mrb[0].mxu0
        %v6189 = vadd.f32 %v5905, %v6188
        %v6190 = vpop.f32.mrb[0].mxu0
        %6191 = vmatprep.mubr.f32.mxu0 0.0
        %6192 = vmatmul.mubr.f32.gmra.mrb[0].mxu0 %v5982
        %v6193 = vpop.f32.mrb[0].mxu0
        %v6194 = vadd.f32 %v5905, %v6193
        %v6195 = vpop.f32.mrb[0].mxu0
        %6196 = vmatprep.mubr.f32.mxu0 0.0
        %6197 = vmatmul.mubr.f32.gmra.mrb[0].mxu0 %v5985
        %v6198 = vpop.f32.mrb[0].mxu0
        %v6199 = vadd.f32 %v5905, %v6198
        %v6200 = vpop.f32.mrb[0].mxu0
        %6201 = vmatprep.mubr.f32.mxu0 0.0
        %6202 = vmatmul.mubr.f32.gmra.mrb[0].mxu0 %v5988
        %v6203 = vpop.f32.mrb[0].mxu0
        %v6204 = vadd.f32 %v5905, %v6203
        %v6205 = vpop.f32.mrb[0].mxu0
        %6206 = vmatprep.mubr.f32.mxu0 0.0
        %6207 = vmatmul.mubr.f32.gmra.mrb[0].mxu0 %v5991
        %v6208 = vpop.f32.mrb[0].mxu0
        %v6209 = vadd.f32 %v5905, %v6208
        %v6210 = vpop.f32.mrb[0].mxu0
        %6211 = vmatprep.mubr.f32.mxu0 0.0
        %6212 = vmatmul.mubr.f32.gmra.mrb[0].mxu0 %v5994
        %v6213 = vpop.f32.mrb[0].mxu0
        %v6214 = vadd.f32 %v5905, %v6213
        %v6215 = vpop.f32.mrb[0].mxu0
        %6216 = vmatprep.mubr.f32.mxu0 0.0
        %6217 = vmatmul.mubr.f32.gmra.mrb[0].mxu0 %v5997
        %v6218 = vpop.f32.mrb[0].mxu0
        %v6219 = vadd.f32 %v5905, %v6218
        %v6220 = vpop.f32.mrb[0].mxu0
        %6221 = vmatprep.mubr.f32.mxu0 0.0
        %6222 = vmatmul.mubr.f32.gmra.mrb[0].mxu0 %v6000
        %v6223 = vpop.f32.mrb[0].mxu0
        %v6224 = vadd.f32 %v5905, %v6223
        %v6225 = vpop.f32.mrb[0].mxu0
        %6226 = vdwg.mxu0
        %6227 = vrot.lane.b32.xlu0 %v5870, 64
        %v6228 = vpop.permute.xlu0 %6227
        %6229 = vrot.lane.b32.xlu0 %v5871, 64
        %v6230 = vpop.permute.xlu0 %6229
        %6231 = vrot.lane.b32.xlu0 %v5872, 64
        %v6232 = vpop.permute.xlu0 %6231
        %6233 = vrot.lane.b32.xlu0 %v5873, 64
        %v6234 = vpop.permute.xlu0 %6233
        %6235 = vrot.lane.b32.xlu0 %v5874, 64
        %v6236 = vpop.permute.xlu0 %6235
        %6237 = vrot.lane.b32.xlu0 %v5875, 64
        %v6238 = vpop.permute.xlu0 %6237
        %6239 = vrot.lane.b32.xlu0 %v5876, 64
        %v6240 = vpop.permute.xlu0 %6239
        %6241 = vrot.lane.b32.xlu0 %v5877, 64
        %v6242 = vpop.permute.xlu0 %6241
        %6243 = vrot.lane.b32.xlu0 %v5878, 64
        %v6244 = vpop.permute.xlu0 %6243
        %6245 = vrot.lane.b32.xlu0 %v5879, 64
        %v6246 = vpop.permute.xlu0 %6245
        %6247 = vrot.lane.b32.xlu0 %v5880, 64
        %v6248 = vpop.permute.xlu0 %6247
        %6249 = vrot.lane.b32.xlu0 %v5881, 64
        %v6250 = vpop.permute.xlu0 %6249
        %6251 = vrot.lane.b32.xlu0 %v5882, 64
        %v6252 = vpop.permute.xlu0 %6251
        %6253 = vrot.lane.b32.xlu0 %v5883, 64
        %v6254 = vpop.permute.xlu0 %6253
        %6255 = vrot.lane.b32.xlu0 %v5884, 64
        %v6256 = vpop.permute.xlu0 %6255
        %6257 = vrot.lane.b32.xlu0 %v5885, 64
        %v6258 = vpop.permute.xlu0 %6257
        %6259 = vrot.lane.b32.xlu0 %v5886, 64
        %v6260 = vpop.permute.xlu0 %6259
        %6261 = vrot.lane.b32.xlu0 %v5887, 64
        %v6262 = vpop.permute.xlu0 %6261
        %6263 = vrot.lane.b32.xlu0 %v5888, 64
        %v6264 = vpop.permute.xlu0 %6263
        %6265 = vrot.lane.b32.xlu0 %v5889, 64
        %v6266 = vpop.permute.xlu0 %6265
        %6267 = vrot.lane.b32.xlu0 %v5890, 64
        %v6268 = vpop.permute.xlu0 %6267
        %6269 = vrot.lane.b32.xlu0 %v5891, 64
        %v6270 = vpop.permute.xlu0 %6269
        %6271 = vrot.lane.b32.xlu0 %v5892, 64
        %v6272 = vpop.permute.xlu0 %6271
        %6273 = vrot.lane.b32.xlu0 %v5893, 64
        %v6274 = vpop.permute.xlu0 %6273
        %6275 = vrot.lane.b32.xlu0 %v5894, 64
        %v6276 = vpop.permute.xlu0 %6275
        %6277 = vrot.lane.b32.xlu0 %v5895, 64
        %v6278 = vpop.permute.xlu0 %6277
        %6279 = vrot.lane.b32.xlu0 %v5896, 64
        %v6280 = vpop.permute.xlu0 %6279
        %6281 = vrot.lane.b32.xlu0 %v5897, 64
        %v6282 = vpop.permute.xlu0 %6281
        %6283 = vrot.lane.b32.xlu0 %v5898, 64
        %v6284 = vpop.permute.xlu0 %6283
        %6285 = vrot.lane.b32.xlu0 %v5899, 64
        %v6286 = vpop.permute.xlu0 %6285
        %6287 = vrot.lane.b32.xlu0 %v5900, 64
        %v6288 = vpop.permute.xlu0 %6287
        %6289 = vrot.lane.b32.xlu0 %v5901, 64
        %v6290 = vpop.permute.xlu0 %6289
        %v6323 = vsel %vm461, %v5321, %v6228
        %v6324 = vsel %vm461, %v5322, %v6230
        %v6325 = vsel %vm461, %v5323, %v6232
        %v6326 = vsel %vm461, %v5324, %v6234
        %v6327 = vsel %vm461, %v5325, %v6236
        %v6328 = vsel %vm461, %v5326, %v6238
        %v6329 = vsel %vm461, %v5327, %v6240
        %v6330 = vsel %vm461, %v5328, %v6242
        %v6331 = vsel %vm461, %v5329, %v6244
        %v6332 = vsel %vm461, %v5330, %v6246
        %v6333 = vsel %vm461, %v5331, %v6248
        %v6334 = vsel %vm461, %v5332, %v6250
        %v6335 = vsel %vm461, %v5333, %v6252
        %v6336 = vsel %vm461, %v5334, %v6254
        %v6337 = vsel %vm461, %v5335, %v6256
        %v6338 = vsel %vm461, %v5336, %v6258
        %v6339 = vsel %vm461, %v5337, %v6260
        %v6340 = vsel %vm461, %v5338, %v6262
        %v6341 = vsel %vm461, %v5339, %v6264
        %v6342 = vsel %vm461, %v5340, %v6266
        %v6343 = vsel %vm461, %v5341, %v6268
        %v6344 = vsel %vm461, %v5342, %v6270
        %v6345 = vsel %vm461, %v5343, %v6272
        %v6346 = vsel %vm461, %v5344, %v6274
        %v6347 = vsel %vm461, %v5345, %v6276
        %v6348 = vsel %vm461, %v5346, %v6278
        %v6349 = vsel %vm461, %v5347, %v6280
        %v6350 = vsel %vm461, %v5348, %v6282
        %v6351 = vsel %vm461, %v5349, %v6284
        %v6352 = vsel %vm461, %v5350, %v6286
        %v6353 = vsel %vm461, %v5351, %v6288
        %v6354 = vsel %vm461, %v5352, %v6290
        %v6355 = vpack.c.bf16 %v6324, %v6323
        %v6356 = vpack.c.bf16 %v6326, %v6325
        %v6357 = vpack.c.bf16 %v6328, %v6327
        %v6358 = vpack.c.bf16 %v6330, %v6329
        %v6359 = vpack.c.bf16 %v6332, %v6331
        %v6360 = vpack.c.bf16 %v6334, %v6333
        %v6361 = vpack.c.bf16 %v6336, %v6335
        %v6362 = vpack.c.bf16 %v6338, %v6337
        %v6363 = vpack.c.bf16 %v6340, %v6339
        %v6364 = vpack.c.bf16 %v6342, %v6341
        %v6365 = vpack.c.bf16 %v6344, %v6343
        %v6366 = vpack.c.bf16 %v6346, %v6345
        %v6367 = vpack.c.bf16 %v6348, %v6347
        %v6368 = vpack.c.bf16 %v6350, %v6349
        %v6369 = vpack.c.bf16 %v6352, %v6351
        %v6370 = vpack.c.bf16 %v6354, %v6353
        %v6387 = vunpack.c.l.b16 %v6355
        %v6388 = vunpack.c.h.b16 %v6355
        %v6389 = vunpack.c.l.b16 %v6356
        %v6390 = vunpack.c.h.b16 %v6356
        %v6391 = vunpack.c.l.b16 %v6357
        %v6392 = vunpack.c.h.b16 %v6357
        %v6393 = vunpack.c.l.b16 %v6358
        %v6394 = vunpack.c.h.b16 %v6358
        %v6395 = vunpack.c.l.b16 %v6359
        %v6396 = vunpack.c.h.b16 %v6359
        %v6397 = vunpack.c.l.b16 %v6360
        %v6398 = vunpack.c.h.b16 %v6360
        %v6399 = vunpack.c.l.b16 %v6361
        %v6400 = vunpack.c.h.b16 %v6361
        %v6401 = vunpack.c.l.b16 %v6362
        %v6402 = vunpack.c.h.b16 %v6362
        %v6403 = vunpack.c.l.b16 %v6363
        %v6404 = vunpack.c.h.b16 %v6363
        %v6405 = vunpack.c.l.b16 %v6364
        %v6406 = vunpack.c.h.b16 %v6364
        %v6407 = vunpack.c.l.b16 %v6365
        %v6408 = vunpack.c.h.b16 %v6365
        %v6409 = vunpack.c.l.b16 %v6366
        %v6410 = vunpack.c.h.b16 %v6366
        %v6411 = vunpack.c.l.b16 %v6367
        %v6412 = vunpack.c.h.b16 %v6367
        %v6413 = vunpack.c.l.b16 %v6368
        %v6414 = vunpack.c.h.b16 %v6368
        %v6415 = vunpack.c.l.b16 %v6369
        %v6416 = vunpack.c.h.b16 %v6369
        %v6417 = vunpack.c.l.b16 %v6370
        %v6418 = vunpack.c.h.b16 %v6370
        %v6419 = vpack.c.b16 %v6387, %v6387
        %v6420 = vpack.c.b16 %v6388, %v6388
        %v6421 = vpack.c.b16 %v6389, %v6389
        %v6422 = vpack.c.b16 %v6390, %v6390
        %v6423 = vpack.c.b16 %v6391, %v6391
        %v6424 = vpack.c.b16 %v6392, %v6392
        %v6425 = vpack.c.b16 %v6393, %v6393
        %v6426 = vpack.c.b16 %v6394, %v6394
        %v6427 = vpack.c.b16 %v6395, %v6395
        %v6428 = vpack.c.b16 %v6396, %v6396
        %v6429 = vpack.c.b16 %v6397, %v6397
        %v6430 = vpack.c.b16 %v6398, %v6398
        %v6431 = vpack.c.b16 %v6399, %v6399
        %v6432 = vpack.c.b16 %v6400, %v6400
        %v6433 = vpack.c.b16 %v6401, %v6401
        %v6434 = vpack.c.b16 %v6402, %v6402
        %v6435 = vpack.c.b16 %v6403, %v6403
        %v6436 = vpack.c.b16 %v6404, %v6404
        %v6437 = vpack.c.b16 %v6405, %v6405
        %v6438 = vpack.c.b16 %v6406, %v6406
        %v6439 = vpack.c.b16 %v6407, %v6407
        %v6440 = vpack.c.b16 %v6408, %v6408
        %v6441 = vpack.c.b16 %v6409, %v6409
        %v6442 = vpack.c.b16 %v6410, %v6410
        %v6443 = vpack.c.b16 %v6411, %v6411
        %v6444 = vpack.c.b16 %v6412, %v6412
        %v6445 = vpack.c.b16 %v6413, %v6413
        %v6446 = vpack.c.b16 %v6414, %v6414
        %v6447 = vpack.c.b16 %v6415, %v6415
        %v6448 = vpack.c.b16 %v6416, %v6416
        %v6449 = vpack.c.b16 %v6417, %v6417
        %v6450 = vpack.c.b16 %v6418, %v6418
        %s6483 = scalar_lea.vmem %s206, 256 [#allocation2]
        %6484 = vst [vmem:[%s6483] sm:$0xf] %v6419
        %6485 = vst [vmem:[%s6483 + $0x4] sm:$0xf] %v6420
        %6486 = vst [vmem:[%s6483 + $0x8] sm:$0xf] %v6421
        %6487 = vst [vmem:[%s6483 + $0xc] sm:$0xf] %v6422
        %6488 = vst [vmem:[%s6483 + $0x10] sm:$0xf] %v6423
        %6489 = vst [vmem:[%s6483 + $0x14] sm:$0xf] %v6424
        %6490 = vst [vmem:[%s6483 + $0x18] sm:$0xf] %v6425
        %6491 = vst [vmem:[%s6483 + $0x1c] sm:$0xf] %v6426
        %6492 = vst [vmem:[%s6483 + $0x20] sm:$0xf] %v6427
        %6493 = vst [vmem:[%s6483 + $0x24] sm:$0xf] %v6428
        %6494 = vst [vmem:[%s6483 + $0x28] sm:$0xf] %v6429
        %6495 = vst [vmem:[%s6483 + $0x2c] sm:$0xf] %v6430
        %6496 = vst [vmem:[%s6483 + $0x30] sm:$0xf] %v6431
        %6497 = vst [vmem:[%s6483 + $0x34] sm:$0xf] %v6432
        %6498 = vst [vmem:[%s6483 + $0x38] sm:$0xf] %v6433
        %6499 = vst [vmem:[%s6483 + $0x3c] sm:$0xf] %v6434
        %6500 = vst [vmem:[%s6483 + $0x40] sm:$0xf] %v6435
        %6501 = vst [vmem:[%s6483 + $0x44] sm:$0xf] %v6436
        %6502 = vst [vmem:[%s6483 + $0x48] sm:$0xf] %v6437
        %6503 = vst [vmem:[%s6483 + $0x4c] sm:$0xf] %v6438
        %6504 = vst [vmem:[%s6483 + $0x50] sm:$0xf] %v6439
        %6505 = vst [vmem:[%s6483 + $0x54] sm:$0xf] %v6440
        %6506 = vst [vmem:[%s6483 + $0x58] sm:$0xf] %v6441
        %6507 = vst [vmem:[%s6483 + $0x5c] sm:$0xf] %v6442
        %6508 = vst [vmem:[%s6483 + $0x60] sm:$0xf] %v6443
        %6509 = vst [vmem:[%s6483 + $0x64] sm:$0xf] %v6444
        %6510 = vst [vmem:[%s6483 + $0x68] sm:$0xf] %v6445
        %6511 = vst [vmem:[%s6483 + $0x6c] sm:$0xf] %v6446
        %6512 = vst [vmem:[%s6483 + $0x70] sm:$0xf] %v6447
        %6513 = vst [vmem:[%s6483 + $0x74] sm:$0xf] %v6448
        %6514 = vst [vmem:[%s6483 + $0x78] sm:$0xf] %v6449
        %6515 = vst [vmem:[%s6483 + $0x7c] sm:$0xf] %v6450
        %v6516 = vmul.f32 %v4761, 1.0008531
        %v6517 = vmul.f32 %v4762, 1.0008531
        %v6518 = vmul.f32 %v4763, 1.0008531
        %v6519 = vmul.f32 %v4764, 1.0008531
        %v6520 = vmul.f32 %v4765, 1.0008531
        %v6521 = vmul.f32 %v4766, 1.0008531
        %v6522 = vmul.f32 %v4767, 1.0008531
        %v6523 = vmul.f32 %v4768, 1.0008531
        %v6524 = vmul.f32 %v4769, 1.0008531
        %v6525 = vmul.f32 %v4770, 1.0008531
        %v6526 = vmul.f32 %v4771, 1.0008531
        %v6527 = vmul.f32 %v4772, 1.0008531
        %v6528 = vmul.f32 %v4773, 1.0008531
        %v6529 = vmul.f32 %v4774, 1.0008531
        %v6530 = vmul.f32 %v4775, 1.0008531
        %v6531 = vmul.f32 %v4776, 1.0008531
        %v6532 = vmul.f32 %v4777, 1.0008531
        %v6533 = vmul.f32 %v4778, 1.0008531
        %v6534 = vmul.f32 %v4779, 1.0008531
        %v6535 = vmul.f32 %v4780, 1.0008531
        %v6536 = vmul.f32 %v4781, 1.0008531
        %v6537 = vmul.f32 %v4782, 1.0008531
        %v6538 = vmul.f32 %v4783, 1.0008531
        %v6539 = vmul.f32 %v4784, 1.0008531
        %v6540 = vmul.f32 %v4785, 1.0008531
        %v6541 = vmul.f32 %v4786, 1.0008531
        %v6542 = vmul.f32 %v4787, 1.0008531
        %v6543 = vmul.f32 %v4788, 1.0008531
        %v6544 = vmul.f32 %v4789, 1.0008531
        %v6545 = vmul.f32 %v4790, 1.0008531
        %v6546 = vmul.f32 %v4791, 1.0008531
        %v6547 = vmul.f32 %v4792, 1.0008531
        %v6548 = vadd.f32 %v6516, %v6069
        %v6549 = vadd.f32 %v6517, %v6074
        %v6550 = vadd.f32 %v6518, %v6079
        %v6551 = vadd.f32 %v6519, %v6084
        %v6552 = vadd.f32 %v6520, %v6089
        %v6553 = vadd.f32 %v6521, %v6094
        %v6554 = vadd.f32 %v6522, %v6099
        %v6555 = vadd.f32 %v6523, %v6104
        %v6556 = vadd.f32 %v6524, %v6109
        %v6557 = vadd.f32 %v6525, %v6114
        %v6558 = vadd.f32 %v6526, %v6119
        %v6559 = vadd.f32 %v6527, %v6124
        %v6560 = vadd.f32 %v6528, %v6129
        %v6561 = vadd.f32 %v6529, %v6134
        %v6562 = vadd.f32 %v6530, %v6139
        %v6563 = vadd.f32 %v6531, %v6144
        %v6564 = vadd.f32 %v6532, %v6149
        %v6565 = vadd.f32 %v6533, %v6154
        %v6566 = vadd.f32 %v6534, %v6159
        %v6567 = vadd.f32 %v6535, %v6164
        %v6568 = vadd.f32 %v6536, %v6169
        %v6569 = vadd.f32 %v6537, %v6174
        %v6570 = vadd.f32 %v6538, %v6179
        %v6571 = vadd.f32 %v6539, %v6184
        %v6572 = vadd.f32 %v6540, %v6189
        %v6573 = vadd.f32 %v6541, %v6194
        %v6574 = vadd.f32 %v6542, %v6199
        %v6575 = vadd.f32 %v6543, %v6204
        %v6576 = vadd.f32 %v6544, %v6209
        %v6577 = vadd.f32 %v6545, %v6214
        %v6578 = vadd.f32 %v6546, %v6219
        %v6579 = vadd.f32 %v6547, %v6224
        %6580 = vst.msk [vmem:[%s232] sm:$0xff] %vm1230, %v6548
        %6581 = vst.msk [vmem:[%s232 + $0x8] sm:$0xff] %vm1230, %v6549
        %6582 = vst.msk [vmem:[%s232 + $0x10] sm:$0xff] %vm1230, %v6550
        %6583 = vst.msk [vmem:[%s232 + $0x18] sm:$0xff] %vm1230, %v6551
        %6584 = vst.msk [vmem:[%s232 + $0x20] sm:$0xff] %vm1230, %v6552
        %6585 = vst.msk [vmem:[%s232 + $0x28] sm:$0xff] %vm1230, %v6553
        %6586 = vst.msk [vmem:[%s232 + $0x30] sm:$0xff] %vm1230, %v6554
        %6587 = vst.msk [vmem:[%s232 + $0x38] sm:$0xff] %vm1230, %v6555
        %6588 = vst.msk [vmem:[%s232 + $0x40] sm:$0xff] %vm1230, %v6556
        %6589 = vst.msk [vmem:[%s232 + $0x48] sm:$0xff] %vm1230, %v6557
        %6590 = vst.msk [vmem:[%s232 + $0x50] sm:$0xff] %vm1230, %v6558
        %6591 = vst.msk [vmem:[%s232 + $0x58] sm:$0xff] %vm1230, %v6559
        %6592 = vst.msk [vmem:[%s232 + $0x60] sm:$0xff] %vm1230, %v6560
        %6593 = vst.msk [vmem:[%s232 + $0x68] sm:$0xff] %vm1230, %v6561
        %6594 = vst.msk [vmem:[%s232 + $0x70] sm:$0xff] %vm1230, %v6562
        %6595 = vst.msk [vmem:[%s232 + $0x78] sm:$0xff] %vm1230, %v6563
        %6596 = vst.msk [vmem:[%s232 + $0x80] sm:$0xff] %vm1230, %v6564
        %6597 = vst.msk [vmem:[%s232 + $0x88] sm:$0xff] %vm1230, %v6565
        %6598 = vst.msk [vmem:[%s232 + $0x90] sm:$0xff] %vm1230, %v6566
        %6599 = vst.msk [vmem:[%s232 + $0x98] sm:$0xff] %vm1230, %v6567
        %6600 = vst.msk [vmem:[%s232 + $0xa0] sm:$0xff] %vm1230, %v6568
        %6601 = vst.msk [vmem:[%s232 + $0xa8] sm:$0xff] %vm1230, %v6569
        %6602 = vst.msk [vmem:[%s232 + $0xb0] sm:$0xff] %vm1230, %v6570
        %6603 = vst.msk [vmem:[%s232 + $0xb8] sm:$0xff] %vm1230, %v6571
        %6604 = vst.msk [vmem:[%s232 + $0xc0] sm:$0xff] %vm1230, %v6572
        %6605 = vst.msk [vmem:[%s232 + $0xc8] sm:$0xff] %vm1230, %v6573
        %6606 = vst.msk [vmem:[%s232 + $0xd0] sm:$0xff] %vm1230, %v6574
        %6607 = vst.msk [vmem:[%s232 + $0xd8] sm:$0xff] %vm1230, %v6575
        %6608 = vst.msk [vmem:[%s232 + $0xe0] sm:$0xff] %vm1230, %v6576
        %6609 = vst.msk [vmem:[%s232 + $0xe8] sm:$0xff] %vm1230, %v6577
        %6610 = vst.msk [vmem:[%s232 + $0xf0] sm:$0xff] %vm1230, %v6578
        %6611 = vst.msk [vmem:[%s232 + $0xf8] sm:$0xff] %vm1230, %v6579
        %s6612 = sand.u32 %s97, 1
        %s6613 = sand.u32 %s97, 1
        %s6614 = smul.addr %s6613, 384
        %s6615 = scalar_lea.vmem [#allocation2], %s6614
        %s6616 = smul.u32 32, %s16
        %p6617 = scmp.lt.s32.totalorder %s6616, 63
        %s6618 = scalar_select %p6617, %s6616, 63
        %s6619 = smul.addr %s6618, 8
        %s6620 = scalar_lea.vmem %s4, %s6619
        // Predicated region
        $region33: #{diffusion_extractor_forward.1} parent=31 // pred_check
          %p6621 = pneg %p107
        $region34: #{diffusion_extractor_forward.1} parent=31 // pred_check_branch
          %6623 = sbr.rel (%p6621) target = $region36
        $region35: #{diffusion_extractor_forward.1} parent=31 // pred_region
          %s6624 = smul.u32 32, %s16
          %s6625 = smul.addr %s6624, 4
          %s6626 = scalar_lea.vmem %s3, %s6625
          // Predicated region
          $region37: #{diffusion_extractor_forward.1} parent=35 // pred_check
            _
          $region38: #{diffusion_extractor_forward.1} parent=35 // pred_check_branch
            %6628 = sbr.rel (0) target = $region40
          $region39: #{diffusion_extractor_forward.1} parent=35 // pred_region
            // Predicated region
            $region41: #{diffusion_extractor_forward.1} parent=39 // pred_check
              _
            $region42: #{diffusion_extractor_forward.1} parent=39 // pred_check_branch
              %6630 = sbr.rel target = $region44
            $region43: #{diffusion_extractor_forward.1} parent=39 // pred_region
              // Predicated region
              $region56: #{diffusion_extractor_forward.1} parent=43 // pred_check
                _
              $region57: #{diffusion_extractor_forward.1} parent=43 // pred_check_branch
                %6835 = sbr.rel (0) target = $region59
              $region58: #{diffusion_extractor_forward.1} parent=43 // pred_region
                loop: start=0, step=1, limit=1
                $region60: #{diffusion_extractor_forward.1} parent=58 // loop_pre_header
                  _
                $region61: #{diffusion_extractor_forward.1} parent=58 // loop_header
                  %s6837 = sphi 0, %s6841
                  %p6838 = scmp.ge.s32.totalorder %s6837, 1
                  %s6842 = sphi %s6615, %s6615
                  %s6843 = sphi %s6626, %s6626
                $region62: #{diffusion_extractor_forward.1} parent=58 // loop_header_branch
                  %6840 = sbr.rel (%p6838) target = $region66
                $region63: #{diffusion_extractor_forward.1} parent=58 // loop_body
                  _
                $region64: #{diffusion_extractor_forward.1} parent=58 // loop_footer
                  %s6841 = sadd.s32 1, %s6837
                $region65: #{diffusion_extractor_forward.1} parent=58 // loop_footer_branch
                  %6836 = sbr.rel target = $region61
                $region66: #{diffusion_extractor_forward.1} parent=58 // loop_exit
                  _
                loop: start=0, step=1, limit=1
                $region67: #{diffusion_extractor_forward.1} parent=58 // loop_pre_header
                  _
                $region68: #{diffusion_extractor_forward.1} parent=58 // loop_header
                  %s6846 = sphi 0, %s6850
                  %p6847 = scmp.ge.s32.totalorder %s6846, 1
                  %s6851 = sphi %s6615, %s6615
                  %s6852 = sphi %s6626, %s6626
                $region69: #{diffusion_extractor_forward.1} parent=58 // loop_header_branch
                  %6849 = sbr.rel (%p6847) target = $region73
                $region70: #{diffusion_extractor_forward.1} parent=58 // loop_body
                  %v6853 = vld [vmem:[%s6851] sm:$0xf]
                  %6854 = vst [vmem:[%s6852] sm:$0xf] %v6853
                  %v6855 = vld [vmem:[%s6851 + $0x4] sm:$0xf]
                  %6856 = vst [vmem:[%s6852 + $0x4] sm:$0xf] %v6855
                  %v6857 = vld [vmem:[%s6851 + $0x8] sm:$0xf]
                  %6858 = vst [vmem:[%s6852 + $0x8] sm:$0xf] %v6857
                  %v6859 = vld [vmem:[%s6851 + $0xc] sm:$0xf]
                  %6860 = vst [vmem:[%s6852 + $0xc] sm:$0xf] %v6859
                  %v6861 = vld [vmem:[%s6851 + $0x10] sm:$0xf]
                  %6862 = vst [vmem:[%s6852 + $0x10] sm:$0xf] %v6861
                  %v6863 = vld [vmem:[%s6851 + $0x14] sm:$0xf]
                  %6864 = vst [vmem:[%s6852 + $0x14] sm:$0xf] %v6863
                  %v6865 = vld [vmem:[%s6851 + $0x18] sm:$0xf]
                  %6866 = vst [vmem:[%s6852 + $0x18] sm:$0xf] %v6865
                  %v6867 = vld [vmem:[%s6851 + $0x1c] sm:$0xf]
                  %6868 = vst [vmem:[%s6852 + $0x1c] sm:$0xf] %v6867
                  %v6869 = vld [vmem:[%s6851 + $0x20] sm:$0xf]
                  %6870 = vst [vmem:[%s6852 + $0x20] sm:$0xf] %v6869
                  %v6871 = vld [vmem:[%s6851 + $0x24] sm:$0xf]
                  %6872 = vst [vmem:[%s6852 + $0x24] sm:$0xf] %v6871
                  %v6873 = vld [vmem:[%s6851 + $0x28] sm:$0xf]
                  %6874 = vst [vmem:[%s6852 + $0x28] sm:$0xf] %v6873
                  %v6875 = vld [vmem:[%s6851 + $0x2c] sm:$0xf]
                  %6876 = vst [vmem:[%s6852 + $0x2c] sm:$0xf] %v6875
                  %v6877 = vld [vmem:[%s6851 + $0x30] sm:$0xf]
                  %6878 = vst [vmem:[%s6852 + $0x30] sm:$0xf] %v6877
                  %v6879 = vld [vmem:[%s6851 + $0x34] sm:$0xf]
                  %6880 = vst [vmem:[%s6852 + $0x34] sm:$0xf] %v6879
                  %v6881 = vld [vmem:[%s6851 + $0x38] sm:$0xf]
                  %6882 = vst [vmem:[%s6852 + $0x38] sm:$0xf] %v6881
                  %v6883 = vld [vmem:[%s6851 + $0x3c] sm:$0xf]
                  %6884 = vst [vmem:[%s6852 + $0x3c] sm:$0xf] %v6883
                  %v6885 = vld [vmem:[%s6851 + $0x40] sm:$0xf]
                  %6886 = vst [vmem:[%s6852 + $0x40] sm:$0xf] %v6885
                  %v6887 = vld [vmem:[%s6851 + $0x44] sm:$0xf]
                  %6888 = vst [vmem:[%s6852 + $0x44] sm:$0xf] %v6887
                  %v6889 = vld [vmem:[%s6851 + $0x48] sm:$0xf]
                  %6890 = vst [vmem:[%s6852 + $0x48] sm:$0xf] %v6889
                  %v6891 = vld [vmem:[%s6851 + $0x4c] sm:$0xf]
                  %6892 = vst [vmem:[%s6852 + $0x4c] sm:$0xf] %v6891
                  %v6893 = vld [vmem:[%s6851 + $0x50] sm:$0xf]
                  %6894 = vst [vmem:[%s6852 + $0x50] sm:$0xf] %v6893
                  %v6895 = vld [vmem:[%s6851 + $0x54] sm:$0xf]
                  %6896 = vst [vmem:[%s6852 + $0x54] sm:$0xf] %v6895
                  %v6897 = vld [vmem:[%s6851 + $0x58] sm:$0xf]
                  %6898 = vst [vmem:[%s6852 + $0x58] sm:$0xf] %v6897
                  %v6899 = vld [vmem:[%s6851 + $0x5c] sm:$0xf]
                  %6900 = vst [vmem:[%s6852 + $0x5c] sm:$0xf] %v6899
                  %v6901 = vld [vmem:[%s6851 + $0x60] sm:$0xf]
                  %6902 = vst [vmem:[%s6852 + $0x60] sm:$0xf] %v6901
                  %v6903 = vld [vmem:[%s6851 + $0x64] sm:$0xf]
                  %6904 = vst [vmem:[%s6852 + $0x64] sm:$0xf] %v6903
                  %v6905 = vld [vmem:[%s6851 + $0x68] sm:$0xf]
                  %6906 = vst [vmem:[%s6852 + $0x68] sm:$0xf] %v6905
                  %v6907 = vld [vmem:[%s6851 + $0x6c] sm:$0xf]
                  %6908 = vst [vmem:[%s6852 + $0x6c] sm:$0xf] %v6907
                  %v6909 = vld [vmem:[%s6851 + $0x70] sm:$0xf]
                  %6910 = vst [vmem:[%s6852 + $0x70] sm:$0xf] %v6909
                  %v6911 = vld [vmem:[%s6851 + $0x74] sm:$0xf]
                  %6912 = vst [vmem:[%s6852 + $0x74] sm:$0xf] %v6911
                  %v6913 = vld [vmem:[%s6851 + $0x78] sm:$0xf]
                  %6914 = vst [vmem:[%s6852 + $0x78] sm:$0xf] %v6913
                  %v6915 = vld [vmem:[%s6851 + $0x7c] sm:$0xf]
                  %6916 = vst [vmem:[%s6852 + $0x7c] sm:$0xf] %v6915
                  %v6917 = vld [vmem:[%s6851 + $0x80] sm:$0xf]
                  %6918 = vst [vmem:[%s6852 + $0x100] sm:$0xf] %v6917
                  %v6919 = vld [vmem:[%s6851 + $0x84] sm:$0xf]
                  %6920 = vst [vmem:[%s6852 + $0x104] sm:$0xf] %v6919
                  %v6921 = vld [vmem:[%s6851 + $0x88] sm:$0xf]
                  %6922 = vst [vmem:[%s6852 + $0x108] sm:$0xf] %v6921
                  %v6923 = vld [vmem:[%s6851 + $0x8c] sm:$0xf]
                  %6924 = vst [vmem:[%s6852 + $0x10c] sm:$0xf] %v6923
                  %v6925 = vld [vmem:[%s6851 + $0x90] sm:$0xf]
                  %6926 = vst [vmem:[%s6852 + $0x110] sm:$0xf] %v6925
                  %v6927 = vld [vmem:[%s6851 + $0x94] sm:$0xf]
                  %6928 = vst [vmem:[%s6852 + $0x114] sm:$0xf] %v6927
                  %v6929 = vld [vmem:[%s6851 + $0x98] sm:$0xf]
                  %6930 = vst [vmem:[%s6852 + $0x118] sm:$0xf] %v6929
                  %v6931 = vld [vmem:[%s6851 + $0x9c] sm:$0xf]
                  %6932 = vst [vmem:[%s6852 + $0x11c] sm:$0xf] %v6931
                  %v6933 = vld [vmem:[%s6851 + $0xa0] sm:$0xf]
                  %6934 = vst [vmem:[%s6852 + $0x120] sm:$0xf] %v6933
                  %v6935 = vld [vmem:[%s6851 + $0xa4] sm:$0xf]
                  %6936 = vst [vmem:[%s6852 + $0x124] sm:$0xf] %v6935
                  %v6937 = vld [vmem:[%s6851 + $0xa8] sm:$0xf]
                  %6938 = vst [vmem:[%s6852 + $0x128] sm:$0xf] %v6937
                  %v6939 = vld [vmem:[%s6851 + $0xac] sm:$0xf]
                  %6940 = vst [vmem:[%s6852 + $0x12c] sm:$0xf] %v6939
                  %v6941 = vld [vmem:[%s6851 + $0xb0] sm:$0xf]
                  %6942 = vst [vmem:[%s6852 + $0x130] sm:$0xf] %v6941
                  %v6943 = vld [vmem:[%s6851 + $0xb4] sm:$0xf]
                  %6944 = vst [vmem:[%s6852 + $0x134] sm:$0xf] %v6943
                  %v6945 = vld [vmem:[%s6851 + $0xb8] sm:$0xf]
                  %6946 = vst [vmem:[%s6852 + $0x138] sm:$0xf] %v6945
                  %v6947 = vld [vmem:[%s6851 + $0xbc] sm:$0xf]
                  %6948 = vst [vmem:[%s6852 + $0x13c] sm:$0xf] %v6947
                  %v6949 = vld [vmem:[%s6851 + $0xc0] sm:$0xf]
                  %6950 = vst [vmem:[%s6852 + $0x140] sm:$0xf] %v6949
                  %v6951 = vld [vmem:[%s6851 + $0xc4] sm:$0xf]
                  %6952 = vst [vmem:[%s6852 + $0x144] sm:$0xf] %v6951
                  %v6953 = vld [vmem:[%s6851 + $0xc8] sm:$0xf]
                  %6954 = vst [vmem:[%s6852 + $0x148] sm:$0xf] %v6953
                  %v6955 = vld [vmem:[%s6851 + $0xcc] sm:$0xf]
                  %6956 = vst [vmem:[%s6852 + $0x14c] sm:$0xf] %v6955
                  %v6957 = vld [vmem:[%s6851 + $0xd0] sm:$0xf]
                  %6958 = vst [vmem:[%s6852 + $0x150] sm:$0xf] %v6957
                  %v6959 = vld [vmem:[%s6851 + $0xd4] sm:$0xf]
                  %6960 = vst [vmem:[%s6852 + $0x154] sm:$0xf] %v6959
                  %v6961 = vld [vmem:[%s6851 + $0xd8] sm:$0xf]
                  %6962 = vst [vmem:[%s6852 + $0x158] sm:$0xf] %v6961
                  %v6963 = vld [vmem:[%s6851 + $0xdc] sm:$0xf]
                  %6964 = vst [vmem:[%s6852 + $0x15c] sm:$0xf] %v6963
                  %v6965 = vld [vmem:[%s6851 + $0xe0] sm:$0xf]
                  %6966 = vst [vmem:[%s6852 + $0x160] sm:$0xf] %v6965
                  %v6967 = vld [vmem:[%s6851 + $0xe4] sm:$0xf]
                  %6968 = vst [vmem:[%s6852 + $0x164] sm:$0xf] %v6967
                  %v6969 = vld [vmem:[%s6851 + $0xe8] sm:$0xf]
                  %6970 = vst [vmem:[%s6852 + $0x168] sm:$0xf] %v6969
                  %v6971 = vld [vmem:[%s6851 + $0xec] sm:$0xf]
                  %6972 = vst [vmem:[%s6852 + $0x16c] sm:$0xf] %v6971
                  %v6973 = vld [vmem:[%s6851 + $0xf0] sm:$0xf]
                  %6974 = vst [vmem:[%s6852 + $0x170] sm:$0xf] %v6973
                  %v6975 = vld [vmem:[%s6851 + $0xf4] sm:$0xf]
                  %6976 = vst [vmem:[%s6852 + $0x174] sm:$0xf] %v6975
                  %v6977 = vld [vmem:[%s6851 + $0xf8] sm:$0xf]
                  %6978 = vst [vmem:[%s6852 + $0x178] sm:$0xf] %v6977
                  %v6979 = vld [vmem:[%s6851 + $0xfc] sm:$0xf]
                  %6980 = vst [vmem:[%s6852 + $0x17c] sm:$0xf] %v6979
                  %v6981 = vld [vmem:[%s6851 + $0x100] sm:$0xf]
                  %6982 = vst [vmem:[%s6852 + $0x200] sm:$0xf] %v6981
                  %v6983 = vld [vmem:[%s6851 + $0x104] sm:$0xf]
                  %6984 = vst [vmem:[%s6852 + $0x204] sm:$0xf] %v6983
                  %v6985 = vld [vmem:[%s6851 + $0x108] sm:$0xf]
                  %6986 = vst [vmem:[%s6852 + $0x208] sm:$0xf] %v6985
                  %v6987 = vld [vmem:[%s6851 + $0x10c] sm:$0xf]
                  %6988 = vst [vmem:[%s6852 + $0x20c] sm:$0xf] %v6987
                  %v6989 = vld [vmem:[%s6851 + $0x110] sm:$0xf]
                  %6990 = vst [vmem:[%s6852 + $0x210] sm:$0xf] %v6989
                  %v6991 = vld [vmem:[%s6851 + $0x114] sm:$0xf]
                  %6992 = vst [vmem:[%s6852 + $0x214] sm:$0xf] %v6991
                  %v6993 = vld [vmem:[%s6851 + $0x118] sm:$0xf]
                  %6994 = vst [vmem:[%s6852 + $0x218] sm:$0xf] %v6993
                  %v6995 = vld [vmem:[%s6851 + $0x11c] sm:$0xf]
                  %6996 = vst [vmem:[%s6852 + $0x21c] sm:$0xf] %v6995
                  %v6997 = vld [vmem:[%s6851 + $0x120] sm:$0xf]
                  %6998 = vst [vmem:[%s6852 + $0x220] sm:$0xf] %v6997
                  %v6999 = vld [vmem:[%s6851 + $0x124] sm:$0xf]
                  %7000 = vst [vmem:[%s6852 + $0x224] sm:$0xf] %v6999
                  %v7001 = vld [vmem:[%s6851 + $0x128] sm:$0xf]
                  %7002 = vst [vmem:[%s6852 + $0x228] sm:$0xf] %v7001
                  %v7003 = vld [vmem:[%s6851 + $0x12c] sm:$0xf]
                  %7004 = vst [vmem:[%s6852 + $0x22c] sm:$0xf] %v7003
                  %v7005 = vld [vmem:[%s6851 + $0x130] sm:$0xf]
                  %7006 = vst [vmem:[%s6852 + $0x230] sm:$0xf] %v7005
                  %v7007 = vld [vmem:[%s6851 + $0x134] sm:$0xf]
                  %7008 = vst [vmem:[%s6852 + $0x234] sm:$0xf] %v7007
                  %v7009 = vld [vmem:[%s6851 + $0x138] sm:$0xf]
                  %7010 = vst [vmem:[%s6852 + $0x238] sm:$0xf] %v7009
                  %v7011 = vld [vmem:[%s6851 + $0x13c] sm:$0xf]
                  %7012 = vst [vmem:[%s6852 + $0x23c] sm:$0xf] %v7011
                  %v7013 = vld [vmem:[%s6851 + $0x140] sm:$0xf]
                  %7014 = vst [vmem:[%s6852 + $0x240] sm:$0xf] %v7013
                  %v7015 = vld [vmem:[%s6851 + $0x144] sm:$0xf]
                  %7016 = vst [vmem:[%s6852 + $0x244] sm:$0xf] %v7015
                  %v7017 = vld [vmem:[%s6851 + $0x148] sm:$0xf]
                  %7018 = vst [vmem:[%s6852 + $0x248] sm:$0xf] %v7017
                  %v7019 = vld [vmem:[%s6851 + $0x14c] sm:$0xf]
                  %7020 = vst [vmem:[%s6852 + $0x24c] sm:$0xf] %v7019
                  %v7021 = vld [vmem:[%s6851 + $0x150] sm:$0xf]
                  %7022 = vst [vmem:[%s6852 + $0x250] sm:$0xf] %v7021
                  %v7023 = vld [vmem:[%s6851 + $0x154] sm:$0xf]
                  %7024 = vst [vmem:[%s6852 + $0x254] sm:$0xf] %v7023
                  %v7025 = vld [vmem:[%s6851 + $0x158] sm:$0xf]
                  %7026 = vst [vmem:[%s6852 + $0x258] sm:$0xf] %v7025
                  %v7027 = vld [vmem:[%s6851 + $0x15c] sm:$0xf]
                  %7028 = vst [vmem:[%s6852 + $0x25c] sm:$0xf] %v7027
                  %v7029 = vld [vmem:[%s6851 + $0x160] sm:$0xf]
                  %7030 = vst [vmem:[%s6852 + $0x260] sm:$0xf] %v7029
                  %v7031 = vld [vmem:[%s6851 + $0x164] sm:$0xf]
                  %7032 = vst [vmem:[%s6852 + $0x264] sm:$0xf] %v7031
                  %v7033 = vld [vmem:[%s6851 + $0x168] sm:$0xf]
                  %7034 = vst [vmem:[%s6852 + $0x268] sm:$0xf] %v7033
                  %v7035 = vld [vmem:[%s6851 + $0x16c] sm:$0xf]
                  %7036 = vst [vmem:[%s6852 + $0x26c] sm:$0xf] %v7035
                  %v7037 = vld [vmem:[%s6851 + $0x170] sm:$0xf]
                  %7038 = vst [vmem:[%s6852 + $0x270] sm:$0xf] %v7037
                  %v7039 = vld [vmem:[%s6851 + $0x174] sm:$0xf]
                  %7040 = vst [vmem:[%s6852 + $0x274] sm:$0xf] %v7039
                  %v7041 = vld [vmem:[%s6851 + $0x178] sm:$0xf]
                  %7042 = vst [vmem:[%s6852 + $0x278] sm:$0xf] %v7041
                  %v7043 = vld [vmem:[%s6851 + $0x17c] sm:$0xf]
                  %7044 = vst [vmem:[%s6852 + $0x27c] sm:$0xf] %v7043
                $region71: #{diffusion_extractor_forward.1} parent=58 // loop_footer
                  %s6850 = sadd.s32 1, %s6846
                $region72: #{diffusion_extractor_forward.1} parent=58 // loop_footer_branch
                  %6845 = sbr.rel target = $region68
                $region73: #{diffusion_extractor_forward.1} parent=58 // loop_exit
                  _
              $region59: #{diffusion_extractor_forward.1} parent=43 // pred_fallthru
                _
            $region44: #{diffusion_extractor_forward.1} parent=39 // pred_fallthru
              _
            // Predicated region
            $region45: #{diffusion_extractor_forward.1} parent=39 // pred_check
              _
            $region46: #{diffusion_extractor_forward.1} parent=39 // pred_check_branch
              %6632 = sbr.rel (0) target = $region48
            $region47: #{diffusion_extractor_forward.1} parent=39 // pred_region
              loop: start=0, step=1, limit=1
              $region49: #{diffusion_extractor_forward.1} parent=47 // loop_pre_header
                _
              $region50: #{diffusion_extractor_forward.1} parent=47 // loop_header
                %s6635 = sphi 0, %s6639
                %p6636 = scmp.ge.s32.totalorder %s6635, 1
                %s6640 = sphi %s6615, %s6615
                %s6641 = sphi %s6626, %s6626
              $region51: #{diffusion_extractor_forward.1} parent=47 // loop_header_branch
                %6638 = sbr.rel (%p6636) target = $region55
              $region52: #{diffusion_extractor_forward.1} parent=47 // loop_body
                %v6642 = vld [vmem:[%s6640] sm:$0xf]
                %6643 = vst [vmem:[%s6641] sm:$0xf] %v6642
                %v6644 = vld [vmem:[%s6640 + $0x4] sm:$0xf]
                %6645 = vst [vmem:[%s6641 + $0x4] sm:$0xf] %v6644
                %v6646 = vld [vmem:[%s6640 + $0x8] sm:$0xf]
                %6647 = vst [vmem:[%s6641 + $0x8] sm:$0xf] %v6646
                %v6648 = vld [vmem:[%s6640 + $0xc] sm:$0xf]
                %6649 = vst [vmem:[%s6641 + $0xc] sm:$0xf] %v6648
                %v6650 = vld [vmem:[%s6640 + $0x10] sm:$0xf]
                %6651 = vst [vmem:[%s6641 + $0x10] sm:$0xf] %v6650
                %v6652 = vld [vmem:[%s6640 + $0x14] sm:$0xf]
                %6653 = vst [vmem:[%s6641 + $0x14] sm:$0xf] %v6652
                %v6654 = vld [vmem:[%s6640 + $0x18] sm:$0xf]
                %6655 = vst [vmem:[%s6641 + $0x18] sm:$0xf] %v6654
                %v6656 = vld [vmem:[%s6640 + $0x1c] sm:$0xf]
                %6657 = vst [vmem:[%s6641 + $0x1c] sm:$0xf] %v6656
                %v6658 = vld [vmem:[%s6640 + $0x20] sm:$0xf]
                %6659 = vst [vmem:[%s6641 + $0x20] sm:$0xf] %v6658
                %v6660 = vld [vmem:[%s6640 + $0x24] sm:$0xf]
                %6661 = vst [vmem:[%s6641 + $0x24] sm:$0xf] %v6660
                %v6662 = vld [vmem:[%s6640 + $0x28] sm:$0xf]
                %6663 = vst [vmem:[%s6641 + $0x28] sm:$0xf] %v6662
                %v6664 = vld [vmem:[%s6640 + $0x2c] sm:$0xf]
                %6665 = vst [vmem:[%s6641 + $0x2c] sm:$0xf] %v6664
                %v6666 = vld [vmem:[%s6640 + $0x30] sm:$0xf]
                %6667 = vst [vmem:[%s6641 + $0x30] sm:$0xf] %v6666
                %v6668 = vld [vmem:[%s6640 + $0x34] sm:$0xf]
                %6669 = vst [vmem:[%s6641 + $0x34] sm:$0xf] %v6668
                %v6670 = vld [vmem:[%s6640 + $0x38] sm:$0xf]
                %6671 = vst [vmem:[%s6641 + $0x38] sm:$0xf] %v6670
                %v6672 = vld [vmem:[%s6640 + $0x3c] sm:$0xf]
                %6673 = vst [vmem:[%s6641 + $0x3c] sm:$0xf] %v6672
                %v6674 = vld [vmem:[%s6640 + $0x40] sm:$0xf]
                %6675 = vst [vmem:[%s6641 + $0x40] sm:$0xf] %v6674
                %v6676 = vld [vmem:[%s6640 + $0x44] sm:$0xf]
                %6677 = vst [vmem:[%s6641 + $0x44] sm:$0xf] %v6676
                %v6678 = vld [vmem:[%s6640 + $0x48] sm:$0xf]
                %6679 = vst [vmem:[%s6641 + $0x48] sm:$0xf] %v6678
                %v6680 = vld [vmem:[%s6640 + $0x4c] sm:$0xf]
                %6681 = vst [vmem:[%s6641 + $0x4c] sm:$0xf] %v6680
                %v6682 = vld [vmem:[%s6640 + $0x50] sm:$0xf]
                %6683 = vst [vmem:[%s6641 + $0x50] sm:$0xf] %v6682
                %v6684 = vld [vmem:[%s6640 + $0x54] sm:$0xf]
                %6685 = vst [vmem:[%s6641 + $0x54] sm:$0xf] %v6684
                %v6686 = vld [vmem:[%s6640 + $0x58] sm:$0xf]
                %6687 = vst [vmem:[%s6641 + $0x58] sm:$0xf] %v6686
                %v6688 = vld [vmem:[%s6640 + $0x5c] sm:$0xf]
                %6689 = vst [vmem:[%s6641 + $0x5c] sm:$0xf] %v6688
                %v6690 = vld [vmem:[%s6640 + $0x60] sm:$0xf]
                %6691 = vst [vmem:[%s6641 + $0x60] sm:$0xf] %v6690
                %v6692 = vld [vmem:[%s6640 + $0x64] sm:$0xf]
                %6693 = vst [vmem:[%s6641 + $0x64] sm:$0xf] %v6692
                %v6694 = vld [vmem:[%s6640 + $0x68] sm:$0xf]
                %6695 = vst [vmem:[%s6641 + $0x68] sm:$0xf] %v6694
                %v6696 = vld [vmem:[%s6640 + $0x6c] sm:$0xf]
                %6697 = vst [vmem:[%s6641 + $0x6c] sm:$0xf] %v6696
                %v6698 = vld [vmem:[%s6640 + $0x70] sm:$0xf]
                %6699 = vst [vmem:[%s6641 + $0x70] sm:$0xf] %v6698
                %v6700 = vld [vmem:[%s6640 + $0x74] sm:$0xf]
                %6701 = vst [vmem:[%s6641 + $0x74] sm:$0xf] %v6700
                %v6702 = vld [vmem:[%s6640 + $0x78] sm:$0xf]
                %6703 = vst [vmem:[%s6641 + $0x78] sm:$0xf] %v6702
                %v6704 = vld [vmem:[%s6640 + $0x7c] sm:$0xf]
                %6705 = vst [vmem:[%s6641 + $0x7c] sm:$0xf] %v6704
                %v6706 = vld [vmem:[%s6640 + $0x80] sm:$0xf]
                %6707 = vst [vmem:[%s6641 + $0x100] sm:$0xf] %v6706
                %v6708 = vld [vmem:[%s6640 + $0x84] sm:$0xf]
                %6709 = vst [vmem:[%s6641 + $0x104] sm:$0xf] %v6708
                %v6710 = vld [vmem:[%s6640 + $0x88] sm:$0xf]
                %6711 = vst [vmem:[%s6641 + $0x108] sm:$0xf] %v6710
                %v6712 = vld [vmem:[%s6640 + $0x8c] sm:$0xf]
                %6713 = vst [vmem:[%s6641 + $0x10c] sm:$0xf] %v6712
                %v6714 = vld [vmem:[%s6640 + $0x90] sm:$0xf]
                %6715 = vst [vmem:[%s6641 + $0x110] sm:$0xf] %v6714
                %v6716 = vld [vmem:[%s6640 + $0x94] sm:$0xf]
                %6717 = vst [vmem:[%s6641 + $0x114] sm:$0xf] %v6716
                %v6718 = vld [vmem:[%s6640 + $0x98] sm:$0xf]
                %6719 = vst [vmem:[%s6641 + $0x118] sm:$0xf] %v6718
                %v6720 = vld [vmem:[%s6640 + $0x9c] sm:$0xf]
                %6721 = vst [vmem:[%s6641 + $0x11c] sm:$0xf] %v6720
                %v6722 = vld [vmem:[%s6640 + $0xa0] sm:$0xf]
                %6723 = vst [vmem:[%s6641 + $0x120] sm:$0xf] %v6722
                %v6724 = vld [vmem:[%s6640 + $0xa4] sm:$0xf]
                %6725 = vst [vmem:[%s6641 + $0x124] sm:$0xf] %v6724
                %v6726 = vld [vmem:[%s6640 + $0xa8] sm:$0xf]
                %6727 = vst [vmem:[%s6641 + $0x128] sm:$0xf] %v6726
                %v6728 = vld [vmem:[%s6640 + $0xac] sm:$0xf]
                %6729 = vst [vmem:[%s6641 + $0x12c] sm:$0xf] %v6728
                %v6730 = vld [vmem:[%s6640 + $0xb0] sm:$0xf]
                %6731 = vst [vmem:[%s6641 + $0x130] sm:$0xf] %v6730
                %v6732 = vld [vmem:[%s6640 + $0xb4] sm:$0xf]
                %6733 = vst [vmem:[%s6641 + $0x134] sm:$0xf] %v6732
                %v6734 = vld [vmem:[%s6640 + $0xb8] sm:$0xf]
                %6735 = vst [vmem:[%s6641 + $0x138] sm:$0xf] %v6734
                %v6736 = vld [vmem:[%s6640 + $0xbc] sm:$0xf]
                %6737 = vst [vmem:[%s6641 + $0x13c] sm:$0xf] %v6736
                %v6738 = vld [vmem:[%s6640 + $0xc0] sm:$0xf]
                %6739 = vst [vmem:[%s6641 + $0x140] sm:$0xf] %v6738
                %v6740 = vld [vmem:[%s6640 + $0xc4] sm:$0xf]
                %6741 = vst [vmem:[%s6641 + $0x144] sm:$0xf] %v6740
                %v6742 = vld [vmem:[%s6640 + $0xc8] sm:$0xf]
                %6743 = vst [vmem:[%s6641 + $0x148] sm:$0xf] %v6742
                %v6744 = vld [vmem:[%s6640 + $0xcc] sm:$0xf]
                %6745 = vst [vmem:[%s6641 + $0x14c] sm:$0xf] %v6744
                %v6746 = vld [vmem:[%s6640 + $0xd0] sm:$0xf]
                %6747 = vst [vmem:[%s6641 + $0x150] sm:$0xf] %v6746
                %v6748 = vld [vmem:[%s6640 + $0xd4] sm:$0xf]
                %6749 = vst [vmem:[%s6641 + $0x154] sm:$0xf] %v6748
                %v6750 = vld [vmem:[%s6640 + $0xd8] sm:$0xf]
                %6751 = vst [vmem:[%s6641 + $0x158] sm:$0xf] %v6750
                %v6752 = vld [vmem:[%s6640 + $0xdc] sm:$0xf]
                %6753 = vst [vmem:[%s6641 + $0x15c] sm:$0xf] %v6752
                %v6754 = vld [vmem:[%s6640 + $0xe0] sm:$0xf]
                %6755 = vst [vmem:[%s6641 + $0x160] sm:$0xf] %v6754
                %v6756 = vld [vmem:[%s6640 + $0xe4] sm:$0xf]
                %6757 = vst [vmem:[%s6641 + $0x164] sm:$0xf] %v6756
                %v6758 = vld [vmem:[%s6640 + $0xe8] sm:$0xf]
                %6759 = vst [vmem:[%s6641 + $0x168] sm:$0xf] %v6758
                %v6760 = vld [vmem:[%s6640 + $0xec] sm:$0xf]
                %6761 = vst [vmem:[%s6641 + $0x16c] sm:$0xf] %v6760
                %v6762 = vld [vmem:[%s6640 + $0xf0] sm:$0xf]
                %6763 = vst [vmem:[%s6641 + $0x170] sm:$0xf] %v6762
                %v6764 = vld [vmem:[%s6640 + $0xf4] sm:$0xf]
                %6765 = vst [vmem:[%s6641 + $0x174] sm:$0xf] %v6764
                %v6766 = vld [vmem:[%s6640 + $0xf8] sm:$0xf]
                %6767 = vst [vmem:[%s6641 + $0x178] sm:$0xf] %v6766
                %v6768 = vld [vmem:[%s6640 + $0xfc] sm:$0xf]
                %6769 = vst [vmem:[%s6641 + $0x17c] sm:$0xf] %v6768
                %v6770 = vld [vmem:[%s6640 + $0x100] sm:$0xf]
                %6771 = vst [vmem:[%s6641 + $0x200] sm:$0xf] %v6770
                %v6772 = vld [vmem:[%s6640 + $0x104] sm:$0xf]
                %6773 = vst [vmem:[%s6641 + $0x204] sm:$0xf] %v6772
                %v6774 = vld [vmem:[%s6640 + $0x108] sm:$0xf]
                %6775 = vst [vmem:[%s6641 + $0x208] sm:$0xf] %v6774
                %v6776 = vld [vmem:[%s6640 + $0x10c] sm:$0xf]
                %6777 = vst [vmem:[%s6641 + $0x20c] sm:$0xf] %v6776
                %v6778 = vld [vmem:[%s6640 + $0x110] sm:$0xf]
                %6779 = vst [vmem:[%s6641 + $0x210] sm:$0xf] %v6778
                %v6780 = vld [vmem:[%s6640 + $0x114] sm:$0xf]
                %6781 = vst [vmem:[%s6641 + $0x214] sm:$0xf] %v6780
                %v6782 = vld [vmem:[%s6640 + $0x118] sm:$0xf]
                %6783 = vst [vmem:[%s6641 + $0x218] sm:$0xf] %v6782
                %v6784 = vld [vmem:[%s6640 + $0x11c] sm:$0xf]
                %6785 = vst [vmem:[%s6641 + $0x21c] sm:$0xf] %v6784
                %v6786 = vld [vmem:[%s6640 + $0x120] sm:$0xf]
                %6787 = vst [vmem:[%s6641 + $0x220] sm:$0xf] %v6786
                %v6788 = vld [vmem:[%s6640 + $0x124] sm:$0xf]
                %6789 = vst [vmem:[%s6641 + $0x224] sm:$0xf] %v6788
                %v6790 = vld [vmem:[%s6640 + $0x128] sm:$0xf]
                %6791 = vst [vmem:[%s6641 + $0x228] sm:$0xf] %v6790
                %v6792 = vld [vmem:[%s6640 + $0x12c] sm:$0xf]
                %6793 = vst [vmem:[%s6641 + $0x22c] sm:$0xf] %v6792
                %v6794 = vld [vmem:[%s6640 + $0x130] sm:$0xf]
                %6795 = vst [vmem:[%s6641 + $0x230] sm:$0xf] %v6794
                %v6796 = vld [vmem:[%s6640 + $0x134] sm:$0xf]
                %6797 = vst [vmem:[%s6641 + $0x234] sm:$0xf] %v6796
                %v6798 = vld [vmem:[%s6640 + $0x138] sm:$0xf]
                %6799 = vst [vmem:[%s6641 + $0x238] sm:$0xf] %v6798
                %v6800 = vld [vmem:[%s6640 + $0x13c] sm:$0xf]
                %6801 = vst [vmem:[%s6641 + $0x23c] sm:$0xf] %v6800
                %v6802 = vld [vmem:[%s6640 + $0x140] sm:$0xf]
                %6803 = vst [vmem:[%s6641 + $0x240] sm:$0xf] %v6802
                %v6804 = vld [vmem:[%s6640 + $0x144] sm:$0xf]
                %6805 = vst [vmem:[%s6641 + $0x244] sm:$0xf] %v6804
                %v6806 = vld [vmem:[%s6640 + $0x148] sm:$0xf]
                %6807 = vst [vmem:[%s6641 + $0x248] sm:$0xf] %v6806
                %v6808 = vld [vmem:[%s6640 + $0x14c] sm:$0xf]
                %6809 = vst [vmem:[%s6641 + $0x24c] sm:$0xf] %v6808
                %v6810 = vld [vmem:[%s6640 + $0x150] sm:$0xf]
                %6811 = vst [vmem:[%s6641 + $0x250] sm:$0xf] %v6810
                %v6812 = vld [vmem:[%s6640 + $0x154] sm:$0xf]
                %6813 = vst [vmem:[%s6641 + $0x254] sm:$0xf] %v6812
                %v6814 = vld [vmem:[%s6640 + $0x158] sm:$0xf]
                %6815 = vst [vmem:[%s6641 + $0x258] sm:$0xf] %v6814
                %v6816 = vld [vmem:[%s6640 + $0x15c] sm:$0xf]
                %6817 = vst [vmem:[%s6641 + $0x25c] sm:$0xf] %v6816
                %v6818 = vld [vmem:[%s6640 + $0x160] sm:$0xf]
                %6819 = vst [vmem:[%s6641 + $0x260] sm:$0xf] %v6818
                %v6820 = vld [vmem:[%s6640 + $0x164] sm:$0xf]
                %6821 = vst [vmem:[%s6641 + $0x264] sm:$0xf] %v6820
                %v6822 = vld [vmem:[%s6640 + $0x168] sm:$0xf]
                %6823 = vst [vmem:[%s6641 + $0x268] sm:$0xf] %v6822
                %v6824 = vld [vmem:[%s6640 + $0x16c] sm:$0xf]
                %6825 = vst [vmem:[%s6641 + $0x26c] sm:$0xf] %v6824
                %v6826 = vld [vmem:[%s6640 + $0x170] sm:$0xf]
                %6827 = vst [vmem:[%s6641 + $0x270] sm:$0xf] %v6826
                %v6828 = vld [vmem:[%s6640 + $0x174] sm:$0xf]
                %6829 = vst [vmem:[%s6641 + $0x274] sm:$0xf] %v6828
                %v6830 = vld [vmem:[%s6640 + $0x178] sm:$0xf]
                %6831 = vst [vmem:[%s6641 + $0x278] sm:$0xf] %v6830
                %v6832 = vld [vmem:[%s6640 + $0x17c] sm:$0xf]
                %6833 = vst [vmem:[%s6641 + $0x27c] sm:$0xf] %v6832
              $region53: #{diffusion_extractor_forward.1} parent=47 // loop_footer
                %s6639 = sadd.s32 1, %s6635
              $region54: #{diffusion_extractor_forward.1} parent=47 // loop_footer_branch
                %6634 = sbr.rel target = $region50
              $region55: #{diffusion_extractor_forward.1} parent=47 // loop_exit
                _
            $region48: #{diffusion_extractor_forward.1} parent=39 // pred_fallthru
              _
          $region40: #{diffusion_extractor_forward.1} parent=35 // pred_fallthru
            _
          %7045 = vnop
        $region36: #{diffusion_extractor_forward.1} parent=31 // pred_fallthru
          _
        // Predicated region
        $region74: #{diffusion_extractor_forward.1} parent=31 // pred_check
          %p7046 = pneg %p133
        $region75: #{diffusion_extractor_forward.1} parent=31 // pred_check_branch
          %7048 = sbr.rel (%p7046) target = $region77
        $region76: #{diffusion_extractor_forward.1} parent=31 // pred_region
          %s7049 = smul.u32 32, %s16
        $region77: #{diffusion_extractor_forward.1} parent=31 // pred_fallthru
          _
      $region32: #{diffusion_extractor_forward.1} parent=5 // pred_fallthru
        _
      %p7050 = scmp.le.s32.totalorder 2, %s11
      // Predicated region
      $region78: #{diffusion_extractor_forward.1} parent=5 // pred_check
        %p7051 = pneg %p7050
      $region79: #{diffusion_extractor_forward.1} parent=5 // pred_check_branch
        %7053 = sbr.rel (%p7051) target = $region81
      $region80: #{diffusion_extractor_forward.1} parent=5 // pred_region
        %s7054 = ssub.s32 %s11, 2
        // Predicated region
        $region82: #{diffusion_extractor_forward.1} parent=80 // pred_check
          %p7055 = pneg %p113
        $region83: #{diffusion_extractor_forward.1} parent=80 // pred_check_branch
          %7057 = sbr.rel (%p7055) target = $region85
        $region84: #{diffusion_extractor_forward.1} parent=80 // pred_region
          %s7058 = sand.u32 %s98, 1
          %s7059 = sand.u32 %s98, 1
          %s7060 = smul.addr %s7059, 384
          %s7061 = scalar_lea.vmem [#allocation2], %s7060
        $region85: #{diffusion_extractor_forward.1} parent=80 // pred_fallthru
          _
        // Predicated region
        $region86: #{diffusion_extractor_forward.1} parent=80 // pred_check
          %p7062 = pneg %p139
        $region87: #{diffusion_extractor_forward.1} parent=80 // pred_check_branch
          %7064 = sbr.rel (%p7062) target = $region89
        $region88: #{diffusion_extractor_forward.1} parent=80 // pred_region
          %s7065 = smul.u32 32, %s17
          %p7066 = scmp.lt.s32.totalorder %s7065, 63
          %s7067 = scalar_select %p7066, %s7065, 63
          %s7068 = smul.addr %s7067, 8
          %s7069 = scalar_lea.vmem %s4, %s7068
        $region89: #{diffusion_extractor_forward.1} parent=80 // pred_fallthru
          _
      $region81: #{diffusion_extractor_forward.1} parent=5 // pred_fallthru
        _
    $region6: #{diffusion_extractor_forward.1} parent=1 // loop_footer
      %s15 = sadd.s32 1, %s11
    $region7: #{diffusion_extractor_forward.1} parent=1 // loop_footer_branch
      %10 = sbr.rel target = $region3
    $region8: #{diffusion_extractor_forward.1} parent=1 // loop_exit
      _

</llo_original>
